<compile_context>
chip_gen: v6e
topology: v6e:2x2x1
jax: 0.10.0
libtpu: 0.0.40
codegen_flags: <defaults>
</compile_context>

<pallas_src>
import functools

import jax
import jax.numpy as jnp
from jax import lax
from jax.experimental import pallas as pl
from jax.experimental.pallas import tpu as pltpu

EPS = 1e-8             # getCadistAvg eps
IN_EPS = 1e-5          # nn.InstanceNorm2d default eps
BINS = 32
NBINS = 2 * BINS + 2   # 66 relative-position bins
NBINS_PAD = 128        # pad the one-hot lookup K-dim to the MXU width
XHEAD_PAD = 128        # pad the xyz head output columns to a full lane group
PAIR_DIM = 128         # pairwise_state_dim (== channel: ircn0(channel, channel))
SEQ_DIM = 1024         # sequence_state_dim
ACT_DTYPE = jnp.bfloat16          # pair activations stored in HBM
_VMEM_LIMIT = 48 * 1024 * 1024    # headroom for v7x (64 MiB / TC); raise on v5e/v6e


def _cparams(semantics):
    return pltpu.CompilerParams(dimension_semantics=semantics,
                                vmem_limit_bytes=_VMEM_LIMIT)


def _pick_tile(n_rows, target):
    """cdiv-friendly tile: full rows if small, else `target` (multiple of 8)."""
    target = max(8, (target // 8) * 8)
    return n_rows if n_rows <= target else target


def _elu(y):
    # exp() only on the clamped-negative branch: no overflow in the dead branch.
    return jnp.where(y > 0, y, jnp.exp(jnp.minimum(y, 0.0)) - 1.0)


def _tile_stats(y, stats_ref, rows_global, n_rows, needs_mask):
    """Per-tile [sum ; centered M2] for a numerically stable two-pass InstanceNorm."""
    if needs_mask:
        valid = rows_global < n_rows                       # (T, 1) bool
        yv = jnp.where(valid, y, 0.0)
        cnt = jnp.maximum(jnp.sum(valid.astype(jnp.float32)), 1.0)
        sum_t = jnp.sum(yv, axis=0, keepdims=True)         # (1, C)
        mean_t = sum_t / cnt
        dev = jnp.where(valid, y - mean_t, 0.0)
    else:
        sum_t = jnp.sum(y, axis=0, keepdims=True)
        mean_t = sum_t * (1.0 / y.shape[0])
        dev = y - mean_t
    m2_t = jnp.sum(dev * dev, axis=0, keepdims=True)       # (1, C)
    stats = jnp.concatenate([sum_t, m2_t], axis=0)         # (2, C)
    stats_ref[...] = stats.reshape(stats_ref.shape)


def _combine_stats(partial, counts, n_rows, gamma, beta):
    """XLA-side combine of per-tile stats -> per-(b,c) scale/shift (folds affine)."""
    sums = partial[:, :, 0, :]                             # (B, nt, C)
    m2s = partial[:, :, 1, :]
    cnt = counts[None, :, None]                            # (1, nt, 1)
    mean = jnp.sum(sums, axis=1) / n_rows                  # (B, C)
    mean_t = sums / cnt
    m2 = jnp.sum(m2s, axis=1) + jnp.sum(cnt * jnp.square(mean_t - mean[:, None, :]),
                                        axis=1)
    var = m2 / n_rows                                      # biased, as InstanceNorm2d
    scale = gamma * lax.rsqrt(var + IN_EPS)                # (1,C)*(B,C) -> (B,C)
    shift = beta - mean * scale
    return jnp.stack([scale, shift], axis=1)               # (B, 2, C) f32


# ----------------------------------------------------------------------------
# Kernel 1: ircn0 fused with RelativePosition
#   y = ELU([z | onehot(idx)] @ [[W],[emb@W]] + b); per-tile norm stats.
# ----------------------------------------------------------------------------
def _fr_first_kernel(z_ref, idx_ref, w_ref, b_ref, out_ref, stats_ref,
                     *, n_rows, needs_mask):
    t = pl.program_id(1)
    tile = z_ref.shape[1]
    nbp = w_ref.shape[0] - z_ref.shape[2]
    onehot = (idx_ref[0] == lax.broadcasted_iota(jnp.int32, (tile, nbp), 1)
              ).astype(jnp.bfloat16)
    x = jnp.concatenate([z_ref[0].astype(jnp.bfloat16), onehot], axis=-1)  # (T, 2C)
    y = jnp.dot(x, w_ref[...], preferred_element_type=jnp.float32) + b_ref[...]
    y_bf = _elu(y).astype(out_ref.dtype)
    out_ref[0] = y_bf
    rows = t * tile + lax.broadcasted_iota(jnp.int32, (tile, 1), 0)
    _tile_stats(y_bf.astype(jnp.float32), stats_ref, rows, n_rows, needs_mask)


# ----------------------------------------------------------------------------
# Kernel 2: fused predDxyz head (shared weights) + next featureReduction
#   xn   = norm(y_prev)                    (scale/shift precomputed in XLA)
#   [feat|xyz] = xn @ W_heads + b_heads;   feat = ELU(feat); xyz *= maskdiag
#   y_next = ELU([y_prev | feat] @ W_pair + b_pair);  per-tile norm stats.
# ----------------------------------------------------------------------------
def _head_pair_kernel(y_ref, norm_ref, wh_ref, bh_ref, wp_ref, bp_ref,
                      xyz_ref, out_ref, stats_ref,
                      *, l_side, n_rows, needs_mask):
    t = pl.program_id(1)
    tile = y_ref.shape[1]
    c = y_ref.shape[2]

    y_bf = y_ref[0]                                        # (T, C) bf16
    nm = norm_ref[0]                                       # (2, C) f32
    xn = y_bf.astype(jnp.float32) * nm[0:1, :] + nm[1:2, :]
    xn_bf = xn.astype(jnp.bfloat16)

    heads = jnp.dot(xn_bf, wh_ref[...],
                    preferred_element_type=jnp.float32) + bh_ref[...]     # (T, 2C)
    feat = _elu(heads[:, :c])

    # maskdiag computed in-kernel (assumes maskdiag == 1 - I as in the reference).
    rows = t * tile + lax.broadcasted_iota(jnp.int32, (tile, 1), 0)
    md = (rows % (l_side + 1) != 0).astype(jnp.float32)
    xyz_ref[0] = (heads[:, c:c + 3] * md).astype(xyz_ref.dtype)

    x_cat = jnp.concatenate([y_bf, feat.astype(jnp.bfloat16)], axis=-1)   # (T, 2C)
    y_next = _elu(jnp.dot(x_cat, wp_ref[...],
                          preferred_element_type=jnp.float32) + bp_ref[...])
    y_next_bf = y_next.astype(out_ref.dtype)
    out_ref[0] = y_next_bf
    _tile_stats(y_next_bf.astype(jnp.float32), stats_ref, rows, n_rows, needs_mask)


# ----------------------------------------------------------------------------
# Kernel 3: standalone InstanceNorm apply (only for the final pair_feats)
# ----------------------------------------------------------------------------
def _insnorm_kernel(y_ref, norm_ref, o_ref):
    nm = norm_ref[0]
    xn = y_ref[0].astype(jnp.float32) * nm[0:1, :] + nm[1:2, :]
    o_ref[0] = xn.astype(o_ref.dtype)


# ----------------------------------------------------------------------------
# Kernel 4: getCadistAvg, tiled over i (reduction) and k (output columns)
#   out[b, j, k] = mean_i sqrt(sum_c (p[b,c,i,k] - p[b,c,i,j])^2 + eps)
# ----------------------------------------------------------------------------
def _cadist_kernel(rows_ref, cols_ref, o_ref, *, inv_l):
    it = pl.program_id(2)

    @pl.when(it == 0)
    def _():
        o_ref[...] = jnp.zeros_like(o_ref)

    rows = rows_ref[0]                 # (3, Ti, Tk)  rows    p[c, i, k]
    cols = cols_ref[0]                 # (3, Ti, L)   columns p[c, i, j]
    ti = rows.shape[1]
    tk = rows.shape[2]
    l_full = cols.shape[2]
    colt = [cols[c].T for c in range(3)]            # (L, Ti) each, XLU transpose
    acc = jnp.zeros((l_full, tk), jnp.float32)
    for i in range(ti):
        d2 = jnp.zeros((l_full, tk), jnp.float32)
        for c in range(3):
            rel = rows[c, i:i + 1, :] - colt[c][:, i:i + 1]      # (L, Tk)
            d2 = d2 + rel * rel
        acc = acc + jnp.sqrt(d2 + EPS)
    o_ref[0] += acc * inv_l


# ----------------------------------------------------------------------------
# Wrappers
# ----------------------------------------------------------------------------
def fr_first(z, idx, w_stack, b, *, tile):
    B, N, C = z.shape
    n_tiles = pl.cdiv(N, tile)
    needs_mask = (N % tile) != 0
    return pl.pallas_call(
        functools.partial(_fr_first_kernel, n_rows=N, needs_mask=needs_mask),
        out_shape=(jax.ShapeDtypeStruct((B, N, C), ACT_DTYPE),
                   jax.ShapeDtypeStruct((B, n_tiles, 2, C), jnp.float32)),
        grid=(B, n_tiles),
        in_specs=[
            pl.BlockSpec((1, tile, C), lambda b, t: (b, t, 0)),          # z (f32)
            pl.BlockSpec((1, tile, 1), lambda b, t: (b, t, 0)),          # relpos idx
            pl.BlockSpec((C + NBINS_PAD, C), lambda b, t: (0, 0)),       # [W ; emb@W]
            pl.BlockSpec((1, C), lambda b, t: (0, 0)),                   # bias
        ],
        out_specs=(pl.BlockSpec((1, tile, C), lambda b, t: (b, t, 0)),
                   pl.BlockSpec((1, 1, 2, C), lambda b, t: (b, t, 0, 0))),
        compiler_params=_cparams(("parallel", "parallel")),
    )(z, idx, w_stack, b)


def head_pair(y, norm_ss, w_heads, b_heads, w_pair, b_pair, *, l_side, tile):
    B, N, C = y.shape
    n_tiles = pl.cdiv(N, tile)
    needs_mask = (N % tile) != 0
    return pl.pallas_call(
        functools.partial(_head_pair_kernel, l_side=l_side, n_rows=N,
                          needs_mask=needs_mask),
        out_shape=(jax.ShapeDtypeStruct((B, N, 3), jnp.float32),
                   jax.ShapeDtypeStruct((B, N, C), ACT_DTYPE),
                   jax.ShapeDtypeStruct((B, n_tiles, 2, C), jnp.float32)),
        grid=(B, n_tiles),
        in_specs=[
            pl.BlockSpec((1, tile, C), lambda b, t: (b, t, 0)),          # pre-norm y
            pl.BlockSpec((1, 2, C), lambda b, t: (b, 0, 0)),             # scale/shift
            pl.BlockSpec((C, C + XHEAD_PAD), lambda b, t: (0, 0)),       # merged heads
            pl.BlockSpec((1, C + XHEAD_PAD), lambda b, t: (0, 0)),       # merged bias
            pl.BlockSpec((2 * C, C), lambda b, t: (0, 0)),               # [Wa ; Wb]
            pl.BlockSpec((1, C), lambda b, t: (0, 0)),                   # pair bias
        ],
        out_specs=(pl.BlockSpec((1, tile, 3), lambda b, t: (b, t, 0)),
                   pl.BlockSpec((1, tile, C), lambda b, t: (b, t, 0)),
                   pl.BlockSpec((1, 1, 2, C), lambda b, t: (b, t, 0, 0))),
        compiler_params=_cparams(("parallel", "parallel")),
    )(y, norm_ss, w_heads, b_heads, w_pair, b_pair)


def instance_norm_apply(y, norm_ss, *, tile, out_dtype=ACT_DTYPE):
    B, N, C = y.shape
    n_tiles = pl.cdiv(N, tile)
    return pl.pallas_call(
        _insnorm_kernel,
        out_shape=jax.ShapeDtypeStruct((B, N, C), out_dtype),
        grid=(B, n_tiles),
        in_specs=[pl.BlockSpec((1, tile, C), lambda b, t: (b, t, 0)),
                  pl.BlockSpec((1, 2, C), lambda b, t: (b, 0, 0))],
        out_specs=pl.BlockSpec((1, tile, C), lambda b, t: (b, t, 0)),
        compiler_params=_cparams(("parallel", "parallel")),
    )(y, norm_ss)


def _cadist_tiles(l):
    ti = 8 if l % 8 == 0 else l
    tk = l
    if l > 512:
        for cand in (512, 256, 128):
            if l % cand == 0:
                tk = cand
                break
    return ti, tk


def cadist_avg(predxyz):
    B, _, L, _ = predxyz.shape
    ti, tk = _cadist_tiles(L)
    return pl.pallas_call(
        functools.partial(_cadist_kernel, inv_l=1.0 / L),
        out_shape=jax.ShapeDtypeStruct((B, L, L), jnp.float32),
        grid=(B, L // tk, L // ti),
        in_specs=[pl.BlockSpec((1, 3, ti, tk), lambda b, kt, it: (b, 0, it, kt)),
                  pl.BlockSpec((1, 3, ti, L), lambda b, kt, it: (b, 0, it, 0))],
        out_specs=pl.BlockSpec((1, L, tk), lambda b, kt, it: (b, 0, kt)),
        compiler_params=_cparams(("parallel", "parallel", "arbitrary")),
    )(predxyz, predxyz)


def relpos_indices(residx, mask, bins=BINS):
    # Tiny int tensor computed in XLA; the embedded (B, L*L, 128) f32 tensor is
    # never materialised in HBM (lookup is folded into the fr_first matmul).
    r = residx.astype(jnp.int32)
    diff = r[:, None, :] - r[:, :, None]              # diff[b,i,j] = r[j] - r[i]
    diff = jnp.clip(diff, -bins, bins) + bins + 1
    if mask is not None:
        m = mask.astype(jnp.int32)
        pair = (m[:, None, :] * m[:, :, None]) > 0
        diff = jnp.where(pair, diff, 0)
    B, L, _ = diff.shape
    return diff.reshape(B, L * L, 1)


def _tile_counts(n, tile):
    n_tiles = pl.cdiv(n, tile)
    counts = jnp.full((n_tiles,), float(tile), jnp.float32)
    counts = counts.at[-1].set(float(n - (n_tiles - 1) * tile))
    return counts


# ----------------------------------------------------------------------------
# BlockV0 forward (wiring mirrors the PyTorch reference)
# ----------------------------------------------------------------------------
def block_v0_forward(params, seq_feats, pair_feats, true_aa, residx, mask, maskdiag,
                     *, spatial_tile=8192):
    del true_aa            # unused by the reference forward
    del maskdiag           # TODO(synk): maskdiag is recomputed in-kernel as 1 - I
    B, L, _, C = pair_feats.shape
    N = L * L

    # ---- fold / cast parameters (tiny XLA ops) ------------------------------
    def fold3(w):
        # TODO(synk): Module.IRCN is not defined in the reference; the stand-in
        # triplicates channels, so cat([x,x,x]) @ W == x @ (W0+W1+W2).
        cin = w.shape[0] // 3
        return w[:cin] + w[cin:2 * cin] + w[2 * cin:]

    fr0, fr1, fr2 = params["fr0"], params["fr1"], params["fr2"]
    w0 = fold3(fr0["w"])                                               # (C, C) f32
    embw = params["rel_emb"] @ w0                                      # fold relpos
    embw_pad = jnp.zeros((NBINS_PAD, C), jnp.float32).at[:NBINS].set(embw)
    w_first = jnp.concatenate([w0, embw_pad], axis=0).astype(jnp.bfloat16)
    w_pair1 = fold3(fr1["w"]).astype(jnp.bfloat16)                     # (2C, C)
    w_pair2 = fold3(fr2["w"]).astype(jnp.bfloat16)

    pd = params["pd"]
    # merged shared-weight heads: [w_feat | zero-padded w_xyz] -> (C, C+128) bf16
    # (xyz now uses bf16 inputs with f32 accumulation; validated at small scale)
    wx_pad = jnp.zeros((C, XHEAD_PAD), jnp.float32).at[:, :3].set(pd["w_xyz"])
    w_heads = jnp.concatenate([pd["w_feat"], wx_pad], axis=1).astype(jnp.bfloat16)
    bx_pad = jnp.zeros((1, XHEAD_PAD), jnp.float32).at[:, :3].set(pd["b_xyz"])
    b_heads = jnp.concatenate([pd["b_feat"], bx_pad], axis=1)          # (1, C+128)

    idx = relpos_indices(residx, mask)
    z0 = pair_feats.reshape(B, N, C)      # f32 (producer output; no extra cast pass)

    T = _pick_tile(N, spatial_tile)
    counts = _tile_counts(N, T)

    Predxyz, PredCadistavg, Plddt = [], [], []
    s = seq_feats
    # TODO(synk): TriangularSelfAttentionBlock (trunk) has no provided
    # definition; the depth-many trunk blocks are treated as identity on (s, z).

    # ircn0: RelativePosition + conv1x1 + ELU fused; per-tile norm stats.
    out0, st0p = fr_first(z0, idx, w_first, fr0["b"], tile=T)
    ns0 = _combine_stats(st0p, counts, N, fr0["gamma"], fr0["beta"])

    # predDxyz0 (call 1) + ircn1 fused: feat1 never touches HBM.
    xyz1, out1, st1p = head_pair(out0, ns0, w_heads, b_heads, w_pair1, fr1["b"],
                                 l_side=L, tile=T)
    ns1 = _combine_stats(st1p, counts, N, fr1["gamma"], fr1["beta"])

    predxyz = jnp.transpose(xyz1.reshape(B, L, L, 3), (0, 3, 1, 2))    # (B,3,L,L)
    cadistavg = cadist_avg(predxyz)
    Predxyz.append(predxyz)
    PredCadistavg.append(cadistavg)
    Plddt.append(None)   # TODO(synk): Module.pLDDT has no provided definition.

    # predDxyz0 (call 2, shared weights) + ircn2 fused.
    # TODO(synk): the optional cadistavg conditioning of predDxyz_shareWeight is
    # not defined in the reference and is ignored by this stand-in.
    dxyz_flat, out2, st2p = head_pair(out1, ns1, w_heads, b_heads, w_pair2, fr2["b"],
                                      l_side=L, tile=T)
    ns2 = _combine_stats(st2p, counts, N, fr2["gamma"], fr2["beta"])

    dxyz = jnp.transpose(dxyz_flat.reshape(B, L, L, 3), (0, 3, 1, 2))
    predxyz = predxyz + dxyz
    cadistavg = cadist_avg(predxyz)
    Predxyz.append(predxyz)
    PredCadistavg.append(cadistavg)
    Plddt.append(None)   # TODO(synk): Module.pLDDT has no provided definition.

    # Final pair_feats = InstanceNorm branch of ircn2 (emitted bf16).
    # TODO(synk): Module.forNextBlock has no provided definition; identity.
    z_out = instance_norm_apply(out2, ns2, tile=T, out_dtype=ACT_DTYPE)
    return Predxyz, PredCadistavg, Plddt, s, z_out.reshape(B, L, L, C)


# ----------------------------------------------------------------------------
# Deterministic parameter init (synthetic, matches module-implied shapes)
# ----------------------------------------------------------------------------
def init_params(key, channel=PAIR_DIM, pair_dim=PAIR_DIM, bins=BINS):
    ks = jax.random.split(key, 8)

    def nrm(k, shape, scale=0.05):
        return (scale * jax.random.normal(k, shape)).astype(jnp.float32)

    def fr_params(k, cin, cout):
        k1, k2 = jax.random.split(k)
        return {"w": nrm(k1, (3 * cin, cout)),                 # conv1x1 weight
                "b": nrm(k2, (1, cout)),
                "gamma": jnp.ones((1, cout), jnp.float32),
                "beta": jnp.zeros((1, cout), jnp.float32)}

    return {
        "rel_emb": nrm(ks[0], (2 * bins + 2, pair_dim), 0.1),
        "fr0": fr_params(ks[1], channel, channel),
        "fr1": fr_params(ks[2], 2 * channel, channel),
        "fr2": fr_params(ks[3], 2 * channel, channel),
        "pd": {
            "w_feat": nrm(ks[4], (channel, channel)),
            "b_feat": nrm(ks[5], (1, channel)),
            "w_xyz": nrm(ks[6], (channel, 3)),
            "b_xyz": nrm(ks[7], (1, 3)),
        },
    }


if __name__ == "__main__":
    B, L = 2, 32
    channel = PAIR_DIM  # 128 (pairwise_state_dim must equal channel for ircn0)

    key = jax.random.PRNGKey(0)
    k_in = jax.random.split(key, 4)
    seq_feats = jax.random.normal(k_in[0], (B, L, SEQ_DIM), jnp.float32)
    pair_feats = jax.random.normal(k_in[1], (B, L, L, PAIR_DIM), jnp.float32)
    true_aa = jax.random.randint(k_in[2], (B, L), 0, 20, dtype=jnp.int32)
    residx = jnp.broadcast_to(jnp.arange(L, dtype=jnp.int32), (B, L))
    mask = jnp.ones((B, L), jnp.int32)
    maskdiag = jnp.broadcast_to(
        (1.0 - jnp.eye(L, dtype=jnp.float32))[None, None], (B, 1, L, L))

    params = init_params(jax.random.PRNGKey(42), channel=channel)

    # small spatial tile so the demo exercises the multi-tile / partial-stats path
    fwd = jax.jit(functools.partial(block_v0_forward, spatial_tile=256))
    Predxyz, PredCadistavg, Plddt, s_out, z_out = fwd(
        params, seq_feats, pair_feats, true_aa, residx, mask, maskdiag)

    jax.block_until_ready((Predxyz, PredCadistavg, s_out, z_out))
    assert Predxyz[0].shape == (B, 3, L, L)
    assert Predxyz[1].shape == (B, 3, L, L)
    assert PredCadistavg[0].shape == (B, L, L)
    assert z_out.shape == (B, L, L, channel)
    assert bool(jnp.isfinite(z_out.astype(jnp.float32)).all())
    assert bool(jnp.isfinite(PredCadistavg[1]).all())
    print("KERNEL_OK")
</pallas_src>

<mosaic_0001>
module attributes {stable_mosaic.version = 11 : i64} {
  func.func @_fr_first_kernel(%arg0: i32, %arg1: i32, %arg2: memref<1x256x128xf32, #tpu.memory_space<vmem>>, %arg3: memref<1x256x1xi32, #tpu.memory_space<vmem>>, %arg4: memref<256x128xbf16, #tpu.memory_space<vmem>>, %arg5: memref<1x128xf32, #tpu.memory_space<vmem>>, %arg6: memref<1x256x128xbf16, #tpu.memory_space<vmem>>, %arg7: memref<1x1x2x128xf32, #tpu.memory_space<vmem>>) attributes {dimension_semantics = [#tpu.dimension_semantics<parallel>, #tpu.dimension_semantics<parallel>], iteration_bounds = array<i64: 2, 4>, scalar_prefetch = 0 : i64, scratch_operands = 0 : i64, tpu.core_type = #tpu.core_type<tc>, window_params = [{transform_indices = @transform_0, window_bounds = array<i64: 1, 256, 128>}, {transform_indices = @transform_1, window_bounds = array<i64: 1, 256, 1>}, {pipeline_mode = #tpu.pipeline_mode<synchronous>, transform_indices = @transform_2, window_bounds = array<i64: 256, 128>}, {pipeline_mode = #tpu.pipeline_mode<synchronous>, transform_indices = @transform_3, window_bounds = array<i64: 1, 128>}, {transform_indices = @transform_4, window_bounds = array<i64: 1, 256, 128>}, {transform_indices = @transform_5, window_bounds = array<i64: 1, 1, 2, 128>}]} {
    %c0 = arith.constant 0 : index
    %c0_0 = arith.constant 0 : index
    %c0_1 = arith.constant 0 : index
    %0 = vector.load %arg3[%c0, %c0_0, %c0_1] : memref<1x256x1xi32, #tpu.memory_space<vmem>>, vector<1x256x1xi32>
    %1 = vector.shape_cast %0 : vector<1x256x1xi32> to vector<256x1xi32>
    %2 = tpu.iota {dimensions = array<i32: 1>} : vector<256x128xi32>
    %3 = vector.broadcast %1 : vector<256x1xi32> to vector<256x128xi32>
    %4 = arith.cmpi eq, %3, %2 : vector<256x128xi32>
    %5 = arith.extui %4 : vector<256x128xi1> to vector<256x128xi32>
    %6 = arith.sitofp %5 : vector<256x128xi32> to vector<256x128xf32>
    %7 = arith.truncf %6 : vector<256x128xf32> to vector<256x128xbf16>
    %c0_2 = arith.constant 0 : index
    %c0_3 = arith.constant 0 : index
    %c0_4 = arith.constant 0 : index
    %8 = vector.load %arg2[%c0_2, %c0_3, %c0_4] : memref<1x256x128xf32, #tpu.memory_space<vmem>>, vector<1x256x128xf32>
    %9 = vector.shape_cast %8 : vector<1x256x128xf32> to vector<256x128xf32>
    %10 = arith.truncf %9 : vector<256x128xf32> to vector<256x128xbf16>
    %11 = tpu.concatenate %10, %7 in 1 : vector<256x128xbf16>, vector<256x128xbf16> -> vector<256x256xbf16>
    %c0_5 = arith.constant 0 : index
    %c0_6 = arith.constant 0 : index
    %12 = vector.load %arg4[%c0_5, %c0_6] : memref<256x128xbf16, #tpu.memory_space<vmem>>, vector<256x128xbf16>
    %cst = arith.constant dense<0.000000e+00> : vector<256x128xf32>
    %13 = tpu.matmul %11, %12, %cst {dimension_numbers = #tpu.dot_dimension_numbers<[1], [0], [0], [1], [0, 0, 1, 1], [], []>} : vector<256x256xbf16>, vector<256x128xbf16>, vector<256x128xf32> -> vector<256x128xf32>
    %c0_7 = arith.constant 0 : index
    %c0_8 = arith.constant 0 : index
    %14 = vector.load %arg5[%c0_7, %c0_8] : memref<1x128xf32, #tpu.memory_space<vmem>>, vector<1x128xf32>
    %15 = vector.broadcast %14 : vector<1x128xf32> to vector<256x128xf32>
    %16 = arith.addf %13, %15 : vector<256x128xf32>
    %cst_9 = arith.constant 0.000000e+00 : f32
    %17 = vector.broadcast %cst_9 : f32 to vector<256x128xf32>
    %18 = arith.cmpf ogt, %16, %17 : vector<256x128xf32>
    %cst_10 = arith.constant 0.000000e+00 : f32
    %19 = vector.broadcast %cst_10 : f32 to vector<256x128xf32>
    %20 = arith.minimumf %16, %19 : vector<256x128xf32>
    %21 = math.exp %20 : vector<256x128xf32>
    %cst_11 = arith.constant 1.000000e+00 : f32
    %22 = vector.broadcast %cst_11 : f32 to vector<256x128xf32>
    %23 = arith.subf %21, %22 : vector<256x128xf32>
    %24 = arith.select %18, %16, %23 : vector<256x128xi1>, vector<256x128xf32>
    %25 = arith.truncf %24 : vector<256x128xf32> to vector<256x128xbf16>
    %c0_12 = arith.constant 0 : index
    %c0_13 = arith.constant 0 : index
    %c0_14 = arith.constant 0 : index
    %26 = vector.load %arg6[%c0_12, %c0_13, %c0_14] : memref<1x256x128xbf16, #tpu.memory_space<vmem>>, vector<1x256x128xbf16>
    %27 = vector.shape_cast %26 : vector<1x256x128xbf16> to vector<256x128xbf16>
    %28 = vector.shape_cast %25 : vector<256x128xbf16> to vector<1x256x128xbf16>
    tpu.vector_store %arg6[%c0_12, %c0_13, %c0_14], %28 {strides = array<i32>} : memref<1x256x128xbf16, #tpu.memory_space<vmem>>, vector<1x256x128xbf16>,
    %29 = arith.extf %25 : vector<256x128xbf16> to vector<256x128xf32>
    %cst_15 = arith.constant dense<0.000000e+00> : vector<128xf32>
    %30 = vector.multi_reduction <add>, %29, %cst_15 [0] : vector<256x128xf32> to vector<128xf32>
    %31 = vector.shape_cast %30 : vector<128xf32> to vector<1x128xf32>
    %cst_16 = arith.constant 3.906250e-03 : f32
    %32 = vector.broadcast %cst_16 : f32 to vector<1x128xf32>
    %33 = arith.mulf %31, %32 : vector<1x128xf32>
    %34 = vector.broadcast %33 : vector<1x128xf32> to vector<256x128xf32>
    %35 = arith.subf %29, %34 : vector<256x128xf32>
    %36 = arith.mulf %35, %35 : vector<256x128xf32>
    %cst_17 = arith.constant dense<0.000000e+00> : vector<128xf32>
    %37 = vector.multi_reduction <add>, %36, %cst_17 [0] : vector<256x128xf32> to vector<128xf32>
    %38 = vector.shape_cast %37 : vector<128xf32> to vector<1x128xf32>
    %39 = tpu.concatenate %31, %38 in 0 : vector<1x128xf32>, vector<1x128xf32> -> vector<2x128xf32>
    %40 = vector.shape_cast %39 : vector<2x128xf32> to vector<1x1x2x128xf32>
    %c0_18 = arith.constant 0 : index
    %c0_19 = arith.constant 0 : index
    %c0_20 = arith.constant 0 : index
    %c0_21 = arith.constant 0 : index
    %41 = vector.load %arg7[%c0_18, %c0_19, %c0_20, %c0_21] : memref<1x1x2x128xf32, #tpu.memory_space<vmem>>, vector<1x1x2x128xf32>
    tpu.vector_store %arg7[%c0_18, %c0_19, %c0_20, %c0_21], %40 {strides = array<i32>} : memref<1x1x2x128xf32, #tpu.memory_space<vmem>>, vector<1x1x2x128xf32>,
    return
  }
  func.func @transform_0(%arg0: i32, %arg1: i32) -> (i32, i32, i32) {
    %c0_i32 = arith.constant 0 : i32
    %c0_i32_0 = arith.constant 0 : i32
    return %arg0, %arg1, %c0_i32 : i32, i32, i32
  }
  func.func @transform_1(%arg0: i32, %arg1: i32) -> (i32, i32, i32) {
    %c0_i32 = arith.constant 0 : i32
    %c0_i32_0 = arith.constant 0 : i32
    return %arg0, %arg1, %c0_i32 : i32, i32, i32
  }
  func.func @transform_2(%arg0: i32, %arg1: i32) -> (i32, i32) {
    %c0_i32 = arith.constant 0 : i32
    %c0_i32_0 = arith.constant 0 : i32
    %c0_i32_1 = arith.constant 0 : i32
    return %c0_i32, %c0_i32_0 : i32, i32
  }
  func.func @transform_3(%arg0: i32, %arg1: i32) -> (i32, i32) {
    %c0_i32 = arith.constant 0 : i32
    %c0_i32_0 = arith.constant 0 : i32
    %c0_i32_1 = arith.constant 0 : i32
    return %c0_i32, %c0_i32_0 : i32, i32
  }
  func.func @transform_4(%arg0: i32, %arg1: i32) -> (i32, i32, i32) {
    %c0_i32 = arith.constant 0 : i32
    %c0_i32_0 = arith.constant 0 : i32
    return %arg0, %arg1, %c0_i32 : i32, i32, i32
  }
  func.func @transform_5(%arg0: i32, %arg1: i32) -> (i32, i32, i32, i32) {
    %c0_i32 = arith.constant 0 : i32
    %c0_i32_0 = arith.constant 0 : i32
    %c0_i32_1 = arith.constant 0 : i32
    return %arg0, %arg1, %c0_i32, %c0_i32_0 : i32, i32, i32, i32
  }
}

module attributes {stable_mosaic.version = 11 : i64} {
  func.func @_head_pair_kernel(%arg0: i32, %arg1: i32, %arg2: memref<1x256x128xbf16, #tpu.memory_space<vmem>>, %arg3: memref<1x2x128xf32, #tpu.memory_space<vmem>>, %arg4: memref<128x256xbf16, #tpu.memory_space<vmem>>, %arg5: memref<1x256xf32, #tpu.memory_space<vmem>>, %arg6: memref<256x128xbf16, #tpu.memory_space<vmem>>, %arg7: memref<1x128xf32, #tpu.memory_space<vmem>>, %arg8: memref<1x256x3xf32, #tpu.memory_space<vmem>>, %arg9: memref<1x256x128xbf16, #tpu.memory_space<vmem>>, %arg10: memref<1x1x2x128xf32, #tpu.memory_space<vmem>>) attributes {dimension_semantics = [#tpu.dimension_semantics<parallel>, #tpu.dimension_semantics<parallel>], iteration_bounds = array<i64: 2, 4>, scalar_prefetch = 0 : i64, scratch_operands = 0 : i64, tpu.core_type = #tpu.core_type<tc>, window_params = [{transform_indices = @transform_0, window_bounds = array<i64: 1, 256, 128>}, {transform_indices = @transform_1, window_bounds = array<i64: 1, 2, 128>}, {pipeline_mode = #tpu.pipeline_mode<synchronous>, transform_indices = @transform_2, window_bounds = array<i64: 128, 256>}, {pipeline_mode = #tpu.pipeline_mode<synchronous>, transform_indices = @transform_3, window_bounds = array<i64: 1, 256>}, {pipeline_mode = #tpu.pipeline_mode<synchronous>, transform_indices = @transform_4, window_bounds = array<i64: 256, 128>}, {pipeline_mode = #tpu.pipeline_mode<synchronous>, transform_indices = @transform_5, window_bounds = array<i64: 1, 128>}, {transform_indices = @transform_6, window_bounds = array<i64: 1, 256, 3>}, {transform_indices = @transform_7, window_bounds = array<i64: 1, 256, 128>}, {transform_indices = @transform_8, window_bounds = array<i64: 1, 1, 2, 128>}]} {
    %c0 = arith.constant 0 : index
    %c0_0 = arith.constant 0 : index
    %c0_1 = arith.constant 0 : index
    %0 = vector.load %arg2[%c0, %c0_0, %c0_1] : memref<1x256x128xbf16, #tpu.memory_space<vmem>>, vector<1x256x128xbf16>
    %1 = vector.shape_cast %0 : vector<1x256x128xbf16> to vector<256x128xbf16>
    %c0_2 = arith.constant 0 : index
    %c0_3 = arith.constant 0 : index
    %c0_4 = arith.constant 0 : index
    %2 = vector.load %arg3[%c0_2, %c0_3, %c0_4] : memref<1x2x128xf32, #tpu.memory_space<vmem>>, vector<1x2x128xf32>
    %3 = vector.shape_cast %2 : vector<1x2x128xf32> to vector<2x128xf32>
    %4 = arith.extf %1 : vector<256x128xbf16> to vector<256x128xf32>
    %5 = vector.extract_strided_slice %3 {offsets = [0, 0], sizes = [1, 128], strides = [1, 1]} : vector<2x128xf32> to vector<1x128xf32>
    %6 = vector.broadcast %5 : vector<1x128xf32> to vector<256x128xf32>
    %7 = arith.mulf %4, %6 : vector<256x128xf32>
    %8 = vector.extract_strided_slice %3 {offsets = [1, 0], sizes = [1, 128], strides = [1, 1]} : vector<2x128xf32> to vector<1x128xf32>
    %9 = vector.broadcast %8 : vector<1x128xf32> to vector<256x128xf32>
    %10 = arith.addf %7, %9 : vector<256x128xf32>
    %11 = arith.truncf %10 : vector<256x128xf32> to vector<256x128xbf16>
    %c0_5 = arith.constant 0 : index
    %c0_6 = arith.constant 0 : index
    %12 = vector.load %arg4[%c0_5, %c0_6] : memref<128x256xbf16, #tpu.memory_space<vmem>>, vector<128x256xbf16>
    %cst = arith.constant dense<0.000000e+00> : vector<256x256xf32>
    %13 = tpu.matmul %11, %12, %cst {dimension_numbers = #tpu.dot_dimension_numbers<[1], [0], [0], [1], [0, 0, 1, 1], [], []>} : vector<256x128xbf16>, vector<128x256xbf16>, vector<256x256xf32> -> vector<256x256xf32>
    %c0_7 = arith.constant 0 : index
    %c0_8 = arith.constant 0 : index
    %14 = vector.load %arg5[%c0_7, %c0_8] : memref<1x256xf32, #tpu.memory_space<vmem>>, vector<1x256xf32>
    %15 = vector.broadcast %14 : vector<1x256xf32> to vector<256x256xf32>
    %16 = arith.addf %13, %15 : vector<256x256xf32>
    %17 = vector.extract_strided_slice %16 {offsets = [0, 0], sizes = [256, 128], strides = [1, 1]} : vector<256x256xf32> to vector<256x128xf32>
    %cst_9 = arith.constant 0.000000e+00 : f32
    %18 = vector.broadcast %cst_9 : f32 to vector<256x128xf32>
    %19 = arith.cmpf ogt, %17, %18 : vector<256x128xf32>
    %cst_10 = arith.constant 0.000000e+00 : f32
    %20 = vector.broadcast %cst_10 : f32 to vector<256x128xf32>
    %21 = arith.minimumf %17, %20 : vector<256x128xf32>
    %22 = math.exp %21 : vector<256x128xf32>
    %cst_11 = arith.constant 1.000000e+00 : f32
    %23 = vector.broadcast %cst_11 : f32 to vector<256x128xf32>
    %24 = arith.subf %22, %23 : vector<256x128xf32>
    %25 = arith.select %19, %17, %24 : vector<256x128xi1>, vector<256x128xf32>
    %c256_i32 = arith.constant 256 : i32
    %26 = arith.muli %arg1, %c256_i32 : i32
    %27 = tpu.iota {dimensions = array<i32: 0>} : vector<256x1xi32>
    %28 = vector.broadcast %26 : i32 to vector<256x1xi32>
    %29 = arith.addi %28, %27 : vector<256x1xi32>
    %c33_i32 = arith.constant 33 : i32
    %c0_i32 = arith.constant 0 : i32
    %30 = arith.cmpi eq, %c33_i32, %c0_i32 : i32
    %c1_i32 = arith.constant 1 : i32
    %31 = arith.select %30, %c1_i32, %c33_i32 : i32
    %32 = vector.broadcast %31 : i32 to vector<256x1xi32>
    %33 = arith.remsi %29, %32 : vector<256x1xi32>
    %c0_i32_12 = arith.constant 0 : i32
    %34 = vector.broadcast %c0_i32_12 : i32 to vector<256x1xi32>
    %35 = arith.cmpi ne, %33, %34 : vector<256x1xi32>
    %c0_i32_13 = arith.constant 0 : i32
    %36 = vector.broadcast %c0_i32_13 : i32 to vector<256x1xi32>
    %37 = arith.cmpi slt, %33, %36 : vector<256x1xi32>
    %c0_i32_14 = arith.constant 0 : i32
    %38 = arith.cmpi slt, %31, %c0_i32_14 : i32
    %39 = vector.broadcast %38 : i1 to vector<256x1xi1>
    %40 = vector.broadcast %39 : vector<256x1xi1> to vector<256x1xi1>
    %41 = arith.xori %37, %40 : vector<256x1xi1>
    %42 = arith.andi %41, %35 : vector<256x1xi1>
    %43 = vector.broadcast %31 : i32 to vector<256x1xi32>
    %44 = arith.addi %33, %43 : vector<256x1xi32>
    %45 = arith.select %42, %44, %33 : vector<256x1xi1>, vector<256x1xi32>
    %c0_i32_15 = arith.constant 0 : i32
    %46 = vector.broadcast %c0_i32_15 : i32 to vector<256x1xi32>
    %47 = arith.cmpi ne, %45, %46 : vector<256x1xi32>
    %48 = arith.extui %47 : vector<256x1xi1> to vector<256x1xi32>
    %49 = arith.sitofp %48 : vector<256x1xi32> to vector<256x1xf32>
    %50 = vector.extract_strided_slice %16 {offsets = [0, 128], sizes = [256, 3], strides = [1, 1]} : vector<256x256xf32> to vector<256x3xf32>
    %51 = vector.broadcast %49 : vector<256x1xf32> to vector<256x3xf32>
    %52 = arith.mulf %50, %51 : vector<256x3xf32>
    %c0_16 = arith.constant 0 : index
    %c0_17 = arith.constant 0 : index
    %c0_18 = arith.constant 0 : index
    %53 = vector.load %arg8[%c0_16, %c0_17, %c0_18] : memref<1x256x3xf32, #tpu.memory_space<vmem>>, vector<1x256x3xf32>
    %54 = vector.shape_cast %53 : vector<1x256x3xf32> to vector<256x3xf32>
    %55 = vector.shape_cast %52 : vector<256x3xf32> to vector<1x256x3xf32>
    tpu.vector_store %arg8[%c0_16, %c0_17, %c0_18], %55 {strides = array<i32>} : memref<1x256x3xf32, #tpu.memory_space<vmem>>, vector<1x256x3xf32>,
    %56 = arith.truncf %25 : vector<256x128xf32> to vector<256x128xbf16>
    %57 = tpu.concatenate %1, %56 in 1 : vector<256x128xbf16>, vector<256x128xbf16> -> vector<256x256xbf16>
    %c0_19 = arith.constant 0 : index
    %c0_20 = arith.constant 0 : index
    %58 = vector.load %arg6[%c0_19, %c0_20] : memref<256x128xbf16, #tpu.memory_space<vmem>>, vector<256x128xbf16>
    %cst_21 = arith.constant dense<0.000000e+00> : vector<256x128xf32>
    %59 = tpu.matmul %57, %58, %cst_21 {dimension_numbers = #tpu.dot_dimension_numbers<[1], [0], [0], [1], [0, 0, 1, 1], [], []>} : vector<256x256xbf16>, vector<256x128xbf16>, vector<256x128xf32> -> vector<256x128xf32>
    %c0_22 = arith.constant 0 : index
    %c0_23 = arith.constant 0 : index
    %60 = vector.load %arg7[%c0_22, %c0_23] : memref<1x128xf32, #tpu.memory_space<vmem>>, vector<1x128xf32>
    %61 = vector.broadcast %60 : vector<1x128xf32> to vector<256x128xf32>
    %62 = arith.addf %59, %61 : vector<256x128xf32>
    %cst_24 = arith.constant 0.000000e+00 : f32
    %63 = vector.broadcast %cst_24 : f32 to vector<256x128xf32>
    %64 = arith.cmpf ogt, %62, %63 : vector<256x128xf32>
    %cst_25 = arith.constant 0.000000e+00 : f32
    %65 = vector.broadcast %cst_25 : f32 to vector<256x128xf32>
    %66 = arith.minimumf %62, %65 : vector<256x128xf32>
    %67 = math.exp %66 : vector<256x128xf32>
    %cst_26 = arith.constant 1.000000e+00 : f32
    %68 = vector.broadcast %cst_26 : f32 to vector<256x128xf32>
    %69 = arith.subf %67, %68 : vector<256x128xf32>
    %70 = arith.select %64, %62, %69 : vector<256x128xi1>, vector<256x128xf32>
    %71 = arith.truncf %70 : vector<256x128xf32> to vector<256x128xbf16>
    %c0_27 = arith.constant 0 : index
    %c0_28 = arith.constant 0 : index
    %c0_29 = arith.constant 0 : index
    %72 = vector.load %arg9[%c0_27, %c0_28, %c0_29] : memref<1x256x128xbf16, #tpu.memory_space<vmem>>, vector<1x256x128xbf16>
    %73 = vector.shape_cast %72 : vector<1x256x128xbf16> to vector<256x128xbf16>
    %74 = vector.shape_cast %71 : vector<256x128xbf16> to vector<1x256x128xbf16>
    tpu.vector_store %arg9[%c0_27, %c0_28, %c0_29], %74 {strides = array<i32>} : memref<1x256x128xbf16, #tpu.memory_space<vmem>>, vector<1x256x128xbf16>,
    %75 = arith.extf %71 : vector<256x128xbf16> to vector<256x128xf32>
    %cst_30 = arith.constant dense<0.000000e+00> : vector<128xf32>
    %76 = vector.multi_reduction <add>, %75, %cst_30 [0] : vector<256x128xf32> to vector<128xf32>
    %77 = vector.shape_cast %76 : vector<128xf32> to vector<1x128xf32>
    %cst_31 = arith.constant 3.906250e-03 : f32
    %78 = vector.broadcast %cst_31 : f32 to vector<1x128xf32>
    %79 = arith.mulf %77, %78 : vector<1x128xf32>
    %80 = vector.broadcast %79 : vector<1x128xf32> to vector<256x128xf32>
    %81 = arith.subf %75, %80 : vector<256x128xf32>
    %82 = arith.mulf %81, %81 : vector<256x128xf32>
    %cst_32 = arith.constant dense<0.000000e+00> : vector<128xf32>
    %83 = vector.multi_reduction <add>, %82, %cst_32 [0] : vector<256x128xf32> to vector<128xf32>
    %84 = vector.shape_cast %83 : vector<128xf32> to vector<1x128xf32>
    %85 = tpu.concatenate %77, %84 in 0 : vector<1x128xf32>, vector<1x128xf32> -> vector<2x128xf32>
    %86 = vector.shape_cast %85 : vector<2x128xf32> to vector<1x1x2x128xf32>
    %c0_33 = arith.constant 0 : index
    %c0_34 = arith.constant 0 : index
    %c0_35 = arith.constant 0 : index
    %c0_36 = arith.constant 0 : index
    %87 = vector.load %arg10[%c0_33, %c0_34, %c0_35, %c0_36] : memref<1x1x2x128xf32, #tpu.memory_space<vmem>>, vector<1x1x2x128xf32>
    tpu.vector_store %arg10[%c0_33, %c0_34, %c0_35, %c0_36], %86 {strides = array<i32>} : memref<1x1x2x128xf32, #tpu.memory_space<vmem>>, vector<1x1x2x128xf32>,
    return
  }
  func.func @transform_0(%arg0: i32, %arg1: i32) -> (i32, i32, i32) {
    %c0_i32 = arith.constant 0 : i32
    %c0_i32_0 = arith.constant 0 : i32
    return %arg0, %arg1, %c0_i32 : i32, i32, i32
  }
  func.func @transform_1(%arg0: i32, %arg1: i32) -> (i32, i32, i32) {
    %c0_i32 = arith.constant 0 : i32
    %c0_i32_0 = arith.constant 0 : i32
    %c0_i32_1 = arith.constant 0 : i32
    return %arg0, %c0_i32, %c0_i32_0 : i32, i32, i32
  }
  func.func @transform_2(%arg0: i32, %arg1: i32) -> (i32, i32) {
    %c0_i32 = arith.constant 0 : i32
    %c0_i32_0 = arith.constant 0 : i32
    %c0_i32_1 = arith.constant 0 : i32
    return %c0_i32, %c0_i32_0 : i32, i32
  }
  func.func @transform_3(%arg0: i32, %arg1: i32) -> (i32, i32) {
    %c0_i32 = arith.constant 0 : i32
    %c0_i32_0 = arith.constant 0 : i32
    %c0_i32_1 = arith.constant 0 : i32
    return %c0_i32, %c0_i32_0 : i32, i32
  }
  func.func @transform_4(%arg0: i32, %arg1: i32) -> (i32, i32) {
    %c0_i32 = arith.constant 0 : i32
    %c0_i32_0 = arith.constant 0 : i32
    %c0_i32_1 = arith.constant 0 : i32
    return %c0_i32, %c0_i32_0 : i32, i32
  }
  func.func @transform_5(%arg0: i32, %arg1: i32) -> (i32, i32) {
    %c0_i32 = arith.constant 0 : i32
    %c0_i32_0 = arith.constant 0 : i32
    %c0_i32_1 = arith.constant 0 : i32
    return %c0_i32, %c0_i32_0 : i32, i32
  }
  func.func @transform_6(%arg0: i32, %arg1: i32) -> (i32, i32, i32) {
    %c0_i32 = arith.constant 0 : i32
    %c0_i32_0 = arith.constant 0 : i32
    return %arg0, %arg1, %c0_i32 : i32, i32, i32
  }
  func.func @transform_7(%arg0: i32, %arg1: i32) -> (i32, i32, i32) {
    %c0_i32 = arith.constant 0 : i32
    %c0_i32_0 = arith.constant 0 : i32
    return %arg0, %arg1, %c0_i32 : i32, i32, i32
  }
  func.func @transform_8(%arg0: i32, %arg1: i32) -> (i32, i32, i32, i32) {
    %c0_i32 = arith.constant 0 : i32
    %c0_i32_0 = arith.constant 0 : i32
    %c0_i32_1 = arith.constant 0 : i32
    return %arg0, %arg1, %c0_i32, %c0_i32_0 : i32, i32, i32, i32
  }
}

module attributes {stable_mosaic.version = 11 : i64} {
  func.func @_cadist_kernel(%arg0: i32, %arg1: i32, %arg2: i32, %arg3: memref<1x3x8x32xf32, #tpu.memory_space<vmem>>, %arg4: memref<1x3x8x32xf32, #tpu.memory_space<vmem>>, %arg5: memref<1x32x32xf32, #tpu.memory_space<vmem>>) attributes {dimension_semantics = [#tpu.dimension_semantics<parallel>, #tpu.dimension_semantics<parallel>, #tpu.dimension_semantics<arbitrary>], iteration_bounds = array<i64: 2, 1, 4>, scalar_prefetch = 0 : i64, scratch_operands = 0 : i64, tpu.core_type = #tpu.core_type<tc>, window_params = [{transform_indices = @transform_0, window_bounds = array<i64: 1, 3, 8, 32>}, {transform_indices = @transform_1, window_bounds = array<i64: 1, 3, 8, 32>}, {transform_indices = @transform_2, window_bounds = array<i64: 1, 32, 32>}]} {
    %c0_i32 = arith.constant 0 : i32
    %0 = arith.cmpi eq, %arg2, %c0_i32 : i32
    %1 = arith.extui %0 : i1 to i32
    %c0_i32_0 = arith.constant 0 : i32
    %2 = arith.cmpi ne, %1, %c0_i32_0 : i32
    scf.if %2 {
      %cst_31 = arith.constant 0.000000e+00 : f32
      %257 = vector.broadcast %cst_31 : f32 to vector<1x32x32xf32>
      %c0_32 = arith.constant 0 : index
      %c0_33 = arith.constant 0 : index
      %c0_34 = arith.constant 0 : index
      %258 = vector.load %arg5[%c0_32, %c0_33, %c0_34] : memref<1x32x32xf32, #tpu.memory_space<vmem>>, vector<1x32x32xf32>
      tpu.vector_store %arg5[%c0_32, %c0_33, %c0_34], %257 {strides = array<i32>} : memref<1x32x32xf32, #tpu.memory_space<vmem>>, vector<1x32x32xf32>,
    } else {
    }
    %c0 = arith.constant 0 : index
    %c0_1 = arith.constant 0 : index
    %c0_2 = arith.constant 0 : index
    %c0_3 = arith.constant 0 : index
    %3 = vector.load %arg3[%c0, %c0_1, %c0_2, %c0_3] : memref<1x3x8x32xf32, #tpu.memory_space<vmem>>, vector<1x3x8x32xf32>
    %4 = vector.shape_cast %3 : vector<1x3x8x32xf32> to vector<3x8x32xf32>
    %c0_4 = arith.constant 0 : index
    %c0_5 = arith.constant 0 : index
    %c0_6 = arith.constant 0 : index
    %c0_7 = arith.constant 0 : index
    %5 = vector.load %arg4[%c0_4, %c0_5, %c0_6, %c0_7] : memref<1x3x8x32xf32, #tpu.memory_space<vmem>>, vector<1x3x8x32xf32>
    %6 = vector.shape_cast %5 : vector<1x3x8x32xf32> to vector<3x8x32xf32>
    %7 = vector.extract_strided_slice %6 {offsets = [0, 0, 0], sizes = [1, 8, 32], strides = [1, 1, 1]} : vector<3x8x32xf32> to vector<1x8x32xf32>
    %8 = vector.shape_cast %7 : vector<1x8x32xf32> to vector<8x32xf32>
    %9 = tpu.transpose %8, [1, 0] : vector<8x32xf32> -> vector<32x8xf32>
    %10 = vector.extract_strided_slice %6 {offsets = [1, 0, 0], sizes = [1, 8, 32], strides = [1, 1, 1]} : vector<3x8x32xf32> to vector<1x8x32xf32>
    %11 = vector.shape_cast %10 : vector<1x8x32xf32> to vector<8x32xf32>
    %12 = tpu.transpose %11, [1, 0] : vector<8x32xf32> -> vector<32x8xf32>
    %13 = vector.extract_strided_slice %6 {offsets = [2, 0, 0], sizes = [1, 8, 32], strides = [1, 1, 1]} : vector<3x8x32xf32> to vector<1x8x32xf32>
    %14 = vector.shape_cast %13 : vector<1x8x32xf32> to vector<8x32xf32>
    %15 = tpu.transpose %14, [1, 0] : vector<8x32xf32> -> vector<32x8xf32>
    %cst = arith.constant 0.000000e+00 : f32
    %16 = vector.broadcast %cst : f32 to vector<32x32xf32>
    %cst_8 = arith.constant 0.000000e+00 : f32
    %17 = vector.broadcast %cst_8 : f32 to vector<32x32xf32>
    %18 = vector.extract_strided_slice %4 {offsets = [0, 0, 0], sizes = [1, 1, 32], strides = [1, 1, 1]} : vector<3x8x32xf32> to vector<1x1x32xf32>
    %19 = vector.shape_cast %18 : vector<1x1x32xf32> to vector<1x32xf32>
    %20 = vector.extract_strided_slice %9 {offsets = [0, 0], sizes = [32, 1], strides = [1, 1]} : vector<32x8xf32> to vector<32x1xf32>
    %21 = vector.broadcast %19 : vector<1x32xf32> to vector<32x32xf32>
    %22 = vector.broadcast %20 : vector<32x1xf32> to vector<32x32xf32>
    %23 = arith.subf %21, %22 : vector<32x32xf32>
    %24 = arith.mulf %23, %23 : vector<32x32xf32>
    %25 = arith.addf %17, %24 : vector<32x32xf32>
    %26 = vector.extract_strided_slice %4 {offsets = [1, 0, 0], sizes = [1, 1, 32], strides = [1, 1, 1]} : vector<3x8x32xf32> to vector<1x1x32xf32>
    %27 = vector.shape_cast %26 : vector<1x1x32xf32> to vector<1x32xf32>
    %28 = vector.extract_strided_slice %12 {offsets = [0, 0], sizes = [32, 1], strides = [1, 1]} : vector<32x8xf32> to vector<32x1xf32>
    %29 = vector.broadcast %27 : vector<1x32xf32> to vector<32x32xf32>
    %30 = vector.broadcast %28 : vector<32x1xf32> to vector<32x32xf32>
    %31 = arith.subf %29, %30 : vector<32x32xf32>
    %32 = arith.mulf %31, %31 : vector<32x32xf32>
    %33 = arith.addf %25, %32 : vector<32x32xf32>
    %34 = vector.extract_strided_slice %4 {offsets = [2, 0, 0], sizes = [1, 1, 32], strides = [1, 1, 1]} : vector<3x8x32xf32> to vector<1x1x32xf32>
    %35 = vector.shape_cast %34 : vector<1x1x32xf32> to vector<1x32xf32>
    %36 = vector.extract_strided_slice %15 {offsets = [0, 0], sizes = [32, 1], strides = [1, 1]} : vector<32x8xf32> to vector<32x1xf32>
    %37 = vector.broadcast %35 : vector<1x32xf32> to vector<32x32xf32>
    %38 = vector.broadcast %36 : vector<32x1xf32> to vector<32x32xf32>
    %39 = arith.subf %37, %38 : vector<32x32xf32>
    %40 = arith.mulf %39, %39 : vector<32x32xf32>
    %41 = arith.addf %33, %40 : vector<32x32xf32>
    %cst_9 = arith.constant 9.99999993E-9 : f32
    %42 = vector.broadcast %cst_9 : f32 to vector<32x32xf32>
    %43 = arith.addf %41, %42 : vector<32x32xf32>
    %44 = math.sqrt %43 : vector<32x32xf32>
    %45 = arith.addf %16, %44 : vector<32x32xf32>
    %cst_10 = arith.constant 0.000000e+00 : f32
    %46 = vector.broadcast %cst_10 : f32 to vector<32x32xf32>
    %47 = vector.extract_strided_slice %4 {offsets = [0, 1, 0], sizes = [1, 1, 32], strides = [1, 1, 1]} : vector<3x8x32xf32> to vector<1x1x32xf32>
    %48 = vector.shape_cast %47 : vector<1x1x32xf32> to vector<1x32xf32>
    %49 = vector.extract_strided_slice %9 {offsets = [0, 1], sizes = [32, 1], strides = [1, 1]} : vector<32x8xf32> to vector<32x1xf32>
    %50 = vector.broadcast %48 : vector<1x32xf32> to vector<32x32xf32>
    %51 = vector.broadcast %49 : vector<32x1xf32> to vector<32x32xf32>
    %52 = arith.subf %50, %51 : vector<32x32xf32>
    %53 = arith.mulf %52, %52 : vector<32x32xf32>
    %54 = arith.addf %46, %53 : vector<32x32xf32>
    %55 = vector.extract_strided_slice %4 {offsets = [1, 1, 0], sizes = [1, 1, 32], strides = [1, 1, 1]} : vector<3x8x32xf32> to vector<1x1x32xf32>
    %56 = vector.shape_cast %55 : vector<1x1x32xf32> to vector<1x32xf32>
    %57 = vector.extract_strided_slice %12 {offsets = [0, 1], sizes = [32, 1], strides = [1, 1]} : vector<32x8xf32> to vector<32x1xf32>
    %58 = vector.broadcast %56 : vector<1x32xf32> to vector<32x32xf32>
    %59 = vector.broadcast %57 : vector<32x1xf32> to vector<32x32xf32>
    %60 = arith.subf %58, %59 : vector<32x32xf32>
    %61 = arith.mulf %60, %60 : vector<32x32xf32>
    %62 = arith.addf %54, %61 : vector<32x32xf32>
    %63 = vector.extract_strided_slice %4 {offsets = [2, 1, 0], sizes = [1, 1, 32], strides = [1, 1, 1]} : vector<3x8x32xf32> to vector<1x1x32xf32>
    %64 = vector.shape_cast %63 : vector<1x1x32xf32> to vector<1x32xf32>
    %65 = vector.extract_strided_slice %15 {offsets = [0, 1], sizes = [32, 1], strides = [1, 1]} : vector<32x8xf32> to vector<32x1xf32>
    %66 = vector.broadcast %64 : vector<1x32xf32> to vector<32x32xf32>
    %67 = vector.broadcast %65 : vector<32x1xf32> to vector<32x32xf32>
    %68 = arith.subf %66, %67 : vector<32x32xf32>
    %69 = arith.mulf %68, %68 : vector<32x32xf32>
    %70 = arith.addf %62, %69 : vector<32x32xf32>
    %cst_11 = arith.constant 9.99999993E-9 : f32
    %71 = vector.broadcast %cst_11 : f32 to vector<32x32xf32>
    %72 = arith.addf %70, %71 : vector<32x32xf32>
    %73 = math.sqrt %72 : vector<32x32xf32>
    %74 = arith.addf %45, %73 : vector<32x32xf32>
    %cst_12 = arith.constant 0.000000e+00 : f32
    %75 = vector.broadcast %cst_12 : f32 to vector<32x32xf32>
    %76 = vector.extract_strided_slice %4 {offsets = [0, 2, 0], sizes = [1, 1, 32], strides = [1, 1, 1]} : vector<3x8x32xf32> to vector<1x1x32xf32>
    %77 = vector.shape_cast %76 : vector<1x1x32xf32> to vector<1x32xf32>
    %78 = vector.extract_strided_slice %9 {offsets = [0, 2], sizes = [32, 1], strides = [1, 1]} : vector<32x8xf32> to vector<32x1xf32>
    %79 = vector.broadcast %77 : vector<1x32xf32> to vector<32x32xf32>
    %80 = vector.broadcast %78 : vector<32x1xf32> to vector<32x32xf32>
    %81 = arith.subf %79, %80 : vector<32x32xf32>
    %82 = arith.mulf %81, %81 : vector<32x32xf32>
    %83 = arith.addf %75, %82 : vector<32x32xf32>
    %84 = vector.extract_strided_slice %4 {offsets = [1, 2, 0], sizes = [1, 1, 32], strides = [1, 1, 1]} : vector<3x8x32xf32> to vector<1x1x32xf32>
    %85 = vector.shape_cast %84 : vector<1x1x32xf32> to vector<1x32xf32>
    %86 = vector.extract_strided_slice %12 {offsets = [0, 2], sizes = [32, 1], strides = [1, 1]} : vector<32x8xf32> to vector<32x1xf32>
    %87 = vector.broadcast %85 : vector<1x32xf32> to vector<32x32xf32>
    %88 = vector.broadcast %86 : vector<32x1xf32> to vector<32x32xf32>
    %89 = arith.subf %87, %88 : vector<32x32xf32>
    %90 = arith.mulf %89, %89 : vector<32x32xf32>
    %91 = arith.addf %83, %90 : vector<32x32xf32>
    %92 = vector.extract_strided_slice %4 {offsets = [2, 2, 0], sizes = [1, 1, 32], strides = [1, 1, 1]} : vector<3x8x32xf32> to vector<1x1x32xf32>
    %93 = vector.shape_cast %92 : vector<1x1x32xf32> to vector<1x32xf32>
    %94 = vector.extract_strided_slice %15 {offsets = [0, 2], sizes = [32, 1], strides = [1, 1]} : vector<32x8xf32> to vector<32x1xf32>
    %95 = vector.broadcast %93 : vector<1x32xf32> to vector<32x32xf32>
    %96 = vector.broadcast %94 : vector<32x1xf32> to vector<32x32xf32>
    %97 = arith.subf %95, %96 : vector<32x32xf32>
    %98 = arith.mulf %97, %97 : vector<32x32xf32>
    %99 = arith.addf %91, %98 : vector<32x32xf32>
    %cst_13 = arith.constant 9.99999993E-9 : f32
    %100 = vector.broadcast %cst_13 : f32 to vector<32x32xf32>
    %101 = arith.addf %99, %100 : vector<32x32xf32>
    %102 = math.sqrt %101 : vector<32x32xf32>
    %103 = arith.addf %74, %102 : vector<32x32xf32>
    %cst_14 = arith.constant 0.000000e+00 : f32
    %104 = vector.broadcast %cst_14 : f32 to vector<32x32xf32>
    %105 = vector.extract_strided_slice %4 {offsets = [0, 3, 0], sizes = [1, 1, 32], strides = [1, 1, 1]} : vector<3x8x32xf32> to vector<1x1x32xf32>
    %106 = vector.shape_cast %105 : vector<1x1x32xf32> to vector<1x32xf32>
    %107 = vector.extract_strided_slice %9 {offsets = [0, 3], sizes = [32, 1], strides = [1, 1]} : vector<32x8xf32> to vector<32x1xf32>
    %108 = vector.broadcast %106 : vector<1x32xf32> to vector<32x32xf32>
    %109 = vector.broadcast %107 : vector<32x1xf32> to vector<32x32xf32>
    %110 = arith.subf %108, %109 : vector<32x32xf32>
    %111 = arith.mulf %110, %110 : vector<32x32xf32>
    %112 = arith.addf %104, %111 : vector<32x32xf32>
    %113 = vector.extract_strided_slice %4 {offsets = [1, 3, 0], sizes = [1, 1, 32], strides = [1, 1, 1]} : vector<3x8x32xf32> to vector<1x1x32xf32>
    %114 = vector.shape_cast %113 : vector<1x1x32xf32> to vector<1x32xf32>
    %115 = vector.extract_strided_slice %12 {offsets = [0, 3], sizes = [32, 1], strides = [1, 1]} : vector<32x8xf32> to vector<32x1xf32>
    %116 = vector.broadcast %114 : vector<1x32xf32> to vector<32x32xf32>
    %117 = vector.broadcast %115 : vector<32x1xf32> to vector<32x32xf32>
    %118 = arith.subf %116, %117 : vector<32x32xf32>
    %119 = arith.mulf %118, %118 : vector<32x32xf32>
    %120 = arith.addf %112, %119 : vector<32x32xf32>
    %121 = vector.extract_strided_slice %4 {offsets = [2, 3, 0], sizes = [1, 1, 32], strides = [1, 1, 1]} : vector<3x8x32xf32> to vector<1x1x32xf32>
    %122 = vector.shape_cast %121 : vector<1x1x32xf32> to vector<1x32xf32>
    %123 = vector.extract_strided_slice %15 {offsets = [0, 3], sizes = [32, 1], strides = [1, 1]} : vector<32x8xf32> to vector<32x1xf32>
    %124 = vector.broadcast %122 : vector<1x32xf32> to vector<32x32xf32>
    %125 = vector.broadcast %123 : vector<32x1xf32> to vector<32x32xf32>
    %126 = arith.subf %124, %125 : vector<32x32xf32>
    %127 = arith.mulf %126, %126 : vector<32x32xf32>
    %128 = arith.addf %120, %127 : vector<32x32xf32>
    %cst_15 = arith.constant 9.99999993E-9 : f32
    %129 = vector.broadcast %cst_15 : f32 to vector<32x32xf32>
    %130 = arith.addf %128, %129 : vector<32x32xf32>
    %131 = math.sqrt %130 : vector<32x32xf32>
    %132 = arith.addf %103, %131 : vector<32x32xf32>
    %cst_16 = arith.constant 0.000000e+00 : f32
    %133 = vector.broadcast %cst_16 : f32 to vector<32x32xf32>
    %134 = vector.extract_strided_slice %4 {offsets = [0, 4, 0], sizes = [1, 1, 32], strides = [1, 1, 1]} : vector<3x8x32xf32> to vector<1x1x32xf32>
    %135 = vector.shape_cast %134 : vector<1x1x32xf32> to vector<1x32xf32>
    %136 = vector.extract_strided_slice %9 {offsets = [0, 4], sizes = [32, 1], strides = [1, 1]} : vector<32x8xf32> to vector<32x1xf32>
    %137 = vector.broadcast %135 : vector<1x32xf32> to vector<32x32xf32>
    %138 = vector.broadcast %136 : vector<32x1xf32> to vector<32x32xf32>
    %139 = arith.subf %137, %138 : vector<32x32xf32>
    %140 = arith.mulf %139, %139 : vector<32x32xf32>
    %141 = arith.addf %133, %140 : vector<32x32xf32>
    %142 = vector.extract_strided_slice %4 {offsets = [1, 4, 0], sizes = [1, 1, 32], strides = [1, 1, 1]} : vector<3x8x32xf32> to vector<1x1x32xf32>
    %143 = vector.shape_cast %142 : vector<1x1x32xf32> to vector<1x32xf32>
    %144 = vector.extract_strided_slice %12 {offsets = [0, 4], sizes = [32, 1], strides = [1, 1]} : vector<32x8xf32> to vector<32x1xf32>
    %145 = vector.broadcast %143 : vector<1x32xf32> to vector<32x32xf32>
    %146 = vector.broadcast %144 : vector<32x1xf32> to vector<32x32xf32>
    %147 = arith.subf %145, %146 : vector<32x32xf32>
    %148 = arith.mulf %147, %147 : vector<32x32xf32>
    %149 = arith.addf %141, %148 : vector<32x32xf32>
    %150 = vector.extract_strided_slice %4 {offsets = [2, 4, 0], sizes = [1, 1, 32], strides = [1, 1, 1]} : vector<3x8x32xf32> to vector<1x1x32xf32>
    %151 = vector.shape_cast %150 : vector<1x1x32xf32> to vector<1x32xf32>
    %152 = vector.extract_strided_slice %15 {offsets = [0, 4], sizes = [32, 1], strides = [1, 1]} : vector<32x8xf32> to vector<32x1xf32>
    %153 = vector.broadcast %151 : vector<1x32xf32> to vector<32x32xf32>
    %154 = vector.broadcast %152 : vector<32x1xf32> to vector<32x32xf32>
    %155 = arith.subf %153, %154 : vector<32x32xf32>
    %156 = arith.mulf %155, %155 : vector<32x32xf32>
    %157 = arith.addf %149, %156 : vector<32x32xf32>
    %cst_17 = arith.constant 9.99999993E-9 : f32
    %158 = vector.broadcast %cst_17 : f32 to vector<32x32xf32>
    %159 = arith.addf %157, %158 : vector<32x32xf32>
    %160 = math.sqrt %159 : vector<32x32xf32>
    %161 = arith.addf %132, %160 : vector<32x32xf32>
    %cst_18 = arith.constant 0.000000e+00 : f32
    %162 = vector.broadcast %cst_18 : f32 to vector<32x32xf32>
    %163 = vector.extract_strided_slice %4 {offsets = [0, 5, 0], sizes = [1, 1, 32], strides = [1, 1, 1]} : vector<3x8x32xf32> to vector<1x1x32xf32>
    %164 = vector.shape_cast %163 : vector<1x1x32xf32> to vector<1x32xf32>
    %165 = vector.extract_strided_slice %9 {offsets = [0, 5], sizes = [32, 1], strides = [1, 1]} : vector<32x8xf32> to vector<32x1xf32>
    %166 = vector.broadcast %164 : vector<1x32xf32> to vector<32x32xf32>
    %167 = vector.broadcast %165 : vector<32x1xf32> to vector<32x32xf32>
    %168 = arith.subf %166, %167 : vector<32x32xf32>
    %169 = arith.mulf %168, %168 : vector<32x32xf32>
    %170 = arith.addf %162, %169 : vector<32x32xf32>
    %171 = vector.extract_strided_slice %4 {offsets = [1, 5, 0], sizes = [1, 1, 32], strides = [1, 1, 1]} : vector<3x8x32xf32> to vector<1x1x32xf32>
    %172 = vector.shape_cast %171 : vector<1x1x32xf32> to vector<1x32xf32>
    %173 = vector.extract_strided_slice %12 {offsets = [0, 5], sizes = [32, 1], strides = [1, 1]} : vector<32x8xf32> to vector<32x1xf32>
    %174 = vector.broadcast %172 : vector<1x32xf32> to vector<32x32xf32>
    %175 = vector.broadcast %173 : vector<32x1xf32> to vector<32x32xf32>
    %176 = arith.subf %174, %175 : vector<32x32xf32>
    %177 = arith.mulf %176, %176 : vector<32x32xf32>
    %178 = arith.addf %170, %177 : vector<32x32xf32>
    %179 = vector.extract_strided_slice %4 {offsets = [2, 5, 0], sizes = [1, 1, 32], strides = [1, 1, 1]} : vector<3x8x32xf32> to vector<1x1x32xf32>
    %180 = vector.shape_cast %179 : vector<1x1x32xf32> to vector<1x32xf32>
    %181 = vector.extract_strided_slice %15 {offsets = [0, 5], sizes = [32, 1], strides = [1, 1]} : vector<32x8xf32> to vector<32x1xf32>
    %182 = vector.broadcast %180 : vector<1x32xf32> to vector<32x32xf32>
    %183 = vector.broadcast %181 : vector<32x1xf32> to vector<32x32xf32>
    %184 = arith.subf %182, %183 : vector<32x32xf32>
    %185 = arith.mulf %184, %184 : vector<32x32xf32>
    %186 = arith.addf %178, %185 : vector<32x32xf32>
    %cst_19 = arith.constant 9.99999993E-9 : f32
    %187 = vector.broadcast %cst_19 : f32 to vector<32x32xf32>
    %188 = arith.addf %186, %187 : vector<32x32xf32>
    %189 = math.sqrt %188 : vector<32x32xf32>
    %190 = arith.addf %161, %189 : vector<32x32xf32>
    %cst_20 = arith.constant 0.000000e+00 : f32
    %191 = vector.broadcast %cst_20 : f32 to vector<32x32xf32>
    %192 = vector.extract_strided_slice %4 {offsets = [0, 6, 0], sizes = [1, 1, 32], strides = [1, 1, 1]} : vector<3x8x32xf32> to vector<1x1x32xf32>
    %193 = vector.shape_cast %192 : vector<1x1x32xf32> to vector<1x32xf32>
    %194 = vector.extract_strided_slice %9 {offsets = [0, 6], sizes = [32, 1], strides = [1, 1]} : vector<32x8xf32> to vector<32x1xf32>
    %195 = vector.broadcast %193 : vector<1x32xf32> to vector<32x32xf32>
    %196 = vector.broadcast %194 : vector<32x1xf32> to vector<32x32xf32>
    %197 = arith.subf %195, %196 : vector<32x32xf32>
    %198 = arith.mulf %197, %197 : vector<32x32xf32>
    %199 = arith.addf %191, %198 : vector<32x32xf32>
    %200 = vector.extract_strided_slice %4 {offsets = [1, 6, 0], sizes = [1, 1, 32], strides = [1, 1, 1]} : vector<3x8x32xf32> to vector<1x1x32xf32>
    %201 = vector.shape_cast %200 : vector<1x1x32xf32> to vector<1x32xf32>
    %202 = vector.extract_strided_slice %12 {offsets = [0, 6], sizes = [32, 1], strides = [1, 1]} : vector<32x8xf32> to vector<32x1xf32>
    %203 = vector.broadcast %201 : vector<1x32xf32> to vector<32x32xf32>
    %204 = vector.broadcast %202 : vector<32x1xf32> to vector<32x32xf32>
    %205 = arith.subf %203, %204 : vector<32x32xf32>
    %206 = arith.mulf %205, %205 : vector<32x32xf32>
    %207 = arith.addf %199, %206 : vector<32x32xf32>
    %208 = vector.extract_strided_slice %4 {offsets = [2, 6, 0], sizes = [1, 1, 32], strides = [1, 1, 1]} : vector<3x8x32xf32> to vector<1x1x32xf32>
    %209 = vector.shape_cast %208 : vector<1x1x32xf32> to vector<1x32xf32>
    %210 = vector.extract_strided_slice %15 {offsets = [0, 6], sizes = [32, 1], strides = [1, 1]} : vector<32x8xf32> to vector<32x1xf32>
    %211 = vector.broadcast %209 : vector<1x32xf32> to vector<32x32xf32>
    %212 = vector.broadcast %210 : vector<32x1xf32> to vector<32x32xf32>
    %213 = arith.subf %211, %212 : vector<32x32xf32>
    %214 = arith.mulf %213, %213 : vector<32x32xf32>
    %215 = arith.addf %207, %214 : vector<32x32xf32>
    %cst_21 = arith.constant 9.99999993E-9 : f32
    %216 = vector.broadcast %cst_21 : f32 to vector<32x32xf32>
    %217 = arith.addf %215, %216 : vector<32x32xf32>
    %218 = math.sqrt %217 : vector<32x32xf32>
    %219 = arith.addf %190, %218 : vector<32x32xf32>
    %cst_22 = arith.constant 0.000000e+00 : f32
    %220 = vector.broadcast %cst_22 : f32 to vector<32x32xf32>
    %221 = vector.extract_strided_slice %4 {offsets = [0, 7, 0], sizes = [1, 1, 32], strides = [1, 1, 1]} : vector<3x8x32xf32> to vector<1x1x32xf32>
    %222 = vector.shape_cast %221 : vector<1x1x32xf32> to vector<1x32xf32>
    %223 = vector.extract_strided_slice %9 {offsets = [0, 7], sizes = [32, 1], strides = [1, 1]} : vector<32x8xf32> to vector<32x1xf32>
    %224 = vector.broadcast %222 : vector<1x32xf32> to vector<32x32xf32>
    %225 = vector.broadcast %223 : vector<32x1xf32> to vector<32x32xf32>
    %226 = arith.subf %224, %225 : vector<32x32xf32>
    %227 = arith.mulf %226, %226 : vector<32x32xf32>
    %228 = arith.addf %220, %227 : vector<32x32xf32>
    %229 = vector.extract_strided_slice %4 {offsets = [1, 7, 0], sizes = [1, 1, 32], strides = [1, 1, 1]} : vector<3x8x32xf32> to vector<1x1x32xf32>
    %230 = vector.shape_cast %229 : vector<1x1x32xf32> to vector<1x32xf32>
    %231 = vector.extract_strided_slice %12 {offsets = [0, 7], sizes = [32, 1], strides = [1, 1]} : vector<32x8xf32> to vector<32x1xf32>
    %232 = vector.broadcast %230 : vector<1x32xf32> to vector<32x32xf32>
    %233 = vector.broadcast %231 : vector<32x1xf32> to vector<32x32xf32>
    %234 = arith.subf %232, %233 : vector<32x32xf32>
    %235 = arith.mulf %234, %234 : vector<32x32xf32>
    %236 = arith.addf %228, %235 : vector<32x32xf32>
    %237 = vector.extract_strided_slice %4 {offsets = [2, 7, 0], sizes = [1, 1, 32], strides = [1, 1, 1]} : vector<3x8x32xf32> to vector<1x1x32xf32>
    %238 = vector.shape_cast %237 : vector<1x1x32xf32> to vector<1x32xf32>
    %239 = vector.extract_strided_slice %15 {offsets = [0, 7], sizes = [32, 1], strides = [1, 1]} : vector<32x8xf32> to vector<32x1xf32>
    %240 = vector.broadcast %238 : vector<1x32xf32> to vector<32x32xf32>
    %241 = vector.broadcast %239 : vector<32x1xf32> to vector<32x32xf32>
    %242 = arith.subf %240, %241 : vector<32x32xf32>
    %243 = arith.mulf %242, %242 : vector<32x32xf32>
    %244 = arith.addf %236, %243 : vector<32x32xf32>
    %cst_23 = arith.constant 9.99999993E-9 : f32
    %245 = vector.broadcast %cst_23 : f32 to vector<32x32xf32>
    %246 = arith.addf %244, %245 : vector<32x32xf32>
    %247 = math.sqrt %246 : vector<32x32xf32>
    %248 = arith.addf %219, %247 : vector<32x32xf32>
    %c0_24 = arith.constant 0 : index
    %c0_25 = arith.constant 0 : index
    %c0_26 = arith.constant 0 : index
    %249 = vector.load %arg5[%c0_24, %c0_25, %c0_26] : memref<1x32x32xf32, #tpu.memory_space<vmem>>, vector<1x32x32xf32>
    %250 = vector.shape_cast %249 : vector<1x32x32xf32> to vector<32x32xf32>
    %cst_27 = arith.constant 3.125000e-02 : f32
    %251 = vector.broadcast %cst_27 : f32 to vector<32x32xf32>
    %252 = arith.mulf %248, %251 : vector<32x32xf32>
    %253 = arith.addf %250, %252 : vector<32x32xf32>
    %c0_28 = arith.constant 0 : index
    %c0_29 = arith.constant 0 : index
    %c0_30 = arith.constant 0 : index
    %254 = vector.load %arg5[%c0_28, %c0_29, %c0_30] : memref<1x32x32xf32, #tpu.memory_space<vmem>>, vector<1x32x32xf32>
    %255 = vector.shape_cast %254 : vector<1x32x32xf32> to vector<32x32xf32>
    %256 = vector.shape_cast %253 : vector<32x32xf32> to vector<1x32x32xf32>
    tpu.vector_store %arg5[%c0_28, %c0_29, %c0_30], %256 {strides = array<i32>} : memref<1x32x32xf32, #tpu.memory_space<vmem>>, vector<1x32x32xf32>,
    return
  }
  func.func @transform_0(%arg0: i32, %arg1: i32, %arg2: i32) -> (i32, i32, i32, i32) {
    %c0_i32 = arith.constant 0 : i32
    %c0_i32_0 = arith.constant 0 : i32
    return %arg0, %c0_i32, %arg2, %arg1 : i32, i32, i32, i32
  }
  func.func @transform_1(%arg0: i32, %arg1: i32, %arg2: i32) -> (i32, i32, i32, i32) {
    %c0_i32 = arith.constant 0 : i32
    %c0_i32_0 = arith.constant 0 : i32
    %c0_i32_1 = arith.constant 0 : i32
    return %arg0, %c0_i32, %arg2, %c0_i32_0 : i32, i32, i32, i32
  }
  func.func @transform_2(%arg0: i32, %arg1: i32, %arg2: i32) -> (i32, i32, i32) {
    %c0_i32 = arith.constant 0 : i32
    %c0_i32_0 = arith.constant 0 : i32
    return %arg0, %c0_i32, %arg1 : i32, i32, i32
  }
}

module attributes {stable_mosaic.version = 11 : i64} {
  func.func @_insnorm_kernel(%arg0: i32, %arg1: i32, %arg2: memref<1x256x128xbf16, #tpu.memory_space<vmem>>, %arg3: memref<1x2x128xf32, #tpu.memory_space<vmem>>, %arg4: memref<1x256x128xbf16, #tpu.memory_space<vmem>>) attributes {dimension_semantics = [#tpu.dimension_semantics<parallel>, #tpu.dimension_semantics<parallel>], iteration_bounds = array<i64: 2, 4>, scalar_prefetch = 0 : i64, scratch_operands = 0 : i64, tpu.core_type = #tpu.core_type<tc>, window_params = [{transform_indices = @transform_0, window_bounds = array<i64: 1, 256, 128>}, {transform_indices = @transform_1, window_bounds = array<i64: 1, 2, 128>}, {transform_indices = @transform_2, window_bounds = array<i64: 1, 256, 128>}]} {
    %c0 = arith.constant 0 : index
    %c0_0 = arith.constant 0 : index
    %c0_1 = arith.constant 0 : index
    %0 = vector.load %arg3[%c0, %c0_0, %c0_1] : memref<1x2x128xf32, #tpu.memory_space<vmem>>, vector<1x2x128xf32>
    %1 = vector.shape_cast %0 : vector<1x2x128xf32> to vector<2x128xf32>
    %c0_2 = arith.constant 0 : index
    %c0_3 = arith.constant 0 : index
    %c0_4 = arith.constant 0 : index
    %2 = vector.load %arg2[%c0_2, %c0_3, %c0_4] : memref<1x256x128xbf16, #tpu.memory_space<vmem>>, vector<1x256x128xbf16>
    %3 = vector.shape_cast %2 : vector<1x256x128xbf16> to vector<256x128xbf16>
    %4 = arith.extf %3 : vector<256x128xbf16> to vector<256x128xf32>
    %5 = vector.extract_strided_slice %1 {offsets = [0, 0], sizes = [1, 128], strides = [1, 1]} : vector<2x128xf32> to vector<1x128xf32>
    %6 = vector.broadcast %5 : vector<1x128xf32> to vector<256x128xf32>
    %7 = arith.mulf %4, %6 : vector<256x128xf32>
    %8 = vector.extract_strided_slice %1 {offsets = [1, 0], sizes = [1, 128], strides = [1, 1]} : vector<2x128xf32> to vector<1x128xf32>
    %9 = vector.broadcast %8 : vector<1x128xf32> to vector<256x128xf32>
    %10 = arith.addf %7, %9 : vector<256x128xf32>
    %11 = arith.truncf %10 : vector<256x128xf32> to vector<256x128xbf16>
    %c0_5 = arith.constant 0 : index
    %c0_6 = arith.constant 0 : index
    %c0_7 = arith.constant 0 : index
    %12 = vector.load %arg4[%c0_5, %c0_6, %c0_7] : memref<1x256x128xbf16, #tpu.memory_space<vmem>>, vector<1x256x128xbf16>
    %13 = vector.shape_cast %12 : vector<1x256x128xbf16> to vector<256x128xbf16>
    %14 = vector.shape_cast %11 : vector<256x128xbf16> to vector<1x256x128xbf16>
    tpu.vector_store %arg4[%c0_5, %c0_6, %c0_7], %14 {strides = array<i32>} : memref<1x256x128xbf16, #tpu.memory_space<vmem>>, vector<1x256x128xbf16>,
    return
  }
  func.func @transform_0(%arg0: i32, %arg1: i32) -> (i32, i32, i32) {
    %c0_i32 = arith.constant 0 : i32
    %c0_i32_0 = arith.constant 0 : i32
    return %arg0, %arg1, %c0_i32 : i32, i32, i32
  }
  func.func @transform_1(%arg0: i32, %arg1: i32) -> (i32, i32, i32) {
    %c0_i32 = arith.constant 0 : i32
    %c0_i32_0 = arith.constant 0 : i32
    %c0_i32_1 = arith.constant 0 : i32
    return %arg0, %c0_i32, %c0_i32_0 : i32, i32, i32
  }
  func.func @transform_2(%arg0: i32, %arg1: i32) -> (i32, i32, i32) {
    %c0_i32 = arith.constant 0 : i32
    %c0_i32_0 = arith.constant 0 : i32
    return %arg0, %arg1, %c0_i32 : i32, i32, i32
  }
}

</mosaic_0001>

<llo_original>
// kernel: block_v0_forward.6
$region0: #{block_v0_forward.6}
  #allocation0 [shape = 'u32[]', space=smem, size = 0x4, offset = 0x4, fixed_abs, tag = 'smem constant byte address 0x4 - core index']
  #allocation1 [shape = 'u32[144,128]{1,0:T(1,128)}', space=vmem, size = 0x12000, scoped, tag = 'internal scratch']
  %s0 = inlined_call_operand.vmem [shape: f32[2,1024,128], index: 0, kind: input, shape index: {}]
  %s1 = inlined_call_operand.vmem [shape: s32[2,1024,1], index: 1, kind: input, shape index: {}]
  %s2 = inlined_call_operand.vmem [shape: bf16[256,128], index: 2, kind: input, shape index: {}]
  %s3 = inlined_call_operand.vmem [shape: f32[1,128], index: 3, kind: input, shape index: {}]
  %s4 = inlined_call_operand.vmem [shape: bf16[2,1024,128], index: 4, kind: output, shape index: {0}]
  %s5 = inlined_call_operand.vmem [shape: f32[2,4,2,128], index: 5, kind: output, shape index: {1}]
  %6 = xla_tuple %s4, %s5
  %s7 = sld [smem:[#allocation0]]
  $region57: #{block_v0_forward.6} parent=0
    _
  %s9 = ssub.s32 1, %s7
  %s10 = scalar_select 0, %s9, %s7
  loop: start=0, step=1, limit=10
  $region2: #{block_v0_forward.6} parent=0 // loop_pre_header
    _
  $region3: #{block_v0_forward.6} parent=0 // loop_header
    %s12 = sphi 0, %s16
    %p13 = scmp.ge.s32.totalorder %s12, 10
    %s19 = sphi 0, %s31
    %s20 = sphi 0, %s27
    %s21 = sphi 0, %s19
    %s22 = sphi 0, %s20
    %s23 = sphi 0, %s21
    %s24 = sphi 0, %s22
    %s36 = sphi 0, %s38
    %s39 = sphi 0, %s36
    %s40 = sphi 0, %s39
    %s56 = sphi 0, %s40
    %s64 = sphi 0, %s66
    %s67 = sphi 0, %s64
    %s68 = sphi 0, %s67
    %s84 = sphi 0, %s68
    %s88 = sphi 0, %s88
    %s90 = sphi 0, %s88
    %s91 = sphi 0, %s90
    %s105 = sphi 0, %s91
    %s109 = sphi 0, %s109
    %s111 = sphi 0, %s109
    %s112 = sphi 0, %s111
    %s126 = sphi 0, %s112
    %s134 = sphi 0, %s136
    %s137 = sphi 0, %s134
    %s138 = sphi 0, %s137
    %s154 = sphi 0, %s138
    %s162 = sphi 0, %s164
    %s165 = sphi 0, %s162
    %s166 = sphi 0, %s165
    %s182 = sphi 0, %s166
  $region4: #{block_v0_forward.6} parent=0 // loop_header_branch
    %15 = sbr.rel (%p13) target = $region8
  $region5: #{block_v0_forward.6} parent=0 // loop_body
    %s17 = ssub.s32 %s12, 1
    %s18 = ssub.s32 %s12, 2
    %s25 = sadd.s32 1, %s20
    %p26 = scmp.ge.s32.totalorder %s25, 4
    %s27 = scalar_select %p26, 0, %s25
    %s28 = sadd.s32 1, %s19
    %s29 = scalar_select %p26, %s28, %s19
    %p30 = scmp.ge.s32.totalorder %s29, 2
    %s31 = scalar_select %p30, 0, %s29
    %s32 = ssub.s32 %s19, %s31
    %s33 = ssub.s32 %s20, %s27
    %s34 = sor.u32 %s32, %s33
    %p35 = scmp.eq.s32.totalorder %s34, 0
    %s37 = sadd.s32 %s36, 1
    %s38 = scalar_select %p35, %s36, %s37
    %p41 = pneg %p35
    %p42 = scmp.eq.s32.totalorder %s12, 7
    %p43 = por %p41, %p42
    %p44 = scmp.ne.s32.totalorder %s36, %s39
    %p45 = scmp.eq.s32.totalorder %s12, 0
    %p46 = por %p44, %p45
    %p47 = scmp.ne.s32.totalorder %s36, %s39
    %p48 = scmp.eq.s32.totalorder %s17, 7
    %p49 = por %p47, %p48
    %p50 = scmp.ne.s32.totalorder %s39, %s40
    %p51 = scmp.eq.s32.totalorder %s17, 0
    %p52 = por %p50, %p51
    %p53 = scmp.ne.s32.totalorder %s39, %s40
    %p54 = scmp.eq.s32.totalorder %s18, 7
    %p55 = por %p53, %p54
    %p57 = scmp.ne.s32.totalorder %s40, %s56
    %p58 = scmp.eq.s32.totalorder %s18, 0
    %p59 = por %p57, %p58
    %s60 = ssub.s32 %s19, %s31
    %s61 = ssub.s32 %s20, %s27
    %s62 = sor.u32 %s60, %s61
    %p63 = scmp.eq.s32.totalorder %s62, 0
    %s65 = sadd.s32 %s64, 1
    %s66 = scalar_select %p63, %s64, %s65
    %p69 = pneg %p63
    %p70 = scmp.eq.s32.totalorder %s12, 7
    %p71 = por %p69, %p70
    %p72 = scmp.ne.s32.totalorder %s64, %s67
    %p73 = scmp.eq.s32.totalorder %s12, 0
    %p74 = por %p72, %p73
    %p75 = scmp.ne.s32.totalorder %s64, %s67
    %p76 = scmp.eq.s32.totalorder %s17, 7
    %p77 = por %p75, %p76
    %p78 = scmp.ne.s32.totalorder %s67, %s68
    %p79 = scmp.eq.s32.totalorder %s17, 0
    %p80 = por %p78, %p79
    %p81 = scmp.ne.s32.totalorder %s67, %s68
    %p82 = scmp.eq.s32.totalorder %s18, 7
    %p83 = por %p81, %p82
    %p85 = scmp.ne.s32.totalorder %s68, %s84
    %p86 = scmp.eq.s32.totalorder %s18, 0
    %p87 = por %p85, %p86
    %s89 = sadd.s32 %s88, 1
    %p92 = scmp.eq.s32.totalorder %s12, 7
    %p93 = scmp.ne.s32.totalorder %s88, %s90
    %p94 = scmp.eq.s32.totalorder %s12, 0
    %p95 = por %p93, %p94
    %p96 = scmp.ne.s32.totalorder %s88, %s90
    %p97 = scmp.eq.s32.totalorder %s17, 7
    %p98 = por %p96, %p97
    %p99 = scmp.ne.s32.totalorder %s90, %s91
    %p100 = scmp.eq.s32.totalorder %s17, 0
    %p101 = por %p99, %p100
    %p102 = scmp.ne.s32.totalorder %s90, %s91
    %p103 = scmp.eq.s32.totalorder %s18, 7
    %p104 = por %p102, %p103
    %p106 = scmp.ne.s32.totalorder %s91, %s105
    %p107 = scmp.eq.s32.totalorder %s18, 0
    %p108 = por %p106, %p107
    %s110 = sadd.s32 %s109, 1
    %p113 = scmp.eq.s32.totalorder %s12, 7
    %p114 = scmp.ne.s32.totalorder %s109, %s111
    %p115 = scmp.eq.s32.totalorder %s12, 0
    %p116 = por %p114, %p115
    %p117 = scmp.ne.s32.totalorder %s109, %s111
    %p118 = scmp.eq.s32.totalorder %s17, 7
    %p119 = por %p117, %p118
    %p120 = scmp.ne.s32.totalorder %s111, %s112
    %p121 = scmp.eq.s32.totalorder %s17, 0
    %p122 = por %p120, %p121
    %p123 = scmp.ne.s32.totalorder %s111, %s112
    %p124 = scmp.eq.s32.totalorder %s18, 7
    %p125 = por %p123, %p124
    %p127 = scmp.ne.s32.totalorder %s112, %s126
    %p128 = scmp.eq.s32.totalorder %s18, 0
    %p129 = por %p127, %p128
    %s130 = ssub.s32 %s19, %s31
    %s131 = ssub.s32 %s20, %s27
    %s132 = sor.u32 %s130, %s131
    %p133 = scmp.eq.s32.totalorder %s132, 0
    %s135 = sadd.s32 %s134, 1
    %s136 = scalar_select %p133, %s134, %s135
    %p139 = pneg %p133
    %p140 = scmp.eq.s32.totalorder %s12, 7
    %p141 = por %p139, %p140
    %p142 = scmp.ne.s32.totalorder %s134, %s137
    %p143 = scmp.eq.s32.totalorder %s12, 0
    %p144 = por %p142, %p143
    %p145 = scmp.ne.s32.totalorder %s134, %s137
    %p146 = scmp.eq.s32.totalorder %s17, 7
    %p147 = por %p145, %p146
    %p148 = scmp.ne.s32.totalorder %s137, %s138
    %p149 = scmp.eq.s32.totalorder %s17, 0
    %p150 = por %p148, %p149
    %p151 = scmp.ne.s32.totalorder %s137, %s138
    %p152 = scmp.eq.s32.totalorder %s18, 7
    %p153 = por %p151, %p152
    %p155 = scmp.ne.s32.totalorder %s138, %s154
    %p156 = scmp.eq.s32.totalorder %s18, 0
    %p157 = por %p155, %p156
    %s158 = ssub.s32 %s19, %s31
    %s159 = ssub.s32 %s20, %s27
    %s160 = sor.u32 %s158, %s159
    %p161 = scmp.eq.s32.totalorder %s160, 0
    %s163 = sadd.s32 %s162, 1
    %s164 = scalar_select %p161, %s162, %s163
    %p167 = pneg %p161
    %p168 = scmp.eq.s32.totalorder %s12, 7
    %p169 = por %p167, %p168
    %p170 = scmp.ne.s32.totalorder %s162, %s165
    %p171 = scmp.eq.s32.totalorder %s12, 0
    %p172 = por %p170, %p171
    %p173 = scmp.ne.s32.totalorder %s162, %s165
    %p174 = scmp.eq.s32.totalorder %s17, 7
    %p175 = por %p173, %p174
    %p176 = scmp.ne.s32.totalorder %s165, %s166
    %p177 = scmp.eq.s32.totalorder %s17, 0
    %p178 = por %p176, %p177
    %p179 = scmp.ne.s32.totalorder %s165, %s166
    %p180 = scmp.eq.s32.totalorder %s18, 7
    %p181 = por %p179, %p180
    %p183 = scmp.ne.s32.totalorder %s166, %s182
    %p184 = scmp.eq.s32.totalorder %s18, 0
    %p185 = por %p183, %p184
    %p186 = scmp.le.s32.totalorder 1, %s12
    %p187 = scmp.lt.s32.totalorder %s12, 9
    %p188 = pnand %p186, %p187
    %p189 = pneg %p188
    // Predicated region
    $region9: #{block_v0_forward.6} parent=5 // pred_check
      _
    $region10: #{block_v0_forward.6} parent=5 // pred_check_branch
      %191 = sbr.rel (%p188) target = $region12
    $region11: #{block_v0_forward.6} parent=5 // pred_region
      %s192 = ssub.s32 %s12, 1
      // Predicated region
      $region13: #{block_v0_forward.6} parent=11 // pred_check
        %p193 = pneg %p101
      $region14: #{block_v0_forward.6} parent=11 // pred_check_branch
        %195 = sbr.rel (%p193) target = $region16
      $region15: #{block_v0_forward.6} parent=11 // pred_region
        _
      $region16: #{block_v0_forward.6} parent=11 // pred_fallthru
        _
      // Predicated region
      $region17: #{block_v0_forward.6} parent=11 // pred_check
        %p196 = pneg %p122
      $region18: #{block_v0_forward.6} parent=11 // pred_check_branch
        %198 = sbr.rel (%p196) target = $region20
      $region19: #{block_v0_forward.6} parent=11 // pred_region
        _
      $region20: #{block_v0_forward.6} parent=11 // pred_fallthru
        _
    $region12: #{block_v0_forward.6} parent=5 // pred_fallthru
      _
    %p199 = scmp.lt.s32.totalorder %s12, 8
    // Predicated region
    $region21: #{block_v0_forward.6} parent=5 // pred_check
      %p200 = pneg %p199
    $region22: #{block_v0_forward.6} parent=5 // pred_check_branch
      %202 = sbr.rel (%p200) target = $region24
    $region23: #{block_v0_forward.6} parent=5 // pred_region
      // Predicated region
      $region25: #{block_v0_forward.6} parent=23 // pred_check
        %p203 = pneg %p46
      $region26: #{block_v0_forward.6} parent=23 // pred_check_branch
        %205 = sbr.rel (%p203) target = $region28
      $region27: #{block_v0_forward.6} parent=23 // pred_region
        %s206 = smul.u32 32, %s20
        %p207 = scmp.lt.s32.totalorder %s19, 1
        %s208 = scalar_select %p207, %s19, 1
        %p209 = scmp.lt.s32.totalorder %s206, 127
        %s210 = scalar_select %p209, %s206, 127
        %s211 = smul.addr %s208, 128
        %s212 = sadd.s32 %s210, %s211
        %s213 = smul.addr %s212, 8
        %s214 = scalar_lea.vmem %s0, %s213
        %s215 = smul.u32 32, %s20
      $region28: #{block_v0_forward.6} parent=23 // pred_fallthru
        _
      // Predicated region
      $region29: #{block_v0_forward.6} parent=23 // pred_check
        %p216 = pneg %p74
      $region30: #{block_v0_forward.6} parent=23 // pred_check_branch
        %218 = sbr.rel (%p216) target = $region32
      $region31: #{block_v0_forward.6} parent=23 // pred_region
        %s219 = smul.u32 32, %s20
        %p220 = scmp.lt.s32.totalorder %s19, 1
        %s221 = scalar_select %p220, %s19, 1
        %p222 = scmp.lt.s32.totalorder %s219, 127
        %s223 = scalar_select %p222, %s219, 127
        %s224 = smul.addr %s221, 128
        %s225 = sadd.s32 %s223, %s224
        %s226 = smul.addr %s225, 8
        %s227 = scalar_lea.vmem %s1, %s226
        %s228 = smul.u32 32, %s20
      $region32: #{block_v0_forward.6} parent=23 // pred_fallthru
        _
    $region24: #{block_v0_forward.6} parent=5 // pred_fallthru
      _
    %p229 = scmp.le.s32.totalorder 1, %s12
    %p230 = scmp.lt.s32.totalorder %s12, 9
    %p231 = pnand %p229, %p230
    %p232 = pneg %p231
    // Predicated region
    $region33: #{block_v0_forward.6} parent=5 // pred_check
      _
    $region34: #{block_v0_forward.6} parent=5 // pred_check_branch
      %234 = sbr.rel (%p231) target = $region36
    $region35: #{block_v0_forward.6} parent=5 // pred_region
      %s235 = ssub.s32 %s12, 1
      %s236 = smul.u32 32, %s22
      %p237 = scmp.lt.s32.totalorder %s21, 1
      %s238 = scalar_select %p237, %s21, 1
      %p239 = scmp.lt.s32.totalorder %s236, 127
      %s240 = scalar_select %p239, %s236, 127
      %s241 = smul.addr %s238, 128
      %s242 = sadd.s32 %s240, %s241
      %s243 = smul.addr %s242, 8
      %s244 = scalar_lea.vmem %s0, %s243
      %p245 = pneg %p52
      %p246 = pneg %p49
      %s247 = smul.u32 32, %s22
      %p248 = scmp.lt.s32.totalorder %s21, 1
      %s249 = scalar_select %p248, %s21, 1
      %p250 = scmp.lt.s32.totalorder %s247, 127
      %s251 = scalar_select %p250, %s247, 127
      %s252 = smul.addr %s249, 128
      %s253 = sadd.s32 %s251, %s252
      %s254 = smul.addr %s253, 8
      %s255 = scalar_lea.vmem %s1, %s254
      %p256 = pneg %p80
      %p257 = pneg %p77
      %p258 = pneg %p101
      %p259 = pneg %p98
      %p260 = pneg %p122
      %p261 = pneg %p119
      %p262 = pneg %p150
      %p263 = pneg %p147
      %s264 = smul.u32 32, %s22
      %p265 = scmp.lt.s32.totalorder %s21, 1
      %s266 = scalar_select %p265, %s21, 1
      %p267 = scmp.lt.s32.totalorder %s264, 127
      %s268 = scalar_select %p267, %s264, 127
      %s269 = smul.addr %s266, 128
      %s270 = sadd.s32 %s268, %s269
      %s271 = smul.addr %s270, 4
      %s272 = scalar_lea.vmem %s4, %s271
      %p273 = pneg %p178
      %p274 = pneg %p175
      %p275 = scmp.lt.s32.totalorder %s21, 1
      %s276 = scalar_select %p275, %s21, 1
      %p277 = scmp.lt.s32.totalorder %s22, 3
      %s278 = scalar_select %p277, %s22, 3
      %s279 = smul.addr %s276, 4
      %s280 = sadd.s32 %s278, %s279
      %s281 = smul.addr %s280, 2
      %s282 = scalar_lea.vmem %s5, %s281
      %s283 = smul.u32 32, %s22
      %p284 = scmp.lt.s32.totalorder %s21, 1
      %s285 = scalar_select %p284, %s21, 1
      %p286 = scmp.lt.s32.totalorder %s283, 127
      %s287 = scalar_select %p286, %s283, 127
      %s288 = smul.addr %s285, 128
      %s289 = sadd.s32 %s287, %s288
      %s290 = smul.addr %s289, 8
      %s291 = scalar_lea.vmem %s0, %s290
      %s292 = smul.u32 32, %s22
      %s293 = smul.u32 32, %s22
      %p294 = scmp.lt.s32.totalorder %s21, 1
      %s295 = scalar_select %p294, %s21, 1
      %p296 = scmp.lt.s32.totalorder %s293, 127
      %s297 = scalar_select %p296, %s293, 127
      %s298 = smul.addr %s295, 128
      %s299 = sadd.s32 %s297, %s298
      %s300 = smul.addr %s299, 8
      %s301 = scalar_lea.vmem %s1, %s300
      %s302 = smul.u32 32, %s22
      %s303 = smul.u32 32, %s22
      %p304 = scmp.lt.s32.totalorder %s21, 1
      %s305 = scalar_select %p304, %s21, 1
      %p306 = scmp.lt.s32.totalorder %s303, 127
      %s307 = scalar_select %p306, %s303, 127
      %s308 = smul.addr %s305, 128
      %s309 = sadd.s32 %s307, %s308
      %s310 = smul.addr %s309, 4
      %s311 = scalar_lea.vmem %s4, %s310
      %s312 = smul.u32 32, %s22
      %p313 = scmp.lt.s32.totalorder %s21, 1
      %s314 = scalar_select %p313, %s21, 1
      %p315 = scmp.lt.s32.totalorder %s22, 3
      %s316 = scalar_select %p315, %s22, 3
      %s317 = smul.addr %s314, 4
      %s318 = sadd.s32 %s316, %s317
      %s319 = smul.addr %s318, 2
      %s320 = scalar_lea.vmem %s5, %s319
      %v322 = vld [vmem:[%s301] sm:$0xff]
      %v323 = vld [vmem:[%s301 + $0x8] sm:$0xff]
      %v324 = vld [vmem:[%s301 + $0x10] sm:$0xff]
      %v325 = vld [vmem:[%s301 + $0x18] sm:$0xff]
      %v326 = vld [vmem:[%s301 + $0x20] sm:$0xff]
      %v327 = vld [vmem:[%s301 + $0x28] sm:$0xff]
      %v328 = vld [vmem:[%s301 + $0x30] sm:$0xff]
      %v329 = vld [vmem:[%s301 + $0x38] sm:$0xff]
      %v330 = vld [vmem:[%s301 + $0x40] sm:$0xff]
      %v331 = vld [vmem:[%s301 + $0x48] sm:$0xff]
      %v332 = vld [vmem:[%s301 + $0x50] sm:$0xff]
      %v333 = vld [vmem:[%s301 + $0x58] sm:$0xff]
      %v334 = vld [vmem:[%s301 + $0x60] sm:$0xff]
      %v335 = vld [vmem:[%s301 + $0x68] sm:$0xff]
      %v336 = vld [vmem:[%s301 + $0x70] sm:$0xff]
      %v337 = vld [vmem:[%s301 + $0x78] sm:$0xff]
      %v338 = vld [vmem:[%s301 + $0x80] sm:$0xff]
      %v339 = vld [vmem:[%s301 + $0x88] sm:$0xff]
      %v340 = vld [vmem:[%s301 + $0x90] sm:$0xff]
      %v341 = vld [vmem:[%s301 + $0x98] sm:$0xff]
      %v342 = vld [vmem:[%s301 + $0xa0] sm:$0xff]
      %v343 = vld [vmem:[%s301 + $0xa8] sm:$0xff]
      %v344 = vld [vmem:[%s301 + $0xb0] sm:$0xff]
      %v345 = vld [vmem:[%s301 + $0xb8] sm:$0xff]
      %v346 = vld [vmem:[%s301 + $0xc0] sm:$0xff]
      %v347 = vld [vmem:[%s301 + $0xc8] sm:$0xff]
      %v348 = vld [vmem:[%s301 + $0xd0] sm:$0xff]
      %v349 = vld [vmem:[%s301 + $0xd8] sm:$0xff]
      %v350 = vld [vmem:[%s301 + $0xe0] sm:$0xff]
      %v351 = vld [vmem:[%s301 + $0xe8] sm:$0xff]
      %v352 = vld [vmem:[%s301 + $0xf0] sm:$0xff]
      %v353 = vld [vmem:[%s301 + $0xf8] sm:$0xff]
      %v354 = vlaneseq
      %v355 = vand.u32 %v354, 127
      %356 = vset.pattern.permute.xlu0 0
      %357 = vperm.xlu0 %356, %v322
      %v358 = vpop.permute.xlu0 %357
      %359 = vset.pattern.permute.xlu0 0
      %360 = vperm.xlu0 %359, %v323
      %v361 = vpop.permute.xlu0 %360
      %362 = vset.pattern.permute.xlu0 0
      %363 = vperm.xlu0 %362, %v324
      %v364 = vpop.permute.xlu0 %363
      %365 = vset.pattern.permute.xlu0 0
      %366 = vperm.xlu0 %365, %v325
      %v367 = vpop.permute.xlu0 %366
      %368 = vset.pattern.permute.xlu0 0
      %369 = vperm.xlu0 %368, %v326
      %v370 = vpop.permute.xlu0 %369
      %371 = vset.pattern.permute.xlu0 0
      %372 = vperm.xlu0 %371, %v327
      %v373 = vpop.permute.xlu0 %372
      %374 = vset.pattern.permute.xlu0 0
      %375 = vperm.xlu0 %374, %v328
      %v376 = vpop.permute.xlu0 %375
      %377 = vset.pattern.permute.xlu0 0
      %378 = vperm.xlu0 %377, %v329
      %v379 = vpop.permute.xlu0 %378
      %380 = vset.pattern.permute.xlu0 0
      %381 = vperm.xlu0 %380, %v330
      %v382 = vpop.permute.xlu0 %381
      %383 = vset.pattern.permute.xlu0 0
      %384 = vperm.xlu0 %383, %v331
      %v385 = vpop.permute.xlu0 %384
      %386 = vset.pattern.permute.xlu0 0
      %387 = vperm.xlu0 %386, %v332
      %v388 = vpop.permute.xlu0 %387
      %389 = vset.pattern.permute.xlu0 0
      %390 = vperm.xlu0 %389, %v333
      %v391 = vpop.permute.xlu0 %390
      %392 = vset.pattern.permute.xlu0 0
      %393 = vperm.xlu0 %392, %v334
      %v394 = vpop.permute.xlu0 %393
      %395 = vset.pattern.permute.xlu0 0
      %396 = vperm.xlu0 %395, %v335
      %v397 = vpop.permute.xlu0 %396
      %398 = vset.pattern.permute.xlu0 0
      %399 = vperm.xlu0 %398, %v336
      %v400 = vpop.permute.xlu0 %399
      %401 = vset.pattern.permute.xlu0 0
      %402 = vperm.xlu0 %401, %v337
      %v403 = vpop.permute.xlu0 %402
      %404 = vset.pattern.permute.xlu0 0
      %405 = vperm.xlu0 %404, %v338
      %v406 = vpop.permute.xlu0 %405
      %407 = vset.pattern.permute.xlu0 0
      %408 = vperm.xlu0 %407, %v339
      %v409 = vpop.permute.xlu0 %408
      %410 = vset.pattern.permute.xlu0 0
      %411 = vperm.xlu0 %410, %v340
      %v412 = vpop.permute.xlu0 %411
      %413 = vset.pattern.permute.xlu0 0
      %414 = vperm.xlu0 %413, %v341
      %v415 = vpop.permute.xlu0 %414
      %416 = vset.pattern.permute.xlu0 0
      %417 = vperm.xlu0 %416, %v342
      %v418 = vpop.permute.xlu0 %417
      %419 = vset.pattern.permute.xlu0 0
      %420 = vperm.xlu0 %419, %v343
      %v421 = vpop.permute.xlu0 %420
      %422 = vset.pattern.permute.xlu0 0
      %423 = vperm.xlu0 %422, %v344
      %v424 = vpop.permute.xlu0 %423
      %425 = vset.pattern.permute.xlu0 0
      %426 = vperm.xlu0 %425, %v345
      %v427 = vpop.permute.xlu0 %426
      %428 = vset.pattern.permute.xlu0 0
      %429 = vperm.xlu0 %428, %v346
      %v430 = vpop.permute.xlu0 %429
      %431 = vset.pattern.permute.xlu0 0
      %432 = vperm.xlu0 %431, %v347
      %v433 = vpop.permute.xlu0 %432
      %434 = vset.pattern.permute.xlu0 0
      %435 = vperm.xlu0 %434, %v348
      %v436 = vpop.permute.xlu0 %435
      %437 = vset.pattern.permute.xlu0 0
      %438 = vperm.xlu0 %437, %v349
      %v439 = vpop.permute.xlu0 %438
      %440 = vset.pattern.permute.xlu0 0
      %441 = vperm.xlu0 %440, %v350
      %v442 = vpop.permute.xlu0 %441
      %443 = vset.pattern.permute.xlu0 0
      %444 = vperm.xlu0 %443, %v351
      %v445 = vpop.permute.xlu0 %444
      %446 = vset.pattern.permute.xlu0 0
      %447 = vperm.xlu0 %446, %v352
      %v448 = vpop.permute.xlu0 %447
      %449 = vset.pattern.permute.xlu0 0
      %450 = vperm.xlu0 %449, %v353
      %v451 = vpop.permute.xlu0 %450
      %vm452 = vcmp.eq.s32.totalorder %v358, %v355
      %vm453 = vcmp.eq.s32.totalorder %v361, %v355
      %vm454 = vcmp.eq.s32.totalorder %v364, %v355
      %vm455 = vcmp.eq.s32.totalorder %v367, %v355
      %vm456 = vcmp.eq.s32.totalorder %v370, %v355
      %vm457 = vcmp.eq.s32.totalorder %v373, %v355
      %vm458 = vcmp.eq.s32.totalorder %v376, %v355
      %vm459 = vcmp.eq.s32.totalorder %v379, %v355
      %vm460 = vcmp.eq.s32.totalorder %v382, %v355
      %vm461 = vcmp.eq.s32.totalorder %v385, %v355
      %vm462 = vcmp.eq.s32.totalorder %v388, %v355
      %vm463 = vcmp.eq.s32.totalorder %v391, %v355
      %vm464 = vcmp.eq.s32.totalorder %v394, %v355
      %vm465 = vcmp.eq.s32.totalorder %v397, %v355
      %vm466 = vcmp.eq.s32.totalorder %v400, %v355
      %vm467 = vcmp.eq.s32.totalorder %v403, %v355
      %vm468 = vcmp.eq.s32.totalorder %v406, %v355
      %vm469 = vcmp.eq.s32.totalorder %v409, %v355
      %vm470 = vcmp.eq.s32.totalorder %v412, %v355
      %vm471 = vcmp.eq.s32.totalorder %v415, %v355
      %vm472 = vcmp.eq.s32.totalorder %v418, %v355
      %vm473 = vcmp.eq.s32.totalorder %v421, %v355
      %vm474 = vcmp.eq.s32.totalorder %v424, %v355
      %vm475 = vcmp.eq.s32.totalorder %v427, %v355
      %vm476 = vcmp.eq.s32.totalorder %v430, %v355
      %vm477 = vcmp.eq.s32.totalorder %v433, %v355
      %vm478 = vcmp.eq.s32.totalorder %v436, %v355
      %vm479 = vcmp.eq.s32.totalorder %v439, %v355
      %vm480 = vcmp.eq.s32.totalorder %v442, %v355
      %vm481 = vcmp.eq.s32.totalorder %v445, %v355
      %vm482 = vcmp.eq.s32.totalorder %v448, %v355
      %vm483 = vcmp.eq.s32.totalorder %v451, %v355
      %v484 = vsel %vm452, 1, 0
      %v485 = vsel %vm453, 1, 0
      %v486 = vsel %vm454, 1, 0
      %v487 = vsel %vm455, 1, 0
      %v488 = vsel %vm456, 1, 0
      %v489 = vsel %vm457, 1, 0
      %v490 = vsel %vm458, 1, 0
      %v491 = vsel %vm459, 1, 0
      %v492 = vsel %vm460, 1, 0
      %v493 = vsel %vm461, 1, 0
      %v494 = vsel %vm462, 1, 0
      %v495 = vsel %vm463, 1, 0
      %v496 = vsel %vm464, 1, 0
      %v497 = vsel %vm465, 1, 0
      %v498 = vsel %vm466, 1, 0
      %v499 = vsel %vm467, 1, 0
      %v500 = vsel %vm468, 1, 0
      %v501 = vsel %vm469, 1, 0
      %v502 = vsel %vm470, 1, 0
      %v503 = vsel %vm471, 1, 0
      %v504 = vsel %vm472, 1, 0
      %v505 = vsel %vm473, 1, 0
      %v506 = vsel %vm474, 1, 0
      %v507 = vsel %vm475, 1, 0
      %v508 = vsel %vm476, 1, 0
      %v509 = vsel %vm477, 1, 0
      %v510 = vsel %vm478, 1, 0
      %v511 = vsel %vm479, 1, 0
      %v512 = vsel %vm480, 1, 0
      %v513 = vsel %vm481, 1, 0
      %v514 = vsel %vm482, 1, 0
      %v515 = vsel %vm483, 1, 0
      %v516 = vcvt.s32.f32 %v484
      %v517 = vcvt.s32.f32 %v485
      %v518 = vcvt.s32.f32 %v486
      %v519 = vcvt.s32.f32 %v487
      %v520 = vcvt.s32.f32 %v488
      %v521 = vcvt.s32.f32 %v489
      %v522 = vcvt.s32.f32 %v490
      %v523 = vcvt.s32.f32 %v491
      %v524 = vcvt.s32.f32 %v492
      %v525 = vcvt.s32.f32 %v493
      %v526 = vcvt.s32.f32 %v494
      %v527 = vcvt.s32.f32 %v495
      %v528 = vcvt.s32.f32 %v496
      %v529 = vcvt.s32.f32 %v497
      %v530 = vcvt.s32.f32 %v498
      %v531 = vcvt.s32.f32 %v499
      %v532 = vcvt.s32.f32 %v500
      %v533 = vcvt.s32.f32 %v501
      %v534 = vcvt.s32.f32 %v502
      %v535 = vcvt.s32.f32 %v503
      %v536 = vcvt.s32.f32 %v504
      %v537 = vcvt.s32.f32 %v505
      %v538 = vcvt.s32.f32 %v506
      %v539 = vcvt.s32.f32 %v507
      %v540 = vcvt.s32.f32 %v508
      %v541 = vcvt.s32.f32 %v509
      %v542 = vcvt.s32.f32 %v510
      %v543 = vcvt.s32.f32 %v511
      %v544 = vcvt.s32.f32 %v512
      %v545 = vcvt.s32.f32 %v513
      %v546 = vcvt.s32.f32 %v514
      %v547 = vcvt.s32.f32 %v515
      %v548 = vpack.c.bf16 %v517, %v516
      %v549 = vpack.c.bf16 %v519, %v518
      %v550 = vpack.c.bf16 %v521, %v520
      %v551 = vpack.c.bf16 %v523, %v522
      %v552 = vpack.c.bf16 %v525, %v524
      %v553 = vpack.c.bf16 %v527, %v526
      %v554 = vpack.c.bf16 %v529, %v528
      %v555 = vpack.c.bf16 %v531, %v530
      %v556 = vpack.c.bf16 %v533, %v532
      %v557 = vpack.c.bf16 %v535, %v534
      %v558 = vpack.c.bf16 %v537, %v536
      %v559 = vpack.c.bf16 %v539, %v538
      %v560 = vpack.c.bf16 %v541, %v540
      %v561 = vpack.c.bf16 %v543, %v542
      %v562 = vpack.c.bf16 %v545, %v544
      %v563 = vpack.c.bf16 %v547, %v546
      %v564 = vld [vmem:[%s291] sm:$0xff]
      %v565 = vld [vmem:[%s291 + $0x8] sm:$0xff]
      %v566 = vld [vmem:[%s291 + $0x10] sm:$0xff]
      %v567 = vld [vmem:[%s291 + $0x18] sm:$0xff]
      %v568 = vld [vmem:[%s291 + $0x20] sm:$0xff]
      %v569 = vld [vmem:[%s291 + $0x28] sm:$0xff]
      %v570 = vld [vmem:[%s291 + $0x30] sm:$0xff]
      %v571 = vld [vmem:[%s291 + $0x38] sm:$0xff]
      %v572 = vld [vmem:[%s291 + $0x40] sm:$0xff]
      %v573 = vld [vmem:[%s291 + $0x48] sm:$0xff]
      %v574 = vld [vmem:[%s291 + $0x50] sm:$0xff]
      %v575 = vld [vmem:[%s291 + $0x58] sm:$0xff]
      %v576 = vld [vmem:[%s291 + $0x60] sm:$0xff]
      %v577 = vld [vmem:[%s291 + $0x68] sm:$0xff]
      %v578 = vld [vmem:[%s291 + $0x70] sm:$0xff]
      %v579 = vld [vmem:[%s291 + $0x78] sm:$0xff]
      %v580 = vld [vmem:[%s291 + $0x80] sm:$0xff]
      %v581 = vld [vmem:[%s291 + $0x88] sm:$0xff]
      %v582 = vld [vmem:[%s291 + $0x90] sm:$0xff]
      %v583 = vld [vmem:[%s291 + $0x98] sm:$0xff]
      %v584 = vld [vmem:[%s291 + $0xa0] sm:$0xff]
      %v585 = vld [vmem:[%s291 + $0xa8] sm:$0xff]
      %v586 = vld [vmem:[%s291 + $0xb0] sm:$0xff]
      %v587 = vld [vmem:[%s291 + $0xb8] sm:$0xff]
      %v588 = vld [vmem:[%s291 + $0xc0] sm:$0xff]
      %v589 = vld [vmem:[%s291 + $0xc8] sm:$0xff]
      %v590 = vld [vmem:[%s291 + $0xd0] sm:$0xff]
      %v591 = vld [vmem:[%s291 + $0xd8] sm:$0xff]
      %v592 = vld [vmem:[%s291 + $0xe0] sm:$0xff]
      %v593 = vld [vmem:[%s291 + $0xe8] sm:$0xff]
      %v594 = vld [vmem:[%s291 + $0xf0] sm:$0xff]
      %v595 = vld [vmem:[%s291 + $0xf8] sm:$0xff]
      %v596 = vpack.c.bf16 %v565, %v564
      %v597 = vpack.c.bf16 %v567, %v566
      %v598 = vpack.c.bf16 %v569, %v568
      %v599 = vpack.c.bf16 %v571, %v570
      %v600 = vpack.c.bf16 %v573, %v572
      %v601 = vpack.c.bf16 %v575, %v574
      %v602 = vpack.c.bf16 %v577, %v576
      %v603 = vpack.c.bf16 %v579, %v578
      %v604 = vpack.c.bf16 %v581, %v580
      %v605 = vpack.c.bf16 %v583, %v582
      %v606 = vpack.c.bf16 %v585, %v584
      %v607 = vpack.c.bf16 %v587, %v586
      %v608 = vpack.c.bf16 %v589, %v588
      %v609 = vpack.c.bf16 %v591, %v590
      %v610 = vpack.c.bf16 %v593, %v592
      %v611 = vpack.c.bf16 %v595, %v594
      %v612 = vld [vmem:[%s2] sm:$0xf]
      %v613 = vld [vmem:[%s2 + $0x4] sm:$0xf]
      %v614 = vld [vmem:[%s2 + $0x8] sm:$0xf]
      %v615 = vld [vmem:[%s2 + $0xc] sm:$0xf]
      %v616 = vld [vmem:[%s2 + $0x10] sm:$0xf]
      %v617 = vld [vmem:[%s2 + $0x14] sm:$0xf]
      %v618 = vld [vmem:[%s2 + $0x18] sm:$0xf]
      %v619 = vld [vmem:[%s2 + $0x1c] sm:$0xf]
      %v620 = vld [vmem:[%s2 + $0x20] sm:$0xf]
      %v621 = vld [vmem:[%s2 + $0x24] sm:$0xf]
      %v622 = vld [vmem:[%s2 + $0x28] sm:$0xf]
      %v623 = vld [vmem:[%s2 + $0x2c] sm:$0xf]
      %v624 = vld [vmem:[%s2 + $0x30] sm:$0xf]
      %v625 = vld [vmem:[%s2 + $0x34] sm:$0xf]
      %v626 = vld [vmem:[%s2 + $0x38] sm:$0xf]
      %v627 = vld [vmem:[%s2 + $0x3c] sm:$0xf]
      %v628 = vld [vmem:[%s2 + $0x40] sm:$0xf]
      %v629 = vld [vmem:[%s2 + $0x44] sm:$0xf]
      %v630 = vld [vmem:[%s2 + $0x48] sm:$0xf]
      %v631 = vld [vmem:[%s2 + $0x4c] sm:$0xf]
      %v632 = vld [vmem:[%s2 + $0x50] sm:$0xf]
      %v633 = vld [vmem:[%s2 + $0x54] sm:$0xf]
      %v634 = vld [vmem:[%s2 + $0x58] sm:$0xf]
      %v635 = vld [vmem:[%s2 + $0x5c] sm:$0xf]
      %v636 = vld [vmem:[%s2 + $0x60] sm:$0xf]
      %v637 = vld [vmem:[%s2 + $0x64] sm:$0xf]
      %v638 = vld [vmem:[%s2 + $0x68] sm:$0xf]
      %v639 = vld [vmem:[%s2 + $0x6c] sm:$0xf]
      %v640 = vld [vmem:[%s2 + $0x70] sm:$0xf]
      %v641 = vld [vmem:[%s2 + $0x74] sm:$0xf]
      %v642 = vld [vmem:[%s2 + $0x78] sm:$0xf]
      %v643 = vld [vmem:[%s2 + $0x7c] sm:$0xf]
      %v644 = vld [vmem:[%s3] sm:$0x1]
      %v646 = vlaneseq
      %v647 = vshrl.u32 %v646, 7
      %v648 = vsub.s32 0, %v647
      %v649 = vrot.slane %v644, %v648
      %v683 = vunpack.c.l.b16 %v612
      %v684 = vunpack.c.l.b16 %v613
      %v685 = vunpack.c.l.b16 %v614
      %v686 = vunpack.c.l.b16 %v615
      %v687 = vunpack.c.l.b16 %v616
      %v688 = vunpack.c.l.b16 %v617
      %v689 = vunpack.c.l.b16 %v618
      %v690 = vunpack.c.l.b16 %v619
      %v691 = vunpack.c.l.b16 %v620
      %v692 = vunpack.c.l.b16 %v621
      %v693 = vunpack.c.l.b16 %v622
      %v694 = vunpack.c.l.b16 %v623
      %v695 = vunpack.c.l.b16 %v624
      %v696 = vunpack.c.l.b16 %v625
      %v697 = vunpack.c.l.b16 %v626
      %v698 = vunpack.c.l.b16 %v627
      %v699 = vunpack.c.l.b16 %v628
      %v700 = vunpack.c.l.b16 %v629
      %v701 = vunpack.c.l.b16 %v630
      %v702 = vunpack.c.l.b16 %v631
      %v703 = vunpack.c.l.b16 %v632
      %v704 = vunpack.c.l.b16 %v633
      %v705 = vunpack.c.l.b16 %v634
      %v706 = vunpack.c.l.b16 %v635
      %v707 = vunpack.c.l.b16 %v636
      %v708 = vunpack.c.l.b16 %v637
      %v709 = vunpack.c.l.b16 %v638
      %v710 = vunpack.c.l.b16 %v639
      %v711 = vunpack.c.l.b16 %v640
      %v712 = vunpack.c.l.b16 %v641
      %v713 = vunpack.c.l.b16 %v642
      %v714 = vunpack.c.l.b16 %v643
      %v715 = vpack.c.b16 %v684, %v683
      %v716 = vpack.c.b16 %v686, %v685
      %v717 = vpack.c.b16 %v688, %v687
      %v718 = vpack.c.b16 %v690, %v689
      %v719 = vpack.c.b16 %v692, %v691
      %v720 = vpack.c.b16 %v694, %v693
      %v721 = vpack.c.b16 %v696, %v695
      %v722 = vpack.c.b16 %v698, %v697
      %v723 = vpack.c.b16 %v700, %v699
      %v724 = vpack.c.b16 %v702, %v701
      %v725 = vpack.c.b16 %v704, %v703
      %v726 = vpack.c.b16 %v706, %v705
      %v727 = vpack.c.b16 %v708, %v707
      %v728 = vpack.c.b16 %v710, %v709
      %v729 = vpack.c.b16 %v712, %v711
      %v730 = vpack.c.b16 %v714, %v713
      %747 = vmatprep.subr.bf16.mxu0 0
      %748 = vmatpush1.bf16.msra.mxu0 %v722
      %749 = vmatprep.subr.bf16.mxu0 0
      %750 = vmatpush1.bf16.msra.mxu0 %v721
      %751 = vmatprep.subr.bf16.mxu0 0
      %752 = vmatpush1.bf16.msra.mxu0 %v720
      %753 = vmatprep.subr.bf16.mxu0 0
      %754 = vmatpush1.bf16.msra.mxu0 %v719
      %755 = vmatprep.subr.bf16.mxu0 0
      %756 = vmatpush1.bf16.msra.mxu0 %v718
      %757 = vmatprep.subr.bf16.mxu0 0
      %758 = vmatpush1.bf16.msra.mxu0 %v717
      %759 = vmatprep.subr.bf16.mxu0 0
      %760 = vmatpush1.bf16.msra.mxu0 %v716
      %761 = vmatprep.subr.bf16.mxu0 0
      %762 = vmatpush1.bf16.msra.mxu0 %v715
      %763 = vmatprep.subr.bf16.mxu0 0
      %764 = vmatpush2.bf16.msra.mxu0 %v730
      %765 = vmatprep.subr.bf16.mxu0 0
      %766 = vmatpush2.bf16.msra.mxu0 %v729
      %767 = vmatprep.subr.bf16.mxu0 0
      %768 = vmatpush2.bf16.msra.mxu0 %v728
      %769 = vmatprep.subr.bf16.mxu0 0
      %770 = vmatpush2.bf16.msra.mxu0 %v727
      %771 = vmatprep.subr.bf16.mxu0 0
      %772 = vmatpush2.bf16.msra.mxu0 %v726
      %773 = vmatprep.subr.bf16.mxu0 0
      %774 = vmatpush2.bf16.msra.mxu0 %v725
      %775 = vmatprep.subr.bf16.mxu0 0
      %776 = vmatpush2.bf16.msra.mxu0 %v724
      %777 = vmatprep.subr.bf16.mxu0 0
      %778 = vmatpush2.bf16.msra.mxu0 %v723
      %779 = vmatprep.mubr.bf16.mxu0 %v548
      %780 = vmatmul.mubr.bf16.gmra.mxu0 %v596
      %v781 = vpop.f32.mrf.mxu0
      %v782 = vadd.f32 %v649, %v781
      %v783 = vpop.f32.mrf.mxu0
      %v784 = vpop.f32.mrf.mxu0
      %v785 = vadd.f32 %v649, %v784
      %v786 = vpop.f32.mrf.mxu0
      %787 = vmatprep.mubr.bf16.mxu0 %v549
      %788 = vmatmul.mubr.bf16.gmra.mxu0 %v597
      %v789 = vpop.f32.mrf.mxu0
      %v790 = vadd.f32 %v649, %v789
      %v791 = vpop.f32.mrf.mxu0
      %v792 = vpop.f32.mrf.mxu0
      %v793 = vadd.f32 %v649, %v792
      %v794 = vpop.f32.mrf.mxu0
      %795 = vmatprep.mubr.bf16.mxu0 %v550
      %796 = vmatmul.mubr.bf16.gmra.mxu0 %v598
      %v797 = vpop.f32.mrf.mxu0
      %v798 = vadd.f32 %v649, %v797
      %v799 = vpop.f32.mrf.mxu0
      %v800 = vpop.f32.mrf.mxu0
      %v801 = vadd.f32 %v649, %v800
      %v802 = vpop.f32.mrf.mxu0
      %803 = vmatprep.mubr.bf16.mxu0 %v551
      %804 = vmatmul.mubr.bf16.gmra.mxu0 %v599
      %v805 = vpop.f32.mrf.mxu0
      %v806 = vadd.f32 %v649, %v805
      %v807 = vpop.f32.mrf.mxu0
      %v808 = vpop.f32.mrf.mxu0
      %v809 = vadd.f32 %v649, %v808
      %v810 = vpop.f32.mrf.mxu0
      %811 = vmatprep.mubr.bf16.mxu0 %v552
      %812 = vmatmul.mubr.bf16.gmra.mxu0 %v600
      %v813 = vpop.f32.mrf.mxu0
      %v814 = vadd.f32 %v649, %v813
      %v815 = vpop.f32.mrf.mxu0
      %v816 = vpop.f32.mrf.mxu0
      %v817 = vadd.f32 %v649, %v816
      %v818 = vpop.f32.mrf.mxu0
      %819 = vmatprep.mubr.bf16.mxu0 %v553
      %820 = vmatmul.mubr.bf16.gmra.mxu0 %v601
      %v821 = vpop.f32.mrf.mxu0
      %v822 = vadd.f32 %v649, %v821
      %v823 = vpop.f32.mrf.mxu0
      %v824 = vpop.f32.mrf.mxu0
      %v825 = vadd.f32 %v649, %v824
      %v826 = vpop.f32.mrf.mxu0
      %827 = vmatprep.mubr.bf16.mxu0 %v554
      %828 = vmatmul.mubr.bf16.gmra.mxu0 %v602
      %v829 = vpop.f32.mrf.mxu0
      %v830 = vadd.f32 %v649, %v829
      %v831 = vpop.f32.mrf.mxu0
      %v832 = vpop.f32.mrf.mxu0
      %v833 = vadd.f32 %v649, %v832
      %v834 = vpop.f32.mrf.mxu0
      %835 = vmatprep.mubr.bf16.mxu0 %v555
      %836 = vmatmul.mubr.bf16.gmra.mxu0 %v603
      %v837 = vpop.f32.mrf.mxu0
      %v838 = vadd.f32 %v649, %v837
      %v839 = vpop.f32.mrf.mxu0
      %v840 = vpop.f32.mrf.mxu0
      %v841 = vadd.f32 %v649, %v840
      %v842 = vpop.f32.mrf.mxu0
      %843 = vmatprep.mubr.bf16.mxu0 %v556
      %844 = vmatmul.mubr.bf16.gmra.mxu0 %v604
      %v845 = vpop.f32.mrf.mxu0
      %v846 = vadd.f32 %v649, %v845
      %v847 = vpop.f32.mrf.mxu0
      %v848 = vpop.f32.mrf.mxu0
      %v849 = vadd.f32 %v649, %v848
      %v850 = vpop.f32.mrf.mxu0
      %851 = vmatprep.mubr.bf16.mxu0 %v557
      %852 = vmatmul.mubr.bf16.gmra.mxu0 %v605
      %v853 = vpop.f32.mrf.mxu0
      %v854 = vadd.f32 %v649, %v853
      %v855 = vpop.f32.mrf.mxu0
      %v856 = vpop.f32.mrf.mxu0
      %v857 = vadd.f32 %v649, %v856
      %v858 = vpop.f32.mrf.mxu0
      %859 = vmatprep.mubr.bf16.mxu0 %v558
      %860 = vmatmul.mubr.bf16.gmra.mxu0 %v606
      %v861 = vpop.f32.mrf.mxu0
      %v862 = vadd.f32 %v649, %v861
      %v863 = vpop.f32.mrf.mxu0
      %v864 = vpop.f32.mrf.mxu0
      %v865 = vadd.f32 %v649, %v864
      %v866 = vpop.f32.mrf.mxu0
      %867 = vmatprep.mubr.bf16.mxu0 %v559
      %868 = vmatmul.mubr.bf16.gmra.mxu0 %v607
      %v869 = vpop.f32.mrf.mxu0
      %v870 = vadd.f32 %v649, %v869
      %v871 = vpop.f32.mrf.mxu0
      %v872 = vpop.f32.mrf.mxu0
      %v873 = vadd.f32 %v649, %v872
      %v874 = vpop.f32.mrf.mxu0
      %875 = vmatprep.mubr.bf16.mxu0 %v560
      %876 = vmatmul.mubr.bf16.gmra.mxu0 %v608
      %v877 = vpop.f32.mrf.mxu0
      %v878 = vadd.f32 %v649, %v877
      %v879 = vpop.f32.mrf.mxu0
      %v880 = vpop.f32.mrf.mxu0
      %v881 = vadd.f32 %v649, %v880
      %v882 = vpop.f32.mrf.mxu0
      %883 = vmatprep.mubr.bf16.mxu0 %v561
      %884 = vmatmul.mubr.bf16.gmra.mxu0 %v609
      %v885 = vpop.f32.mrf.mxu0
      %v886 = vadd.f32 %v649, %v885
      %v887 = vpop.f32.mrf.mxu0
      %v888 = vpop.f32.mrf.mxu0
      %v889 = vadd.f32 %v649, %v888
      %v890 = vpop.f32.mrf.mxu0
      %891 = vmatprep.mubr.bf16.mxu0 %v562
      %892 = vmatmul.mubr.bf16.gmra.mxu0 %v610
      %v893 = vpop.f32.mrf.mxu0
      %v894 = vadd.f32 %v649, %v893
      %v895 = vpop.f32.mrf.mxu0
      %v896 = vpop.f32.mrf.mxu0
      %v897 = vadd.f32 %v649, %v896
      %v898 = vpop.f32.mrf.mxu0
      %899 = vmatprep.mubr.bf16.mxu0 %v563
      %900 = vmatmul.mubr.bf16.gmra.mxu0 %v611
      %v901 = vpop.f32.mrf.mxu0
      %v902 = vadd.f32 %v649, %v901
      %v903 = vpop.f32.mrf.mxu0
      %v904 = vpop.f32.mrf.mxu0
      %v905 = vadd.f32 %v649, %v904
      %v906 = vpop.f32.mrf.mxu0
      %907 = vdwg.mxu0
      %vm908 = vcmp.gt.f32.partialorder %v782, 0.0
      %vm909 = vcmp.gt.f32.partialorder %v785, 0.0
      %vm910 = vcmp.gt.f32.partialorder %v790, 0.0
      %vm911 = vcmp.gt.f32.partialorder %v793, 0.0
      %vm912 = vcmp.gt.f32.partialorder %v798, 0.0
      %vm913 = vcmp.gt.f32.partialorder %v801, 0.0
      %vm914 = vcmp.gt.f32.partialorder %v806, 0.0
      %vm915 = vcmp.gt.f32.partialorder %v809, 0.0
      %vm916 = vcmp.gt.f32.partialorder %v814, 0.0
      %vm917 = vcmp.gt.f32.partialorder %v817, 0.0
      %vm918 = vcmp.gt.f32.partialorder %v822, 0.0
      %vm919 = vcmp.gt.f32.partialorder %v825, 0.0
      %vm920 = vcmp.gt.f32.partialorder %v830, 0.0
      %vm921 = vcmp.gt.f32.partialorder %v833, 0.0
      %vm922 = vcmp.gt.f32.partialorder %v838, 0.0
      %vm923 = vcmp.gt.f32.partialorder %v841, 0.0
      %vm924 = vcmp.gt.f32.partialorder %v846, 0.0
      %vm925 = vcmp.gt.f32.partialorder %v849, 0.0
      %vm926 = vcmp.gt.f32.partialorder %v854, 0.0
      %vm927 = vcmp.gt.f32.partialorder %v857, 0.0
      %vm928 = vcmp.gt.f32.partialorder %v862, 0.0
      %vm929 = vcmp.gt.f32.partialorder %v865, 0.0
      %vm930 = vcmp.gt.f32.partialorder %v870, 0.0
      %vm931 = vcmp.gt.f32.partialorder %v873, 0.0
      %vm932 = vcmp.gt.f32.partialorder %v878, 0.0
      %vm933 = vcmp.gt.f32.partialorder %v881, 0.0
      %vm934 = vcmp.gt.f32.partialorder %v886, 0.0
      %vm935 = vcmp.gt.f32.partialorder %v889, 0.0
      %vm936 = vcmp.gt.f32.partialorder %v894, 0.0
      %vm937 = vcmp.gt.f32.partialorder %v897, 0.0
      %vm938 = vcmp.gt.f32.partialorder %v902, 0.0
      %vm939 = vcmp.gt.f32.partialorder %v905, 0.0
      %v940 = vmin.f32 %v782, 0.0
      %v941 = vmin.f32 %v785, 0.0
      %v942 = vmin.f32 %v790, 0.0
      %v943 = vmin.f32 %v793, 0.0
      %v944 = vmin.f32 %v798, 0.0
      %v945 = vmin.f32 %v801, 0.0
      %v946 = vmin.f32 %v806, 0.0
      %v947 = vmin.f32 %v809, 0.0
      %v948 = vmin.f32 %v814, 0.0
      %v949 = vmin.f32 %v817, 0.0
      %v950 = vmin.f32 %v822, 0.0
      %v951 = vmin.f32 %v825, 0.0
      %v952 = vmin.f32 %v830, 0.0
      %v953 = vmin.f32 %v833, 0.0
      %v954 = vmin.f32 %v838, 0.0
      %v955 = vmin.f32 %v841, 0.0
      %v956 = vmin.f32 %v846, 0.0
      %v957 = vmin.f32 %v849, 0.0
      %v958 = vmin.f32 %v854, 0.0
      %v959 = vmin.f32 %v857, 0.0
      %v960 = vmin.f32 %v862, 0.0
      %v961 = vmin.f32 %v865, 0.0
      %v962 = vmin.f32 %v870, 0.0
      %v963 = vmin.f32 %v873, 0.0
      %v964 = vmin.f32 %v878, 0.0
      %v965 = vmin.f32 %v881, 0.0
      %v966 = vmin.f32 %v886, 0.0
      %v967 = vmin.f32 %v889, 0.0
      %v968 = vmin.f32 %v894, 0.0
      %v969 = vmin.f32 %v897, 0.0
      %v970 = vmin.f32 %v902, 0.0
      %v971 = vmin.f32 %v905, 0.0
      %v972 = vmul.f32 %v940, 1.442695
      %v973 = vpow.pop %v972
      %v974 = vmul.f32 %v941, 1.442695
      %v975 = vpow.pop %v974
      %v976 = vmul.f32 %v942, 1.442695
      %v977 = vpow.pop %v976
      %v978 = vmul.f32 %v943, 1.442695
      %v979 = vpow.pop %v978
      %v980 = vmul.f32 %v944, 1.442695
      %v981 = vpow.pop %v980
      %v982 = vmul.f32 %v945, 1.442695
      %v983 = vpow.pop %v982
      %v984 = vmul.f32 %v946, 1.442695
      %v985 = vpow.pop %v984
      %v986 = vmul.f32 %v947, 1.442695
      %v987 = vpow.pop %v986
      %v988 = vmul.f32 %v948, 1.442695
      %v989 = vpow.pop %v988
      %v990 = vmul.f32 %v949, 1.442695
      %v991 = vpow.pop %v990
      %v992 = vmul.f32 %v950, 1.442695
      %v993 = vpow.pop %v992
      %v994 = vmul.f32 %v951, 1.442695
      %v995 = vpow.pop %v994
      %v996 = vmul.f32 %v952, 1.442695
      %v997 = vpow.pop %v996
      %v998 = vmul.f32 %v953, 1.442695
      %v999 = vpow.pop %v998
      %v1000 = vmul.f32 %v954, 1.442695
      %v1001 = vpow.pop %v1000
      %v1002 = vmul.f32 %v955, 1.442695
      %v1003 = vpow.pop %v1002
      %v1004 = vmul.f32 %v956, 1.442695
      %v1005 = vpow.pop %v1004
      %v1006 = vmul.f32 %v957, 1.442695
      %v1007 = vpow.pop %v1006
      %v1008 = vmul.f32 %v958, 1.442695
      %v1009 = vpow.pop %v1008
      %v1010 = vmul.f32 %v959, 1.442695
      %v1011 = vpow.pop %v1010
      %v1012 = vmul.f32 %v960, 1.442695
      %v1013 = vpow.pop %v1012
      %v1014 = vmul.f32 %v961, 1.442695
      %v1015 = vpow.pop %v1014
      %v1016 = vmul.f32 %v962, 1.442695
      %v1017 = vpow.pop %v1016
      %v1018 = vmul.f32 %v963, 1.442695
      %v1019 = vpow.pop %v1018
      %v1020 = vmul.f32 %v964, 1.442695
      %v1021 = vpow.pop %v1020
      %v1022 = vmul.f32 %v965, 1.442695
      %v1023 = vpow.pop %v1022
      %v1024 = vmul.f32 %v966, 1.442695
      %v1025 = vpow.pop %v1024
      %v1026 = vmul.f32 %v967, 1.442695
      %v1027 = vpow.pop %v1026
      %v1028 = vmul.f32 %v968, 1.442695
      %v1029 = vpow.pop %v1028
      %v1030 = vmul.f32 %v969, 1.442695
      %v1031 = vpow.pop %v1030
      %v1032 = vmul.f32 %v970, 1.442695
      %v1033 = vpow.pop %v1032
      %v1034 = vmul.f32 %v971, 1.442695
      %v1035 = vpow.pop %v1034
      %v1036 = vsub.f32 %v973, 1.0
      %v1037 = vsub.f32 %v975, 1.0
      %v1038 = vsub.f32 %v977, 1.0
      %v1039 = vsub.f32 %v979, 1.0
      %v1040 = vsub.f32 %v981, 1.0
      %v1041 = vsub.f32 %v983, 1.0
      %v1042 = vsub.f32 %v985, 1.0
      %v1043 = vsub.f32 %v987, 1.0
      %v1044 = vsub.f32 %v989, 1.0
      %v1045 = vsub.f32 %v991, 1.0
      %v1046 = vsub.f32 %v993, 1.0
      %v1047 = vsub.f32 %v995, 1.0
      %v1048 = vsub.f32 %v997, 1.0
      %v1049 = vsub.f32 %v999, 1.0
      %v1050 = vsub.f32 %v1001, 1.0
      %v1051 = vsub.f32 %v1003, 1.0
      %v1052 = vsub.f32 %v1005, 1.0
      %v1053 = vsub.f32 %v1007, 1.0
      %v1054 = vsub.f32 %v1009, 1.0
      %v1055 = vsub.f32 %v1011, 1.0
      %v1056 = vsub.f32 %v1013, 1.0
      %v1057 = vsub.f32 %v1015, 1.0
      %v1058 = vsub.f32 %v1017, 1.0
      %v1059 = vsub.f32 %v1019, 1.0
      %v1060 = vsub.f32 %v1021, 1.0
      %v1061 = vsub.f32 %v1023, 1.0
      %v1062 = vsub.f32 %v1025, 1.0
      %v1063 = vsub.f32 %v1027, 1.0
      %v1064 = vsub.f32 %v1029, 1.0
      %v1065 = vsub.f32 %v1031, 1.0
      %v1066 = vsub.f32 %v1033, 1.0
      %v1067 = vsub.f32 %v1035, 1.0
      %v1068 = vsel %vm908, %v782, %v1036
      %v1069 = vsel %vm909, %v785, %v1037
      %v1070 = vsel %vm910, %v790, %v1038
      %v1071 = vsel %vm911, %v793, %v1039
      %v1072 = vsel %vm912, %v798, %v1040
      %v1073 = vsel %vm913, %v801, %v1041
      %v1074 = vsel %vm914, %v806, %v1042
      %v1075 = vsel %vm915, %v809, %v1043
      %v1076 = vsel %vm916, %v814, %v1044
      %v1077 = vsel %vm917, %v817, %v1045
      %v1078 = vsel %vm918, %v822, %v1046
      %v1079 = vsel %vm919, %v825, %v1047
      %v1080 = vsel %vm920, %v830, %v1048
      %v1081 = vsel %vm921, %v833, %v1049
      %v1082 = vsel %vm922, %v838, %v1050
      %v1083 = vsel %vm923, %v841, %v1051
      %v1084 = vsel %vm924, %v846, %v1052
      %v1085 = vsel %vm925, %v849, %v1053
      %v1086 = vsel %vm926, %v854, %v1054
      %v1087 = vsel %vm927, %v857, %v1055
      %v1088 = vsel %vm928, %v862, %v1056
      %v1089 = vsel %vm929, %v865, %v1057
      %v1090 = vsel %vm930, %v870, %v1058
      %v1091 = vsel %vm931, %v873, %v1059
      %v1092 = vsel %vm932, %v878, %v1060
      %v1093 = vsel %vm933, %v881, %v1061
      %v1094 = vsel %vm934, %v886, %v1062
      %v1095 = vsel %vm935, %v889, %v1063
      %v1096 = vsel %vm936, %v894, %v1064
      %v1097 = vsel %vm937, %v897, %v1065
      %v1098 = vsel %vm938, %v902, %v1066
      %v1099 = vsel %vm939, %v905, %v1067
      %v1100 = vpack.c.bf16 %v1069, %v1068
      %v1101 = vpack.c.bf16 %v1071, %v1070
      %v1102 = vpack.c.bf16 %v1073, %v1072
      %v1103 = vpack.c.bf16 %v1075, %v1074
      %v1104 = vpack.c.bf16 %v1077, %v1076
      %v1105 = vpack.c.bf16 %v1079, %v1078
      %v1106 = vpack.c.bf16 %v1081, %v1080
      %v1107 = vpack.c.bf16 %v1083, %v1082
      %v1108 = vpack.c.bf16 %v1085, %v1084
      %v1109 = vpack.c.bf16 %v1087, %v1086
      %v1110 = vpack.c.bf16 %v1089, %v1088
      %v1111 = vpack.c.bf16 %v1091, %v1090
      %v1112 = vpack.c.bf16 %v1093, %v1092
      %v1113 = vpack.c.bf16 %v1095, %v1094
      %v1114 = vpack.c.bf16 %v1097, %v1096
      %v1115 = vpack.c.bf16 %v1099, %v1098
      %v1132 = vunpack.c.l.b16 %v1100
      %v1133 = vunpack.c.h.b16 %v1100
      %v1134 = vunpack.c.l.b16 %v1101
      %v1135 = vunpack.c.h.b16 %v1101
      %v1136 = vunpack.c.l.b16 %v1102
      %v1137 = vunpack.c.h.b16 %v1102
      %v1138 = vunpack.c.l.b16 %v1103
      %v1139 = vunpack.c.h.b16 %v1103
      %v1140 = vunpack.c.l.b16 %v1104
      %v1141 = vunpack.c.h.b16 %v1104
      %v1142 = vunpack.c.l.b16 %v1105
      %v1143 = vunpack.c.h.b16 %v1105
      %v1144 = vunpack.c.l.b16 %v1106
      %v1145 = vunpack.c.h.b16 %v1106
      %v1146 = vunpack.c.l.b16 %v1107
      %v1147 = vunpack.c.h.b16 %v1107
      %v1148 = vunpack.c.l.b16 %v1108
      %v1149 = vunpack.c.h.b16 %v1108
      %v1150 = vunpack.c.l.b16 %v1109
      %v1151 = vunpack.c.h.b16 %v1109
      %v1152 = vunpack.c.l.b16 %v1110
      %v1153 = vunpack.c.h.b16 %v1110
      %v1154 = vunpack.c.l.b16 %v1111
      %v1155 = vunpack.c.h.b16 %v1111
      %v1156 = vunpack.c.l.b16 %v1112
      %v1157 = vunpack.c.h.b16 %v1112
      %v1158 = vunpack.c.l.b16 %v1113
      %v1159 = vunpack.c.h.b16 %v1113
      %v1160 = vunpack.c.l.b16 %v1114
      %v1161 = vunpack.c.h.b16 %v1114
      %v1162 = vunpack.c.l.b16 %v1115
      %v1163 = vunpack.c.h.b16 %v1115
      %v1164 = vpack.c.b16 %v1132, %v1132
      %v1165 = vpack.c.b16 %v1133, %v1133
      %v1166 = vpack.c.b16 %v1134, %v1134
      %v1167 = vpack.c.b16 %v1135, %v1135
      %v1168 = vpack.c.b16 %v1136, %v1136
      %v1169 = vpack.c.b16 %v1137, %v1137
      %v1170 = vpack.c.b16 %v1138, %v1138
      %v1171 = vpack.c.b16 %v1139, %v1139
      %v1172 = vpack.c.b16 %v1140, %v1140
      %v1173 = vpack.c.b16 %v1141, %v1141
      %v1174 = vpack.c.b16 %v1142, %v1142
      %v1175 = vpack.c.b16 %v1143, %v1143
      %v1176 = vpack.c.b16 %v1144, %v1144
      %v1177 = vpack.c.b16 %v1145, %v1145
      %v1178 = vpack.c.b16 %v1146, %v1146
      %v1179 = vpack.c.b16 %v1147, %v1147
      %v1180 = vpack.c.b16 %v1148, %v1148
      %v1181 = vpack.c.b16 %v1149, %v1149
      %v1182 = vpack.c.b16 %v1150, %v1150
      %v1183 = vpack.c.b16 %v1151, %v1151
      %v1184 = vpack.c.b16 %v1152, %v1152
      %v1185 = vpack.c.b16 %v1153, %v1153
      %v1186 = vpack.c.b16 %v1154, %v1154
      %v1187 = vpack.c.b16 %v1155, %v1155
      %v1188 = vpack.c.b16 %v1156, %v1156
      %v1189 = vpack.c.b16 %v1157, %v1157
      %v1190 = vpack.c.b16 %v1158, %v1158
      %v1191 = vpack.c.b16 %v1159, %v1159
      %v1192 = vpack.c.b16 %v1160, %v1160
      %v1193 = vpack.c.b16 %v1161, %v1161
      %v1194 = vpack.c.b16 %v1162, %v1162
      %v1195 = vpack.c.b16 %v1163, %v1163
      %1228 = vst [vmem:[%s311] sm:$0xf] %v1164
      %1229 = vst [vmem:[%s311 + $0x4] sm:$0xf] %v1165
      %1230 = vst [vmem:[%s311 + $0x8] sm:$0xf] %v1166
      %1231 = vst [vmem:[%s311 + $0xc] sm:$0xf] %v1167
      %1232 = vst [vmem:[%s311 + $0x10] sm:$0xf] %v1168
      %1233 = vst [vmem:[%s311 + $0x14] sm:$0xf] %v1169
      %1234 = vst [vmem:[%s311 + $0x18] sm:$0xf] %v1170
      %1235 = vst [vmem:[%s311 + $0x1c] sm:$0xf] %v1171
      %1236 = vst [vmem:[%s311 + $0x20] sm:$0xf] %v1172
      %1237 = vst [vmem:[%s311 + $0x24] sm:$0xf] %v1173
      %1238 = vst [vmem:[%s311 + $0x28] sm:$0xf] %v1174
      %1239 = vst [vmem:[%s311 + $0x2c] sm:$0xf] %v1175
      %1240 = vst [vmem:[%s311 + $0x30] sm:$0xf] %v1176
      %1241 = vst [vmem:[%s311 + $0x34] sm:$0xf] %v1177
      %1242 = vst [vmem:[%s311 + $0x38] sm:$0xf] %v1178
      %1243 = vst [vmem:[%s311 + $0x3c] sm:$0xf] %v1179
      %1244 = vst [vmem:[%s311 + $0x40] sm:$0xf] %v1180
      %1245 = vst [vmem:[%s311 + $0x44] sm:$0xf] %v1181
      %1246 = vst [vmem:[%s311 + $0x48] sm:$0xf] %v1182
      %1247 = vst [vmem:[%s311 + $0x4c] sm:$0xf] %v1183
      %1248 = vst [vmem:[%s311 + $0x50] sm:$0xf] %v1184
      %1249 = vst [vmem:[%s311 + $0x54] sm:$0xf] %v1185
      %1250 = vst [vmem:[%s311 + $0x58] sm:$0xf] %v1186
      %1251 = vst [vmem:[%s311 + $0x5c] sm:$0xf] %v1187
      %1252 = vst [vmem:[%s311 + $0x60] sm:$0xf] %v1188
      %1253 = vst [vmem:[%s311 + $0x64] sm:$0xf] %v1189
      %1254 = vst [vmem:[%s311 + $0x68] sm:$0xf] %v1190
      %1255 = vst [vmem:[%s311 + $0x6c] sm:$0xf] %v1191
      %1256 = vst [vmem:[%s311 + $0x70] sm:$0xf] %v1192
      %1257 = vst [vmem:[%s311 + $0x74] sm:$0xf] %v1193
      %1258 = vst [vmem:[%s311 + $0x78] sm:$0xf] %v1194
      %1259 = vst [vmem:[%s311 + $0x7c] sm:$0xf] %v1195
      %v1260 = vunpack.c.l.bf16 %v1100
      %v1261 = vunpack.c.h.bf16 %v1100
      %v1262 = vunpack.c.l.bf16 %v1101
      %v1263 = vunpack.c.h.bf16 %v1101
      %v1264 = vunpack.c.l.bf16 %v1102
      %v1265 = vunpack.c.h.bf16 %v1102
      %v1266 = vunpack.c.l.bf16 %v1103
      %v1267 = vunpack.c.h.bf16 %v1103
      %v1268 = vunpack.c.l.bf16 %v1104
      %v1269 = vunpack.c.h.bf16 %v1104
      %v1270 = vunpack.c.l.bf16 %v1105
      %v1271 = vunpack.c.h.bf16 %v1105
      %v1272 = vunpack.c.l.bf16 %v1106
      %v1273 = vunpack.c.h.bf16 %v1106
      %v1274 = vunpack.c.l.bf16 %v1107
      %v1275 = vunpack.c.h.bf16 %v1107
      %v1276 = vunpack.c.l.bf16 %v1108
      %v1277 = vunpack.c.h.bf16 %v1108
      %v1278 = vunpack.c.l.bf16 %v1109
      %v1279 = vunpack.c.h.bf16 %v1109
      %v1280 = vunpack.c.l.bf16 %v1110
      %v1281 = vunpack.c.h.bf16 %v1110
      %v1282 = vunpack.c.l.bf16 %v1111
      %v1283 = vunpack.c.h.bf16 %v1111
      %v1284 = vunpack.c.l.bf16 %v1112
      %v1285 = vunpack.c.h.bf16 %v1112
      %v1286 = vunpack.c.l.bf16 %v1113
      %v1287 = vunpack.c.h.bf16 %v1113
      %v1288 = vunpack.c.l.bf16 %v1114
      %v1289 = vunpack.c.h.bf16 %v1114
      %v1290 = vunpack.c.l.bf16 %v1115
      %v1291 = vunpack.c.h.bf16 %v1115
      %v1292 = vadd.f32 %v1260, %v1261
      %v1293 = vadd.f32 %v1292, %v1262
      %v1294 = vadd.f32 %v1293, %v1263
      %v1295 = vadd.f32 %v1294, %v1264
      %v1296 = vadd.f32 %v1295, %v1265
      %v1297 = vadd.f32 %v1296, %v1266
      %v1298 = vadd.f32 %v1297, %v1267
      %v1299 = vadd.f32 %v1298, %v1268
      %v1300 = vadd.f32 %v1299, %v1269
      %v1301 = vadd.f32 %v1300, %v1270
      %v1302 = vadd.f32 %v1301, %v1271
      %v1303 = vadd.f32 %v1302, %v1272
      %v1304 = vadd.f32 %v1303, %v1273
      %v1305 = vadd.f32 %v1304, %v1274
      %v1306 = vadd.f32 %v1305, %v1275
      %v1307 = vadd.f32 %v1306, %v1276
      %v1308 = vadd.f32 %v1307, %v1277
      %v1309 = vadd.f32 %v1308, %v1278
      %v1310 = vadd.f32 %v1309, %v1279
      %v1311 = vadd.f32 %v1310, %v1280
      %v1312 = vadd.f32 %v1311, %v1281
      %v1313 = vadd.f32 %v1312, %v1282
      %v1314 = vadd.f32 %v1313, %v1283
      %v1315 = vadd.f32 %v1314, %v1284
      %v1316 = vadd.f32 %v1315, %v1285
      %v1317 = vadd.f32 %v1316, %v1286
      %v1318 = vadd.f32 %v1317, %v1287
      %v1319 = vadd.f32 %v1318, %v1288
      %v1320 = vadd.f32 %v1319, %v1289
      %v1321 = vadd.f32 %v1320, %v1290
      %v1322 = vadd.f32 %v1321, %v1291
      %v1323 = vrot.slane %v1322, 4
      %v1324 = vadd.f32 %v1322, %v1323
      %v1325 = vrot.slane %v1324, 2
      %v1326 = vadd.f32 %v1324, %v1325
      %v1327 = vrot.slane %v1326, 1
      %v1328 = vadd.f32 %v1326, %v1327
      %v1329 = vmul.f32 %v1328, 0.00390625
      %v1330 = vsub.f32 %v1260, %v1329
      %v1331 = vsub.f32 %v1261, %v1329
      %v1332 = vsub.f32 %v1262, %v1329
      %v1333 = vsub.f32 %v1263, %v1329
      %v1334 = vsub.f32 %v1264, %v1329
      %v1335 = vsub.f32 %v1265, %v1329
      %v1336 = vsub.f32 %v1266, %v1329
      %v1337 = vsub.f32 %v1267, %v1329
      %v1338 = vsub.f32 %v1268, %v1329
      %v1339 = vsub.f32 %v1269, %v1329
      %v1340 = vsub.f32 %v1270, %v1329
      %v1341 = vsub.f32 %v1271, %v1329
      %v1342 = vsub.f32 %v1272, %v1329
      %v1343 = vsub.f32 %v1273, %v1329
      %v1344 = vsub.f32 %v1274, %v1329
      %v1345 = vsub.f32 %v1275, %v1329
      %v1346 = vsub.f32 %v1276, %v1329
      %v1347 = vsub.f32 %v1277, %v1329
      %v1348 = vsub.f32 %v1278, %v1329
      %v1349 = vsub.f32 %v1279, %v1329
      %v1350 = vsub.f32 %v1280, %v1329
      %v1351 = vsub.f32 %v1281, %v1329
      %v1352 = vsub.f32 %v1282, %v1329
      %v1353 = vsub.f32 %v1283, %v1329
      %v1354 = vsub.f32 %v1284, %v1329
      %v1355 = vsub.f32 %v1285, %v1329
      %v1356 = vsub.f32 %v1286, %v1329
      %v1357 = vsub.f32 %v1287, %v1329
      %v1358 = vsub.f32 %v1288, %v1329
      %v1359 = vsub.f32 %v1289, %v1329
      %v1360 = vsub.f32 %v1290, %v1329
      %v1361 = vsub.f32 %v1291, %v1329
      %v1362 = vmul.f32 %v1330, %v1330
      %v1363 = vmul.f32 %v1331, %v1331
      %v1364 = vmul.f32 %v1332, %v1332
      %v1365 = vmul.f32 %v1333, %v1333
      %v1366 = vmul.f32 %v1334, %v1334
      %v1367 = vmul.f32 %v1335, %v1335
      %v1368 = vmul.f32 %v1336, %v1336
      %v1369 = vmul.f32 %v1337, %v1337
      %v1370 = vmul.f32 %v1338, %v1338
      %v1371 = vmul.f32 %v1339, %v1339
      %v1372 = vmul.f32 %v1340, %v1340
      %v1373 = vmul.f32 %v1341, %v1341
      %v1374 = vmul.f32 %v1342, %v1342
      %v1375 = vmul.f32 %v1343, %v1343
      %v1376 = vmul.f32 %v1344, %v1344
      %v1377 = vmul.f32 %v1345, %v1345
      %v1378 = vmul.f32 %v1346, %v1346
      %v1379 = vmul.f32 %v1347, %v1347
      %v1380 = vmul.f32 %v1348, %v1348
      %v1381 = vmul.f32 %v1349, %v1349
      %v1382 = vmul.f32 %v1350, %v1350
      %v1383 = vmul.f32 %v1351, %v1351
      %v1384 = vmul.f32 %v1352, %v1352
      %v1385 = vmul.f32 %v1353, %v1353
      %v1386 = vmul.f32 %v1354, %v1354
      %v1387 = vmul.f32 %v1355, %v1355
      %v1388 = vmul.f32 %v1356, %v1356
      %v1389 = vmul.f32 %v1357, %v1357
      %v1390 = vmul.f32 %v1358, %v1358
      %v1391 = vmul.f32 %v1359, %v1359
      %v1392 = vmul.f32 %v1360, %v1360
      %v1393 = vmul.f32 %v1361, %v1361
      %v1394 = vadd.f32 %v1362, %v1363
      %v1395 = vadd.f32 %v1394, %v1364
      %v1396 = vadd.f32 %v1395, %v1365
      %v1397 = vadd.f32 %v1396, %v1366
      %v1398 = vadd.f32 %v1397, %v1367
      %v1399 = vadd.f32 %v1398, %v1368
      %v1400 = vadd.f32 %v1399, %v1369
      %v1401 = vadd.f32 %v1400, %v1370
      %v1402 = vadd.f32 %v1401, %v1371
      %v1403 = vadd.f32 %v1402, %v1372
      %v1404 = vadd.f32 %v1403, %v1373
      %v1405 = vadd.f32 %v1404, %v1374
      %v1406 = vadd.f32 %v1405, %v1375
      %v1407 = vadd.f32 %v1406, %v1376
      %v1408 = vadd.f32 %v1407, %v1377
      %v1409 = vadd.f32 %v1408, %v1378
      %v1410 = vadd.f32 %v1409, %v1379
      %v1411 = vadd.f32 %v1410, %v1380
      %v1412 = vadd.f32 %v1411, %v1381
      %v1413 = vadd.f32 %v1412, %v1382
      %v1414 = vadd.f32 %v1413, %v1383
      %v1415 = vadd.f32 %v1414, %v1384
      %v1416 = vadd.f32 %v1415, %v1385
      %v1417 = vadd.f32 %v1416, %v1386
      %v1418 = vadd.f32 %v1417, %v1387
      %v1419 = vadd.f32 %v1418, %v1388
      %v1420 = vadd.f32 %v1419, %v1389
      %v1421 = vadd.f32 %v1420, %v1390
      %v1422 = vadd.f32 %v1421, %v1391
      %v1423 = vadd.f32 %v1422, %v1392
      %v1424 = vadd.f32 %v1423, %v1393
      %v1425 = vrot.slane %v1424, 4
      %v1426 = vadd.f32 %v1424, %v1425
      %v1427 = vrot.slane %v1426, 2
      %v1428 = vadd.f32 %v1426, %v1427
      %v1429 = vrot.slane %v1428, 1
      %v1430 = vadd.f32 %v1428, %v1429
      %vm1431 = vcmask 1040384
      %v1432 = vsel %vm1431, %v1328, %v1430
      %1433 = vst [vmem:[%s320] sm:$0x3] %v1432
      %s1434 = smul.u32 32, %s22
      %p1435 = scmp.lt.s32.totalorder %s21, 1
      %s1436 = scalar_select %p1435, %s21, 1
      %p1437 = scmp.lt.s32.totalorder %s1434, 127
      %s1438 = scalar_select %p1437, %s1434, 127
      %s1439 = smul.addr %s1436, 128
      %s1440 = sadd.s32 %s1438, %s1439
      %s1441 = smul.addr %s1440, 4
      %s1442 = scalar_lea.vmem %s4, %s1441
      %p1443 = scmp.lt.s32.totalorder %s21, 1
      %s1444 = scalar_select %p1443, %s21, 1
      %p1445 = scmp.lt.s32.totalorder %s22, 3
      %s1446 = scalar_select %p1445, %s22, 3
      %s1447 = smul.addr %s1444, 4
      %s1448 = sadd.s32 %s1446, %s1447
      %s1449 = smul.addr %s1448, 2
      %s1450 = scalar_lea.vmem %s5, %s1449
      // Predicated region
      $region37: #{block_v0_forward.6} parent=35 // pred_check
        %p1451 = pneg %p147
      $region38: #{block_v0_forward.6} parent=35 // pred_check_branch
        %1453 = sbr.rel (%p1451) target = $region40
      $region39: #{block_v0_forward.6} parent=35 // pred_region
        %s1454 = smul.u32 32, %s22
      $region40: #{block_v0_forward.6} parent=35 // pred_fallthru
        _
      // Predicated region
      $region41: #{block_v0_forward.6} parent=35 // pred_check
        %p1455 = pneg %p175
      $region42: #{block_v0_forward.6} parent=35 // pred_check_branch
        %1457 = sbr.rel (%p1455) target = $region44
      $region43: #{block_v0_forward.6} parent=35 // pred_region
        _
      $region44: #{block_v0_forward.6} parent=35 // pred_fallthru
        _
    $region36: #{block_v0_forward.6} parent=5 // pred_fallthru
      _
    %p1458 = scmp.le.s32.totalorder 2, %s12
    // Predicated region
    $region45: #{block_v0_forward.6} parent=5 // pred_check
      %p1459 = pneg %p1458
    $region46: #{block_v0_forward.6} parent=5 // pred_check_branch
      %1461 = sbr.rel (%p1459) target = $region48
    $region47: #{block_v0_forward.6} parent=5 // pred_region
      %s1462 = ssub.s32 %s12, 2
      // Predicated region
      $region49: #{block_v0_forward.6} parent=47 // pred_check
        %p1463 = pneg %p153
      $region50: #{block_v0_forward.6} parent=47 // pred_check_branch
        %1465 = sbr.rel (%p1463) target = $region52
      $region51: #{block_v0_forward.6} parent=47 // pred_region
        %s1466 = smul.u32 32, %s24
        %p1467 = scmp.lt.s32.totalorder %s23, 1
        %s1468 = scalar_select %p1467, %s23, 1
        %p1469 = scmp.lt.s32.totalorder %s1466, 127
        %s1470 = scalar_select %p1469, %s1466, 127
        %s1471 = smul.addr %s1468, 128
        %s1472 = sadd.s32 %s1470, %s1471
        %s1473 = smul.addr %s1472, 4
        %s1474 = scalar_lea.vmem %s4, %s1473
      $region52: #{block_v0_forward.6} parent=47 // pred_fallthru
        _
      // Predicated region
      $region53: #{block_v0_forward.6} parent=47 // pred_check
        %p1475 = pneg %p181
      $region54: #{block_v0_forward.6} parent=47 // pred_check_branch
        %1477 = sbr.rel (%p1475) target = $region56
      $region55: #{block_v0_forward.6} parent=47 // pred_region
        %p1478 = scmp.lt.s32.totalorder %s23, 1
        %s1479 = scalar_select %p1478, %s23, 1
        %p1480 = scmp.lt.s32.totalorder %s24, 3
        %s1481 = scalar_select %p1480, %s24, 3
        %s1482 = smul.addr %s1479, 4
        %s1483 = sadd.s32 %s1481, %s1482
        %s1484 = smul.addr %s1483, 2
        %s1485 = scalar_lea.vmem %s5, %s1484
      $region56: #{block_v0_forward.6} parent=47 // pred_fallthru
        _
    $region48: #{block_v0_forward.6} parent=5 // pred_fallthru
      _
  $region6: #{block_v0_forward.6} parent=0 // loop_footer
    %s16 = sadd.s32 1, %s12
  $region7: #{block_v0_forward.6} parent=0 // loop_footer_branch
    %11 = sbr.rel target = $region3
  $region8: #{block_v0_forward.6} parent=0 // loop_exit
    _

// kernel: block_v0_forward.7
$region0: #{block_v0_forward.7}
  #allocation0 [shape = 'u32[]', space=smem, size = 0x4, offset = 0x4, fixed_abs, tag = 'smem constant byte address 0x4 - core index']
  #allocation1 [shape = 'u32[144,128]{1,0:T(1,128)}', space=vmem, size = 0x12000, scoped, tag = 'internal scratch']
  %s0 = inlined_call_operand.vmem [shape: bf16[2,1024,128], index: 0, kind: input, shape index: {}]
  %s1 = inlined_call_operand.vmem [shape: f32[2,2,128], index: 1, kind: input, shape index: {}]
  %s2 = inlined_call_operand.vmem [shape: bf16[128,256], index: 2, kind: input, shape index: {}]
  %s3 = inlined_call_operand.vmem [shape: f32[1,256], index: 3, kind: input, shape index: {}]
  %s4 = inlined_call_operand.vmem [shape: bf16[256,128], index: 4, kind: input, shape index: {}]
  %s5 = inlined_call_operand.vmem [shape: f32[1,128], index: 5, kind: input, shape index: {}]
  %s6 = inlined_call_operand.vmem [shape: f32[2,1024,3], index: 6, kind: output, shape index: {0}]
  %s7 = inlined_call_operand.vmem [shape: bf16[2,1024,128], index: 7, kind: output, shape index: {1}]
  %s8 = inlined_call_operand.vmem [shape: f32[2,4,2,128], index: 8, kind: output, shape index: {2}]
  %9 = xla_tuple %s6, %s7, %s8
  %s10 = sld [smem:[#allocation0]]
  $region73: #{block_v0_forward.7} parent=0
    _
  %s12 = ssub.s32 1, %s10
  %s13 = scalar_select 0, %s12, %s10
  loop: start=0, step=1, limit=10
  $region2: #{block_v0_forward.7} parent=0 // loop_pre_header
    _
  $region3: #{block_v0_forward.7} parent=0 // loop_header
    %s15 = sphi 0, %s19
    %p16 = scmp.ge.s32.totalorder %s15, 10
    %s22 = sphi 0, %s34
    %s23 = sphi 0, %s30
    %s24 = sphi 0, %s22
    %s25 = sphi 0, %s23
    %s26 = sphi 0, %s24
    %s27 = sphi 0, %s25
    %s39 = sphi 0, %s41
    %s42 = sphi 0, %s39
    %s43 = sphi 0, %s42
    %s59 = sphi 0, %s43
    %s65 = sphi 0, %s67
    %s68 = sphi 0, %s65
    %s69 = sphi 0, %s68
    %s85 = sphi 0, %s69
    %s89 = sphi 0, %s89
    %s91 = sphi 0, %s89
    %s92 = sphi 0, %s91
    %s106 = sphi 0, %s92
    %s110 = sphi 0, %s110
    %s112 = sphi 0, %s110
    %s113 = sphi 0, %s112
    %s127 = sphi 0, %s113
    %s131 = sphi 0, %s131
    %s133 = sphi 0, %s131
    %s134 = sphi 0, %s133
    %s148 = sphi 0, %s134
    %s152 = sphi 0, %s152
    %s154 = sphi 0, %s152
    %s155 = sphi 0, %s154
    %s169 = sphi 0, %s155
    %s177 = sphi 0, %s179
    %s180 = sphi 0, %s177
    %s181 = sphi 0, %s180
    %s197 = sphi 0, %s181
    %s205 = sphi 0, %s207
    %s208 = sphi 0, %s205
    %s209 = sphi 0, %s208
    %s225 = sphi 0, %s209
    %s233 = sphi 0, %s235
    %s236 = sphi 0, %s233
    %s237 = sphi 0, %s236
    %s253 = sphi 0, %s237
  $region4: #{block_v0_forward.7} parent=0 // loop_header_branch
    %18 = sbr.rel (%p16) target = $region8
  $region5: #{block_v0_forward.7} parent=0 // loop_body
    %s20 = ssub.s32 %s15, 1
    %s21 = ssub.s32 %s15, 2
    %s28 = sadd.s32 1, %s23
    %p29 = scmp.ge.s32.totalorder %s28, 4
    %s30 = scalar_select %p29, 0, %s28
    %s31 = sadd.s32 1, %s22
    %s32 = scalar_select %p29, %s31, %s22
    %p33 = scmp.ge.s32.totalorder %s32, 2
    %s34 = scalar_select %p33, 0, %s32
    %s35 = ssub.s32 %s22, %s34
    %s36 = ssub.s32 %s23, %s30
    %s37 = sor.u32 %s35, %s36
    %p38 = scmp.eq.s32.totalorder %s37, 0
    %s40 = sadd.s32 %s39, 1
    %s41 = scalar_select %p38, %s39, %s40
    %p44 = pneg %p38
    %p45 = scmp.eq.s32.totalorder %s15, 7
    %p46 = por %p44, %p45
    %p47 = scmp.ne.s32.totalorder %s39, %s42
    %p48 = scmp.eq.s32.totalorder %s15, 0
    %p49 = por %p47, %p48
    %p50 = scmp.ne.s32.totalorder %s39, %s42
    %p51 = scmp.eq.s32.totalorder %s20, 7
    %p52 = por %p50, %p51
    %p53 = scmp.ne.s32.totalorder %s42, %s43
    %p54 = scmp.eq.s32.totalorder %s20, 0
    %p55 = por %p53, %p54
    %p56 = scmp.ne.s32.totalorder %s42, %s43
    %p57 = scmp.eq.s32.totalorder %s21, 7
    %p58 = por %p56, %p57
    %p60 = scmp.ne.s32.totalorder %s43, %s59
    %p61 = scmp.eq.s32.totalorder %s21, 0
    %p62 = por %p60, %p61
    %s63 = ssub.s32 %s22, %s34
    %p64 = scmp.eq.s32.totalorder %s63, 0
    %s66 = sadd.s32 %s65, 1
    %s67 = scalar_select %p64, %s65, %s66
    %p70 = pneg %p64
    %p71 = scmp.eq.s32.totalorder %s15, 7
    %p72 = por %p70, %p71
    %p73 = scmp.ne.s32.totalorder %s65, %s68
    %p74 = scmp.eq.s32.totalorder %s15, 0
    %p75 = por %p73, %p74
    %p76 = scmp.ne.s32.totalorder %s65, %s68
    %p77 = scmp.eq.s32.totalorder %s20, 7
    %p78 = por %p76, %p77
    %p79 = scmp.ne.s32.totalorder %s68, %s69
    %p80 = scmp.eq.s32.totalorder %s20, 0
    %p81 = por %p79, %p80
    %p82 = scmp.ne.s32.totalorder %s68, %s69
    %p83 = scmp.eq.s32.totalorder %s21, 7
    %p84 = por %p82, %p83
    %p86 = scmp.ne.s32.totalorder %s69, %s85
    %p87 = scmp.eq.s32.totalorder %s21, 0
    %p88 = por %p86, %p87
    %s90 = sadd.s32 %s89, 1
    %p93 = scmp.eq.s32.totalorder %s15, 7
    %p94 = scmp.ne.s32.totalorder %s89, %s91
    %p95 = scmp.eq.s32.totalorder %s15, 0
    %p96 = por %p94, %p95
    %p97 = scmp.ne.s32.totalorder %s89, %s91
    %p98 = scmp.eq.s32.totalorder %s20, 7
    %p99 = por %p97, %p98
    %p100 = scmp.ne.s32.totalorder %s91, %s92
    %p101 = scmp.eq.s32.totalorder %s20, 0
    %p102 = por %p100, %p101
    %p103 = scmp.ne.s32.totalorder %s91, %s92
    %p104 = scmp.eq.s32.totalorder %s21, 7
    %p105 = por %p103, %p104
    %p107 = scmp.ne.s32.totalorder %s92, %s106
    %p108 = scmp.eq.s32.totalorder %s21, 0
    %p109 = por %p107, %p108
    %s111 = sadd.s32 %s110, 1
    %p114 = scmp.eq.s32.totalorder %s15, 7
    %p115 = scmp.ne.s32.totalorder %s110, %s112
    %p116 = scmp.eq.s32.totalorder %s15, 0
    %p117 = por %p115, %p116
    %p118 = scmp.ne.s32.totalorder %s110, %s112
    %p119 = scmp.eq.s32.totalorder %s20, 7
    %p120 = por %p118, %p119
    %p121 = scmp.ne.s32.totalorder %s112, %s113
    %p122 = scmp.eq.s32.totalorder %s20, 0
    %p123 = por %p121, %p122
    %p124 = scmp.ne.s32.totalorder %s112, %s113
    %p125 = scmp.eq.s32.totalorder %s21, 7
    %p126 = por %p124, %p125
    %p128 = scmp.ne.s32.totalorder %s113, %s127
    %p129 = scmp.eq.s32.totalorder %s21, 0
    %p130 = por %p128, %p129
    %s132 = sadd.s32 %s131, 1
    %p135 = scmp.eq.s32.totalorder %s15, 7
    %p136 = scmp.ne.s32.totalorder %s131, %s133
    %p137 = scmp.eq.s32.totalorder %s15, 0
    %p138 = por %p136, %p137
    %p139 = scmp.ne.s32.totalorder %s131, %s133
    %p140 = scmp.eq.s32.totalorder %s20, 7
    %p141 = por %p139, %p140
    %p142 = scmp.ne.s32.totalorder %s133, %s134
    %p143 = scmp.eq.s32.totalorder %s20, 0
    %p144 = por %p142, %p143
    %p145 = scmp.ne.s32.totalorder %s133, %s134
    %p146 = scmp.eq.s32.totalorder %s21, 7
    %p147 = por %p145, %p146
    %p149 = scmp.ne.s32.totalorder %s134, %s148
    %p150 = scmp.eq.s32.totalorder %s21, 0
    %p151 = por %p149, %p150
    %s153 = sadd.s32 %s152, 1
    %p156 = scmp.eq.s32.totalorder %s15, 7
    %p157 = scmp.ne.s32.totalorder %s152, %s154
    %p158 = scmp.eq.s32.totalorder %s15, 0
    %p159 = por %p157, %p158
    %p160 = scmp.ne.s32.totalorder %s152, %s154
    %p161 = scmp.eq.s32.totalorder %s20, 7
    %p162 = por %p160, %p161
    %p163 = scmp.ne.s32.totalorder %s154, %s155
    %p164 = scmp.eq.s32.totalorder %s20, 0
    %p165 = por %p163, %p164
    %p166 = scmp.ne.s32.totalorder %s154, %s155
    %p167 = scmp.eq.s32.totalorder %s21, 7
    %p168 = por %p166, %p167
    %p170 = scmp.ne.s32.totalorder %s155, %s169
    %p171 = scmp.eq.s32.totalorder %s21, 0
    %p172 = por %p170, %p171
    %s173 = ssub.s32 %s22, %s34
    %s174 = ssub.s32 %s23, %s30
    %s175 = sor.u32 %s173, %s174
    %p176 = scmp.eq.s32.totalorder %s175, 0
    %s178 = sadd.s32 %s177, 1
    %s179 = scalar_select %p176, %s177, %s178
    %p182 = pneg %p176
    %p183 = scmp.eq.s32.totalorder %s15, 7
    %p184 = por %p182, %p183
    %p185 = scmp.ne.s32.totalorder %s177, %s180
    %p186 = scmp.eq.s32.totalorder %s15, 0
    %p187 = por %p185, %p186
    %p188 = scmp.ne.s32.totalorder %s177, %s180
    %p189 = scmp.eq.s32.totalorder %s20, 7
    %p190 = por %p188, %p189
    %p191 = scmp.ne.s32.totalorder %s180, %s181
    %p192 = scmp.eq.s32.totalorder %s20, 0
    %p193 = por %p191, %p192
    %p194 = scmp.ne.s32.totalorder %s180, %s181
    %p195 = scmp.eq.s32.totalorder %s21, 7
    %p196 = por %p194, %p195
    %p198 = scmp.ne.s32.totalorder %s181, %s197
    %p199 = scmp.eq.s32.totalorder %s21, 0
    %p200 = por %p198, %p199
    %s201 = ssub.s32 %s22, %s34
    %s202 = ssub.s32 %s23, %s30
    %s203 = sor.u32 %s201, %s202
    %p204 = scmp.eq.s32.totalorder %s203, 0
    %s206 = sadd.s32 %s205, 1
    %s207 = scalar_select %p204, %s205, %s206
    %p210 = pneg %p204
    %p211 = scmp.eq.s32.totalorder %s15, 7
    %p212 = por %p210, %p211
    %p213 = scmp.ne.s32.totalorder %s205, %s208
    %p214 = scmp.eq.s32.totalorder %s15, 0
    %p215 = por %p213, %p214
    %p216 = scmp.ne.s32.totalorder %s205, %s208
    %p217 = scmp.eq.s32.totalorder %s20, 7
    %p218 = por %p216, %p217
    %p219 = scmp.ne.s32.totalorder %s208, %s209
    %p220 = scmp.eq.s32.totalorder %s20, 0
    %p221 = por %p219, %p220
    %p222 = scmp.ne.s32.totalorder %s208, %s209
    %p223 = scmp.eq.s32.totalorder %s21, 7
    %p224 = por %p222, %p223
    %p226 = scmp.ne.s32.totalorder %s209, %s225
    %p227 = scmp.eq.s32.totalorder %s21, 0
    %p228 = por %p226, %p227
    %s229 = ssub.s32 %s22, %s34
    %s230 = ssub.s32 %s23, %s30
    %s231 = sor.u32 %s229, %s230
    %p232 = scmp.eq.s32.totalorder %s231, 0
    %s234 = sadd.s32 %s233, 1
    %s235 = scalar_select %p232, %s233, %s234
    %p238 = pneg %p232
    %p239 = scmp.eq.s32.totalorder %s15, 7
    %p240 = por %p238, %p239
    %p241 = scmp.ne.s32.totalorder %s233, %s236
    %p242 = scmp.eq.s32.totalorder %s15, 0
    %p243 = por %p241, %p242
    %p244 = scmp.ne.s32.totalorder %s233, %s236
    %p245 = scmp.eq.s32.totalorder %s20, 7
    %p246 = por %p244, %p245
    %p247 = scmp.ne.s32.totalorder %s236, %s237
    %p248 = scmp.eq.s32.totalorder %s20, 0
    %p249 = por %p247, %p248
    %p250 = scmp.ne.s32.totalorder %s236, %s237
    %p251 = scmp.eq.s32.totalorder %s21, 7
    %p252 = por %p250, %p251
    %p254 = scmp.ne.s32.totalorder %s237, %s253
    %p255 = scmp.eq.s32.totalorder %s21, 0
    %p256 = por %p254, %p255
    %p257 = scmp.le.s32.totalorder 1, %s15
    %p258 = scmp.lt.s32.totalorder %s15, 9
    %p259 = pnand %p257, %p258
    %p260 = pneg %p259
    // Predicated region
    $region9: #{block_v0_forward.7} parent=5 // pred_check
      _
    $region10: #{block_v0_forward.7} parent=5 // pred_check_branch
      %262 = sbr.rel (%p259) target = $region12
    $region11: #{block_v0_forward.7} parent=5 // pred_region
      %s263 = ssub.s32 %s15, 1
      // Predicated region
      $region13: #{block_v0_forward.7} parent=11 // pred_check
        %p264 = pneg %p102
      $region14: #{block_v0_forward.7} parent=11 // pred_check_branch
        %266 = sbr.rel (%p264) target = $region16
      $region15: #{block_v0_forward.7} parent=11 // pred_region
        _
      $region16: #{block_v0_forward.7} parent=11 // pred_fallthru
        _
      // Predicated region
      $region17: #{block_v0_forward.7} parent=11 // pred_check
        %p267 = pneg %p123
      $region18: #{block_v0_forward.7} parent=11 // pred_check_branch
        %269 = sbr.rel (%p267) target = $region20
      $region19: #{block_v0_forward.7} parent=11 // pred_region
        _
      $region20: #{block_v0_forward.7} parent=11 // pred_fallthru
        _
      // Predicated region
      $region21: #{block_v0_forward.7} parent=11 // pred_check
        %p270 = pneg %p144
      $region22: #{block_v0_forward.7} parent=11 // pred_check_branch
        %272 = sbr.rel (%p270) target = $region24
      $region23: #{block_v0_forward.7} parent=11 // pred_region
        _
      $region24: #{block_v0_forward.7} parent=11 // pred_fallthru
        _
      // Predicated region
      $region25: #{block_v0_forward.7} parent=11 // pred_check
        %p273 = pneg %p165
      $region26: #{block_v0_forward.7} parent=11 // pred_check_branch
        %275 = sbr.rel (%p273) target = $region28
      $region27: #{block_v0_forward.7} parent=11 // pred_region
        _
      $region28: #{block_v0_forward.7} parent=11 // pred_fallthru
        _
    $region12: #{block_v0_forward.7} parent=5 // pred_fallthru
      _
    %p276 = scmp.lt.s32.totalorder %s15, 8
    // Predicated region
    $region29: #{block_v0_forward.7} parent=5 // pred_check
      %p277 = pneg %p276
    $region30: #{block_v0_forward.7} parent=5 // pred_check_branch
      %279 = sbr.rel (%p277) target = $region32
    $region31: #{block_v0_forward.7} parent=5 // pred_region
      // Predicated region
      $region33: #{block_v0_forward.7} parent=31 // pred_check
        %p280 = pneg %p49
      $region34: #{block_v0_forward.7} parent=31 // pred_check_branch
        %282 = sbr.rel (%p280) target = $region36
      $region35: #{block_v0_forward.7} parent=31 // pred_region
        %s283 = smul.u32 32, %s23
        %p284 = scmp.lt.s32.totalorder %s22, 1
        %s285 = scalar_select %p284, %s22, 1
        %p286 = scmp.lt.s32.totalorder %s283, 127
        %s287 = scalar_select %p286, %s283, 127
        %s288 = smul.addr %s285, 128
        %s289 = sadd.s32 %s287, %s288
        %s290 = smul.addr %s289, 4
        %s291 = scalar_lea.vmem %s0, %s290
        %s292 = smul.u32 32, %s23
      $region36: #{block_v0_forward.7} parent=31 // pred_fallthru
        _
      // Predicated region
      $region37: #{block_v0_forward.7} parent=31 // pred_check
        %p293 = pneg %p75
      $region38: #{block_v0_forward.7} parent=31 // pred_check_branch
        %295 = sbr.rel (%p293) target = $region40
      $region39: #{block_v0_forward.7} parent=31 // pred_region
        %p296 = scmp.lt.s32.totalorder %s22, 1
        %s297 = scalar_select %p296, %s22, 1
        %s298 = smul.addr %s297, 2
        %s299 = scalar_lea.vmem %s1, %s298
      $region40: #{block_v0_forward.7} parent=31 // pred_fallthru
        _
    $region32: #{block_v0_forward.7} parent=5 // pred_fallthru
      _
    %p300 = scmp.le.s32.totalorder 1, %s15
    %p301 = scmp.lt.s32.totalorder %s15, 9
    %p302 = pnand %p300, %p301
    %p303 = pneg %p302
    // Predicated region
    $region41: #{block_v0_forward.7} parent=5 // pred_check
      _
    $region42: #{block_v0_forward.7} parent=5 // pred_check_branch
      %305 = sbr.rel (%p302) target = $region44
    $region43: #{block_v0_forward.7} parent=5 // pred_region
      %s306 = ssub.s32 %s15, 1
      %s307 = smul.u32 32, %s25
      %p308 = scmp.lt.s32.totalorder %s24, 1
      %s309 = scalar_select %p308, %s24, 1
      %p310 = scmp.lt.s32.totalorder %s307, 127
      %s311 = scalar_select %p310, %s307, 127
      %s312 = smul.addr %s309, 128
      %s313 = sadd.s32 %s311, %s312
      %s314 = smul.addr %s313, 4
      %s315 = scalar_lea.vmem %s0, %s314
      %p316 = pneg %p55
      %p317 = pneg %p52
      %p318 = scmp.lt.s32.totalorder %s24, 1
      %s319 = scalar_select %p318, %s24, 1
      %s320 = smul.addr %s319, 2
      %s321 = scalar_lea.vmem %s1, %s320
      %p322 = pneg %p81
      %p323 = pneg %p78
      %p324 = pneg %p102
      %p325 = pneg %p99
      %p326 = pneg %p123
      %p327 = pneg %p120
      %p328 = pneg %p144
      %p329 = pneg %p141
      %p330 = pneg %p165
      %p331 = pneg %p162
      %p332 = pneg %p193
      %p333 = pneg %p190
      %s334 = smul.u32 32, %s25
      %p335 = scmp.lt.s32.totalorder %s24, 1
      %s336 = scalar_select %p335, %s24, 1
      %p337 = scmp.lt.s32.totalorder %s334, 127
      %s338 = scalar_select %p337, %s334, 127
      %s339 = smul.addr %s336, 128
      %s340 = sadd.s32 %s338, %s339
      %s341 = smul.addr %s340, 8
      %s342 = scalar_lea.vmem %s6, %s341
      %p343 = pneg %p221
      %p344 = pneg %p218
      %s345 = smul.u32 32, %s25
      %p346 = scmp.lt.s32.totalorder %s24, 1
      %s347 = scalar_select %p346, %s24, 1
      %p348 = scmp.lt.s32.totalorder %s345, 127
      %s349 = scalar_select %p348, %s345, 127
      %s350 = smul.addr %s347, 128
      %s351 = sadd.s32 %s349, %s350
      %s352 = smul.addr %s351, 4
      %s353 = scalar_lea.vmem %s7, %s352
      %p354 = pneg %p249
      %p355 = pneg %p246
      %p356 = scmp.lt.s32.totalorder %s24, 1
      %s357 = scalar_select %p356, %s24, 1
      %p358 = scmp.lt.s32.totalorder %s25, 3
      %s359 = scalar_select %p358, %s25, 3
      %s360 = smul.addr %s357, 4
      %s361 = sadd.s32 %s359, %s360
      %s362 = smul.addr %s361, 2
      %s363 = scalar_lea.vmem %s8, %s362
      %s364 = smul.u32 32, %s25
      %p365 = scmp.lt.s32.totalorder %s24, 1
      %s366 = scalar_select %p365, %s24, 1
      %p367 = scmp.lt.s32.totalorder %s364, 127
      %s368 = scalar_select %p367, %s364, 127
      %s369 = smul.addr %s366, 128
      %s370 = sadd.s32 %s368, %s369
      %s371 = smul.addr %s370, 4
      %s372 = scalar_lea.vmem %s0, %s371
      %s373 = smul.u32 32, %s25
      %p374 = scmp.lt.s32.totalorder %s24, 1
      %s375 = scalar_select %p374, %s24, 1
      %s376 = smul.addr %s375, 2
      %s377 = scalar_lea.vmem %s1, %s376
      %s378 = smul.u32 32, %s25
      %p379 = scmp.lt.s32.totalorder %s24, 1
      %s380 = scalar_select %p379, %s24, 1
      %p381 = scmp.lt.s32.totalorder %s378, 127
      %s382 = scalar_select %p381, %s378, 127
      %s383 = smul.addr %s380, 128
      %s384 = sadd.s32 %s382, %s383
      %s385 = smul.addr %s384, 8
      %s386 = scalar_lea.vmem %s6, %s385
      %s387 = smul.u32 32, %s25
      %s388 = smul.u32 32, %s25
      %p389 = scmp.lt.s32.totalorder %s24, 1
      %s390 = scalar_select %p389, %s24, 1
      %p391 = scmp.lt.s32.totalorder %s388, 127
      %s392 = scalar_select %p391, %s388, 127
      %s393 = smul.addr %s390, 128
      %s394 = sadd.s32 %s392, %s393
      %s395 = smul.addr %s394, 4
      %s396 = scalar_lea.vmem %s7, %s395
      %s397 = smul.u32 32, %s25
      %p398 = scmp.lt.s32.totalorder %s24, 1
      %s399 = scalar_select %p398, %s24, 1
      %p400 = scmp.lt.s32.totalorder %s25, 3
      %s401 = scalar_select %p400, %s25, 3
      %s402 = smul.addr %s399, 4
      %s403 = sadd.s32 %s401, %s402
      %s404 = smul.addr %s403, 2
      %s405 = scalar_lea.vmem %s8, %s404
      %v407 = vld [vmem:[%s372] sm:$0xf]
      %v408 = vld [vmem:[%s372 + $0x4] sm:$0xf]
      %v409 = vld [vmem:[%s372 + $0x8] sm:$0xf]
      %v410 = vld [vmem:[%s372 + $0xc] sm:$0xf]
      %v411 = vld [vmem:[%s372 + $0x10] sm:$0xf]
      %v412 = vld [vmem:[%s372 + $0x14] sm:$0xf]
      %v413 = vld [vmem:[%s372 + $0x18] sm:$0xf]
      %v414 = vld [vmem:[%s372 + $0x1c] sm:$0xf]
      %v415 = vld [vmem:[%s372 + $0x20] sm:$0xf]
      %v416 = vld [vmem:[%s372 + $0x24] sm:$0xf]
      %v417 = vld [vmem:[%s372 + $0x28] sm:$0xf]
      %v418 = vld [vmem:[%s372 + $0x2c] sm:$0xf]
      %v419 = vld [vmem:[%s372 + $0x30] sm:$0xf]
      %v420 = vld [vmem:[%s372 + $0x34] sm:$0xf]
      %v421 = vld [vmem:[%s372 + $0x38] sm:$0xf]
      %v422 = vld [vmem:[%s372 + $0x3c] sm:$0xf]
      %v423 = vld [vmem:[%s372 + $0x40] sm:$0xf]
      %v424 = vld [vmem:[%s372 + $0x44] sm:$0xf]
      %v425 = vld [vmem:[%s372 + $0x48] sm:$0xf]
      %v426 = vld [vmem:[%s372 + $0x4c] sm:$0xf]
      %v427 = vld [vmem:[%s372 + $0x50] sm:$0xf]
      %v428 = vld [vmem:[%s372 + $0x54] sm:$0xf]
      %v429 = vld [vmem:[%s372 + $0x58] sm:$0xf]
      %v430 = vld [vmem:[%s372 + $0x5c] sm:$0xf]
      %v431 = vld [vmem:[%s372 + $0x60] sm:$0xf]
      %v432 = vld [vmem:[%s372 + $0x64] sm:$0xf]
      %v433 = vld [vmem:[%s372 + $0x68] sm:$0xf]
      %v434 = vld [vmem:[%s372 + $0x6c] sm:$0xf]
      %v435 = vld [vmem:[%s372 + $0x70] sm:$0xf]
      %v436 = vld [vmem:[%s372 + $0x74] sm:$0xf]
      %v437 = vld [vmem:[%s372 + $0x78] sm:$0xf]
      %v438 = vld [vmem:[%s372 + $0x7c] sm:$0xf]
      %v439 = vld [vmem:[%s377] sm:$0x3]
      %v440 = vunpack.c.l.bf16 %v407
      %v441 = vunpack.c.l.bf16 %v408
      %v442 = vunpack.c.l.bf16 %v409
      %v443 = vunpack.c.l.bf16 %v410
      %v444 = vunpack.c.l.bf16 %v411
      %v445 = vunpack.c.l.bf16 %v412
      %v446 = vunpack.c.l.bf16 %v413
      %v447 = vunpack.c.l.bf16 %v414
      %v448 = vunpack.c.l.bf16 %v415
      %v449 = vunpack.c.l.bf16 %v416
      %v450 = vunpack.c.l.bf16 %v417
      %v451 = vunpack.c.l.bf16 %v418
      %v452 = vunpack.c.l.bf16 %v419
      %v453 = vunpack.c.l.bf16 %v420
      %v454 = vunpack.c.l.bf16 %v421
      %v455 = vunpack.c.l.bf16 %v422
      %v456 = vunpack.c.l.bf16 %v423
      %v457 = vunpack.c.l.bf16 %v424
      %v458 = vunpack.c.l.bf16 %v425
      %v459 = vunpack.c.l.bf16 %v426
      %v460 = vunpack.c.l.bf16 %v427
      %v461 = vunpack.c.l.bf16 %v428
      %v462 = vunpack.c.l.bf16 %v429
      %v463 = vunpack.c.l.bf16 %v430
      %v464 = vunpack.c.l.bf16 %v431
      %v465 = vunpack.c.l.bf16 %v432
      %v466 = vunpack.c.l.bf16 %v433
      %v467 = vunpack.c.l.bf16 %v434
      %v468 = vunpack.c.l.bf16 %v435
      %v469 = vunpack.c.l.bf16 %v436
      %v470 = vunpack.c.l.bf16 %v437
      %v471 = vunpack.c.l.bf16 %v438
      %v472 = vlaneseq
      %v473 = vshrl.u32 %v472, 7
      %v474 = vsub.s32 0, %v473
      %v475 = vrot.slane %v439, %v474
      %v476 = vmul.f32 %v440, %v475
      %v477 = vmul.f32 %v441, %v475
      %v478 = vmul.f32 %v442, %v475
      %v479 = vmul.f32 %v443, %v475
      %v480 = vmul.f32 %v444, %v475
      %v481 = vmul.f32 %v445, %v475
      %v482 = vmul.f32 %v446, %v475
      %v483 = vmul.f32 %v447, %v475
      %v484 = vmul.f32 %v448, %v475
      %v485 = vmul.f32 %v449, %v475
      %v486 = vmul.f32 %v450, %v475
      %v487 = vmul.f32 %v451, %v475
      %v488 = vmul.f32 %v452, %v475
      %v489 = vmul.f32 %v453, %v475
      %v490 = vmul.f32 %v454, %v475
      %v491 = vmul.f32 %v455, %v475
      %v492 = vmul.f32 %v456, %v475
      %v493 = vmul.f32 %v457, %v475
      %v494 = vmul.f32 %v458, %v475
      %v495 = vmul.f32 %v459, %v475
      %v496 = vmul.f32 %v460, %v475
      %v497 = vmul.f32 %v461, %v475
      %v498 = vmul.f32 %v462, %v475
      %v499 = vmul.f32 %v463, %v475
      %v500 = vmul.f32 %v464, %v475
      %v501 = vmul.f32 %v465, %v475
      %v502 = vmul.f32 %v466, %v475
      %v503 = vmul.f32 %v467, %v475
      %v504 = vmul.f32 %v468, %v475
      %v505 = vmul.f32 %v469, %v475
      %v506 = vmul.f32 %v470, %v475
      %v507 = vmul.f32 %v471, %v475
      %v508 = vlaneseq
      %v509 = vshrl.u32 %v508, 7
      %v510 = vsub.s32 1, %v509
      %v511 = vrot.slane %v439, %v510
      %v512 = vadd.f32 %v476, %v511
      %v513 = vadd.f32 %v477, %v511
      %v514 = vadd.f32 %v478, %v511
      %v515 = vadd.f32 %v479, %v511
      %v516 = vadd.f32 %v480, %v511
      %v517 = vadd.f32 %v481, %v511
      %v518 = vadd.f32 %v482, %v511
      %v519 = vadd.f32 %v483, %v511
      %v520 = vadd.f32 %v484, %v511
      %v521 = vadd.f32 %v485, %v511
      %v522 = vadd.f32 %v486, %v511
      %v523 = vadd.f32 %v487, %v511
      %v524 = vadd.f32 %v488, %v511
      %v525 = vadd.f32 %v489, %v511
      %v526 = vadd.f32 %v490, %v511
      %v527 = vadd.f32 %v491, %v511
      %v528 = vadd.f32 %v492, %v511
      %v529 = vadd.f32 %v493, %v511
      %v530 = vadd.f32 %v494, %v511
      %v531 = vadd.f32 %v495, %v511
      %v532 = vadd.f32 %v496, %v511
      %v533 = vadd.f32 %v497, %v511
      %v534 = vadd.f32 %v498, %v511
      %v535 = vadd.f32 %v499, %v511
      %v536 = vadd.f32 %v500, %v511
      %v537 = vadd.f32 %v501, %v511
      %v538 = vadd.f32 %v502, %v511
      %v539 = vadd.f32 %v503, %v511
      %v540 = vadd.f32 %v504, %v511
      %v541 = vadd.f32 %v505, %v511
      %v542 = vadd.f32 %v506, %v511
      %v543 = vadd.f32 %v507, %v511
      %v544 = vpack.c.bf16 %v513, %v512
      %v545 = vpack.c.bf16 %v515, %v514
      %v546 = vpack.c.bf16 %v517, %v516
      %v547 = vpack.c.bf16 %v519, %v518
      %v548 = vpack.c.bf16 %v521, %v520
      %v549 = vpack.c.bf16 %v523, %v522
      %v550 = vpack.c.bf16 %v525, %v524
      %v551 = vpack.c.bf16 %v527, %v526
      %v552 = vpack.c.bf16 %v529, %v528
      %v553 = vpack.c.bf16 %v531, %v530
      %v554 = vpack.c.bf16 %v533, %v532
      %v555 = vpack.c.bf16 %v535, %v534
      %v556 = vpack.c.bf16 %v537, %v536
      %v557 = vpack.c.bf16 %v539, %v538
      %v558 = vpack.c.bf16 %v541, %v540
      %v559 = vpack.c.bf16 %v543, %v542
      %v560 = vld [vmem:[%s2] sm:$0xff]
      %v561 = vld [vmem:[%s2 + $0x8] sm:$0xff]
      %v562 = vld [vmem:[%s2 + $0x10] sm:$0xff]
      %v563 = vld [vmem:[%s2 + $0x18] sm:$0xff]
      %v564 = vld [vmem:[%s2 + $0x20] sm:$0xff]
      %v565 = vld [vmem:[%s2 + $0x28] sm:$0xff]
      %v566 = vld [vmem:[%s2 + $0x30] sm:$0xff]
      %v567 = vld [vmem:[%s2 + $0x38] sm:$0xff]
      %v568 = vld [vmem:[%s2 + $0x40] sm:$0xff]
      %v569 = vld [vmem:[%s2 + $0x48] sm:$0xff]
      %v570 = vld [vmem:[%s2 + $0x50] sm:$0xff]
      %v571 = vld [vmem:[%s2 + $0x58] sm:$0xff]
      %v572 = vld [vmem:[%s2 + $0x60] sm:$0xff]
      %v573 = vld [vmem:[%s2 + $0x68] sm:$0xff]
      %v574 = vld [vmem:[%s2 + $0x70] sm:$0xff]
      %v575 = vld [vmem:[%s2 + $0x78] sm:$0xff]
      %v576 = vld [vmem:[%s3] sm:$0x3]
      %v578 = vlaneseq
      %v579 = vshrl.u32 %v578, 7
      %v580 = vsub.s32 0, %v579
      %v581 = vrot.slane %v576, %v580
      %v582 = vlaneseq
      %v583 = vshrl.u32 %v582, 7
      %v584 = vsub.s32 1, %v583
      %v585 = vrot.slane %v576, %v584
      %v604 = vunpack.c.l.b16 %v560
      %v605 = vunpack.c.h.b16 %v560
      %v606 = vunpack.c.l.b16 %v561
      %v607 = vunpack.c.h.b16 %v561
      %v608 = vunpack.c.l.b16 %v562
      %v609 = vunpack.c.h.b16 %v562
      %v610 = vunpack.c.l.b16 %v563
      %v611 = vunpack.c.h.b16 %v563
      %v612 = vunpack.c.l.b16 %v564
      %v613 = vunpack.c.h.b16 %v564
      %v614 = vunpack.c.l.b16 %v565
      %v615 = vunpack.c.h.b16 %v565
      %v616 = vunpack.c.l.b16 %v566
      %v617 = vunpack.c.h.b16 %v566
      %v618 = vunpack.c.l.b16 %v567
      %v619 = vunpack.c.h.b16 %v567
      %v620 = vunpack.c.l.b16 %v568
      %v621 = vunpack.c.h.b16 %v568
      %v622 = vunpack.c.l.b16 %v569
      %v623 = vunpack.c.h.b16 %v569
      %v624 = vunpack.c.l.b16 %v570
      %v625 = vunpack.c.h.b16 %v570
      %v626 = vunpack.c.l.b16 %v571
      %v627 = vunpack.c.h.b16 %v571
      %v628 = vunpack.c.l.b16 %v572
      %v629 = vunpack.c.h.b16 %v572
      %v630 = vunpack.c.l.b16 %v573
      %v631 = vunpack.c.h.b16 %v573
      %v632 = vunpack.c.l.b16 %v574
      %v633 = vunpack.c.h.b16 %v574
      %v634 = vunpack.c.l.b16 %v575
      %v635 = vunpack.c.h.b16 %v575
      %v636 = vpack.c.b16 %v606, %v604
      %v637 = vpack.c.b16 %v607, %v605
      %v638 = vpack.c.b16 %v610, %v608
      %v639 = vpack.c.b16 %v611, %v609
      %v640 = vpack.c.b16 %v614, %v612
      %v641 = vpack.c.b16 %v615, %v613
      %v642 = vpack.c.b16 %v618, %v616
      %v643 = vpack.c.b16 %v619, %v617
      %v644 = vpack.c.b16 %v622, %v620
      %v645 = vpack.c.b16 %v623, %v621
      %v646 = vpack.c.b16 %v626, %v624
      %v647 = vpack.c.b16 %v627, %v625
      %v648 = vpack.c.b16 %v630, %v628
      %v649 = vpack.c.b16 %v631, %v629
      %v650 = vpack.c.b16 %v634, %v632
      %v651 = vpack.c.b16 %v635, %v633
      %668 = vmatprep.subr.bf16.mxu0 %v651
      %669 = vmatpush1.bf16.msra.mxu0 %v650
      %670 = vmatprep.subr.bf16.mxu0 %v649
      %671 = vmatpush1.bf16.msra.mxu0 %v648
      %672 = vmatprep.subr.bf16.mxu0 %v647
      %673 = vmatpush1.bf16.msra.mxu0 %v646
      %674 = vmatprep.subr.bf16.mxu0 %v645
      %675 = vmatpush1.bf16.msra.mxu0 %v644
      %676 = vmatprep.subr.bf16.mxu0 %v643
      %677 = vmatpush1.bf16.msra.mxu0 %v642
      %678 = vmatprep.subr.bf16.mxu0 %v641
      %679 = vmatpush1.bf16.msra.mxu0 %v640
      %680 = vmatprep.subr.bf16.mxu0 %v639
      %681 = vmatpush1.bf16.msra.mxu0 %v638
      %682 = vmatprep.subr.bf16.mxu0 %v637
      %683 = vmatpush1.bf16.msra.mxu0 %v636
      %684 = vmatprep.subr.bf16.mxu0 0
      %685 = vmatpush2.bf16.msra.mxu0 0
      %686 = vmatprep.subr.bf16.mxu0 0
      %687 = vmatpush2.bf16.msra.mxu0 0
      %688 = vmatprep.subr.bf16.mxu0 0
      %689 = vmatpush2.bf16.msra.mxu0 0
      %690 = vmatprep.subr.bf16.mxu0 0
      %691 = vmatpush2.bf16.msra.mxu0 0
      %692 = vmatprep.subr.bf16.mxu0 0
      %693 = vmatpush2.bf16.msra.mxu0 0
      %694 = vmatprep.subr.bf16.mxu0 0
      %695 = vmatpush2.bf16.msra.mxu0 0
      %696 = vmatprep.subr.bf16.mxu0 0
      %697 = vmatpush2.bf16.msra.mxu0 0
      %698 = vmatprep.subr.bf16.mxu0 0
      %699 = vmatpush2.bf16.msra.mxu0 0
      %700 = vmatprep.mubr.bf16.mxu0 0
      %701 = vmatmul.mubr.bf16.gmra.mxu0 %v544
      %v702 = vpop.f32.mrf.mxu0
      %v703 = vadd.f32 %v581, %v702
      %v704 = vpop.f32.mrf.mxu0
      %v705 = vadd.f32 %v585, %v704
      %v706 = vpop.f32.mrf.mxu0
      %v707 = vadd.f32 %v581, %v706
      %v708 = vpop.f32.mrf.mxu0
      %v709 = vadd.f32 %v585, %v708
      %710 = vmatprep.mubr.bf16.mxu0 0
      %711 = vmatmul.mubr.bf16.gmra.mxu0 %v545
      %v712 = vpop.f32.mrf.mxu0
      %v713 = vadd.f32 %v581, %v712
      %v714 = vpop.f32.mrf.mxu0
      %v715 = vadd.f32 %v585, %v714
      %v716 = vpop.f32.mrf.mxu0
      %v717 = vadd.f32 %v581, %v716
      %v718 = vpop.f32.mrf.mxu0
      %v719 = vadd.f32 %v585, %v718
      %720 = vmatprep.mubr.bf16.mxu0 0
      %721 = vmatmul.mubr.bf16.gmra.mxu0 %v546
      %v722 = vpop.f32.mrf.mxu0
      %v723 = vadd.f32 %v581, %v722
      %v724 = vpop.f32.mrf.mxu0
      %v725 = vadd.f32 %v585, %v724
      %v726 = vpop.f32.mrf.mxu0
      %v727 = vadd.f32 %v581, %v726
      %v728 = vpop.f32.mrf.mxu0
      %v729 = vadd.f32 %v585, %v728
      %730 = vmatprep.mubr.bf16.mxu0 0
      %731 = vmatmul.mubr.bf16.gmra.mxu0 %v547
      %v732 = vpop.f32.mrf.mxu0
      %v733 = vadd.f32 %v581, %v732
      %v734 = vpop.f32.mrf.mxu0
      %v735 = vadd.f32 %v585, %v734
      %v736 = vpop.f32.mrf.mxu0
      %v737 = vadd.f32 %v581, %v736
      %v738 = vpop.f32.mrf.mxu0
      %v739 = vadd.f32 %v585, %v738
      %740 = vmatprep.mubr.bf16.mxu0 0
      %741 = vmatmul.mubr.bf16.gmra.mxu0 %v548
      %v742 = vpop.f32.mrf.mxu0
      %v743 = vadd.f32 %v581, %v742
      %v744 = vpop.f32.mrf.mxu0
      %v745 = vadd.f32 %v585, %v744
      %v746 = vpop.f32.mrf.mxu0
      %v747 = vadd.f32 %v581, %v746
      %v748 = vpop.f32.mrf.mxu0
      %v749 = vadd.f32 %v585, %v748
      %750 = vmatprep.mubr.bf16.mxu0 0
      %751 = vmatmul.mubr.bf16.gmra.mxu0 %v549
      %v752 = vpop.f32.mrf.mxu0
      %v753 = vadd.f32 %v581, %v752
      %v754 = vpop.f32.mrf.mxu0
      %v755 = vadd.f32 %v585, %v754
      %v756 = vpop.f32.mrf.mxu0
      %v757 = vadd.f32 %v581, %v756
      %v758 = vpop.f32.mrf.mxu0
      %v759 = vadd.f32 %v585, %v758
      %760 = vmatprep.mubr.bf16.mxu0 0
      %761 = vmatmul.mubr.bf16.gmra.mxu0 %v550
      %v762 = vpop.f32.mrf.mxu0
      %v763 = vadd.f32 %v581, %v762
      %v764 = vpop.f32.mrf.mxu0
      %v765 = vadd.f32 %v585, %v764
      %v766 = vpop.f32.mrf.mxu0
      %v767 = vadd.f32 %v581, %v766
      %v768 = vpop.f32.mrf.mxu0
      %v769 = vadd.f32 %v585, %v768
      %770 = vmatprep.mubr.bf16.mxu0 0
      %771 = vmatmul.mubr.bf16.gmra.mxu0 %v551
      %v772 = vpop.f32.mrf.mxu0
      %v773 = vadd.f32 %v581, %v772
      %v774 = vpop.f32.mrf.mxu0
      %v775 = vadd.f32 %v585, %v774
      %v776 = vpop.f32.mrf.mxu0
      %v777 = vadd.f32 %v581, %v776
      %v778 = vpop.f32.mrf.mxu0
      %v779 = vadd.f32 %v585, %v778
      %780 = vmatprep.mubr.bf16.mxu0 0
      %781 = vmatmul.mubr.bf16.gmra.mxu0 %v552
      %v782 = vpop.f32.mrf.mxu0
      %v783 = vadd.f32 %v581, %v782
      %v784 = vpop.f32.mrf.mxu0
      %v785 = vadd.f32 %v585, %v784
      %v786 = vpop.f32.mrf.mxu0
      %v787 = vadd.f32 %v581, %v786
      %v788 = vpop.f32.mrf.mxu0
      %v789 = vadd.f32 %v585, %v788
      %790 = vmatprep.mubr.bf16.mxu0 0
      %791 = vmatmul.mubr.bf16.gmra.mxu0 %v553
      %v792 = vpop.f32.mrf.mxu0
      %v793 = vadd.f32 %v581, %v792
      %v794 = vpop.f32.mrf.mxu0
      %v795 = vadd.f32 %v585, %v794
      %v796 = vpop.f32.mrf.mxu0
      %v797 = vadd.f32 %v581, %v796
      %v798 = vpop.f32.mrf.mxu0
      %v799 = vadd.f32 %v585, %v798
      %800 = vmatprep.mubr.bf16.mxu0 0
      %801 = vmatmul.mubr.bf16.gmra.mxu0 %v554
      %v802 = vpop.f32.mrf.mxu0
      %v803 = vadd.f32 %v581, %v802
      %v804 = vpop.f32.mrf.mxu0
      %v805 = vadd.f32 %v585, %v804
      %v806 = vpop.f32.mrf.mxu0
      %v807 = vadd.f32 %v581, %v806
      %v808 = vpop.f32.mrf.mxu0
      %v809 = vadd.f32 %v585, %v808
      %810 = vmatprep.mubr.bf16.mxu0 0
      %811 = vmatmul.mubr.bf16.gmra.mxu0 %v555
      %v812 = vpop.f32.mrf.mxu0
      %v813 = vadd.f32 %v581, %v812
      %v814 = vpop.f32.mrf.mxu0
      %v815 = vadd.f32 %v585, %v814
      %v816 = vpop.f32.mrf.mxu0
      %v817 = vadd.f32 %v581, %v816
      %v818 = vpop.f32.mrf.mxu0
      %v819 = vadd.f32 %v585, %v818
      %820 = vmatprep.mubr.bf16.mxu0 0
      %821 = vmatmul.mubr.bf16.gmra.mxu0 %v556
      %v822 = vpop.f32.mrf.mxu0
      %v823 = vadd.f32 %v581, %v822
      %v824 = vpop.f32.mrf.mxu0
      %v825 = vadd.f32 %v585, %v824
      %v826 = vpop.f32.mrf.mxu0
      %v827 = vadd.f32 %v581, %v826
      %v828 = vpop.f32.mrf.mxu0
      %v829 = vadd.f32 %v585, %v828
      %830 = vmatprep.mubr.bf16.mxu0 0
      %831 = vmatmul.mubr.bf16.gmra.mxu0 %v557
      %v832 = vpop.f32.mrf.mxu0
      %v833 = vadd.f32 %v581, %v832
      %v834 = vpop.f32.mrf.mxu0
      %v835 = vadd.f32 %v585, %v834
      %v836 = vpop.f32.mrf.mxu0
      %v837 = vadd.f32 %v581, %v836
      %v838 = vpop.f32.mrf.mxu0
      %v839 = vadd.f32 %v585, %v838
      %840 = vmatprep.mubr.bf16.mxu0 0
      %841 = vmatmul.mubr.bf16.gmra.mxu0 %v558
      %v842 = vpop.f32.mrf.mxu0
      %v843 = vadd.f32 %v581, %v842
      %v844 = vpop.f32.mrf.mxu0
      %v845 = vadd.f32 %v585, %v844
      %v846 = vpop.f32.mrf.mxu0
      %v847 = vadd.f32 %v581, %v846
      %v848 = vpop.f32.mrf.mxu0
      %v849 = vadd.f32 %v585, %v848
      %850 = vmatprep.mubr.bf16.mxu0 0
      %851 = vmatmul.mubr.bf16.gmra.mxu0 %v559
      %v852 = vpop.f32.mrf.mxu0
      %v853 = vadd.f32 %v581, %v852
      %v854 = vpop.f32.mrf.mxu0
      %v855 = vadd.f32 %v585, %v854
      %v856 = vpop.f32.mrf.mxu0
      %v857 = vadd.f32 %v581, %v856
      %v858 = vpop.f32.mrf.mxu0
      %v859 = vadd.f32 %v585, %v858
      %860 = vdwg.mxu0
      %vm861 = vcmp.gt.f32.partialorder %v703, 0.0
      %vm862 = vcmp.gt.f32.partialorder %v707, 0.0
      %vm863 = vcmp.gt.f32.partialorder %v713, 0.0
      %vm864 = vcmp.gt.f32.partialorder %v717, 0.0
      %vm865 = vcmp.gt.f32.partialorder %v723, 0.0
      %vm866 = vcmp.gt.f32.partialorder %v727, 0.0
      %vm867 = vcmp.gt.f32.partialorder %v733, 0.0
      %vm868 = vcmp.gt.f32.partialorder %v737, 0.0
      %vm869 = vcmp.gt.f32.partialorder %v743, 0.0
      %vm870 = vcmp.gt.f32.partialorder %v747, 0.0
      %vm871 = vcmp.gt.f32.partialorder %v753, 0.0
      %vm872 = vcmp.gt.f32.partialorder %v757, 0.0
      %vm873 = vcmp.gt.f32.partialorder %v763, 0.0
      %vm874 = vcmp.gt.f32.partialorder %v767, 0.0
      %vm875 = vcmp.gt.f32.partialorder %v773, 0.0
      %vm876 = vcmp.gt.f32.partialorder %v777, 0.0
      %vm877 = vcmp.gt.f32.partialorder %v783, 0.0
      %vm878 = vcmp.gt.f32.partialorder %v787, 0.0
      %vm879 = vcmp.gt.f32.partialorder %v793, 0.0
      %vm880 = vcmp.gt.f32.partialorder %v797, 0.0
      %vm881 = vcmp.gt.f32.partialorder %v803, 0.0
      %vm882 = vcmp.gt.f32.partialorder %v807, 0.0
      %vm883 = vcmp.gt.f32.partialorder %v813, 0.0
      %vm884 = vcmp.gt.f32.partialorder %v817, 0.0
      %vm885 = vcmp.gt.f32.partialorder %v823, 0.0
      %vm886 = vcmp.gt.f32.partialorder %v827, 0.0
      %vm887 = vcmp.gt.f32.partialorder %v833, 0.0
      %vm888 = vcmp.gt.f32.partialorder %v837, 0.0
      %vm889 = vcmp.gt.f32.partialorder %v843, 0.0
      %vm890 = vcmp.gt.f32.partialorder %v847, 0.0
      %vm891 = vcmp.gt.f32.partialorder %v853, 0.0
      %vm892 = vcmp.gt.f32.partialorder %v857, 0.0
      %v893 = vmin.f32 %v703, 0.0
      %v894 = vmin.f32 %v707, 0.0
      %v895 = vmin.f32 %v713, 0.0
      %v896 = vmin.f32 %v717, 0.0
      %v897 = vmin.f32 %v723, 0.0
      %v898 = vmin.f32 %v727, 0.0
      %v899 = vmin.f32 %v733, 0.0
      %v900 = vmin.f32 %v737, 0.0
      %v901 = vmin.f32 %v743, 0.0
      %v902 = vmin.f32 %v747, 0.0
      %v903 = vmin.f32 %v753, 0.0
      %v904 = vmin.f32 %v757, 0.0
      %v905 = vmin.f32 %v763, 0.0
      %v906 = vmin.f32 %v767, 0.0
      %v907 = vmin.f32 %v773, 0.0
      %v908 = vmin.f32 %v777, 0.0
      %v909 = vmin.f32 %v783, 0.0
      %v910 = vmin.f32 %v787, 0.0
      %v911 = vmin.f32 %v793, 0.0
      %v912 = vmin.f32 %v797, 0.0
      %v913 = vmin.f32 %v803, 0.0
      %v914 = vmin.f32 %v807, 0.0
      %v915 = vmin.f32 %v813, 0.0
      %v916 = vmin.f32 %v817, 0.0
      %v917 = vmin.f32 %v823, 0.0
      %v918 = vmin.f32 %v827, 0.0
      %v919 = vmin.f32 %v833, 0.0
      %v920 = vmin.f32 %v837, 0.0
      %v921 = vmin.f32 %v843, 0.0
      %v922 = vmin.f32 %v847, 0.0
      %v923 = vmin.f32 %v853, 0.0
      %v924 = vmin.f32 %v857, 0.0
      %v925 = vmul.f32 %v893, 1.442695
      %v926 = vpow.pop %v925
      %v927 = vmul.f32 %v894, 1.442695
      %v928 = vpow.pop %v927
      %v929 = vmul.f32 %v895, 1.442695
      %v930 = vpow.pop %v929
      %v931 = vmul.f32 %v896, 1.442695
      %v932 = vpow.pop %v931
      %v933 = vmul.f32 %v897, 1.442695
      %v934 = vpow.pop %v933
      %v935 = vmul.f32 %v898, 1.442695
      %v936 = vpow.pop %v935
      %v937 = vmul.f32 %v899, 1.442695
      %v938 = vpow.pop %v937
      %v939 = vmul.f32 %v900, 1.442695
      %v940 = vpow.pop %v939
      %v941 = vmul.f32 %v901, 1.442695
      %v942 = vpow.pop %v941
      %v943 = vmul.f32 %v902, 1.442695
      %v944 = vpow.pop %v943
      %v945 = vmul.f32 %v903, 1.442695
      %v946 = vpow.pop %v945
      %v947 = vmul.f32 %v904, 1.442695
      %v948 = vpow.pop %v947
      %v949 = vmul.f32 %v905, 1.442695
      %v950 = vpow.pop %v949
      %v951 = vmul.f32 %v906, 1.442695
      %v952 = vpow.pop %v951
      %v953 = vmul.f32 %v907, 1.442695
      %v954 = vpow.pop %v953
      %v955 = vmul.f32 %v908, 1.442695
      %v956 = vpow.pop %v955
      %v957 = vmul.f32 %v909, 1.442695
      %v958 = vpow.pop %v957
      %v959 = vmul.f32 %v910, 1.442695
      %v960 = vpow.pop %v959
      %v961 = vmul.f32 %v911, 1.442695
      %v962 = vpow.pop %v961
      %v963 = vmul.f32 %v912, 1.442695
      %v964 = vpow.pop %v963
      %v965 = vmul.f32 %v913, 1.442695
      %v966 = vpow.pop %v965
      %v967 = vmul.f32 %v914, 1.442695
      %v968 = vpow.pop %v967
      %v969 = vmul.f32 %v915, 1.442695
      %v970 = vpow.pop %v969
      %v971 = vmul.f32 %v916, 1.442695
      %v972 = vpow.pop %v971
      %v973 = vmul.f32 %v917, 1.442695
      %v974 = vpow.pop %v973
      %v975 = vmul.f32 %v918, 1.442695
      %v976 = vpow.pop %v975
      %v977 = vmul.f32 %v919, 1.442695
      %v978 = vpow.pop %v977
      %v979 = vmul.f32 %v920, 1.442695
      %v980 = vpow.pop %v979
      %v981 = vmul.f32 %v921, 1.442695
      %v982 = vpow.pop %v981
      %v983 = vmul.f32 %v922, 1.442695
      %v984 = vpow.pop %v983
      %v985 = vmul.f32 %v923, 1.442695
      %v986 = vpow.pop %v985
      %v987 = vmul.f32 %v924, 1.442695
      %v988 = vpow.pop %v987
      %v989 = vsub.f32 %v926, 1.0
      %v990 = vsub.f32 %v928, 1.0
      %v991 = vsub.f32 %v930, 1.0
      %v992 = vsub.f32 %v932, 1.0
      %v993 = vsub.f32 %v934, 1.0
      %v994 = vsub.f32 %v936, 1.0
      %v995 = vsub.f32 %v938, 1.0
      %v996 = vsub.f32 %v940, 1.0
      %v997 = vsub.f32 %v942, 1.0
      %v998 = vsub.f32 %v944, 1.0
      %v999 = vsub.f32 %v946, 1.0
      %v1000 = vsub.f32 %v948, 1.0
      %v1001 = vsub.f32 %v950, 1.0
      %v1002 = vsub.f32 %v952, 1.0
      %v1003 = vsub.f32 %v954, 1.0
      %v1004 = vsub.f32 %v956, 1.0
      %v1005 = vsub.f32 %v958, 1.0
      %v1006 = vsub.f32 %v960, 1.0
      %v1007 = vsub.f32 %v962, 1.0
      %v1008 = vsub.f32 %v964, 1.0
      %v1009 = vsub.f32 %v966, 1.0
      %v1010 = vsub.f32 %v968, 1.0
      %v1011 = vsub.f32 %v970, 1.0
      %v1012 = vsub.f32 %v972, 1.0
      %v1013 = vsub.f32 %v974, 1.0
      %v1014 = vsub.f32 %v976, 1.0
      %v1015 = vsub.f32 %v978, 1.0
      %v1016 = vsub.f32 %v980, 1.0
      %v1017 = vsub.f32 %v982, 1.0
      %v1018 = vsub.f32 %v984, 1.0
      %v1019 = vsub.f32 %v986, 1.0
      %v1020 = vsub.f32 %v988, 1.0
      %v1021 = vsel %vm861, %v703, %v989
      %v1022 = vsel %vm862, %v707, %v990
      %v1023 = vsel %vm863, %v713, %v991
      %v1024 = vsel %vm864, %v717, %v992
      %v1025 = vsel %vm865, %v723, %v993
      %v1026 = vsel %vm866, %v727, %v994
      %v1027 = vsel %vm867, %v733, %v995
      %v1028 = vsel %vm868, %v737, %v996
      %v1029 = vsel %vm869, %v743, %v997
      %v1030 = vsel %vm870, %v747, %v998
      %v1031 = vsel %vm871, %v753, %v999
      %v1032 = vsel %vm872, %v757, %v1000
      %v1033 = vsel %vm873, %v763, %v1001
      %v1034 = vsel %vm874, %v767, %v1002
      %v1035 = vsel %vm875, %v773, %v1003
      %v1036 = vsel %vm876, %v777, %v1004
      %v1037 = vsel %vm877, %v783, %v1005
      %v1038 = vsel %vm878, %v787, %v1006
      %v1039 = vsel %vm879, %v793, %v1007
      %v1040 = vsel %vm880, %v797, %v1008
      %v1041 = vsel %vm881, %v803, %v1009
      %v1042 = vsel %vm882, %v807, %v1010
      %v1043 = vsel %vm883, %v813, %v1011
      %v1044 = vsel %vm884, %v817, %v1012
      %v1045 = vsel %vm885, %v823, %v1013
      %v1046 = vsel %vm886, %v827, %v1014
      %v1047 = vsel %vm887, %v833, %v1015
      %v1048 = vsel %vm888, %v837, %v1016
      %v1049 = vsel %vm889, %v843, %v1017
      %v1050 = vsel %vm890, %v847, %v1018
      %v1051 = vsel %vm891, %v853, %v1019
      %v1052 = vsel %vm892, %v857, %v1020
      %s1053 = smul.u32 %s25, 256
      %v1054 = vlaneseq
      %v1055 = vshrl.u32 %v1054, 7
      %v1056 = vadd.s32 %v1055, 8
      %v1057 = vadd.s32 %v1055, 16
      %v1058 = vadd.s32 %v1055, 24
      %v1059 = vadd.s32 %v1055, 32
      %v1060 = vadd.s32 %v1055, 40
      %v1061 = vadd.s32 %v1055, 48
      %v1062 = vadd.s32 %v1055, 56
      %v1063 = vadd.s32 %v1055, 64
      %v1064 = vadd.s32 %v1055, 72
      %v1065 = vadd.s32 %v1055, 80
      %v1066 = vadd.s32 %v1055, 88
      %v1067 = vadd.s32 %v1055, 96
      %v1068 = vadd.s32 %v1055, 104
      %v1069 = vadd.s32 %v1055, 112
      %v1070 = vadd.s32 %v1055, 120
      %v1071 = vadd.s32 %v1055, 128
      %v1072 = vadd.s32 %v1055, 136
      %v1073 = vadd.s32 %v1055, 144
      %v1074 = vadd.s32 %v1055, 152
      %v1075 = vadd.s32 %v1055, 160
      %v1076 = vadd.s32 %v1055, 168
      %v1077 = vadd.s32 %v1055, 176
      %v1078 = vadd.s32 %v1055, 184
      %v1079 = vadd.s32 %v1055, 192
      %v1080 = vadd.s32 %v1055, 200
      %v1081 = vadd.s32 %v1055, 208
      %v1082 = vadd.s32 %v1055, 216
      %v1083 = vadd.s32 %v1055, 224
      %v1084 = vadd.s32 %v1055, 232
      %v1085 = vadd.s32 %v1055, 240
      %v1086 = vadd.s32 %v1055, 248
      %v1087 = vstv %s1053
      %v1088 = vadd.s32 %v1087, %v1055
      %v1089 = vadd.s32 %v1087, %v1056
      %v1090 = vadd.s32 %v1087, %v1057
      %v1091 = vadd.s32 %v1087, %v1058
      %v1092 = vadd.s32 %v1087, %v1059
      %v1093 = vadd.s32 %v1087, %v1060
      %v1094 = vadd.s32 %v1087, %v1061
      %v1095 = vadd.s32 %v1087, %v1062
      %v1096 = vadd.s32 %v1087, %v1063
      %v1097 = vadd.s32 %v1087, %v1064
      %v1098 = vadd.s32 %v1087, %v1065
      %v1099 = vadd.s32 %v1087, %v1066
      %v1100 = vadd.s32 %v1087, %v1067
      %v1101 = vadd.s32 %v1087, %v1068
      %v1102 = vadd.s32 %v1087, %v1069
      %v1103 = vadd.s32 %v1087, %v1070
      %v1104 = vadd.s32 %v1087, %v1071
      %v1105 = vadd.s32 %v1087, %v1072
      %v1106 = vadd.s32 %v1087, %v1073
      %v1107 = vadd.s32 %v1087, %v1074
      %v1108 = vadd.s32 %v1087, %v1075
      %v1109 = vadd.s32 %v1087, %v1076
      %v1110 = vadd.s32 %v1087, %v1077
      %v1111 = vadd.s32 %v1087, %v1078
      %v1112 = vadd.s32 %v1087, %v1079
      %v1113 = vadd.s32 %v1087, %v1080
      %v1114 = vadd.s32 %v1087, %v1081
      %v1115 = vadd.s32 %v1087, %v1082
      %v1116 = vadd.s32 %v1087, %v1083
      %v1117 = vadd.s32 %v1087, %v1084
      %v1118 = vadd.s32 %v1087, %v1085
      %v1119 = vadd.s32 %v1087, %v1086
      %vm1120 = vcmp.lt.s32.totalorder %v1088, 0
      %v1121 = vsub.s32 0, %v1088
      %v1122 = vsel %vm1120, %v1121, %v1088
      %v1123 = vmul.u32.u64.compose %v1122, 4164816772
      %v1124 = vextract.low.u32 %v1123
      %v1125 = vextract.high.u32 %v1123
      %v1126 = vshrl.u32 %v1125, 5
      %v1127 = vmul.u32 %v1126, 33
      %v1128 = vsub.s32 %v1122, %v1127
      %v1129 = vsub.s32 0, %v1128
      %v1130 = vsel %vm1120, %v1129, %v1128
      %vm1131 = vcmp.lt.s32.totalorder %v1089, 0
      %v1132 = vsub.s32 0, %v1089
      %v1133 = vsel %vm1131, %v1132, %v1089
      %v1134 = vmul.u32.u64.compose %v1133, 4164816772
      %v1135 = vextract.low.u32 %v1134
      %v1136 = vextract.high.u32 %v1134
      %v1137 = vshrl.u32 %v1136, 5
      %v1138 = vmul.u32 %v1137, 33
      %v1139 = vsub.s32 %v1133, %v1138
      %v1140 = vsub.s32 0, %v1139
      %v1141 = vsel %vm1131, %v1140, %v1139
      %vm1142 = vcmp.lt.s32.totalorder %v1090, 0
      %v1143 = vsub.s32 0, %v1090
      %v1144 = vsel %vm1142, %v1143, %v1090
      %v1145 = vmul.u32.u64.compose %v1144, 4164816772
      %v1146 = vextract.low.u32 %v1145
      %v1147 = vextract.high.u32 %v1145
      %v1148 = vshrl.u32 %v1147, 5
      %v1149 = vmul.u32 %v1148, 33
      %v1150 = vsub.s32 %v1144, %v1149
      %v1151 = vsub.s32 0, %v1150
      %v1152 = vsel %vm1142, %v1151, %v1150
      %vm1153 = vcmp.lt.s32.totalorder %v1091, 0
      %v1154 = vsub.s32 0, %v1091
      %v1155 = vsel %vm1153, %v1154, %v1091
      %v1156 = vmul.u32.u64.compose %v1155, 4164816772
      %v1157 = vextract.low.u32 %v1156
      %v1158 = vextract.high.u32 %v1156
      %v1159 = vshrl.u32 %v1158, 5
      %v1160 = vmul.u32 %v1159, 33
      %v1161 = vsub.s32 %v1155, %v1160
      %v1162 = vsub.s32 0, %v1161
      %v1163 = vsel %vm1153, %v1162, %v1161
      %vm1164 = vcmp.lt.s32.totalorder %v1092, 0
      %v1165 = vsub.s32 0, %v1092
      %v1166 = vsel %vm1164, %v1165, %v1092
      %v1167 = vmul.u32.u64.compose %v1166, 4164816772
      %v1168 = vextract.low.u32 %v1167
      %v1169 = vextract.high.u32 %v1167
      %v1170 = vshrl.u32 %v1169, 5
      %v1171 = vmul.u32 %v1170, 33
      %v1172 = vsub.s32 %v1166, %v1171
      %v1173 = vsub.s32 0, %v1172
      %v1174 = vsel %vm1164, %v1173, %v1172
      %vm1175 = vcmp.lt.s32.totalorder %v1093, 0
      %v1176 = vsub.s32 0, %v1093
      %v1177 = vsel %vm1175, %v1176, %v1093
      %v1178 = vmul.u32.u64.compose %v1177, 4164816772
      %v1179 = vextract.low.u32 %v1178
      %v1180 = vextract.high.u32 %v1178
      %v1181 = vshrl.u32 %v1180, 5
      %v1182 = vmul.u32 %v1181, 33
      %v1183 = vsub.s32 %v1177, %v1182
      %v1184 = vsub.s32 0, %v1183
      %v1185 = vsel %vm1175, %v1184, %v1183
      %vm1186 = vcmp.lt.s32.totalorder %v1094, 0
      %v1187 = vsub.s32 0, %v1094
      %v1188 = vsel %vm1186, %v1187, %v1094
      %v1189 = vmul.u32.u64.compose %v1188, 4164816772
      %v1190 = vextract.low.u32 %v1189
      %v1191 = vextract.high.u32 %v1189
      %v1192 = vshrl.u32 %v1191, 5
      %v1193 = vmul.u32 %v1192, 33
      %v1194 = vsub.s32 %v1188, %v1193
      %v1195 = vsub.s32 0, %v1194
      %v1196 = vsel %vm1186, %v1195, %v1194
      %vm1197 = vcmp.lt.s32.totalorder %v1095, 0
      %v1198 = vsub.s32 0, %v1095
      %v1199 = vsel %vm1197, %v1198, %v1095
      %v1200 = vmul.u32.u64.compose %v1199, 4164816772
      %v1201 = vextract.low.u32 %v1200
      %v1202 = vextract.high.u32 %v1200
      %v1203 = vshrl.u32 %v1202, 5
      %v1204 = vmul.u32 %v1203, 33
      %v1205 = vsub.s32 %v1199, %v1204
      %v1206 = vsub.s32 0, %v1205
      %v1207 = vsel %vm1197, %v1206, %v1205
      %vm1208 = vcmp.lt.s32.totalorder %v1096, 0
      %v1209 = vsub.s32 0, %v1096
      %v1210 = vsel %vm1208, %v1209, %v1096
      %v1211 = vmul.u32.u64.compose %v1210, 4164816772
      %v1212 = vextract.low.u32 %v1211
      %v1213 = vextract.high.u32 %v1211
      %v1214 = vshrl.u32 %v1213, 5
      %v1215 = vmul.u32 %v1214, 33
      %v1216 = vsub.s32 %v1210, %v1215
      %v1217 = vsub.s32 0, %v1216
      %v1218 = vsel %vm1208, %v1217, %v1216
      %vm1219 = vcmp.lt.s32.totalorder %v1097, 0
      %v1220 = vsub.s32 0, %v1097
      %v1221 = vsel %vm1219, %v1220, %v1097
      %v1222 = vmul.u32.u64.compose %v1221, 4164816772
      %v1223 = vextract.low.u32 %v1222
      %v1224 = vextract.high.u32 %v1222
      %v1225 = vshrl.u32 %v1224, 5
      %v1226 = vmul.u32 %v1225, 33
      %v1227 = vsub.s32 %v1221, %v1226
      %v1228 = vsub.s32 0, %v1227
      %v1229 = vsel %vm1219, %v1228, %v1227
      %vm1230 = vcmp.lt.s32.totalorder %v1098, 0
      %v1231 = vsub.s32 0, %v1098
      %v1232 = vsel %vm1230, %v1231, %v1098
      %v1233 = vmul.u32.u64.compose %v1232, 4164816772
      %v1234 = vextract.low.u32 %v1233
      %v1235 = vextract.high.u32 %v1233
      %v1236 = vshrl.u32 %v1235, 5
      %v1237 = vmul.u32 %v1236, 33
      %v1238 = vsub.s32 %v1232, %v1237
      %v1239 = vsub.s32 0, %v1238
      %v1240 = vsel %vm1230, %v1239, %v1238
      %vm1241 = vcmp.lt.s32.totalorder %v1099, 0
      %v1242 = vsub.s32 0, %v1099
      %v1243 = vsel %vm1241, %v1242, %v1099
      %v1244 = vmul.u32.u64.compose %v1243, 4164816772
      %v1245 = vextract.low.u32 %v1244
      %v1246 = vextract.high.u32 %v1244
      %v1247 = vshrl.u32 %v1246, 5
      %v1248 = vmul.u32 %v1247, 33
      %v1249 = vsub.s32 %v1243, %v1248
      %v1250 = vsub.s32 0, %v1249
      %v1251 = vsel %vm1241, %v1250, %v1249
      %vm1252 = vcmp.lt.s32.totalorder %v1100, 0
      %v1253 = vsub.s32 0, %v1100
      %v1254 = vsel %vm1252, %v1253, %v1100
      %v1255 = vmul.u32.u64.compose %v1254, 4164816772
      %v1256 = vextract.low.u32 %v1255
      %v1257 = vextract.high.u32 %v1255
      %v1258 = vshrl.u32 %v1257, 5
      %v1259 = vmul.u32 %v1258, 33
      %v1260 = vsub.s32 %v1254, %v1259
      %v1261 = vsub.s32 0, %v1260
      %v1262 = vsel %vm1252, %v1261, %v1260
      %vm1263 = vcmp.lt.s32.totalorder %v1101, 0
      %v1264 = vsub.s32 0, %v1101
      %v1265 = vsel %vm1263, %v1264, %v1101
      %v1266 = vmul.u32.u64.compose %v1265, 4164816772
      %v1267 = vextract.low.u32 %v1266
      %v1268 = vextract.high.u32 %v1266
      %v1269 = vshrl.u32 %v1268, 5
      %v1270 = vmul.u32 %v1269, 33
      %v1271 = vsub.s32 %v1265, %v1270
      %v1272 = vsub.s32 0, %v1271
      %v1273 = vsel %vm1263, %v1272, %v1271
      %vm1274 = vcmp.lt.s32.totalorder %v1102, 0
      %v1275 = vsub.s32 0, %v1102
      %v1276 = vsel %vm1274, %v1275, %v1102
      %v1277 = vmul.u32.u64.compose %v1276, 4164816772
      %v1278 = vextract.low.u32 %v1277
      %v1279 = vextract.high.u32 %v1277
      %v1280 = vshrl.u32 %v1279, 5
      %v1281 = vmul.u32 %v1280, 33
      %v1282 = vsub.s32 %v1276, %v1281
      %v1283 = vsub.s32 0, %v1282
      %v1284 = vsel %vm1274, %v1283, %v1282
      %vm1285 = vcmp.lt.s32.totalorder %v1103, 0
      %v1286 = vsub.s32 0, %v1103
      %v1287 = vsel %vm1285, %v1286, %v1103
      %v1288 = vmul.u32.u64.compose %v1287, 4164816772
      %v1289 = vextract.low.u32 %v1288
      %v1290 = vextract.high.u32 %v1288
      %v1291 = vshrl.u32 %v1290, 5
      %v1292 = vmul.u32 %v1291, 33
      %v1293 = vsub.s32 %v1287, %v1292
      %v1294 = vsub.s32 0, %v1293
      %v1295 = vsel %vm1285, %v1294, %v1293
      %vm1296 = vcmp.lt.s32.totalorder %v1104, 0
      %v1297 = vsub.s32 0, %v1104
      %v1298 = vsel %vm1296, %v1297, %v1104
      %v1299 = vmul.u32.u64.compose %v1298, 4164816772
      %v1300 = vextract.low.u32 %v1299
      %v1301 = vextract.high.u32 %v1299
      %v1302 = vshrl.u32 %v1301, 5
      %v1303 = vmul.u32 %v1302, 33
      %v1304 = vsub.s32 %v1298, %v1303
      %v1305 = vsub.s32 0, %v1304
      %v1306 = vsel %vm1296, %v1305, %v1304
      %vm1307 = vcmp.lt.s32.totalorder %v1105, 0
      %v1308 = vsub.s32 0, %v1105
      %v1309 = vsel %vm1307, %v1308, %v1105
      %v1310 = vmul.u32.u64.compose %v1309, 4164816772
      %v1311 = vextract.low.u32 %v1310
      %v1312 = vextract.high.u32 %v1310
      %v1313 = vshrl.u32 %v1312, 5
      %v1314 = vmul.u32 %v1313, 33
      %v1315 = vsub.s32 %v1309, %v1314
      %v1316 = vsub.s32 0, %v1315
      %v1317 = vsel %vm1307, %v1316, %v1315
      %vm1318 = vcmp.lt.s32.totalorder %v1106, 0
      %v1319 = vsub.s32 0, %v1106
      %v1320 = vsel %vm1318, %v1319, %v1106
      %v1321 = vmul.u32.u64.compose %v1320, 4164816772
      %v1322 = vextract.low.u32 %v1321
      %v1323 = vextract.high.u32 %v1321
      %v1324 = vshrl.u32 %v1323, 5
      %v1325 = vmul.u32 %v1324, 33
      %v1326 = vsub.s32 %v1320, %v1325
      %v1327 = vsub.s32 0, %v1326
      %v1328 = vsel %vm1318, %v1327, %v1326
      %vm1329 = vcmp.lt.s32.totalorder %v1107, 0
      %v1330 = vsub.s32 0, %v1107
      %v1331 = vsel %vm1329, %v1330, %v1107
      %v1332 = vmul.u32.u64.compose %v1331, 4164816772
      %v1333 = vextract.low.u32 %v1332
      %v1334 = vextract.high.u32 %v1332
      %v1335 = vshrl.u32 %v1334, 5
      %v1336 = vmul.u32 %v1335, 33
      %v1337 = vsub.s32 %v1331, %v1336
      %v1338 = vsub.s32 0, %v1337
      %v1339 = vsel %vm1329, %v1338, %v1337
      %vm1340 = vcmp.lt.s32.totalorder %v1108, 0
      %v1341 = vsub.s32 0, %v1108
      %v1342 = vsel %vm1340, %v1341, %v1108
      %v1343 = vmul.u32.u64.compose %v1342, 4164816772
      %v1344 = vextract.low.u32 %v1343
      %v1345 = vextract.high.u32 %v1343
      %v1346 = vshrl.u32 %v1345, 5
      %v1347 = vmul.u32 %v1346, 33
      %v1348 = vsub.s32 %v1342, %v1347
      %v1349 = vsub.s32 0, %v1348
      %v1350 = vsel %vm1340, %v1349, %v1348
      %vm1351 = vcmp.lt.s32.totalorder %v1109, 0
      %v1352 = vsub.s32 0, %v1109
      %v1353 = vsel %vm1351, %v1352, %v1109
      %v1354 = vmul.u32.u64.compose %v1353, 4164816772
      %v1355 = vextract.low.u32 %v1354
      %v1356 = vextract.high.u32 %v1354
      %v1357 = vshrl.u32 %v1356, 5
      %v1358 = vmul.u32 %v1357, 33
      %v1359 = vsub.s32 %v1353, %v1358
      %v1360 = vsub.s32 0, %v1359
      %v1361 = vsel %vm1351, %v1360, %v1359
      %vm1362 = vcmp.lt.s32.totalorder %v1110, 0
      %v1363 = vsub.s32 0, %v1110
      %v1364 = vsel %vm1362, %v1363, %v1110
      %v1365 = vmul.u32.u64.compose %v1364, 4164816772
      %v1366 = vextract.low.u32 %v1365
      %v1367 = vextract.high.u32 %v1365
      %v1368 = vshrl.u32 %v1367, 5
      %v1369 = vmul.u32 %v1368, 33
      %v1370 = vsub.s32 %v1364, %v1369
      %v1371 = vsub.s32 0, %v1370
      %v1372 = vsel %vm1362, %v1371, %v1370
      %vm1373 = vcmp.lt.s32.totalorder %v1111, 0
      %v1374 = vsub.s32 0, %v1111
      %v1375 = vsel %vm1373, %v1374, %v1111
      %v1376 = vmul.u32.u64.compose %v1375, 4164816772
      %v1377 = vextract.low.u32 %v1376
      %v1378 = vextract.high.u32 %v1376
      %v1379 = vshrl.u32 %v1378, 5
      %v1380 = vmul.u32 %v1379, 33
      %v1381 = vsub.s32 %v1375, %v1380
      %v1382 = vsub.s32 0, %v1381
      %v1383 = vsel %vm1373, %v1382, %v1381
      %vm1384 = vcmp.lt.s32.totalorder %v1112, 0
      %v1385 = vsub.s32 0, %v1112
      %v1386 = vsel %vm1384, %v1385, %v1112
      %v1387 = vmul.u32.u64.compose %v1386, 4164816772
      %v1388 = vextract.low.u32 %v1387
      %v1389 = vextract.high.u32 %v1387
      %v1390 = vshrl.u32 %v1389, 5
      %v1391 = vmul.u32 %v1390, 33
      %v1392 = vsub.s32 %v1386, %v1391
      %v1393 = vsub.s32 0, %v1392
      %v1394 = vsel %vm1384, %v1393, %v1392
      %vm1395 = vcmp.lt.s32.totalorder %v1113, 0
      %v1396 = vsub.s32 0, %v1113
      %v1397 = vsel %vm1395, %v1396, %v1113
      %v1398 = vmul.u32.u64.compose %v1397, 4164816772
      %v1399 = vextract.low.u32 %v1398
      %v1400 = vextract.high.u32 %v1398
      %v1401 = vshrl.u32 %v1400, 5
      %v1402 = vmul.u32 %v1401, 33
      %v1403 = vsub.s32 %v1397, %v1402
      %v1404 = vsub.s32 0, %v1403
      %v1405 = vsel %vm1395, %v1404, %v1403
      %vm1406 = vcmp.lt.s32.totalorder %v1114, 0
      %v1407 = vsub.s32 0, %v1114
      %v1408 = vsel %vm1406, %v1407, %v1114
      %v1409 = vmul.u32.u64.compose %v1408, 4164816772
      %v1410 = vextract.low.u32 %v1409
      %v1411 = vextract.high.u32 %v1409
      %v1412 = vshrl.u32 %v1411, 5
      %v1413 = vmul.u32 %v1412, 33
      %v1414 = vsub.s32 %v1408, %v1413
      %v1415 = vsub.s32 0, %v1414
      %v1416 = vsel %vm1406, %v1415, %v1414
      %vm1417 = vcmp.lt.s32.totalorder %v1115, 0
      %v1418 = vsub.s32 0, %v1115
      %v1419 = vsel %vm1417, %v1418, %v1115
      %v1420 = vmul.u32.u64.compose %v1419, 4164816772
      %v1421 = vextract.low.u32 %v1420
      %v1422 = vextract.high.u32 %v1420
      %v1423 = vshrl.u32 %v1422, 5
      %v1424 = vmul.u32 %v1423, 33
      %v1425 = vsub.s32 %v1419, %v1424
      %v1426 = vsub.s32 0, %v1425
      %v1427 = vsel %vm1417, %v1426, %v1425
      %vm1428 = vcmp.lt.s32.totalorder %v1116, 0
      %v1429 = vsub.s32 0, %v1116
      %v1430 = vsel %vm1428, %v1429, %v1116
      %v1431 = vmul.u32.u64.compose %v1430, 4164816772
      %v1432 = vextract.low.u32 %v1431
      %v1433 = vextract.high.u32 %v1431
      %v1434 = vshrl.u32 %v1433, 5
      %v1435 = vmul.u32 %v1434, 33
      %v1436 = vsub.s32 %v1430, %v1435
      %v1437 = vsub.s32 0, %v1436
      %v1438 = vsel %vm1428, %v1437, %v1436
      %vm1439 = vcmp.lt.s32.totalorder %v1117, 0
      %v1440 = vsub.s32 0, %v1117
      %v1441 = vsel %vm1439, %v1440, %v1117
      %v1442 = vmul.u32.u64.compose %v1441, 4164816772
      %v1443 = vextract.low.u32 %v1442
      %v1444 = vextract.high.u32 %v1442
      %v1445 = vshrl.u32 %v1444, 5
      %v1446 = vmul.u32 %v1445, 33
      %v1447 = vsub.s32 %v1441, %v1446
      %v1448 = vsub.s32 0, %v1447
      %v1449 = vsel %vm1439, %v1448, %v1447
      %vm1450 = vcmp.lt.s32.totalorder %v1118, 0
      %v1451 = vsub.s32 0, %v1118
      %v1452 = vsel %vm1450, %v1451, %v1118
      %v1453 = vmul.u32.u64.compose %v1452, 4164816772
      %v1454 = vextract.low.u32 %v1453
      %v1455 = vextract.high.u32 %v1453
      %v1456 = vshrl.u32 %v1455, 5
      %v1457 = vmul.u32 %v1456, 33
      %v1458 = vsub.s32 %v1452, %v1457
      %v1459 = vsub.s32 0, %v1458
      %v1460 = vsel %vm1450, %v1459, %v1458
      %vm1461 = vcmp.lt.s32.totalorder %v1119, 0
      %v1462 = vsub.s32 0, %v1119
      %v1463 = vsel %vm1461, %v1462, %v1119
      %v1464 = vmul.u32.u64.compose %v1463, 4164816772
      %v1465 = vextract.low.u32 %v1464
      %v1466 = vextract.high.u32 %v1464
      %v1467 = vshrl.u32 %v1466, 5
      %v1468 = vmul.u32 %v1467, 33
      %v1469 = vsub.s32 %v1463, %v1468
      %v1470 = vsub.s32 0, %v1469
      %v1471 = vsel %vm1461, %v1470, %v1469
      %vm1472 = vcmp.ne.s32.totalorder %v1130, 0
      %vm1473 = vcmp.ne.s32.totalorder %v1141, 0
      %vm1474 = vcmp.ne.s32.totalorder %v1152, 0
      %vm1475 = vcmp.ne.s32.totalorder %v1163, 0
      %vm1476 = vcmp.ne.s32.totalorder %v1174, 0
      %vm1477 = vcmp.ne.s32.totalorder %v1185, 0
      %vm1478 = vcmp.ne.s32.totalorder %v1196, 0
      %vm1479 = vcmp.ne.s32.totalorder %v1207, 0
      %vm1480 = vcmp.ne.s32.totalorder %v1218, 0
      %vm1481 = vcmp.ne.s32.totalorder %v1229, 0
      %vm1482 = vcmp.ne.s32.totalorder %v1240, 0
      %vm1483 = vcmp.ne.s32.totalorder %v1251, 0
      %vm1484 = vcmp.ne.s32.totalorder %v1262, 0
      %vm1485 = vcmp.ne.s32.totalorder %v1273, 0
      %vm1486 = vcmp.ne.s32.totalorder %v1284, 0
      %vm1487 = vcmp.ne.s32.totalorder %v1295, 0
      %vm1488 = vcmp.ne.s32.totalorder %v1306, 0
      %vm1489 = vcmp.ne.s32.totalorder %v1317, 0
      %vm1490 = vcmp.ne.s32.totalorder %v1328, 0
      %vm1491 = vcmp.ne.s32.totalorder %v1339, 0
      %vm1492 = vcmp.ne.s32.totalorder %v1350, 0
      %vm1493 = vcmp.ne.s32.totalorder %v1361, 0
      %vm1494 = vcmp.ne.s32.totalorder %v1372, 0
      %vm1495 = vcmp.ne.s32.totalorder %v1383, 0
      %vm1496 = vcmp.ne.s32.totalorder %v1394, 0
      %vm1497 = vcmp.ne.s32.totalorder %v1405, 0
      %vm1498 = vcmp.ne.s32.totalorder %v1416, 0
      %vm1499 = vcmp.ne.s32.totalorder %v1427, 0
      %vm1500 = vcmp.ne.s32.totalorder %v1438, 0
      %vm1501 = vcmp.ne.s32.totalorder %v1449, 0
      %vm1502 = vcmp.ne.s32.totalorder %v1460, 0
      %vm1503 = vcmp.ne.s32.totalorder %v1471, 0
      %vm1504 = vcmp.lt.s32.totalorder %v1130, 0
      %vm1505 = vcmp.lt.s32.totalorder %v1141, 0
      %vm1506 = vcmp.lt.s32.totalorder %v1152, 0
      %vm1507 = vcmp.lt.s32.totalorder %v1163, 0
      %vm1508 = vcmp.lt.s32.totalorder %v1174, 0
      %vm1509 = vcmp.lt.s32.totalorder %v1185, 0
      %vm1510 = vcmp.lt.s32.totalorder %v1196, 0
      %vm1511 = vcmp.lt.s32.totalorder %v1207, 0
      %vm1512 = vcmp.lt.s32.totalorder %v1218, 0
      %vm1513 = vcmp.lt.s32.totalorder %v1229, 0
      %vm1514 = vcmp.lt.s32.totalorder %v1240, 0
      %vm1515 = vcmp.lt.s32.totalorder %v1251, 0
      %vm1516 = vcmp.lt.s32.totalorder %v1262, 0
      %vm1517 = vcmp.lt.s32.totalorder %v1273, 0
      %vm1518 = vcmp.lt.s32.totalorder %v1284, 0
      %vm1519 = vcmp.lt.s32.totalorder %v1295, 0
      %vm1520 = vcmp.lt.s32.totalorder %v1306, 0
      %vm1521 = vcmp.lt.s32.totalorder %v1317, 0
      %vm1522 = vcmp.lt.s32.totalorder %v1328, 0
      %vm1523 = vcmp.lt.s32.totalorder %v1339, 0
      %vm1524 = vcmp.lt.s32.totalorder %v1350, 0
      %vm1525 = vcmp.lt.s32.totalorder %v1361, 0
      %vm1526 = vcmp.lt.s32.totalorder %v1372, 0
      %vm1527 = vcmp.lt.s32.totalorder %v1383, 0
      %vm1528 = vcmp.lt.s32.totalorder %v1394, 0
      %vm1529 = vcmp.lt.s32.totalorder %v1405, 0
      %vm1530 = vcmp.lt.s32.totalorder %v1416, 0
      %vm1531 = vcmp.lt.s32.totalorder %v1427, 0
      %vm1532 = vcmp.lt.s32.totalorder %v1438, 0
      %vm1533 = vcmp.lt.s32.totalorder %v1449, 0
      %vm1534 = vcmp.lt.s32.totalorder %v1460, 0
      %vm1535 = vcmp.lt.s32.totalorder %v1471, 0
      %vm1536 = vmand %vm1504, %vm1472
      %vm1537 = vmand %vm1505, %vm1473
      %vm1538 = vmand %vm1506, %vm1474
      %vm1539 = vmand %vm1507, %vm1475
      %vm1540 = vmand %vm1508, %vm1476
      %vm1541 = vmand %vm1509, %vm1477
      %vm1542 = vmand %vm1510, %vm1478
      %vm1543 = vmand %vm1511, %vm1479
      %vm1544 = vmand %vm1512, %vm1480
      %vm1545 = vmand %vm1513, %vm1481
      %vm1546 = vmand %vm1514, %vm1482
      %vm1547 = vmand %vm1515, %vm1483
      %vm1548 = vmand %vm1516, %vm1484
      %vm1549 = vmand %vm1517, %vm1485
      %vm1550 = vmand %vm1518, %vm1486
      %vm1551 = vmand %vm1519, %vm1487
      %vm1552 = vmand %vm1520, %vm1488
      %vm1553 = vmand %vm1521, %vm1489
      %vm1554 = vmand %vm1522, %vm1490
      %vm1555 = vmand %vm1523, %vm1491
      %vm1556 = vmand %vm1524, %vm1492
      %vm1557 = vmand %vm1525, %vm1493
      %vm1558 = vmand %vm1526, %vm1494
      %vm1559 = vmand %vm1527, %vm1495
      %vm1560 = vmand %vm1528, %vm1496
      %vm1561 = vmand %vm1529, %vm1497
      %vm1562 = vmand %vm1530, %vm1498
      %vm1563 = vmand %vm1531, %vm1499
      %vm1564 = vmand %vm1532, %vm1500
      %vm1565 = vmand %vm1533, %vm1501
      %vm1566 = vmand %vm1534, %vm1502
      %vm1567 = vmand %vm1535, %vm1503
      %v1568 = vadd.s32 %v1130, 33
      %v1569 = vadd.s32 %v1141, 33
      %v1570 = vadd.s32 %v1152, 33
      %v1571 = vadd.s32 %v1163, 33
      %v1572 = vadd.s32 %v1174, 33
      %v1573 = vadd.s32 %v1185, 33
      %v1574 = vadd.s32 %v1196, 33
      %v1575 = vadd.s32 %v1207, 33
      %v1576 = vadd.s32 %v1218, 33
      %v1577 = vadd.s32 %v1229, 33
      %v1578 = vadd.s32 %v1240, 33
      %v1579 = vadd.s32 %v1251, 33
      %v1580 = vadd.s32 %v1262, 33
      %v1581 = vadd.s32 %v1273, 33
      %v1582 = vadd.s32 %v1284, 33
      %v1583 = vadd.s32 %v1295, 33
      %v1584 = vadd.s32 %v1306, 33
      %v1585 = vadd.s32 %v1317, 33
      %v1586 = vadd.s32 %v1328, 33
      %v1587 = vadd.s32 %v1339, 33
      %v1588 = vadd.s32 %v1350, 33
      %v1589 = vadd.s32 %v1361, 33
      %v1590 = vadd.s32 %v1372, 33
      %v1591 = vadd.s32 %v1383, 33
      %v1592 = vadd.s32 %v1394, 33
      %v1593 = vadd.s32 %v1405, 33
      %v1594 = vadd.s32 %v1416, 33
      %v1595 = vadd.s32 %v1427, 33
      %v1596 = vadd.s32 %v1438, 33
      %v1597 = vadd.s32 %v1449, 33
      %v1598 = vadd.s32 %v1460, 33
      %v1599 = vadd.s32 %v1471, 33
      %v1600 = vsel %vm1536, %v1568, %v1130
      %v1601 = vsel %vm1537, %v1569, %v1141
      %v1602 = vsel %vm1538, %v1570, %v1152
      %v1603 = vsel %vm1539, %v1571, %v1163
      %v1604 = vsel %vm1540, %v1572, %v1174
      %v1605 = vsel %vm1541, %v1573, %v1185
      %v1606 = vsel %vm1542, %v1574, %v1196
      %v1607 = vsel %vm1543, %v1575, %v1207
      %v1608 = vsel %vm1544, %v1576, %v1218
      %v1609 = vsel %vm1545, %v1577, %v1229
      %v1610 = vsel %vm1546, %v1578, %v1240
      %v1611 = vsel %vm1547, %v1579, %v1251
      %v1612 = vsel %vm1548, %v1580, %v1262
      %v1613 = vsel %vm1549, %v1581, %v1273
      %v1614 = vsel %vm1550, %v1582, %v1284
      %v1615 = vsel %vm1551, %v1583, %v1295
      %v1616 = vsel %vm1552, %v1584, %v1306
      %v1617 = vsel %vm1553, %v1585, %v1317
      %v1618 = vsel %vm1554, %v1586, %v1328
      %v1619 = vsel %vm1555, %v1587, %v1339
      %v1620 = vsel %vm1556, %v1588, %v1350
      %v1621 = vsel %vm1557, %v1589, %v1361
      %v1622 = vsel %vm1558, %v1590, %v1372
      %v1623 = vsel %vm1559, %v1591, %v1383
      %v1624 = vsel %vm1560, %v1592, %v1394
      %v1625 = vsel %vm1561, %v1593, %v1405
      %v1626 = vsel %vm1562, %v1594, %v1416
      %v1627 = vsel %vm1563, %v1595, %v1427
      %v1628 = vsel %vm1564, %v1596, %v1438
      %v1629 = vsel %vm1565, %v1597, %v1449
      %v1630 = vsel %vm1566, %v1598, %v1460
      %v1631 = vsel %vm1567, %v1599, %v1471
      %vm1632 = vcmp.ne.s32.totalorder %v1600, 0
      %vm1633 = vcmp.ne.s32.totalorder %v1601, 0
      %vm1634 = vcmp.ne.s32.totalorder %v1602, 0
      %vm1635 = vcmp.ne.s32.totalorder %v1603, 0
      %vm1636 = vcmp.ne.s32.totalorder %v1604, 0
      %vm1637 = vcmp.ne.s32.totalorder %v1605, 0
      %vm1638 = vcmp.ne.s32.totalorder %v1606, 0
      %vm1639 = vcmp.ne.s32.totalorder %v1607, 0
      %vm1640 = vcmp.ne.s32.totalorder %v1608, 0
      %vm1641 = vcmp.ne.s32.totalorder %v1609, 0
      %vm1642 = vcmp.ne.s32.totalorder %v1610, 0
      %vm1643 = vcmp.ne.s32.totalorder %v1611, 0
      %vm1644 = vcmp.ne.s32.totalorder %v1612, 0
      %vm1645 = vcmp.ne.s32.totalorder %v1613, 0
      %vm1646 = vcmp.ne.s32.totalorder %v1614, 0
      %vm1647 = vcmp.ne.s32.totalorder %v1615, 0
      %vm1648 = vcmp.ne.s32.totalorder %v1616, 0
      %vm1649 = vcmp.ne.s32.totalorder %v1617, 0
      %vm1650 = vcmp.ne.s32.totalorder %v1618, 0
      %vm1651 = vcmp.ne.s32.totalorder %v1619, 0
      %vm1652 = vcmp.ne.s32.totalorder %v1620, 0
      %vm1653 = vcmp.ne.s32.totalorder %v1621, 0
      %vm1654 = vcmp.ne.s32.totalorder %v1622, 0
      %vm1655 = vcmp.ne.s32.totalorder %v1623, 0
      %vm1656 = vcmp.ne.s32.totalorder %v1624, 0
      %vm1657 = vcmp.ne.s32.totalorder %v1625, 0
      %vm1658 = vcmp.ne.s32.totalorder %v1626, 0
      %vm1659 = vcmp.ne.s32.totalorder %v1627, 0
      %vm1660 = vcmp.ne.s32.totalorder %v1628, 0
      %vm1661 = vcmp.ne.s32.totalorder %v1629, 0
      %vm1662 = vcmp.ne.s32.totalorder %v1630, 0
      %vm1663 = vcmp.ne.s32.totalorder %v1631, 0
      %v1664 = vsel %vm1632, 1, 0
      %v1665 = vsel %vm1633, 1, 0
      %v1666 = vsel %vm1634, 1, 0
      %v1667 = vsel %vm1635, 1, 0
      %v1668 = vsel %vm1636, 1, 0
      %v1669 = vsel %vm1637, 1, 0
      %v1670 = vsel %vm1638, 1, 0
      %v1671 = vsel %vm1639, 1, 0
      %v1672 = vsel %vm1640, 1, 0
      %v1673 = vsel %vm1641, 1, 0
      %v1674 = vsel %vm1642, 1, 0
      %v1675 = vsel %vm1643, 1, 0
      %v1676 = vsel %vm1644, 1, 0
      %v1677 = vsel %vm1645, 1, 0
      %v1678 = vsel %vm1646, 1, 0
      %v1679 = vsel %vm1647, 1, 0
      %v1680 = vsel %vm1648, 1, 0
      %v1681 = vsel %vm1649, 1, 0
      %v1682 = vsel %vm1650, 1, 0
      %v1683 = vsel %vm1651, 1, 0
      %v1684 = vsel %vm1652, 1, 0
      %v1685 = vsel %vm1653, 1, 0
      %v1686 = vsel %vm1654, 1, 0
      %v1687 = vsel %vm1655, 1, 0
      %v1688 = vsel %vm1656, 1, 0
      %v1689 = vsel %vm1657, 1, 0
      %v1690 = vsel %vm1658, 1, 0
      %v1691 = vsel %vm1659, 1, 0
      %v1692 = vsel %vm1660, 1, 0
      %v1693 = vsel %vm1661, 1, 0
      %v1694 = vsel %vm1662, 1, 0
      %v1695 = vsel %vm1663, 1, 0
      %v1696 = vcvt.s32.f32 %v1664
      %v1697 = vcvt.s32.f32 %v1665
      %v1698 = vcvt.s32.f32 %v1666
      %v1699 = vcvt.s32.f32 %v1667
      %v1700 = vcvt.s32.f32 %v1668
      %v1701 = vcvt.s32.f32 %v1669
      %v1702 = vcvt.s32.f32 %v1670
      %v1703 = vcvt.s32.f32 %v1671
      %v1704 = vcvt.s32.f32 %v1672
      %v1705 = vcvt.s32.f32 %v1673
      %v1706 = vcvt.s32.f32 %v1674
      %v1707 = vcvt.s32.f32 %v1675
      %v1708 = vcvt.s32.f32 %v1676
      %v1709 = vcvt.s32.f32 %v1677
      %v1710 = vcvt.s32.f32 %v1678
      %v1711 = vcvt.s32.f32 %v1679
      %v1712 = vcvt.s32.f32 %v1680
      %v1713 = vcvt.s32.f32 %v1681
      %v1714 = vcvt.s32.f32 %v1682
      %v1715 = vcvt.s32.f32 %v1683
      %v1716 = vcvt.s32.f32 %v1684
      %v1717 = vcvt.s32.f32 %v1685
      %v1718 = vcvt.s32.f32 %v1686
      %v1719 = vcvt.s32.f32 %v1687
      %v1720 = vcvt.s32.f32 %v1688
      %v1721 = vcvt.s32.f32 %v1689
      %v1722 = vcvt.s32.f32 %v1690
      %v1723 = vcvt.s32.f32 %v1691
      %v1724 = vcvt.s32.f32 %v1692
      %v1725 = vcvt.s32.f32 %v1693
      %v1726 = vcvt.s32.f32 %v1694
      %v1727 = vcvt.s32.f32 %v1695
      %v1728 = vmul.f32 %v705, %v1696
      %v1729 = vmul.f32 %v709, %v1697
      %v1730 = vmul.f32 %v715, %v1698
      %v1731 = vmul.f32 %v719, %v1699
      %v1732 = vmul.f32 %v725, %v1700
      %v1733 = vmul.f32 %v729, %v1701
      %v1734 = vmul.f32 %v735, %v1702
      %v1735 = vmul.f32 %v739, %v1703
      %v1736 = vmul.f32 %v745, %v1704
      %v1737 = vmul.f32 %v749, %v1705
      %v1738 = vmul.f32 %v755, %v1706
      %v1739 = vmul.f32 %v759, %v1707
      %v1740 = vmul.f32 %v765, %v1708
      %v1741 = vmul.f32 %v769, %v1709
      %v1742 = vmul.f32 %v775, %v1710
      %v1743 = vmul.f32 %v779, %v1711
      %v1744 = vmul.f32 %v785, %v1712
      %v1745 = vmul.f32 %v789, %v1713
      %v1746 = vmul.f32 %v795, %v1714
      %v1747 = vmul.f32 %v799, %v1715
      %v1748 = vmul.f32 %v805, %v1716
      %v1749 = vmul.f32 %v809, %v1717
      %v1750 = vmul.f32 %v815, %v1718
      %v1751 = vmul.f32 %v819, %v1719
      %v1752 = vmul.f32 %v825, %v1720
      %v1753 = vmul.f32 %v829, %v1721
      %v1754 = vmul.f32 %v835, %v1722
      %v1755 = vmul.f32 %v839, %v1723
      %v1756 = vmul.f32 %v845, %v1724
      %v1757 = vmul.f32 %v849, %v1725
      %v1758 = vmul.f32 %v855, %v1726
      %v1759 = vmul.f32 %v859, %v1727
      %vm1760 = vcmask 23552
      %1761 = vst.msk [vmem:[%s386] sm:$0xff] %vm1760, %v1728
      %1762 = vst.msk [vmem:[%s386 + $0x8] sm:$0xff] %vm1760, %v1729
      %1763 = vst.msk [vmem:[%s386 + $0x10] sm:$0xff] %vm1760, %v1730
      %1764 = vst.msk [vmem:[%s386 + $0x18] sm:$0xff] %vm1760, %v1731
      %1765 = vst.msk [vmem:[%s386 + $0x20] sm:$0xff] %vm1760, %v1732
      %1766 = vst.msk [vmem:[%s386 + $0x28] sm:$0xff] %vm1760, %v1733
      %1767 = vst.msk [vmem:[%s386 + $0x30] sm:$0xff] %vm1760, %v1734
      %1768 = vst.msk [vmem:[%s386 + $0x38] sm:$0xff] %vm1760, %v1735
      %1769 = vst.msk [vmem:[%s386 + $0x40] sm:$0xff] %vm1760, %v1736
      %1770 = vst.msk [vmem:[%s386 + $0x48] sm:$0xff] %vm1760, %v1737
      %1771 = vst.msk [vmem:[%s386 + $0x50] sm:$0xff] %vm1760, %v1738
      %1772 = vst.msk [vmem:[%s386 + $0x58] sm:$0xff] %vm1760, %v1739
      %1773 = vst.msk [vmem:[%s386 + $0x60] sm:$0xff] %vm1760, %v1740
      %1774 = vst.msk [vmem:[%s386 + $0x68] sm:$0xff] %vm1760, %v1741
      %1775 = vst.msk [vmem:[%s386 + $0x70] sm:$0xff] %vm1760, %v1742
      %1776 = vst.msk [vmem:[%s386 + $0x78] sm:$0xff] %vm1760, %v1743
      %1777 = vst.msk [vmem:[%s386 + $0x80] sm:$0xff] %vm1760, %v1744
      %1778 = vst.msk [vmem:[%s386 + $0x88] sm:$0xff] %vm1760, %v1745
      %1779 = vst.msk [vmem:[%s386 + $0x90] sm:$0xff] %vm1760, %v1746
      %1780 = vst.msk [vmem:[%s386 + $0x98] sm:$0xff] %vm1760, %v1747
      %1781 = vst.msk [vmem:[%s386 + $0xa0] sm:$0xff] %vm1760, %v1748
      %1782 = vst.msk [vmem:[%s386 + $0xa8] sm:$0xff] %vm1760, %v1749
      %1783 = vst.msk [vmem:[%s386 + $0xb0] sm:$0xff] %vm1760, %v1750
      %1784 = vst.msk [vmem:[%s386 + $0xb8] sm:$0xff] %vm1760, %v1751
      %1785 = vst.msk [vmem:[%s386 + $0xc0] sm:$0xff] %vm1760, %v1752
      %1786 = vst.msk [vmem:[%s386 + $0xc8] sm:$0xff] %vm1760, %v1753
      %1787 = vst.msk [vmem:[%s386 + $0xd0] sm:$0xff] %vm1760, %v1754
      %1788 = vst.msk [vmem:[%s386 + $0xd8] sm:$0xff] %vm1760, %v1755
      %1789 = vst.msk [vmem:[%s386 + $0xe0] sm:$0xff] %vm1760, %v1756
      %1790 = vst.msk [vmem:[%s386 + $0xe8] sm:$0xff] %vm1760, %v1757
      %1791 = vst.msk [vmem:[%s386 + $0xf0] sm:$0xff] %vm1760, %v1758
      %1792 = vst.msk [vmem:[%s386 + $0xf8] sm:$0xff] %vm1760, %v1759
      %v1793 = vpack.c.bf16 %v1022, %v1021
      %v1794 = vpack.c.bf16 %v1024, %v1023
      %v1795 = vpack.c.bf16 %v1026, %v1025
      %v1796 = vpack.c.bf16 %v1028, %v1027
      %v1797 = vpack.c.bf16 %v1030, %v1029
      %v1798 = vpack.c.bf16 %v1032, %v1031
      %v1799 = vpack.c.bf16 %v1034, %v1033
      %v1800 = vpack.c.bf16 %v1036, %v1035
      %v1801 = vpack.c.bf16 %v1038, %v1037
      %v1802 = vpack.c.bf16 %v1040, %v1039
      %v1803 = vpack.c.bf16 %v1042, %v1041
      %v1804 = vpack.c.bf16 %v1044, %v1043
      %v1805 = vpack.c.bf16 %v1046, %v1045
      %v1806 = vpack.c.bf16 %v1048, %v1047
      %v1807 = vpack.c.bf16 %v1050, %v1049
      %v1808 = vpack.c.bf16 %v1052, %v1051
      %v1841 = vunpack.c.l.b16 %v407
      %v1842 = vunpack.c.l.b16 %v408
      %v1843 = vunpack.c.l.b16 %v409
      %v1844 = vunpack.c.l.b16 %v410
      %v1845 = vunpack.c.l.b16 %v411
      %v1846 = vunpack.c.l.b16 %v412
      %v1847 = vunpack.c.l.b16 %v413
      %v1848 = vunpack.c.l.b16 %v414
      %v1849 = vunpack.c.l.b16 %v415
      %v1850 = vunpack.c.l.b16 %v416
      %v1851 = vunpack.c.l.b16 %v417
      %v1852 = vunpack.c.l.b16 %v418
      %v1853 = vunpack.c.l.b16 %v419
      %v1854 = vunpack.c.l.b16 %v420
      %v1855 = vunpack.c.l.b16 %v421
      %v1856 = vunpack.c.l.b16 %v422
      %v1857 = vunpack.c.l.b16 %v423
      %v1858 = vunpack.c.l.b16 %v424
      %v1859 = vunpack.c.l.b16 %v425
      %v1860 = vunpack.c.l.b16 %v426
      %v1861 = vunpack.c.l.b16 %v427
      %v1862 = vunpack.c.l.b16 %v428
      %v1863 = vunpack.c.l.b16 %v429
      %v1864 = vunpack.c.l.b16 %v430
      %v1865 = vunpack.c.l.b16 %v431
      %v1866 = vunpack.c.l.b16 %v432
      %v1867 = vunpack.c.l.b16 %v433
      %v1868 = vunpack.c.l.b16 %v434
      %v1869 = vunpack.c.l.b16 %v435
      %v1870 = vunpack.c.l.b16 %v436
      %v1871 = vunpack.c.l.b16 %v437
      %v1872 = vunpack.c.l.b16 %v438
      %v1873 = vpack.c.b16 %v1842, %v1841
      %v1874 = vpack.c.b16 %v1844, %v1843
      %v1875 = vpack.c.b16 %v1846, %v1845
      %v1876 = vpack.c.b16 %v1848, %v1847
      %v1877 = vpack.c.b16 %v1850, %v1849
      %v1878 = vpack.c.b16 %v1852, %v1851
      %v1879 = vpack.c.b16 %v1854, %v1853
      %v1880 = vpack.c.b16 %v1856, %v1855
      %v1881 = vpack.c.b16 %v1858, %v1857
      %v1882 = vpack.c.b16 %v1860, %v1859
      %v1883 = vpack.c.b16 %v1862, %v1861
      %v1884 = vpack.c.b16 %v1864, %v1863
      %v1885 = vpack.c.b16 %v1866, %v1865
      %v1886 = vpack.c.b16 %v1868, %v1867
      %v1887 = vpack.c.b16 %v1870, %v1869
      %v1888 = vpack.c.b16 %v1872, %v1871
      %v1905 = vld [vmem:[%s4] sm:$0xf]
      %v1906 = vld [vmem:[%s4 + $0x4] sm:$0xf]
      %v1907 = vld [vmem:[%s4 + $0x8] sm:$0xf]
      %v1908 = vld [vmem:[%s4 + $0xc] sm:$0xf]
      %v1909 = vld [vmem:[%s4 + $0x10] sm:$0xf]
      %v1910 = vld [vmem:[%s4 + $0x14] sm:$0xf]
      %v1911 = vld [vmem:[%s4 + $0x18] sm:$0xf]
      %v1912 = vld [vmem:[%s4 + $0x1c] sm:$0xf]
      %v1913 = vld [vmem:[%s4 + $0x20] sm:$0xf]
      %v1914 = vld [vmem:[%s4 + $0x24] sm:$0xf]
      %v1915 = vld [vmem:[%s4 + $0x28] sm:$0xf]
      %v1916 = vld [vmem:[%s4 + $0x2c] sm:$0xf]
      %v1917 = vld [vmem:[%s4 + $0x30] sm:$0xf]
      %v1918 = vld [vmem:[%s4 + $0x34] sm:$0xf]
      %v1919 = vld [vmem:[%s4 + $0x38] sm:$0xf]
      %v1920 = vld [vmem:[%s4 + $0x3c] sm:$0xf]
      %v1921 = vld [vmem:[%s4 + $0x40] sm:$0xf]
      %v1922 = vld [vmem:[%s4 + $0x44] sm:$0xf]
      %v1923 = vld [vmem:[%s4 + $0x48] sm:$0xf]
      %v1924 = vld [vmem:[%s4 + $0x4c] sm:$0xf]
      %v1925 = vld [vmem:[%s4 + $0x50] sm:$0xf]
      %v1926 = vld [vmem:[%s4 + $0x54] sm:$0xf]
      %v1927 = vld [vmem:[%s4 + $0x58] sm:$0xf]
      %v1928 = vld [vmem:[%s4 + $0x5c] sm:$0xf]
      %v1929 = vld [vmem:[%s4 + $0x60] sm:$0xf]
      %v1930 = vld [vmem:[%s4 + $0x64] sm:$0xf]
      %v1931 = vld [vmem:[%s4 + $0x68] sm:$0xf]
      %v1932 = vld [vmem:[%s4 + $0x6c] sm:$0xf]
      %v1933 = vld [vmem:[%s4 + $0x70] sm:$0xf]
      %v1934 = vld [vmem:[%s4 + $0x74] sm:$0xf]
      %v1935 = vld [vmem:[%s4 + $0x78] sm:$0xf]
      %v1936 = vld [vmem:[%s4 + $0x7c] sm:$0xf]
      %v1937 = vld [vmem:[%s5] sm:$0x1]
      %v1939 = vlaneseq
      %v1940 = vshrl.u32 %v1939, 7
      %v1941 = vsub.s32 0, %v1940
      %v1942 = vrot.slane %v1937, %v1941
      %v1976 = vunpack.c.l.b16 %v1905
      %v1977 = vunpack.c.l.b16 %v1906
      %v1978 = vunpack.c.l.b16 %v1907
      %v1979 = vunpack.c.l.b16 %v1908
      %v1980 = vunpack.c.l.b16 %v1909
      %v1981 = vunpack.c.l.b16 %v1910
      %v1982 = vunpack.c.l.b16 %v1911
      %v1983 = vunpack.c.l.b16 %v1912
      %v1984 = vunpack.c.l.b16 %v1913
      %v1985 = vunpack.c.l.b16 %v1914
      %v1986 = vunpack.c.l.b16 %v1915
      %v1987 = vunpack.c.l.b16 %v1916
      %v1988 = vunpack.c.l.b16 %v1917
      %v1989 = vunpack.c.l.b16 %v1918
      %v1990 = vunpack.c.l.b16 %v1919
      %v1991 = vunpack.c.l.b16 %v1920
      %v1992 = vunpack.c.l.b16 %v1921
      %v1993 = vunpack.c.l.b16 %v1922
      %v1994 = vunpack.c.l.b16 %v1923
      %v1995 = vunpack.c.l.b16 %v1924
      %v1996 = vunpack.c.l.b16 %v1925
      %v1997 = vunpack.c.l.b16 %v1926
      %v1998 = vunpack.c.l.b16 %v1927
      %v1999 = vunpack.c.l.b16 %v1928
      %v2000 = vunpack.c.l.b16 %v1929
      %v2001 = vunpack.c.l.b16 %v1930
      %v2002 = vunpack.c.l.b16 %v1931
      %v2003 = vunpack.c.l.b16 %v1932
      %v2004 = vunpack.c.l.b16 %v1933
      %v2005 = vunpack.c.l.b16 %v1934
      %v2006 = vunpack.c.l.b16 %v1935
      %v2007 = vunpack.c.l.b16 %v1936
      %v2008 = vpack.c.b16 %v1977, %v1976
      %v2009 = vpack.c.b16 %v1979, %v1978
      %v2010 = vpack.c.b16 %v1981, %v1980
      %v2011 = vpack.c.b16 %v1983, %v1982
      %v2012 = vpack.c.b16 %v1985, %v1984
      %v2013 = vpack.c.b16 %v1987, %v1986
      %v2014 = vpack.c.b16 %v1989, %v1988
      %v2015 = vpack.c.b16 %v1991, %v1990
      %v2016 = vpack.c.b16 %v1993, %v1992
      %v2017 = vpack.c.b16 %v1995, %v1994
      %v2018 = vpack.c.b16 %v1997, %v1996
      %v2019 = vpack.c.b16 %v1999, %v1998
      %v2020 = vpack.c.b16 %v2001, %v2000
      %v2021 = vpack.c.b16 %v2003, %v2002
      %v2022 = vpack.c.b16 %v2005, %v2004
      %v2023 = vpack.c.b16 %v2007, %v2006
      %2040 = vmatprep.subr.bf16.mxu0 0
      %2041 = vmatpush1.bf16.msra.mxu0 %v2015
      %2042 = vmatprep.subr.bf16.mxu0 0
      %2043 = vmatpush1.bf16.msra.mxu0 %v2014
      %2044 = vmatprep.subr.bf16.mxu0 0
      %2045 = vmatpush1.bf16.msra.mxu0 %v2013
      %2046 = vmatprep.subr.bf16.mxu0 0
      %2047 = vmatpush1.bf16.msra.mxu0 %v2012
      %2048 = vmatprep.subr.bf16.mxu0 0
      %2049 = vmatpush1.bf16.msra.mxu0 %v2011
      %2050 = vmatprep.subr.bf16.mxu0 0
      %2051 = vmatpush1.bf16.msra.mxu0 %v2010
      %2052 = vmatprep.subr.bf16.mxu0 0
      %2053 = vmatpush1.bf16.msra.mxu0 %v2009
      %2054 = vmatprep.subr.bf16.mxu0 0
      %2055 = vmatpush1.bf16.msra.mxu0 %v2008
      %2056 = vmatprep.subr.bf16.mxu0 0
      %2057 = vmatpush2.bf16.msra.mxu0 %v2023
      %2058 = vmatprep.subr.bf16.mxu0 0
      %2059 = vmatpush2.bf16.msra.mxu0 %v2022
      %2060 = vmatprep.subr.bf16.mxu0 0
      %2061 = vmatpush2.bf16.msra.mxu0 %v2021
      %2062 = vmatprep.subr.bf16.mxu0 0
      %2063 = vmatpush2.bf16.msra.mxu0 %v2020
      %2064 = vmatprep.subr.bf16.mxu0 0
      %2065 = vmatpush2.bf16.msra.mxu0 %v2019
      %2066 = vmatprep.subr.bf16.mxu0 0
      %2067 = vmatpush2.bf16.msra.mxu0 %v2018
      %2068 = vmatprep.subr.bf16.mxu0 0
      %2069 = vmatpush2.bf16.msra.mxu0 %v2017
      %2070 = vmatprep.subr.bf16.mxu0 0
      %2071 = vmatpush2.bf16.msra.mxu0 %v2016
      %2072 = vmatprep.mubr.bf16.mxu0 %v1793
      %2073 = vmatmul.mubr.bf16.gmra.mxu0 %v1873
      %v2074 = vpop.f32.mrf.mxu0
      %v2075 = vadd.f32 %v1942, %v2074
      %v2076 = vpop.f32.mrf.mxu0
      %v2077 = vpop.f32.mrf.mxu0
      %v2078 = vadd.f32 %v1942, %v2077
      %v2079 = vpop.f32.mrf.mxu0
      %2080 = vmatprep.mubr.bf16.mxu0 %v1794
      %2081 = vmatmul.mubr.bf16.gmra.mxu0 %v1874
      %v2082 = vpop.f32.mrf.mxu0
      %v2083 = vadd.f32 %v1942, %v2082
      %v2084 = vpop.f32.mrf.mxu0
      %v2085 = vpop.f32.mrf.mxu0
      %v2086 = vadd.f32 %v1942, %v2085
      %v2087 = vpop.f32.mrf.mxu0
      %2088 = vmatprep.mubr.bf16.mxu0 %v1795
      %2089 = vmatmul.mubr.bf16.gmra.mxu0 %v1875
      %v2090 = vpop.f32.mrf.mxu0
      %v2091 = vadd.f32 %v1942, %v2090
      %v2092 = vpop.f32.mrf.mxu0
      %v2093 = vpop.f32.mrf.mxu0
      %v2094 = vadd.f32 %v1942, %v2093
      %v2095 = vpop.f32.mrf.mxu0
      %2096 = vmatprep.mubr.bf16.mxu0 %v1796
      %2097 = vmatmul.mubr.bf16.gmra.mxu0 %v1876
      %v2098 = vpop.f32.mrf.mxu0
      %v2099 = vadd.f32 %v1942, %v2098
      %v2100 = vpop.f32.mrf.mxu0
      %v2101 = vpop.f32.mrf.mxu0
      %v2102 = vadd.f32 %v1942, %v2101
      %v2103 = vpop.f32.mrf.mxu0
      %2104 = vmatprep.mubr.bf16.mxu0 %v1797
      %2105 = vmatmul.mubr.bf16.gmra.mxu0 %v1877
      %v2106 = vpop.f32.mrf.mxu0
      %v2107 = vadd.f32 %v1942, %v2106
      %v2108 = vpop.f32.mrf.mxu0
      %v2109 = vpop.f32.mrf.mxu0
      %v2110 = vadd.f32 %v1942, %v2109
      %v2111 = vpop.f32.mrf.mxu0
      %2112 = vmatprep.mubr.bf16.mxu0 %v1798
      %2113 = vmatmul.mubr.bf16.gmra.mxu0 %v1878
      %v2114 = vpop.f32.mrf.mxu0
      %v2115 = vadd.f32 %v1942, %v2114
      %v2116 = vpop.f32.mrf.mxu0
      %v2117 = vpop.f32.mrf.mxu0
      %v2118 = vadd.f32 %v1942, %v2117
      %v2119 = vpop.f32.mrf.mxu0
      %2120 = vmatprep.mubr.bf16.mxu0 %v1799
      %2121 = vmatmul.mubr.bf16.gmra.mxu0 %v1879
      %v2122 = vpop.f32.mrf.mxu0
      %v2123 = vadd.f32 %v1942, %v2122
      %v2124 = vpop.f32.mrf.mxu0
      %v2125 = vpop.f32.mrf.mxu0
      %v2126 = vadd.f32 %v1942, %v2125
      %v2127 = vpop.f32.mrf.mxu0
      %2128 = vmatprep.mubr.bf16.mxu0 %v1800
      %2129 = vmatmul.mubr.bf16.gmra.mxu0 %v1880
      %v2130 = vpop.f32.mrf.mxu0
      %v2131 = vadd.f32 %v1942, %v2130
      %v2132 = vpop.f32.mrf.mxu0
      %v2133 = vpop.f32.mrf.mxu0
      %v2134 = vadd.f32 %v1942, %v2133
      %v2135 = vpop.f32.mrf.mxu0
      %2136 = vmatprep.mubr.bf16.mxu0 %v1801
      %2137 = vmatmul.mubr.bf16.gmra.mxu0 %v1881
      %v2138 = vpop.f32.mrf.mxu0
      %v2139 = vadd.f32 %v1942, %v2138
      %v2140 = vpop.f32.mrf.mxu0
      %v2141 = vpop.f32.mrf.mxu0
      %v2142 = vadd.f32 %v1942, %v2141
      %v2143 = vpop.f32.mrf.mxu0
      %2144 = vmatprep.mubr.bf16.mxu0 %v1802
      %2145 = vmatmul.mubr.bf16.gmra.mxu0 %v1882
      %v2146 = vpop.f32.mrf.mxu0
      %v2147 = vadd.f32 %v1942, %v2146
      %v2148 = vpop.f32.mrf.mxu0
      %v2149 = vpop.f32.mrf.mxu0
      %v2150 = vadd.f32 %v1942, %v2149
      %v2151 = vpop.f32.mrf.mxu0
      %2152 = vmatprep.mubr.bf16.mxu0 %v1803
      %2153 = vmatmul.mubr.bf16.gmra.mxu0 %v1883
      %v2154 = vpop.f32.mrf.mxu0
      %v2155 = vadd.f32 %v1942, %v2154
      %v2156 = vpop.f32.mrf.mxu0
      %v2157 = vpop.f32.mrf.mxu0
      %v2158 = vadd.f32 %v1942, %v2157
      %v2159 = vpop.f32.mrf.mxu0
      %2160 = vmatprep.mubr.bf16.mxu0 %v1804
      %2161 = vmatmul.mubr.bf16.gmra.mxu0 %v1884
      %v2162 = vpop.f32.mrf.mxu0
      %v2163 = vadd.f32 %v1942, %v2162
      %v2164 = vpop.f32.mrf.mxu0
      %v2165 = vpop.f32.mrf.mxu0
      %v2166 = vadd.f32 %v1942, %v2165
      %v2167 = vpop.f32.mrf.mxu0
      %2168 = vmatprep.mubr.bf16.mxu0 %v1805
      %2169 = vmatmul.mubr.bf16.gmra.mxu0 %v1885
      %v2170 = vpop.f32.mrf.mxu0
      %v2171 = vadd.f32 %v1942, %v2170
      %v2172 = vpop.f32.mrf.mxu0
      %v2173 = vpop.f32.mrf.mxu0
      %v2174 = vadd.f32 %v1942, %v2173
      %v2175 = vpop.f32.mrf.mxu0
      %2176 = vmatprep.mubr.bf16.mxu0 %v1806
      %2177 = vmatmul.mubr.bf16.gmra.mxu0 %v1886
      %v2178 = vpop.f32.mrf.mxu0
      %v2179 = vadd.f32 %v1942, %v2178
      %v2180 = vpop.f32.mrf.mxu0
      %v2181 = vpop.f32.mrf.mxu0
      %v2182 = vadd.f32 %v1942, %v2181
      %v2183 = vpop.f32.mrf.mxu0
      %2184 = vmatprep.mubr.bf16.mxu0 %v1807
      %2185 = vmatmul.mubr.bf16.gmra.mxu0 %v1887
      %v2186 = vpop.f32.mrf.mxu0
      %v2187 = vadd.f32 %v1942, %v2186
      %v2188 = vpop.f32.mrf.mxu0
      %v2189 = vpop.f32.mrf.mxu0
      %v2190 = vadd.f32 %v1942, %v2189
      %v2191 = vpop.f32.mrf.mxu0
      %2192 = vmatprep.mubr.bf16.mxu0 %v1808
      %2193 = vmatmul.mubr.bf16.gmra.mxu0 %v1888
      %v2194 = vpop.f32.mrf.mxu0
      %v2195 = vadd.f32 %v1942, %v2194
      %v2196 = vpop.f32.mrf.mxu0
      %v2197 = vpop.f32.mrf.mxu0
      %v2198 = vadd.f32 %v1942, %v2197
      %v2199 = vpop.f32.mrf.mxu0
      %2200 = vdwg.mxu0
      %vm2201 = vcmp.gt.f32.partialorder %v2075, 0.0
      %vm2202 = vcmp.gt.f32.partialorder %v2078, 0.0
      %vm2203 = vcmp.gt.f32.partialorder %v2083, 0.0
      %vm2204 = vcmp.gt.f32.partialorder %v2086, 0.0
      %vm2205 = vcmp.gt.f32.partialorder %v2091, 0.0
      %vm2206 = vcmp.gt.f32.partialorder %v2094, 0.0
      %vm2207 = vcmp.gt.f32.partialorder %v2099, 0.0
      %vm2208 = vcmp.gt.f32.partialorder %v2102, 0.0
      %vm2209 = vcmp.gt.f32.partialorder %v2107, 0.0
      %vm2210 = vcmp.gt.f32.partialorder %v2110, 0.0
      %vm2211 = vcmp.gt.f32.partialorder %v2115, 0.0
      %vm2212 = vcmp.gt.f32.partialorder %v2118, 0.0
      %vm2213 = vcmp.gt.f32.partialorder %v2123, 0.0
      %vm2214 = vcmp.gt.f32.partialorder %v2126, 0.0
      %vm2215 = vcmp.gt.f32.partialorder %v2131, 0.0
      %vm2216 = vcmp.gt.f32.partialorder %v2134, 0.0
      %vm2217 = vcmp.gt.f32.partialorder %v2139, 0.0
      %vm2218 = vcmp.gt.f32.partialorder %v2142, 0.0
      %vm2219 = vcmp.gt.f32.partialorder %v2147, 0.0
      %vm2220 = vcmp.gt.f32.partialorder %v2150, 0.0
      %vm2221 = vcmp.gt.f32.partialorder %v2155, 0.0
      %vm2222 = vcmp.gt.f32.partialorder %v2158, 0.0
      %vm2223 = vcmp.gt.f32.partialorder %v2163, 0.0
      %vm2224 = vcmp.gt.f32.partialorder %v2166, 0.0
      %vm2225 = vcmp.gt.f32.partialorder %v2171, 0.0
      %vm2226 = vcmp.gt.f32.partialorder %v2174, 0.0
      %vm2227 = vcmp.gt.f32.partialorder %v2179, 0.0
      %vm2228 = vcmp.gt.f32.partialorder %v2182, 0.0
      %vm2229 = vcmp.gt.f32.partialorder %v2187, 0.0
      %vm2230 = vcmp.gt.f32.partialorder %v2190, 0.0
      %vm2231 = vcmp.gt.f32.partialorder %v2195, 0.0
      %vm2232 = vcmp.gt.f32.partialorder %v2198, 0.0
      %v2233 = vmin.f32 %v2075, 0.0
      %v2234 = vmin.f32 %v2078, 0.0
      %v2235 = vmin.f32 %v2083, 0.0
      %v2236 = vmin.f32 %v2086, 0.0
      %v2237 = vmin.f32 %v2091, 0.0
      %v2238 = vmin.f32 %v2094, 0.0
      %v2239 = vmin.f32 %v2099, 0.0
      %v2240 = vmin.f32 %v2102, 0.0
      %v2241 = vmin.f32 %v2107, 0.0
      %v2242 = vmin.f32 %v2110, 0.0
      %v2243 = vmin.f32 %v2115, 0.0
      %v2244 = vmin.f32 %v2118, 0.0
      %v2245 = vmin.f32 %v2123, 0.0
      %v2246 = vmin.f32 %v2126, 0.0
      %v2247 = vmin.f32 %v2131, 0.0
      %v2248 = vmin.f32 %v2134, 0.0
      %v2249 = vmin.f32 %v2139, 0.0
      %v2250 = vmin.f32 %v2142, 0.0
      %v2251 = vmin.f32 %v2147, 0.0
      %v2252 = vmin.f32 %v2150, 0.0
      %v2253 = vmin.f32 %v2155, 0.0
      %v2254 = vmin.f32 %v2158, 0.0
      %v2255 = vmin.f32 %v2163, 0.0
      %v2256 = vmin.f32 %v2166, 0.0
      %v2257 = vmin.f32 %v2171, 0.0
      %v2258 = vmin.f32 %v2174, 0.0
      %v2259 = vmin.f32 %v2179, 0.0
      %v2260 = vmin.f32 %v2182, 0.0
      %v2261 = vmin.f32 %v2187, 0.0
      %v2262 = vmin.f32 %v2190, 0.0
      %v2263 = vmin.f32 %v2195, 0.0
      %v2264 = vmin.f32 %v2198, 0.0
      %v2265 = vmul.f32 %v2233, 1.442695
      %v2266 = vpow.pop %v2265
      %v2267 = vmul.f32 %v2234, 1.442695
      %v2268 = vpow.pop %v2267
      %v2269 = vmul.f32 %v2235, 1.442695
      %v2270 = vpow.pop %v2269
      %v2271 = vmul.f32 %v2236, 1.442695
      %v2272 = vpow.pop %v2271
      %v2273 = vmul.f32 %v2237, 1.442695
      %v2274 = vpow.pop %v2273
      %v2275 = vmul.f32 %v2238, 1.442695
      %v2276 = vpow.pop %v2275
      %v2277 = vmul.f32 %v2239, 1.442695
      %v2278 = vpow.pop %v2277
      %v2279 = vmul.f32 %v2240, 1.442695
      %v2280 = vpow.pop %v2279
      %v2281 = vmul.f32 %v2241, 1.442695
      %v2282 = vpow.pop %v2281
      %v2283 = vmul.f32 %v2242, 1.442695
      %v2284 = vpow.pop %v2283
      %v2285 = vmul.f32 %v2243, 1.442695
      %v2286 = vpow.pop %v2285
      %v2287 = vmul.f32 %v2244, 1.442695
      %v2288 = vpow.pop %v2287
      %v2289 = vmul.f32 %v2245, 1.442695
      %v2290 = vpow.pop %v2289
      %v2291 = vmul.f32 %v2246, 1.442695
      %v2292 = vpow.pop %v2291
      %v2293 = vmul.f32 %v2247, 1.442695
      %v2294 = vpow.pop %v2293
      %v2295 = vmul.f32 %v2248, 1.442695
      %v2296 = vpow.pop %v2295
      %v2297 = vmul.f32 %v2249, 1.442695
      %v2298 = vpow.pop %v2297
      %v2299 = vmul.f32 %v2250, 1.442695
      %v2300 = vpow.pop %v2299
      %v2301 = vmul.f32 %v2251, 1.442695
      %v2302 = vpow.pop %v2301
      %v2303 = vmul.f32 %v2252, 1.442695
      %v2304 = vpow.pop %v2303
      %v2305 = vmul.f32 %v2253, 1.442695
      %v2306 = vpow.pop %v2305
      %v2307 = vmul.f32 %v2254, 1.442695
      %v2308 = vpow.pop %v2307
      %v2309 = vmul.f32 %v2255, 1.442695
      %v2310 = vpow.pop %v2309
      %v2311 = vmul.f32 %v2256, 1.442695
      %v2312 = vpow.pop %v2311
      %v2313 = vmul.f32 %v2257, 1.442695
      %v2314 = vpow.pop %v2313
      %v2315 = vmul.f32 %v2258, 1.442695
      %v2316 = vpow.pop %v2315
      %v2317 = vmul.f32 %v2259, 1.442695
      %v2318 = vpow.pop %v2317
      %v2319 = vmul.f32 %v2260, 1.442695
      %v2320 = vpow.pop %v2319
      %v2321 = vmul.f32 %v2261, 1.442695
      %v2322 = vpow.pop %v2321
      %v2323 = vmul.f32 %v2262, 1.442695
      %v2324 = vpow.pop %v2323
      %v2325 = vmul.f32 %v2263, 1.442695
      %v2326 = vpow.pop %v2325
      %v2327 = vmul.f32 %v2264, 1.442695
      %v2328 = vpow.pop %v2327
      %v2329 = vsub.f32 %v2266, 1.0
      %v2330 = vsub.f32 %v2268, 1.0
      %v2331 = vsub.f32 %v2270, 1.0
      %v2332 = vsub.f32 %v2272, 1.0
      %v2333 = vsub.f32 %v2274, 1.0
      %v2334 = vsub.f32 %v2276, 1.0
      %v2335 = vsub.f32 %v2278, 1.0
      %v2336 = vsub.f32 %v2280, 1.0
      %v2337 = vsub.f32 %v2282, 1.0
      %v2338 = vsub.f32 %v2284, 1.0
      %v2339 = vsub.f32 %v2286, 1.0
      %v2340 = vsub.f32 %v2288, 1.0
      %v2341 = vsub.f32 %v2290, 1.0
      %v2342 = vsub.f32 %v2292, 1.0
      %v2343 = vsub.f32 %v2294, 1.0
      %v2344 = vsub.f32 %v2296, 1.0
      %v2345 = vsub.f32 %v2298, 1.0
      %v2346 = vsub.f32 %v2300, 1.0
      %v2347 = vsub.f32 %v2302, 1.0
      %v2348 = vsub.f32 %v2304, 1.0
      %v2349 = vsub.f32 %v2306, 1.0
      %v2350 = vsub.f32 %v2308, 1.0
      %v2351 = vsub.f32 %v2310, 1.0
      %v2352 = vsub.f32 %v2312, 1.0
      %v2353 = vsub.f32 %v2314, 1.0
      %v2354 = vsub.f32 %v2316, 1.0
      %v2355 = vsub.f32 %v2318, 1.0
      %v2356 = vsub.f32 %v2320, 1.0
      %v2357 = vsub.f32 %v2322, 1.0
      %v2358 = vsub.f32 %v2324, 1.0
      %v2359 = vsub.f32 %v2326, 1.0
      %v2360 = vsub.f32 %v2328, 1.0
      %v2361 = vsel %vm2201, %v2075, %v2329
      %v2362 = vsel %vm2202, %v2078, %v2330
      %v2363 = vsel %vm2203, %v2083, %v2331
      %v2364 = vsel %vm2204, %v2086, %v2332
      %v2365 = vsel %vm2205, %v2091, %v2333
      %v2366 = vsel %vm2206, %v2094, %v2334
      %v2367 = vsel %vm2207, %v2099, %v2335
      %v2368 = vsel %vm2208, %v2102, %v2336
      %v2369 = vsel %vm2209, %v2107, %v2337
      %v2370 = vsel %vm2210, %v2110, %v2338
      %v2371 = vsel %vm2211, %v2115, %v2339
      %v2372 = vsel %vm2212, %v2118, %v2340
      %v2373 = vsel %vm2213, %v2123, %v2341
      %v2374 = vsel %vm2214, %v2126, %v2342
      %v2375 = vsel %vm2215, %v2131, %v2343
      %v2376 = vsel %vm2216, %v2134, %v2344
      %v2377 = vsel %vm2217, %v2139, %v2345
      %v2378 = vsel %vm2218, %v2142, %v2346
      %v2379 = vsel %vm2219, %v2147, %v2347
      %v2380 = vsel %vm2220, %v2150, %v2348
      %v2381 = vsel %vm2221, %v2155, %v2349
      %v2382 = vsel %vm2222, %v2158, %v2350
      %v2383 = vsel %vm2223, %v2163, %v2351
      %v2384 = vsel %vm2224, %v2166, %v2352
      %v2385 = vsel %vm2225, %v2171, %v2353
      %v2386 = vsel %vm2226, %v2174, %v2354
      %v2387 = vsel %vm2227, %v2179, %v2355
      %v2388 = vsel %vm2228, %v2182, %v2356
      %v2389 = vsel %vm2229, %v2187, %v2357
      %v2390 = vsel %vm2230, %v2190, %v2358
      %v2391 = vsel %vm2231, %v2195, %v2359
      %v2392 = vsel %vm2232, %v2198, %v2360
      %v2393 = vpack.c.bf16 %v2362, %v2361
      %v2394 = vpack.c.bf16 %v2364, %v2363
      %v2395 = vpack.c.bf16 %v2366, %v2365
      %v2396 = vpack.c.bf16 %v2368, %v2367
      %v2397 = vpack.c.bf16 %v2370, %v2369
      %v2398 = vpack.c.bf16 %v2372, %v2371
      %v2399 = vpack.c.bf16 %v2374, %v2373
      %v2400 = vpack.c.bf16 %v2376, %v2375
      %v2401 = vpack.c.bf16 %v2378, %v2377
      %v2402 = vpack.c.bf16 %v2380, %v2379
      %v2403 = vpack.c.bf16 %v2382, %v2381
      %v2404 = vpack.c.bf16 %v2384, %v2383
      %v2405 = vpack.c.bf16 %v2386, %v2385
      %v2406 = vpack.c.bf16 %v2388, %v2387
      %v2407 = vpack.c.bf16 %v2390, %v2389
      %v2408 = vpack.c.bf16 %v2392, %v2391
      %v2425 = vunpack.c.l.b16 %v2393
      %v2426 = vunpack.c.h.b16 %v2393
      %v2427 = vunpack.c.l.b16 %v2394
      %v2428 = vunpack.c.h.b16 %v2394
      %v2429 = vunpack.c.l.b16 %v2395
      %v2430 = vunpack.c.h.b16 %v2395
      %v2431 = vunpack.c.l.b16 %v2396
      %v2432 = vunpack.c.h.b16 %v2396
      %v2433 = vunpack.c.l.b16 %v2397
      %v2434 = vunpack.c.h.b16 %v2397
      %v2435 = vunpack.c.l.b16 %v2398
      %v2436 = vunpack.c.h.b16 %v2398
      %v2437 = vunpack.c.l.b16 %v2399
      %v2438 = vunpack.c.h.b16 %v2399
      %v2439 = vunpack.c.l.b16 %v2400
      %v2440 = vunpack.c.h.b16 %v2400
      %v2441 = vunpack.c.l.b16 %v2401
      %v2442 = vunpack.c.h.b16 %v2401
      %v2443 = vunpack.c.l.b16 %v2402
      %v2444 = vunpack.c.h.b16 %v2402
      %v2445 = vunpack.c.l.b16 %v2403
      %v2446 = vunpack.c.h.b16 %v2403
      %v2447 = vunpack.c.l.b16 %v2404
      %v2448 = vunpack.c.h.b16 %v2404
      %v2449 = vunpack.c.l.b16 %v2405
      %v2450 = vunpack.c.h.b16 %v2405
      %v2451 = vunpack.c.l.b16 %v2406
      %v2452 = vunpack.c.h.b16 %v2406
      %v2453 = vunpack.c.l.b16 %v2407
      %v2454 = vunpack.c.h.b16 %v2407
      %v2455 = vunpack.c.l.b16 %v2408
      %v2456 = vunpack.c.h.b16 %v2408
      %v2457 = vpack.c.b16 %v2425, %v2425
      %v2458 = vpack.c.b16 %v2426, %v2426
      %v2459 = vpack.c.b16 %v2427, %v2427
      %v2460 = vpack.c.b16 %v2428, %v2428
      %v2461 = vpack.c.b16 %v2429, %v2429
      %v2462 = vpack.c.b16 %v2430, %v2430
      %v2463 = vpack.c.b16 %v2431, %v2431
      %v2464 = vpack.c.b16 %v2432, %v2432
      %v2465 = vpack.c.b16 %v2433, %v2433
      %v2466 = vpack.c.b16 %v2434, %v2434
      %v2467 = vpack.c.b16 %v2435, %v2435
      %v2468 = vpack.c.b16 %v2436, %v2436
      %v2469 = vpack.c.b16 %v2437, %v2437
      %v2470 = vpack.c.b16 %v2438, %v2438
      %v2471 = vpack.c.b16 %v2439, %v2439
      %v2472 = vpack.c.b16 %v2440, %v2440
      %v2473 = vpack.c.b16 %v2441, %v2441
      %v2474 = vpack.c.b16 %v2442, %v2442
      %v2475 = vpack.c.b16 %v2443, %v2443
      %v2476 = vpack.c.b16 %v2444, %v2444
      %v2477 = vpack.c.b16 %v2445, %v2445
      %v2478 = vpack.c.b16 %v2446, %v2446
      %v2479 = vpack.c.b16 %v2447, %v2447
      %v2480 = vpack.c.b16 %v2448, %v2448
      %v2481 = vpack.c.b16 %v2449, %v2449
      %v2482 = vpack.c.b16 %v2450, %v2450
      %v2483 = vpack.c.b16 %v2451, %v2451
      %v2484 = vpack.c.b16 %v2452, %v2452
      %v2485 = vpack.c.b16 %v2453, %v2453
      %v2486 = vpack.c.b16 %v2454, %v2454
      %v2487 = vpack.c.b16 %v2455, %v2455
      %v2488 = vpack.c.b16 %v2456, %v2456
      %2521 = vst [vmem:[%s396] sm:$0xf] %v2457
      %2522 = vst [vmem:[%s396 + $0x4] sm:$0xf] %v2458
      %2523 = vst [vmem:[%s396 + $0x8] sm:$0xf] %v2459
      %2524 = vst [vmem:[%s396 + $0xc] sm:$0xf] %v2460
      %2525 = vst [vmem:[%s396 + $0x10] sm:$0xf] %v2461
      %2526 = vst [vmem:[%s396 + $0x14] sm:$0xf] %v2462
      %2527 = vst [vmem:[%s396 + $0x18] sm:$0xf] %v2463
      %2528 = vst [vmem:[%s396 + $0x1c] sm:$0xf] %v2464
      %2529 = vst [vmem:[%s396 + $0x20] sm:$0xf] %v2465
      %2530 = vst [vmem:[%s396 + $0x24] sm:$0xf] %v2466
      %2531 = vst [vmem:[%s396 + $0x28] sm:$0xf] %v2467
      %2532 = vst [vmem:[%s396 + $0x2c] sm:$0xf] %v2468
      %2533 = vst [vmem:[%s396 + $0x30] sm:$0xf] %v2469
      %2534 = vst [vmem:[%s396 + $0x34] sm:$0xf] %v2470
      %2535 = vst [vmem:[%s396 + $0x38] sm:$0xf] %v2471
      %2536 = vst [vmem:[%s396 + $0x3c] sm:$0xf] %v2472
      %2537 = vst [vmem:[%s396 + $0x40] sm:$0xf] %v2473
      %2538 = vst [vmem:[%s396 + $0x44] sm:$0xf] %v2474
      %2539 = vst [vmem:[%s396 + $0x48] sm:$0xf] %v2475
      %2540 = vst [vmem:[%s396 + $0x4c] sm:$0xf] %v2476
      %2541 = vst [vmem:[%s396 + $0x50] sm:$0xf] %v2477
      %2542 = vst [vmem:[%s396 + $0x54] sm:$0xf] %v2478
      %2543 = vst [vmem:[%s396 + $0x58] sm:$0xf] %v2479
      %2544 = vst [vmem:[%s396 + $0x5c] sm:$0xf] %v2480
      %2545 = vst [vmem:[%s396 + $0x60] sm:$0xf] %v2481
      %2546 = vst [vmem:[%s396 + $0x64] sm:$0xf] %v2482
      %2547 = vst [vmem:[%s396 + $0x68] sm:$0xf] %v2483
      %2548 = vst [vmem:[%s396 + $0x6c] sm:$0xf] %v2484
      %2549 = vst [vmem:[%s396 + $0x70] sm:$0xf] %v2485
      %2550 = vst [vmem:[%s396 + $0x74] sm:$0xf] %v2486
      %2551 = vst [vmem:[%s396 + $0x78] sm:$0xf] %v2487
      %2552 = vst [vmem:[%s396 + $0x7c] sm:$0xf] %v2488
      %v2553 = vunpack.c.l.bf16 %v2393
      %v2554 = vunpack.c.h.bf16 %v2393
      %v2555 = vunpack.c.l.bf16 %v2394
      %v2556 = vunpack.c.h.bf16 %v2394
      %v2557 = vunpack.c.l.bf16 %v2395
      %v2558 = vunpack.c.h.bf16 %v2395
      %v2559 = vunpack.c.l.bf16 %v2396
      %v2560 = vunpack.c.h.bf16 %v2396
      %v2561 = vunpack.c.l.bf16 %v2397
      %v2562 = vunpack.c.h.bf16 %v2397
      %v2563 = vunpack.c.l.bf16 %v2398
      %v2564 = vunpack.c.h.bf16 %v2398
      %v2565 = vunpack.c.l.bf16 %v2399
      %v2566 = vunpack.c.h.bf16 %v2399
      %v2567 = vunpack.c.l.bf16 %v2400
      %v2568 = vunpack.c.h.bf16 %v2400
      %v2569 = vunpack.c.l.bf16 %v2401
      %v2570 = vunpack.c.h.bf16 %v2401
      %v2571 = vunpack.c.l.bf16 %v2402
      %v2572 = vunpack.c.h.bf16 %v2402
      %v2573 = vunpack.c.l.bf16 %v2403
      %v2574 = vunpack.c.h.bf16 %v2403
      %v2575 = vunpack.c.l.bf16 %v2404
      %v2576 = vunpack.c.h.bf16 %v2404
      %v2577 = vunpack.c.l.bf16 %v2405
      %v2578 = vunpack.c.h.bf16 %v2405
      %v2579 = vunpack.c.l.bf16 %v2406
      %v2580 = vunpack.c.h.bf16 %v2406
      %v2581 = vunpack.c.l.bf16 %v2407
      %v2582 = vunpack.c.h.bf16 %v2407
      %v2583 = vunpack.c.l.bf16 %v2408
      %v2584 = vunpack.c.h.bf16 %v2408
      %v2585 = vadd.f32 %v2553, %v2554
      %v2586 = vadd.f32 %v2585, %v2555
      %v2587 = vadd.f32 %v2586, %v2556
      %v2588 = vadd.f32 %v2587, %v2557
      %v2589 = vadd.f32 %v2588, %v2558
      %v2590 = vadd.f32 %v2589, %v2559
      %v2591 = vadd.f32 %v2590, %v2560
      %v2592 = vadd.f32 %v2591, %v2561
      %v2593 = vadd.f32 %v2592, %v2562
      %v2594 = vadd.f32 %v2593, %v2563
      %v2595 = vadd.f32 %v2594, %v2564
      %v2596 = vadd.f32 %v2595, %v2565
      %v2597 = vadd.f32 %v2596, %v2566
      %v2598 = vadd.f32 %v2597, %v2567
      %v2599 = vadd.f32 %v2598, %v2568
      %v2600 = vadd.f32 %v2599, %v2569
      %v2601 = vadd.f32 %v2600, %v2570
      %v2602 = vadd.f32 %v2601, %v2571
      %v2603 = vadd.f32 %v2602, %v2572
      %v2604 = vadd.f32 %v2603, %v2573
      %v2605 = vadd.f32 %v2604, %v2574
      %v2606 = vadd.f32 %v2605, %v2575
      %v2607 = vadd.f32 %v2606, %v2576
      %v2608 = vadd.f32 %v2607, %v2577
      %v2609 = vadd.f32 %v2608, %v2578
      %v2610 = vadd.f32 %v2609, %v2579
      %v2611 = vadd.f32 %v2610, %v2580
      %v2612 = vadd.f32 %v2611, %v2581
      %v2613 = vadd.f32 %v2612, %v2582
      %v2614 = vadd.f32 %v2613, %v2583
      %v2615 = vadd.f32 %v2614, %v2584
      %v2616 = vrot.slane %v2615, 4
      %v2617 = vadd.f32 %v2615, %v2616
      %v2618 = vrot.slane %v2617, 2
      %v2619 = vadd.f32 %v2617, %v2618
      %v2620 = vrot.slane %v2619, 1
      %v2621 = vadd.f32 %v2619, %v2620
      %v2622 = vmul.f32 %v2621, 0.00390625
      %v2623 = vsub.f32 %v2553, %v2622
      %v2624 = vsub.f32 %v2554, %v2622
      %v2625 = vsub.f32 %v2555, %v2622
      %v2626 = vsub.f32 %v2556, %v2622
      %v2627 = vsub.f32 %v2557, %v2622
      %v2628 = vsub.f32 %v2558, %v2622
      %v2629 = vsub.f32 %v2559, %v2622
      %v2630 = vsub.f32 %v2560, %v2622
      %v2631 = vsub.f32 %v2561, %v2622
      %v2632 = vsub.f32 %v2562, %v2622
      %v2633 = vsub.f32 %v2563, %v2622
      %v2634 = vsub.f32 %v2564, %v2622
      %v2635 = vsub.f32 %v2565, %v2622
      %v2636 = vsub.f32 %v2566, %v2622
      %v2637 = vsub.f32 %v2567, %v2622
      %v2638 = vsub.f32 %v2568, %v2622
      %v2639 = vsub.f32 %v2569, %v2622
      %v2640 = vsub.f32 %v2570, %v2622
      %v2641 = vsub.f32 %v2571, %v2622
      %v2642 = vsub.f32 %v2572, %v2622
      %v2643 = vsub.f32 %v2573, %v2622
      %v2644 = vsub.f32 %v2574, %v2622
      %v2645 = vsub.f32 %v2575, %v2622
      %v2646 = vsub.f32 %v2576, %v2622
      %v2647 = vsub.f32 %v2577, %v2622
      %v2648 = vsub.f32 %v2578, %v2622
      %v2649 = vsub.f32 %v2579, %v2622
      %v2650 = vsub.f32 %v2580, %v2622
      %v2651 = vsub.f32 %v2581, %v2622
      %v2652 = vsub.f32 %v2582, %v2622
      %v2653 = vsub.f32 %v2583, %v2622
      %v2654 = vsub.f32 %v2584, %v2622
      %v2655 = vmul.f32 %v2623, %v2623
      %v2656 = vmul.f32 %v2624, %v2624
      %v2657 = vmul.f32 %v2625, %v2625
      %v2658 = vmul.f32 %v2626, %v2626
      %v2659 = vmul.f32 %v2627, %v2627
      %v2660 = vmul.f32 %v2628, %v2628
      %v2661 = vmul.f32 %v2629, %v2629
      %v2662 = vmul.f32 %v2630, %v2630
      %v2663 = vmul.f32 %v2631, %v2631
      %v2664 = vmul.f32 %v2632, %v2632
      %v2665 = vmul.f32 %v2633, %v2633
      %v2666 = vmul.f32 %v2634, %v2634
      %v2667 = vmul.f32 %v2635, %v2635
      %v2668 = vmul.f32 %v2636, %v2636
      %v2669 = vmul.f32 %v2637, %v2637
      %v2670 = vmul.f32 %v2638, %v2638
      %v2671 = vmul.f32 %v2639, %v2639
      %v2672 = vmul.f32 %v2640, %v2640
      %v2673 = vmul.f32 %v2641, %v2641
      %v2674 = vmul.f32 %v2642, %v2642
      %v2675 = vmul.f32 %v2643, %v2643
      %v2676 = vmul.f32 %v2644, %v2644
      %v2677 = vmul.f32 %v2645, %v2645
      %v2678 = vmul.f32 %v2646, %v2646
      %v2679 = vmul.f32 %v2647, %v2647
      %v2680 = vmul.f32 %v2648, %v2648
      %v2681 = vmul.f32 %v2649, %v2649
      %v2682 = vmul.f32 %v2650, %v2650
      %v2683 = vmul.f32 %v2651, %v2651
      %v2684 = vmul.f32 %v2652, %v2652
      %v2685 = vmul.f32 %v2653, %v2653
      %v2686 = vmul.f32 %v2654, %v2654
      %v2687 = vadd.f32 %v2655, %v2656
      %v2688 = vadd.f32 %v2687, %v2657
      %v2689 = vadd.f32 %v2688, %v2658
      %v2690 = vadd.f32 %v2689, %v2659
      %v2691 = vadd.f32 %v2690, %v2660
      %v2692 = vadd.f32 %v2691, %v2661
      %v2693 = vadd.f32 %v2692, %v2662
      %v2694 = vadd.f32 %v2693, %v2663
      %v2695 = vadd.f32 %v2694, %v2664
      %v2696 = vadd.f32 %v2695, %v2665
      %v2697 = vadd.f32 %v2696, %v2666
      %v2698 = vadd.f32 %v2697, %v2667
      %v2699 = vadd.f32 %v2698, %v2668
      %v2700 = vadd.f32 %v2699, %v2669
      %v2701 = vadd.f32 %v2700, %v2670
      %v2702 = vadd.f32 %v2701, %v2671
      %v2703 = vadd.f32 %v2702, %v2672
      %v2704 = vadd.f32 %v2703, %v2673
      %v2705 = vadd.f32 %v2704, %v2674
      %v2706 = vadd.f32 %v2705, %v2675
      %v2707 = vadd.f32 %v2706, %v2676
      %v2708 = vadd.f32 %v2707, %v2677
      %v2709 = vadd.f32 %v2708, %v2678
      %v2710 = vadd.f32 %v2709, %v2679
      %v2711 = vadd.f32 %v2710, %v2680
      %v2712 = vadd.f32 %v2711, %v2681
      %v2713 = vadd.f32 %v2712, %v2682
      %v2714 = vadd.f32 %v2713, %v2683
      %v2715 = vadd.f32 %v2714, %v2684
      %v2716 = vadd.f32 %v2715, %v2685
      %v2717 = vadd.f32 %v2716, %v2686
      %v2718 = vrot.slane %v2717, 4
      %v2719 = vadd.f32 %v2717, %v2718
      %v2720 = vrot.slane %v2719, 2
      %v2721 = vadd.f32 %v2719, %v2720
      %v2722 = vrot.slane %v2721, 1
      %v2723 = vadd.f32 %v2721, %v2722
      %vm2724 = vcmask 1040384
      %v2725 = vsel %vm2724, %v2621, %v2723
      %2726 = vst [vmem:[%s405] sm:$0x3] %v2725
      %s2727 = smul.u32 32, %s25
      %p2728 = scmp.lt.s32.totalorder %s24, 1
      %s2729 = scalar_select %p2728, %s24, 1
      %p2730 = scmp.lt.s32.totalorder %s2727, 127
      %s2731 = scalar_select %p2730, %s2727, 127
      %s2732 = smul.addr %s2729, 128
      %s2733 = sadd.s32 %s2731, %s2732
      %s2734 = smul.addr %s2733, 8
      %s2735 = scalar_lea.vmem %s6, %s2734
      %s2736 = smul.u32 32, %s25
      %p2737 = scmp.lt.s32.totalorder %s24, 1
      %s2738 = scalar_select %p2737, %s24, 1
      %p2739 = scmp.lt.s32.totalorder %s2736, 127
      %s2740 = scalar_select %p2739, %s2736, 127
      %s2741 = smul.addr %s2738, 128
      %s2742 = sadd.s32 %s2740, %s2741
      %s2743 = smul.addr %s2742, 4
      %s2744 = scalar_lea.vmem %s7, %s2743
      %p2745 = scmp.lt.s32.totalorder %s24, 1
      %s2746 = scalar_select %p2745, %s24, 1
      %p2747 = scmp.lt.s32.totalorder %s25, 3
      %s2748 = scalar_select %p2747, %s25, 3
      %s2749 = smul.addr %s2746, 4
      %s2750 = sadd.s32 %s2748, %s2749
      %s2751 = smul.addr %s2750, 2
      %s2752 = scalar_lea.vmem %s8, %s2751
      // Predicated region
      $region45: #{block_v0_forward.7} parent=43 // pred_check
        %p2753 = pneg %p190
      $region46: #{block_v0_forward.7} parent=43 // pred_check_branch
        %2755 = sbr.rel (%p2753) target = $region48
      $region47: #{block_v0_forward.7} parent=43 // pred_region
        %s2756 = smul.u32 32, %s25
      $region48: #{block_v0_forward.7} parent=43 // pred_fallthru
        _
      // Predicated region
      $region49: #{block_v0_forward.7} parent=43 // pred_check
        %p2757 = pneg %p218
      $region50: #{block_v0_forward.7} parent=43 // pred_check_branch
        %2759 = sbr.rel (%p2757) target = $region52
      $region51: #{block_v0_forward.7} parent=43 // pred_region
        %s2760 = smul.u32 32, %s25
      $region52: #{block_v0_forward.7} parent=43 // pred_fallthru
        _
      // Predicated region
      $region53: #{block_v0_forward.7} parent=43 // pred_check
        %p2761 = pneg %p246
      $region54: #{block_v0_forward.7} parent=43 // pred_check_branch
        %2763 = sbr.rel (%p2761) target = $region56
      $region55: #{block_v0_forward.7} parent=43 // pred_region
        _
      $region56: #{block_v0_forward.7} parent=43 // pred_fallthru
        _
    $region44: #{block_v0_forward.7} parent=5 // pred_fallthru
      _
    %p2764 = scmp.le.s32.totalorder 2, %s15
    // Predicated region
    $region57: #{block_v0_forward.7} parent=5 // pred_check
      %p2765 = pneg %p2764
    $region58: #{block_v0_forward.7} parent=5 // pred_check_branch
      %2767 = sbr.rel (%p2765) target = $region60
    $region59: #{block_v0_forward.7} parent=5 // pred_region
      %s2768 = ssub.s32 %s15, 2
      // Predicated region
      $region61: #{block_v0_forward.7} parent=59 // pred_check
        %p2769 = pneg %p196
      $region62: #{block_v0_forward.7} parent=59 // pred_check_branch
        %2771 = sbr.rel (%p2769) target = $region64
      $region63: #{block_v0_forward.7} parent=59 // pred_region
        %s2772 = smul.u32 32, %s27
        %p2773 = scmp.lt.s32.totalorder %s26, 1
        %s2774 = scalar_select %p2773, %s26, 1
        %p2775 = scmp.lt.s32.totalorder %s2772, 127
        %s2776 = scalar_select %p2775, %s2772, 127
        %s2777 = smul.addr %s2774, 128
        %s2778 = sadd.s32 %s2776, %s2777
        %s2779 = smul.addr %s2778, 8
        %s2780 = scalar_lea.vmem %s6, %s2779
      $region64: #{block_v0_forward.7} parent=59 // pred_fallthru
        _
      // Predicated region
      $region65: #{block_v0_forward.7} parent=59 // pred_check
        %p2781 = pneg %p224
      $region66: #{block_v0_forward.7} parent=59 // pred_check_branch
        %2783 = sbr.rel (%p2781) target = $region68
      $region67: #{block_v0_forward.7} parent=59 // pred_region
        %s2784 = smul.u32 32, %s27
        %p2785 = scmp.lt.s32.totalorder %s26, 1
        %s2786 = scalar_select %p2785, %s26, 1
        %p2787 = scmp.lt.s32.totalorder %s2784, 127
        %s2788 = scalar_select %p2787, %s2784, 127
        %s2789 = smul.addr %s2786, 128
        %s2790 = sadd.s32 %s2788, %s2789
        %s2791 = smul.addr %s2790, 4
        %s2792 = scalar_lea.vmem %s7, %s2791
      $region68: #{block_v0_forward.7} parent=59 // pred_fallthru
        _
      // Predicated region
      $region69: #{block_v0_forward.7} parent=59 // pred_check
        %p2793 = pneg %p252
      $region70: #{block_v0_forward.7} parent=59 // pred_check_branch
        %2795 = sbr.rel (%p2793) target = $region72
      $region71: #{block_v0_forward.7} parent=59 // pred_region
        %p2796 = scmp.lt.s32.totalorder %s26, 1
        %s2797 = scalar_select %p2796, %s26, 1
        %p2798 = scmp.lt.s32.totalorder %s27, 3
        %s2799 = scalar_select %p2798, %s27, 3
        %s2800 = smul.addr %s2797, 4
        %s2801 = sadd.s32 %s2799, %s2800
        %s2802 = smul.addr %s2801, 2
        %s2803 = scalar_lea.vmem %s8, %s2802
      $region72: #{block_v0_forward.7} parent=59 // pred_fallthru
        _
    $region60: #{block_v0_forward.7} parent=5 // pred_fallthru
      _
  $region6: #{block_v0_forward.7} parent=0 // loop_footer
    %s19 = sadd.s32 1, %s15
  $region7: #{block_v0_forward.7} parent=0 // loop_footer_branch
    %14 = sbr.rel target = $region3
  $region8: #{block_v0_forward.7} parent=0 // loop_exit
    _

// kernel: block_v0_forward.11
$region0: #{block_v0_forward.11}
  #allocation0 [shape = 'u32[]', space=smem, size = 0x4, offset = 0x4, fixed_abs, tag = 'smem constant byte address 0x4 - core index']
  #allocation1 [shape = 'u32[144,128]{1,0:T(1,128)}', space=vmem, size = 0x12000, scoped, tag = 'internal scratch']
  %s0 = inlined_call_operand.vmem [shape: bf16[2,1024,128], index: 0, kind: input, shape index: {}]
  %s1 = inlined_call_operand.vmem [shape: f32[2,2,128], index: 1, kind: input, shape index: {}]
  %s2 = inlined_call_operand.hbm [shape: bf16[2,1024,128], index: 2, kind: output, shape index: {}]
  %s3 = sld [smem:[#allocation0]]
  $region41: #{block_v0_forward.11} parent=0
    _
  %s5 = ssub.s32 1, %s3
  %s6 = scalar_select 0, %s5, %s3
  $region1: #{block_v0_forward.11} parent=0
    #allocation2 [shape = 'u8[131072]{0}', space=vmem, size = 0x20000, scoped, tag = 'output window, operand 0']
    #allocation3 [shape = 's32[2]{0}', space=sflag, size = 0x8, scoped, tag = 'scoped memory for block_v0_forward.11']
    %7 = vsyncpa [#allocation3], 0
    %s8 = scalar_lea.sflag [#allocation3], 1
    %9 = vsyncpa %s8, 0
    loop: start=0, step=1, limit=10
    $region2: #{block_v0_forward.11} parent=1 // loop_pre_header
      _
    $region3: #{block_v0_forward.11} parent=1 // loop_header
      %s11 = sphi 0, %s15
      %p12 = scmp.ge.s32.totalorder %s11, 10
      %s18 = sphi 0, %s30
      %s19 = sphi 0, %s26
      %s20 = sphi 0, %s18
      %s21 = sphi 0, %s19
      %s22 = sphi 0, %s20
      %s23 = sphi 0, %s21
      %s35 = sphi 0, %s37
      %s38 = sphi 0, %s35
      %s39 = sphi 0, %s38
      %s55 = sphi 0, %s39
      %s61 = sphi 0, %s63
      %s64 = sphi 0, %s61
      %s65 = sphi 0, %s64
      %s81 = sphi 0, %s65
      %s89 = sphi 0, %s91
      %s92 = sphi 0, %s89
      %s93 = sphi 0, %s92
      %s109 = sphi 0, %s93
    $region4: #{block_v0_forward.11} parent=1 // loop_header_branch
      %14 = sbr.rel (%p12) target = $region8
    $region5: #{block_v0_forward.11} parent=1 // loop_body
      %s16 = ssub.s32 %s11, 1
      %s17 = ssub.s32 %s11, 2
      %s24 = sadd.s32 1, %s19
      %p25 = scmp.ge.s32.totalorder %s24, 4
      %s26 = scalar_select %p25, 0, %s24
      %s27 = sadd.s32 1, %s18
      %s28 = scalar_select %p25, %s27, %s18
      %p29 = scmp.ge.s32.totalorder %s28, 2
      %s30 = scalar_select %p29, 0, %s28
      %s31 = ssub.s32 %s18, %s30
      %s32 = ssub.s32 %s19, %s26
      %s33 = sor.u32 %s31, %s32
      %p34 = scmp.eq.s32.totalorder %s33, 0
      %s36 = sadd.s32 %s35, 1
      %s37 = scalar_select %p34, %s35, %s36
      %p40 = pneg %p34
      %p41 = scmp.eq.s32.totalorder %s11, 7
      %p42 = por %p40, %p41
      %p43 = scmp.ne.s32.totalorder %s35, %s38
      %p44 = scmp.eq.s32.totalorder %s11, 0
      %p45 = por %p43, %p44
      %p46 = scmp.ne.s32.totalorder %s35, %s38
      %p47 = scmp.eq.s32.totalorder %s16, 7
      %p48 = por %p46, %p47
      %p49 = scmp.ne.s32.totalorder %s38, %s39
      %p50 = scmp.eq.s32.totalorder %s16, 0
      %p51 = por %p49, %p50
      %p52 = scmp.ne.s32.totalorder %s38, %s39
      %p53 = scmp.eq.s32.totalorder %s17, 7
      %p54 = por %p52, %p53
      %p56 = scmp.ne.s32.totalorder %s39, %s55
      %p57 = scmp.eq.s32.totalorder %s17, 0
      %p58 = por %p56, %p57
      %s59 = ssub.s32 %s18, %s30
      %p60 = scmp.eq.s32.totalorder %s59, 0
      %s62 = sadd.s32 %s61, 1
      %s63 = scalar_select %p60, %s61, %s62
      %p66 = pneg %p60
      %p67 = scmp.eq.s32.totalorder %s11, 7
      %p68 = por %p66, %p67
      %p69 = scmp.ne.s32.totalorder %s61, %s64
      %p70 = scmp.eq.s32.totalorder %s11, 0
      %p71 = por %p69, %p70
      %p72 = scmp.ne.s32.totalorder %s61, %s64
      %p73 = scmp.eq.s32.totalorder %s16, 7
      %p74 = por %p72, %p73
      %p75 = scmp.ne.s32.totalorder %s64, %s65
      %p76 = scmp.eq.s32.totalorder %s16, 0
      %p77 = por %p75, %p76
      %p78 = scmp.ne.s32.totalorder %s64, %s65
      %p79 = scmp.eq.s32.totalorder %s17, 7
      %p80 = por %p78, %p79
      %p82 = scmp.ne.s32.totalorder %s65, %s81
      %p83 = scmp.eq.s32.totalorder %s17, 0
      %p84 = por %p82, %p83
      %s85 = ssub.s32 %s18, %s30
      %s86 = ssub.s32 %s19, %s26
      %s87 = sor.u32 %s85, %s86
      %p88 = scmp.eq.s32.totalorder %s87, 0
      %s90 = sadd.s32 %s89, 1
      %s91 = scalar_select %p88, %s89, %s90
      %p94 = pneg %p88
      %p95 = scmp.eq.s32.totalorder %s11, 7
      %p96 = por %p94, %p95
      %p97 = scmp.ne.s32.totalorder %s89, %s92
      %p98 = scmp.eq.s32.totalorder %s11, 0
      %p99 = por %p97, %p98
      %p100 = scmp.ne.s32.totalorder %s89, %s92
      %p101 = scmp.eq.s32.totalorder %s16, 7
      %p102 = por %p100, %p101
      %p103 = scmp.ne.s32.totalorder %s92, %s93
      %p104 = scmp.eq.s32.totalorder %s16, 0
      %p105 = por %p103, %p104
      %p106 = scmp.ne.s32.totalorder %s92, %s93
      %p107 = scmp.eq.s32.totalorder %s17, 7
      %p108 = por %p106, %p107
      %p110 = scmp.ne.s32.totalorder %s93, %s109
      %p111 = scmp.eq.s32.totalorder %s17, 0
      %p112 = por %p110, %p111
      %p113 = scmp.le.s32.totalorder 1, %s11
      %p114 = scmp.lt.s32.totalorder %s11, 9
      %p115 = pnand %p113, %p114
      %p116 = pneg %p115
      // Predicated region
      $region9: #{block_v0_forward.11} parent=5 // pred_check
        _
      $region10: #{block_v0_forward.11} parent=5 // pred_check_branch
        %118 = sbr.rel (%p115) target = $region12
      $region11: #{block_v0_forward.11} parent=5 // pred_region
        %s119 = ssub.s32 %s11, 1
      $region12: #{block_v0_forward.11} parent=5 // pred_fallthru
        _
      %p120 = scmp.lt.s32.totalorder %s11, 8
      // Predicated region
      $region13: #{block_v0_forward.11} parent=5 // pred_check
        %p121 = pneg %p120
      $region14: #{block_v0_forward.11} parent=5 // pred_check_branch
        %123 = sbr.rel (%p121) target = $region16
      $region15: #{block_v0_forward.11} parent=5 // pred_region
        // Predicated region
        $region17: #{block_v0_forward.11} parent=15 // pred_check
          %p124 = pneg %p45
        $region18: #{block_v0_forward.11} parent=15 // pred_check_branch
          %126 = sbr.rel (%p124) target = $region20
        $region19: #{block_v0_forward.11} parent=15 // pred_region
          %s127 = smul.u32 32, %s19
          %p128 = scmp.lt.s32.totalorder %s18, 1
          %s129 = scalar_select %p128, %s18, 1
          %p130 = scmp.lt.s32.totalorder %s127, 127
          %s131 = scalar_select %p130, %s127, 127
          %s132 = smul.addr %s129, 128
          %s133 = sadd.s32 %s131, %s132
          %s134 = smul.addr %s133, 4
          %s135 = scalar_lea.vmem %s0, %s134
          %s136 = smul.u32 32, %s19
        $region20: #{block_v0_forward.11} parent=15 // pred_fallthru
          _
        // Predicated region
        $region21: #{block_v0_forward.11} parent=15 // pred_check
          %p137 = pneg %p71
        $region22: #{block_v0_forward.11} parent=15 // pred_check_branch
          %139 = sbr.rel (%p137) target = $region24
        $region23: #{block_v0_forward.11} parent=15 // pred_region
          %p140 = scmp.lt.s32.totalorder %s18, 1
          %s141 = scalar_select %p140, %s18, 1
          %s142 = smul.addr %s141, 2
          %s143 = scalar_lea.vmem %s1, %s142
        $region24: #{block_v0_forward.11} parent=15 // pred_fallthru
          _
      $region16: #{block_v0_forward.11} parent=5 // pred_fallthru
        _
      %p144 = scmp.le.s32.totalorder 1, %s11
      %p145 = scmp.lt.s32.totalorder %s11, 9
      %p146 = pnand %p144, %p145
      %p147 = pneg %p146
      // Predicated region
      $region25: #{block_v0_forward.11} parent=5 // pred_check
        _
      $region26: #{block_v0_forward.11} parent=5 // pred_check_branch
        %149 = sbr.rel (%p146) target = $region28
      $region27: #{block_v0_forward.11} parent=5 // pred_region
        %s150 = ssub.s32 %s11, 1
        %s151 = smul.u32 32, %s21
        %p152 = scmp.lt.s32.totalorder %s20, 1
        %s153 = scalar_select %p152, %s20, 1
        %p154 = scmp.lt.s32.totalorder %s151, 127
        %s155 = scalar_select %p154, %s151, 127
        %s156 = smul.addr %s153, 128
        %s157 = sadd.s32 %s155, %s156
        %s158 = smul.addr %s157, 4
        %s159 = scalar_lea.vmem %s0, %s158
        %p160 = pneg %p51
        %p161 = pneg %p48
        %p162 = scmp.lt.s32.totalorder %s20, 1
        %s163 = scalar_select %p162, %s20, 1
        %s164 = smul.addr %s163, 2
        %s165 = scalar_lea.vmem %s1, %s164
        %p166 = pneg %p77
        %p167 = pneg %p74
        %p168 = pneg %p105
        %p169 = pneg %p102
        %s170 = sand.u32 %s92, 1
        %s171 = scalar_lea.sflag [#allocation3], %s170
        %s172 = sand.u32 %s92, 1
        %s173 = smul.addr %s172, 128
        %s174 = scalar_lea.vmem [#allocation2], %s173
        %s175 = smul.u32 32, %s21
        %p176 = scmp.lt.s32.totalorder %s20, 1
        %s177 = scalar_select %p176, %s20, 1
        %p178 = scmp.lt.s32.totalorder %s175, 127
        %s179 = scalar_select %p178, %s175, 127
        %s180 = smul.addr %s177, 128
        %s181 = sadd.s32 %s179, %s180
        %s182 = smul.addr %s181, 4
        %s183 = scalar_lea.vmem %s0, %s182
        %s184 = smul.u32 32, %s21
        %p185 = scmp.lt.s32.totalorder %s20, 1
        %s186 = scalar_select %p185, %s20, 1
        %s187 = smul.addr %s186, 2
        %s188 = scalar_lea.vmem %s1, %s187
        %s189 = smul.u32 32, %s21
        %v190 = vld [vmem:[%s188] sm:$0x3]
        %v191 = vld [vmem:[%s183] sm:$0xf]
        %v192 = vld [vmem:[%s183 + $0x4] sm:$0xf]
        %v193 = vld [vmem:[%s183 + $0x8] sm:$0xf]
        %v194 = vld [vmem:[%s183 + $0xc] sm:$0xf]
        %v195 = vld [vmem:[%s183 + $0x10] sm:$0xf]
        %v196 = vld [vmem:[%s183 + $0x14] sm:$0xf]
        %v197 = vld [vmem:[%s183 + $0x18] sm:$0xf]
        %v198 = vld [vmem:[%s183 + $0x1c] sm:$0xf]
        %v199 = vld [vmem:[%s183 + $0x20] sm:$0xf]
        %v200 = vld [vmem:[%s183 + $0x24] sm:$0xf]
        %v201 = vld [vmem:[%s183 + $0x28] sm:$0xf]
        %v202 = vld [vmem:[%s183 + $0x2c] sm:$0xf]
        %v203 = vld [vmem:[%s183 + $0x30] sm:$0xf]
        %v204 = vld [vmem:[%s183 + $0x34] sm:$0xf]
        %v205 = vld [vmem:[%s183 + $0x38] sm:$0xf]
        %v206 = vld [vmem:[%s183 + $0x3c] sm:$0xf]
        %v207 = vld [vmem:[%s183 + $0x40] sm:$0xf]
        %v208 = vld [vmem:[%s183 + $0x44] sm:$0xf]
        %v209 = vld [vmem:[%s183 + $0x48] sm:$0xf]
        %v210 = vld [vmem:[%s183 + $0x4c] sm:$0xf]
        %v211 = vld [vmem:[%s183 + $0x50] sm:$0xf]
        %v212 = vld [vmem:[%s183 + $0x54] sm:$0xf]
        %v213 = vld [vmem:[%s183 + $0x58] sm:$0xf]
        %v214 = vld [vmem:[%s183 + $0x5c] sm:$0xf]
        %v215 = vld [vmem:[%s183 + $0x60] sm:$0xf]
        %v216 = vld [vmem:[%s183 + $0x64] sm:$0xf]
        %v217 = vld [vmem:[%s183 + $0x68] sm:$0xf]
        %v218 = vld [vmem:[%s183 + $0x6c] sm:$0xf]
        %v219 = vld [vmem:[%s183 + $0x70] sm:$0xf]
        %v220 = vld [vmem:[%s183 + $0x74] sm:$0xf]
        %v221 = vld [vmem:[%s183 + $0x78] sm:$0xf]
        %v222 = vld [vmem:[%s183 + $0x7c] sm:$0xf]
        %v223 = vunpack.c.l.bf16 %v191
        %v224 = vunpack.c.l.bf16 %v192
        %v225 = vunpack.c.l.bf16 %v193
        %v226 = vunpack.c.l.bf16 %v194
        %v227 = vunpack.c.l.bf16 %v195
        %v228 = vunpack.c.l.bf16 %v196
        %v229 = vunpack.c.l.bf16 %v197
        %v230 = vunpack.c.l.bf16 %v198
        %v231 = vunpack.c.l.bf16 %v199
        %v232 = vunpack.c.l.bf16 %v200
        %v233 = vunpack.c.l.bf16 %v201
        %v234 = vunpack.c.l.bf16 %v202
        %v235 = vunpack.c.l.bf16 %v203
        %v236 = vunpack.c.l.bf16 %v204
        %v237 = vunpack.c.l.bf16 %v205
        %v238 = vunpack.c.l.bf16 %v206
        %v239 = vunpack.c.l.bf16 %v207
        %v240 = vunpack.c.l.bf16 %v208
        %v241 = vunpack.c.l.bf16 %v209
        %v242 = vunpack.c.l.bf16 %v210
        %v243 = vunpack.c.l.bf16 %v211
        %v244 = vunpack.c.l.bf16 %v212
        %v245 = vunpack.c.l.bf16 %v213
        %v246 = vunpack.c.l.bf16 %v214
        %v247 = vunpack.c.l.bf16 %v215
        %v248 = vunpack.c.l.bf16 %v216
        %v249 = vunpack.c.l.bf16 %v217
        %v250 = vunpack.c.l.bf16 %v218
        %v251 = vunpack.c.l.bf16 %v219
        %v252 = vunpack.c.l.bf16 %v220
        %v253 = vunpack.c.l.bf16 %v221
        %v254 = vunpack.c.l.bf16 %v222
        %v255 = vlaneseq
        %v256 = vshrl.u32 %v255, 7
        %v257 = vsub.s32 0, %v256
        %v258 = vrot.slane %v190, %v257
        %v259 = vmul.f32 %v223, %v258
        %v260 = vmul.f32 %v224, %v258
        %v261 = vmul.f32 %v225, %v258
        %v262 = vmul.f32 %v226, %v258
        %v263 = vmul.f32 %v227, %v258
        %v264 = vmul.f32 %v228, %v258
        %v265 = vmul.f32 %v229, %v258
        %v266 = vmul.f32 %v230, %v258
        %v267 = vmul.f32 %v231, %v258
        %v268 = vmul.f32 %v232, %v258
        %v269 = vmul.f32 %v233, %v258
        %v270 = vmul.f32 %v234, %v258
        %v271 = vmul.f32 %v235, %v258
        %v272 = vmul.f32 %v236, %v258
        %v273 = vmul.f32 %v237, %v258
        %v274 = vmul.f32 %v238, %v258
        %v275 = vmul.f32 %v239, %v258
        %v276 = vmul.f32 %v240, %v258
        %v277 = vmul.f32 %v241, %v258
        %v278 = vmul.f32 %v242, %v258
        %v279 = vmul.f32 %v243, %v258
        %v280 = vmul.f32 %v244, %v258
        %v281 = vmul.f32 %v245, %v258
        %v282 = vmul.f32 %v246, %v258
        %v283 = vmul.f32 %v247, %v258
        %v284 = vmul.f32 %v248, %v258
        %v285 = vmul.f32 %v249, %v258
        %v286 = vmul.f32 %v250, %v258
        %v287 = vmul.f32 %v251, %v258
        %v288 = vmul.f32 %v252, %v258
        %v289 = vmul.f32 %v253, %v258
        %v290 = vmul.f32 %v254, %v258
        %v291 = vlaneseq
        %v292 = vshrl.u32 %v291, 7
        %v293 = vsub.s32 1, %v292
        %v294 = vrot.slane %v190, %v293
        %v295 = vadd.f32 %v259, %v294
        %v296 = vadd.f32 %v260, %v294
        %v297 = vadd.f32 %v261, %v294
        %v298 = vadd.f32 %v262, %v294
        %v299 = vadd.f32 %v263, %v294
        %v300 = vadd.f32 %v264, %v294
        %v301 = vadd.f32 %v265, %v294
        %v302 = vadd.f32 %v266, %v294
        %v303 = vadd.f32 %v267, %v294
        %v304 = vadd.f32 %v268, %v294
        %v305 = vadd.f32 %v269, %v294
        %v306 = vadd.f32 %v270, %v294
        %v307 = vadd.f32 %v271, %v294
        %v308 = vadd.f32 %v272, %v294
        %v309 = vadd.f32 %v273, %v294
        %v310 = vadd.f32 %v274, %v294
        %v311 = vadd.f32 %v275, %v294
        %v312 = vadd.f32 %v276, %v294
        %v313 = vadd.f32 %v277, %v294
        %v314 = vadd.f32 %v278, %v294
        %v315 = vadd.f32 %v279, %v294
        %v316 = vadd.f32 %v280, %v294
        %v317 = vadd.f32 %v281, %v294
        %v318 = vadd.f32 %v282, %v294
        %v319 = vadd.f32 %v283, %v294
        %v320 = vadd.f32 %v284, %v294
        %v321 = vadd.f32 %v285, %v294
        %v322 = vadd.f32 %v286, %v294
        %v323 = vadd.f32 %v287, %v294
        %v324 = vadd.f32 %v288, %v294
        %v325 = vadd.f32 %v289, %v294
        %v326 = vadd.f32 %v290, %v294
        %v327 = vpack.c.bf16 %v296, %v295
        %v328 = vpack.c.bf16 %v298, %v297
        %v329 = vpack.c.bf16 %v300, %v299
        %v330 = vpack.c.bf16 %v302, %v301
        %v331 = vpack.c.bf16 %v304, %v303
        %v332 = vpack.c.bf16 %v306, %v305
        %v333 = vpack.c.bf16 %v308, %v307
        %v334 = vpack.c.bf16 %v310, %v309
        %v335 = vpack.c.bf16 %v312, %v311
        %v336 = vpack.c.bf16 %v314, %v313
        %v337 = vpack.c.bf16 %v316, %v315
        %v338 = vpack.c.bf16 %v318, %v317
        %v339 = vpack.c.bf16 %v320, %v319
        %v340 = vpack.c.bf16 %v322, %v321
        %v341 = vpack.c.bf16 %v324, %v323
        %v342 = vpack.c.bf16 %v326, %v325
        %v359 = vunpack.c.l.b16 %v327
        %v360 = vunpack.c.h.b16 %v327
        %v361 = vunpack.c.l.b16 %v328
        %v362 = vunpack.c.h.b16 %v328
        %v363 = vunpack.c.l.b16 %v329
        %v364 = vunpack.c.h.b16 %v329
        %v365 = vunpack.c.l.b16 %v330
        %v366 = vunpack.c.h.b16 %v330
        %v367 = vunpack.c.l.b16 %v331
        %v368 = vunpack.c.h.b16 %v331
        %v369 = vunpack.c.l.b16 %v332
        %v370 = vunpack.c.h.b16 %v332
        %v371 = vunpack.c.l.b16 %v333
        %v372 = vunpack.c.h.b16 %v333
        %v373 = vunpack.c.l.b16 %v334
        %v374 = vunpack.c.h.b16 %v334
        %v375 = vunpack.c.l.b16 %v335
        %v376 = vunpack.c.h.b16 %v335
        %v377 = vunpack.c.l.b16 %v336
        %v378 = vunpack.c.h.b16 %v336
        %v379 = vunpack.c.l.b16 %v337
        %v380 = vunpack.c.h.b16 %v337
        %v381 = vunpack.c.l.b16 %v338
        %v382 = vunpack.c.h.b16 %v338
        %v383 = vunpack.c.l.b16 %v339
        %v384 = vunpack.c.h.b16 %v339
        %v385 = vunpack.c.l.b16 %v340
        %v386 = vunpack.c.h.b16 %v340
        %v387 = vunpack.c.l.b16 %v341
        %v388 = vunpack.c.h.b16 %v341
        %v389 = vunpack.c.l.b16 %v342
        %v390 = vunpack.c.h.b16 %v342
        %v391 = vpack.c.b16 %v359, %v359
        %v392 = vpack.c.b16 %v360, %v360
        %v393 = vpack.c.b16 %v361, %v361
        %v394 = vpack.c.b16 %v362, %v362
        %v395 = vpack.c.b16 %v363, %v363
        %v396 = vpack.c.b16 %v364, %v364
        %v397 = vpack.c.b16 %v365, %v365
        %v398 = vpack.c.b16 %v366, %v366
        %v399 = vpack.c.b16 %v367, %v367
        %v400 = vpack.c.b16 %v368, %v368
        %v401 = vpack.c.b16 %v369, %v369
        %v402 = vpack.c.b16 %v370, %v370
        %v403 = vpack.c.b16 %v371, %v371
        %v404 = vpack.c.b16 %v372, %v372
        %v405 = vpack.c.b16 %v373, %v373
        %v406 = vpack.c.b16 %v374, %v374
        %v407 = vpack.c.b16 %v375, %v375
        %v408 = vpack.c.b16 %v376, %v376
        %v409 = vpack.c.b16 %v377, %v377
        %v410 = vpack.c.b16 %v378, %v378
        %v411 = vpack.c.b16 %v379, %v379
        %v412 = vpack.c.b16 %v380, %v380
        %v413 = vpack.c.b16 %v381, %v381
        %v414 = vpack.c.b16 %v382, %v382
        %v415 = vpack.c.b16 %v383, %v383
        %v416 = vpack.c.b16 %v384, %v384
        %v417 = vpack.c.b16 %v385, %v385
        %v418 = vpack.c.b16 %v386, %v386
        %v419 = vpack.c.b16 %v387, %v387
        %v420 = vpack.c.b16 %v388, %v388
        %v421 = vpack.c.b16 %v389, %v389
        %v422 = vpack.c.b16 %v390, %v390
        %455 = vst [vmem:[%s174] sm:$0xf] %v391
        %456 = vst [vmem:[%s174 + $0x4] sm:$0xf] %v392
        %457 = vst [vmem:[%s174 + $0x8] sm:$0xf] %v393
        %458 = vst [vmem:[%s174 + $0xc] sm:$0xf] %v394
        %459 = vst [vmem:[%s174 + $0x10] sm:$0xf] %v395
        %460 = vst [vmem:[%s174 + $0x14] sm:$0xf] %v396
        %461 = vst [vmem:[%s174 + $0x18] sm:$0xf] %v397
        %462 = vst [vmem:[%s174 + $0x1c] sm:$0xf] %v398
        %463 = vst [vmem:[%s174 + $0x20] sm:$0xf] %v399
        %464 = vst [vmem:[%s174 + $0x24] sm:$0xf] %v400
        %465 = vst [vmem:[%s174 + $0x28] sm:$0xf] %v401
        %466 = vst [vmem:[%s174 + $0x2c] sm:$0xf] %v402
        %467 = vst [vmem:[%s174 + $0x30] sm:$0xf] %v403
        %468 = vst [vmem:[%s174 + $0x34] sm:$0xf] %v404
        %469 = vst [vmem:[%s174 + $0x38] sm:$0xf] %v405
        %470 = vst [vmem:[%s174 + $0x3c] sm:$0xf] %v406
        %471 = vst [vmem:[%s174 + $0x40] sm:$0xf] %v407
        %472 = vst [vmem:[%s174 + $0x44] sm:$0xf] %v408
        %473 = vst [vmem:[%s174 + $0x48] sm:$0xf] %v409
        %474 = vst [vmem:[%s174 + $0x4c] sm:$0xf] %v410
        %475 = vst [vmem:[%s174 + $0x50] sm:$0xf] %v411
        %476 = vst [vmem:[%s174 + $0x54] sm:$0xf] %v412
        %477 = vst [vmem:[%s174 + $0x58] sm:$0xf] %v413
        %478 = vst [vmem:[%s174 + $0x5c] sm:$0xf] %v414
        %479 = vst [vmem:[%s174 + $0x60] sm:$0xf] %v415
        %480 = vst [vmem:[%s174 + $0x64] sm:$0xf] %v416
        %481 = vst [vmem:[%s174 + $0x68] sm:$0xf] %v417
        %482 = vst [vmem:[%s174 + $0x6c] sm:$0xf] %v418
        %483 = vst [vmem:[%s174 + $0x70] sm:$0xf] %v419
        %484 = vst [vmem:[%s174 + $0x74] sm:$0xf] %v420
        %485 = vst [vmem:[%s174 + $0x78] sm:$0xf] %v421
        %486 = vst [vmem:[%s174 + $0x7c] sm:$0xf] %v422
        %s487 = sand.u32 %s92, 1
        %s488 = scalar_lea.sflag [#allocation3], %s487
        %s489 = sand.u32 %s92, 1
        %s490 = smul.addr %s489, 128
        %s491 = scalar_lea.vmem [#allocation2], %s490
        // Predicated region
        $region29: #{block_v0_forward.11} parent=27 // pred_check
          %p492 = pneg %p102
        $region30: #{block_v0_forward.11} parent=27 // pred_check_branch
          %494 = sbr.rel (%p492) target = $region32
        $region31: #{block_v0_forward.11} parent=27 // pred_region
          %s495 = smul.u32 32, %s21
          %s497 = ssub.s32 2048, 2048
          %498 = vsyncadd %s488, %s497
          %s499 = smul.addr %s20, 128
          %s500 = sadd.s32 %s495, %s499
          %s501 = smul.addr %s500, 64
          %s502 = scalar_lea.hbm %s2, %s501
          %s503 = sshll.u32 %s491, 4
          %s504 = int_to_ptr.vmem [resolvable:$true] %s503
          %509 = dma.vmem_to_hbm [thread:$0]  %s504, 2048, %s502, %s488, 64, 64, 4
        $region32: #{block_v0_forward.11} parent=27 // pred_fallthru
          _
      $region28: #{block_v0_forward.11} parent=5 // pred_fallthru
        _
      %p510 = scmp.le.s32.totalorder 2, %s11
      // Predicated region
      $region33: #{block_v0_forward.11} parent=5 // pred_check
        %p511 = pneg %p510
      $region34: #{block_v0_forward.11} parent=5 // pred_check_branch
        %513 = sbr.rel (%p511) target = $region36
      $region35: #{block_v0_forward.11} parent=5 // pred_region
        %s514 = ssub.s32 %s11, 2
        // Predicated region
        $region37: #{block_v0_forward.11} parent=35 // pred_check
          %p515 = pneg %p108
        $region38: #{block_v0_forward.11} parent=35 // pred_check_branch
          %517 = sbr.rel (%p515) target = $region40
        $region39: #{block_v0_forward.11} parent=35 // pred_region
          %s518 = sand.u32 %s93, 1
          %s519 = scalar_lea.sflag [#allocation3], %s518
          %s520 = sand.u32 %s93, 1
          %s521 = smul.addr %s520, 128
          %s522 = scalar_lea.vmem [#allocation2], %s521
          %523 = dma.done %s519, 2048
        $region40: #{block_v0_forward.11} parent=35 // pred_fallthru
          _
      $region36: #{block_v0_forward.11} parent=5 // pred_fallthru
        _
    $region6: #{block_v0_forward.11} parent=1 // loop_footer
      %s15 = sadd.s32 1, %s11
    $region7: #{block_v0_forward.11} parent=1 // loop_footer_branch
      %10 = sbr.rel target = $region3
    $region8: #{block_v0_forward.11} parent=1 // loop_exit
      _
    %524 = vsyncpa [#allocation3], 1
    %s525 = scalar_lea.sflag [#allocation3], 1
    %526 = vsyncpa %s525, 1

// kernel: block_v0_forward.8
$region0: #{block_v0_forward.8}
  #allocation0 [shape = 'u32[]', space=smem, size = 0x4, offset = 0x4, fixed_abs, tag = 'smem constant byte address 0x4 - core index']
  #allocation1 [shape = 'u32[144,128]{1,0:T(1,128)}', space=vmem, size = 0x12000, scoped, tag = 'internal scratch']
  %s0 = inlined_call_operand.vmem [shape: f32[2,3,32,32], index: 0, kind: input, shape index: {}, may-alias: {0,1}]
  %s1 = inlined_call_operand.vmem [shape: f32[2,3,32,32], index: 1, kind: input, shape index: {}, may-alias: {0,1}]
  %s2 = inlined_call_operand.hbm [shape: f32[2,32,32], index: 2, kind: output, shape index: {}]
  %s3 = sld [smem:[#allocation0]]
  $region121: #{block_v0_forward.8} parent=0
    _
  %s5 = ssub.s32 1, %s3
  %s6 = scalar_select 0, %s5, %s3
  $region1: #{block_v0_forward.8} parent=0
    #allocation2 [shape = 'u8[24576]{0}', space=vmem, size = 0x6000, scoped, tag = 'input window, operand 0']
    #allocation3 [shape = 'u8[24576]{0}', space=vmem, size = 0x6000, scoped, tag = 'input window, operand 1']
    #allocation4 [shape = 'u8[32768]{0}', space=vmem, size = 0x8000, scoped, tag = 'output window, operand 0']
    #allocation5 [shape = 's32[2]{0}', space=sflag, size = 0x8, scoped, tag = 'scoped memory for block_v0_forward.8']
    %7 = vsyncpa [#allocation5], 0
    %s8 = scalar_lea.sflag [#allocation5], 1
    %9 = vsyncpa %s8, 0
    loop: start=0, step=1, limit=10
    $region2: #{block_v0_forward.8} parent=1 // loop_pre_header
      _
    $region3: #{block_v0_forward.8} parent=1 // loop_header
      %s11 = sphi 0, %s15
      %p12 = scmp.ge.s32.totalorder %s11, 10
      %s18 = sphi 0, %s37
      %s19 = sphi 0, %s33
      %s20 = sphi 0, %s29
      %s21 = sphi 0, %s18
      %s22 = sphi 0, %s19
      %s23 = sphi 0, %s20
      %s24 = sphi 0, %s21
      %s25 = sphi 0, %s22
      %s26 = sphi 0, %s23
      %s44 = sphi 0, %s46
      %s47 = sphi 0, %s44
      %s48 = sphi 0, %s47
      %s64 = sphi 0, %s48
      %s72 = sphi 0, %s74
      %s75 = sphi 0, %s72
      %s76 = sphi 0, %s75
      %s92 = sphi 0, %s76
      %s100 = sphi 0, %s102
      %s103 = sphi 0, %s100
      %s104 = sphi 0, %s103
      %s120 = sphi 0, %s104
    $region4: #{block_v0_forward.8} parent=1 // loop_header_branch
      %14 = sbr.rel (%p12) target = $region8
    $region5: #{block_v0_forward.8} parent=1 // loop_body
      %s16 = ssub.s32 %s11, 1
      %s17 = ssub.s32 %s11, 2
      %s27 = sadd.s32 1, %s20
      %p28 = scmp.ge.s32.totalorder %s27, 4
      %s29 = scalar_select %p28, 0, %s27
      %s30 = sadd.s32 1, %s19
      %s31 = scalar_select %p28, %s30, %s19
      %p32 = scmp.ge.s32.totalorder %s31, 1
      %s33 = scalar_select %p32, 0, %s31
      %s34 = sadd.s32 1, %s18
      %s35 = scalar_select %p32, %s34, %s18
      %p36 = scmp.ge.s32.totalorder %s35, 2
      %s37 = scalar_select %p36, 0, %s35
      %s38 = ssub.s32 %s18, %s37
      %s39 = ssub.s32 %s20, %s29
      %s40 = sor.u32 %s38, %s39
      %s41 = ssub.s32 %s19, %s33
      %s42 = sor.u32 %s40, %s41
      %p43 = scmp.eq.s32.totalorder %s42, 0
      %s45 = sadd.s32 %s44, 1
      %s46 = scalar_select %p43, %s44, %s45
      %p49 = pneg %p43
      %p50 = scmp.eq.s32.totalorder %s11, 7
      %p51 = por %p49, %p50
      %p52 = scmp.ne.s32.totalorder %s44, %s47
      %p53 = scmp.eq.s32.totalorder %s11, 0
      %p54 = por %p52, %p53
      %p55 = scmp.ne.s32.totalorder %s44, %s47
      %p56 = scmp.eq.s32.totalorder %s16, 7
      %p57 = por %p55, %p56
      %p58 = scmp.ne.s32.totalorder %s47, %s48
      %p59 = scmp.eq.s32.totalorder %s16, 0
      %p60 = por %p58, %p59
      %p61 = scmp.ne.s32.totalorder %s47, %s48
      %p62 = scmp.eq.s32.totalorder %s17, 7
      %p63 = por %p61, %p62
      %p65 = scmp.ne.s32.totalorder %s48, %s64
      %p66 = scmp.eq.s32.totalorder %s17, 0
      %p67 = por %p65, %p66
      %s68 = ssub.s32 %s18, %s37
      %s69 = ssub.s32 %s20, %s29
      %s70 = sor.u32 %s68, %s69
      %p71 = scmp.eq.s32.totalorder %s70, 0
      %s73 = sadd.s32 %s72, 1
      %s74 = scalar_select %p71, %s72, %s73
      %p77 = pneg %p71
      %p78 = scmp.eq.s32.totalorder %s11, 7
      %p79 = por %p77, %p78
      %p80 = scmp.ne.s32.totalorder %s72, %s75
      %p81 = scmp.eq.s32.totalorder %s11, 0
      %p82 = por %p80, %p81
      %p83 = scmp.ne.s32.totalorder %s72, %s75
      %p84 = scmp.eq.s32.totalorder %s16, 7
      %p85 = por %p83, %p84
      %p86 = scmp.ne.s32.totalorder %s75, %s76
      %p87 = scmp.eq.s32.totalorder %s16, 0
      %p88 = por %p86, %p87
      %p89 = scmp.ne.s32.totalorder %s75, %s76
      %p90 = scmp.eq.s32.totalorder %s17, 7
      %p91 = por %p89, %p90
      %p93 = scmp.ne.s32.totalorder %s76, %s92
      %p94 = scmp.eq.s32.totalorder %s17, 0
      %p95 = por %p93, %p94
      %s96 = ssub.s32 %s18, %s37
      %s97 = ssub.s32 %s19, %s33
      %s98 = sor.u32 %s96, %s97
      %p99 = scmp.eq.s32.totalorder %s98, 0
      %s101 = sadd.s32 %s100, 1
      %s102 = scalar_select %p99, %s100, %s101
      %p105 = pneg %p99
      %p106 = scmp.eq.s32.totalorder %s11, 7
      %p107 = por %p105, %p106
      %p108 = scmp.ne.s32.totalorder %s100, %s103
      %p109 = scmp.eq.s32.totalorder %s11, 0
      %p110 = por %p108, %p109
      %p111 = scmp.ne.s32.totalorder %s100, %s103
      %p112 = scmp.eq.s32.totalorder %s16, 7
      %p113 = por %p111, %p112
      %p114 = scmp.ne.s32.totalorder %s103, %s104
      %p115 = scmp.eq.s32.totalorder %s16, 0
      %p116 = por %p114, %p115
      %p117 = scmp.ne.s32.totalorder %s103, %s104
      %p118 = scmp.eq.s32.totalorder %s17, 7
      %p119 = por %p117, %p118
      %p121 = scmp.ne.s32.totalorder %s104, %s120
      %p122 = scmp.eq.s32.totalorder %s17, 0
      %p123 = por %p121, %p122
      %p124 = scmp.le.s32.totalorder 1, %s11
      %p125 = scmp.lt.s32.totalorder %s11, 9
      %p126 = pnand %p124, %p125
      %p127 = pneg %p126
      // Predicated region
      $region9: #{block_v0_forward.8} parent=5 // pred_check
        _
      $region10: #{block_v0_forward.8} parent=5 // pred_check_branch
        %129 = sbr.rel (%p126) target = $region12
      $region11: #{block_v0_forward.8} parent=5 // pred_region
        %s130 = ssub.s32 %s11, 1
      $region12: #{block_v0_forward.8} parent=5 // pred_fallthru
        _
      %p131 = scmp.lt.s32.totalorder %s11, 8
      // Predicated region
      $region13: #{block_v0_forward.8} parent=5 // pred_check
        %p132 = pneg %p131
      $region14: #{block_v0_forward.8} parent=5 // pred_check_branch
        %134 = sbr.rel (%p132) target = $region16
      $region15: #{block_v0_forward.8} parent=5 // pred_region
        // Predicated region
        $region17: #{block_v0_forward.8} parent=15 // pred_check
          %p135 = pneg %p54
        $region18: #{block_v0_forward.8} parent=15 // pred_check_branch
          %137 = sbr.rel (%p135) target = $region20
        $region19: #{block_v0_forward.8} parent=15 // pred_region
          %s138 = sand.u32 %s44, 1
          %s139 = sand.u32 %s44, 1
          %s140 = smul.addr %s139, 24
          %s141 = scalar_lea.vmem [#allocation2], %s140
          %s142 = sadd.s32 %s19, %s20
          %s143 = smul.addr %s18, 12
          %s144 = sadd.s32 %s142, %s143
          %s145 = smul.addr %s144, 8
          %s146 = scalar_lea.vmem %s0, %s145
          // Predicated region
          $region21: #{block_v0_forward.8} parent=19 // pred_check
            _
          $region22: #{block_v0_forward.8} parent=19 // pred_check_branch
            %148 = sbr.rel (0) target = $region24
          $region23: #{block_v0_forward.8} parent=19 // pred_region
            // Predicated region
            $region25: #{block_v0_forward.8} parent=23 // pred_check
              _
            $region26: #{block_v0_forward.8} parent=23 // pred_check_branch
              %150 = sbr.rel (0) target = $region28
            $region27: #{block_v0_forward.8} parent=23 // pred_region
              // Predicated region
              $region40: #{block_v0_forward.8} parent=27 // pred_check
                _
              $region41: #{block_v0_forward.8} parent=27 // pred_check_branch
                %170 = sbr.rel (0) target = $region43
              $region42: #{block_v0_forward.8} parent=27 // pred_region
                loop: start=0, step=1, limit=1
                $region44: #{block_v0_forward.8} parent=42 // loop_pre_header
                  _
                $region45: #{block_v0_forward.8} parent=42 // loop_header
                  %s172 = sphi 0, %s176
                  %p173 = scmp.ge.s32.totalorder %s172, 1
                  %s177 = sphi %s146, %s146
                  %s178 = sphi %s141, %s141
                $region46: #{block_v0_forward.8} parent=42 // loop_header_branch
                  %175 = sbr.rel (%p173) target = $region50
                $region47: #{block_v0_forward.8} parent=42 // loop_body
                  %v179 = vld [vmem:[%s177] sm:$0xff]
                  %180 = vst [vmem:[%s178] sm:$0xff] %v179
                  %v181 = vld [vmem:[%s177 + $0x20] sm:$0xff]
                  %182 = vst [vmem:[%s178 + $0x8] sm:$0xff] %v181
                  %v183 = vld [vmem:[%s177 + $0x40] sm:$0xff]
                  %184 = vst [vmem:[%s178 + $0x10] sm:$0xff] %v183
                $region48: #{block_v0_forward.8} parent=42 // loop_footer
                  %s176 = sadd.s32 1, %s172
                $region49: #{block_v0_forward.8} parent=42 // loop_footer_branch
                  %171 = sbr.rel target = $region45
                $region50: #{block_v0_forward.8} parent=42 // loop_exit
                  _
              $region43: #{block_v0_forward.8} parent=27 // pred_fallthru
                _
              // Predicated region
              $region51: #{block_v0_forward.8} parent=27 // pred_check
                _
              $region52: #{block_v0_forward.8} parent=27 // pred_check_branch
                %186 = sbr.rel target = $region54
              $region53: #{block_v0_forward.8} parent=27 // pred_region
                _
              $region54: #{block_v0_forward.8} parent=27 // pred_fallthru
                _
            $region28: #{block_v0_forward.8} parent=23 // pred_fallthru
              _
            // Predicated region
            $region29: #{block_v0_forward.8} parent=23 // pred_check
              _
            $region30: #{block_v0_forward.8} parent=23 // pred_check_branch
              %152 = sbr.rel target = $region32
            $region31: #{block_v0_forward.8} parent=23 // pred_region
              %s154 = ssub.s32 256, 1
              loop: start=0, step=1, limit=1
              $region33: #{block_v0_forward.8} parent=31 // loop_pre_header
                _
              $region34: #{block_v0_forward.8} parent=31 // loop_header
                %s156 = sphi 0, %s160
                %p157 = scmp.ge.s32.totalorder %s156, 1
                %s161 = sphi %s146, %s146
                %s162 = sphi %s141, %s141
              $region35: #{block_v0_forward.8} parent=31 // loop_header_branch
                %159 = sbr.rel (%p157) target = $region39
              $region36: #{block_v0_forward.8} parent=31 // loop_body
                %v163 = vld [vmem:[%s161] sm:%s154]
                %164 = vst [vmem:[%s162] sm:%s154] %v163
                %v165 = vld [vmem:[%s161 + $0x20] sm:%s154]
                %166 = vst [vmem:[%s162 + $0x8] sm:%s154] %v165
                %v167 = vld [vmem:[%s161 + $0x40] sm:%s154]
                %168 = vst [vmem:[%s162 + $0x10] sm:%s154] %v167
              $region37: #{block_v0_forward.8} parent=31 // loop_footer
                %s160 = sadd.s32 1, %s156
              $region38: #{block_v0_forward.8} parent=31 // loop_footer_branch
                %155 = sbr.rel target = $region34
              $region39: #{block_v0_forward.8} parent=31 // loop_exit
                _
            $region32: #{block_v0_forward.8} parent=23 // pred_fallthru
              _
          $region24: #{block_v0_forward.8} parent=19 // pred_fallthru
            _
          %187 = vnop
        $region20: #{block_v0_forward.8} parent=15 // pred_fallthru
          _
        // Predicated region
        $region55: #{block_v0_forward.8} parent=15 // pred_check
          %p188 = pneg %p82
        $region56: #{block_v0_forward.8} parent=15 // pred_check_branch
          %190 = sbr.rel (%p188) target = $region58
        $region57: #{block_v0_forward.8} parent=15 // pred_region
          %s191 = sand.u32 %s72, 1
          %s192 = sand.u32 %s72, 1
          %s193 = smul.addr %s192, 24
          %s194 = scalar_lea.vmem [#allocation3], %s193
          %s195 = smul.addr %s18, 12
          %s196 = sadd.s32 %s20, %s195
          %s197 = smul.addr %s196, 8
          %s198 = scalar_lea.vmem %s1, %s197
          // Predicated region
          $region59: #{block_v0_forward.8} parent=57 // pred_check
            _
          $region60: #{block_v0_forward.8} parent=57 // pred_check_branch
            %200 = sbr.rel (0) target = $region62
          $region61: #{block_v0_forward.8} parent=57 // pred_region
            // Predicated region
            $region63: #{block_v0_forward.8} parent=61 // pred_check
              _
            $region64: #{block_v0_forward.8} parent=61 // pred_check_branch
              %202 = sbr.rel (0) target = $region66
            $region65: #{block_v0_forward.8} parent=61 // pred_region
              // Predicated region
              $region78: #{block_v0_forward.8} parent=65 // pred_check
                _
              $region79: #{block_v0_forward.8} parent=65 // pred_check_branch
                %222 = sbr.rel (0) target = $region81
              $region80: #{block_v0_forward.8} parent=65 // pred_region
                loop: start=0, step=1, limit=1
                $region82: #{block_v0_forward.8} parent=80 // loop_pre_header
                  _
                $region83: #{block_v0_forward.8} parent=80 // loop_header
                  %s224 = sphi 0, %s228
                  %p225 = scmp.ge.s32.totalorder %s224, 1
                  %s229 = sphi %s198, %s198
                  %s230 = sphi %s194, %s194
                $region84: #{block_v0_forward.8} parent=80 // loop_header_branch
                  %227 = sbr.rel (%p225) target = $region88
                $region85: #{block_v0_forward.8} parent=80 // loop_body
                  %v231 = vld [vmem:[%s229] sm:$0xff]
                  %232 = vst [vmem:[%s230] sm:$0xff] %v231
                  %v233 = vld [vmem:[%s229 + $0x20] sm:$0xff]
                  %234 = vst [vmem:[%s230 + $0x8] sm:$0xff] %v233
                  %v235 = vld [vmem:[%s229 + $0x40] sm:$0xff]
                  %236 = vst [vmem:[%s230 + $0x10] sm:$0xff] %v235
                $region86: #{block_v0_forward.8} parent=80 // loop_footer
                  %s228 = sadd.s32 1, %s224
                $region87: #{block_v0_forward.8} parent=80 // loop_footer_branch
                  %223 = sbr.rel target = $region83
                $region88: #{block_v0_forward.8} parent=80 // loop_exit
                  _
              $region81: #{block_v0_forward.8} parent=65 // pred_fallthru
                _
              // Predicated region
              $region89: #{block_v0_forward.8} parent=65 // pred_check
                _
              $region90: #{block_v0_forward.8} parent=65 // pred_check_branch
                %238 = sbr.rel target = $region92
              $region91: #{block_v0_forward.8} parent=65 // pred_region
                _
              $region92: #{block_v0_forward.8} parent=65 // pred_fallthru
                _
            $region66: #{block_v0_forward.8} parent=61 // pred_fallthru
              _
            // Predicated region
            $region67: #{block_v0_forward.8} parent=61 // pred_check
              _
            $region68: #{block_v0_forward.8} parent=61 // pred_check_branch
              %204 = sbr.rel target = $region70
            $region69: #{block_v0_forward.8} parent=61 // pred_region
              %s206 = ssub.s32 256, 1
              loop: start=0, step=1, limit=1
              $region71: #{block_v0_forward.8} parent=69 // loop_pre_header
                _
              $region72: #{block_v0_forward.8} parent=69 // loop_header
                %s208 = sphi 0, %s212
                %p209 = scmp.ge.s32.totalorder %s208, 1
                %s213 = sphi %s198, %s198
                %s214 = sphi %s194, %s194
              $region73: #{block_v0_forward.8} parent=69 // loop_header_branch
                %211 = sbr.rel (%p209) target = $region77
              $region74: #{block_v0_forward.8} parent=69 // loop_body
                %v215 = vld [vmem:[%s213] sm:%s206]
                %216 = vst [vmem:[%s214] sm:%s206] %v215
                %v217 = vld [vmem:[%s213 + $0x20] sm:%s206]
                %218 = vst [vmem:[%s214 + $0x8] sm:%s206] %v217
                %v219 = vld [vmem:[%s213 + $0x40] sm:%s206]
                %220 = vst [vmem:[%s214 + $0x10] sm:%s206] %v219
              $region75: #{block_v0_forward.8} parent=69 // loop_footer
                %s212 = sadd.s32 1, %s208
              $region76: #{block_v0_forward.8} parent=69 // loop_footer_branch
                %207 = sbr.rel target = $region72
              $region77: #{block_v0_forward.8} parent=69 // loop_exit
                _
            $region70: #{block_v0_forward.8} parent=61 // pred_fallthru
              _
          $region62: #{block_v0_forward.8} parent=57 // pred_fallthru
            _
          %239 = vnop
        $region58: #{block_v0_forward.8} parent=15 // pred_fallthru
          _
      $region16: #{block_v0_forward.8} parent=5 // pred_fallthru
        _
      %p240 = scmp.le.s32.totalorder 1, %s11
      %p241 = scmp.lt.s32.totalorder %s11, 9
      %p242 = pnand %p240, %p241
      %p243 = pneg %p242
      // Predicated region
      $region93: #{block_v0_forward.8} parent=5 // pred_check
        _
      $region94: #{block_v0_forward.8} parent=5 // pred_check_branch
        %245 = sbr.rel (%p242) target = $region96
      $region95: #{block_v0_forward.8} parent=5 // pred_region
        %s246 = ssub.s32 %s11, 1
        %s247 = sand.u32 %s47, 1
        %s248 = sand.u32 %s47, 1
        %s249 = smul.addr %s248, 24
        %s250 = scalar_lea.vmem [#allocation2], %s249
        // Predicated region
        $region97: #{block_v0_forward.8} parent=95 // pred_check
          %p251 = pneg %p60
        $region98: #{block_v0_forward.8} parent=95 // pred_check_branch
          %253 = sbr.rel (%p251) target = $region100
        $region99: #{block_v0_forward.8} parent=95 // pred_region
          _
        $region100: #{block_v0_forward.8} parent=95 // pred_fallthru
          _
        %s254 = sand.u32 %s75, 1
        %s255 = sand.u32 %s75, 1
        %s256 = smul.addr %s255, 24
        %s257 = scalar_lea.vmem [#allocation3], %s256
        // Predicated region
        $region101: #{block_v0_forward.8} parent=95 // pred_check
          %p258 = pneg %p88
        $region102: #{block_v0_forward.8} parent=95 // pred_check_branch
          %260 = sbr.rel (%p258) target = $region104
        $region103: #{block_v0_forward.8} parent=95 // pred_region
          _
        $region104: #{block_v0_forward.8} parent=95 // pred_fallthru
          _
        %s261 = sand.u32 %s47, 1
        %s262 = sand.u32 %s47, 1
        %s263 = smul.addr %s262, 24
        %s264 = scalar_lea.vmem [#allocation2], %s263
        %p265 = pneg %p60
        %p266 = pneg %p57
        %s267 = sand.u32 %s75, 1
        %s268 = sand.u32 %s75, 1
        %s269 = smul.addr %s268, 24
        %s270 = scalar_lea.vmem [#allocation3], %s269
        %p271 = pneg %p88
        %p272 = pneg %p85
        %p273 = pneg %p116
        %p274 = pneg %p113
        %s275 = sand.u32 %s103, 1
        %s276 = scalar_lea.sflag [#allocation5], %s275
        %s277 = sand.u32 %s103, 1
        %s278 = smul.addr %s277, 32
        %s279 = scalar_lea.vmem [#allocation4], %s278
        %p280 = scmp.eq.s32.totalorder %s23, 0
        // Predicated region
        $region105: #{block_v0_forward.8} parent=95 // pred_check
          %p281 = pneg %p280
        $region106: #{block_v0_forward.8} parent=95 // pred_check_branch
          %283 = sbr.rel (%p281) target = $region108
        $region107: #{block_v0_forward.8} parent=95 // pred_region
          %vm284 = vcmask 261120
          %285 = vst.msk [vmem:[%s279] sm:$0xff] %vm284, 0.0
          %286 = vst.msk [vmem:[%s279 + $0x8] sm:$0xff] %vm284, 0.0
          %287 = vst.msk [vmem:[%s279 + $0x10] sm:$0xff] %vm284, 0.0
          %288 = vst.msk [vmem:[%s279 + $0x18] sm:$0xff] %vm284, 0.0
        $region108: #{block_v0_forward.8} parent=95 // pred_fallthru
          _
        %v289 = vld [vmem:[%s250] sm:$0xff]
        %v290 = vld [vmem:[%s250 + $0x8] sm:$0xff]
        %v291 = vld [vmem:[%s250 + $0x10] sm:$0xff]
        %v292 = vld [vmem:[%s257] sm:$0xff]
        %v293 = vld [vmem:[%s257 + $0x8] sm:$0xff]
        %v294 = vld [vmem:[%s257 + $0x10] sm:$0xff]
        %295 = vxpose.xlu0.b32.start [1/16] %v292, 128
        %296 = vxpose.xlu0.b32.cont [2/16] 0.0, 128
        %297 = vxpose.xlu0.b32.cont [3/16] 0.0, 128
        %298 = vxpose.xlu0.b32.cont [4/16] 0.0, 128
        %299 = vxpose.xlu0.b32.cont [5/16] 0.0, 128
        %300 = vxpose.xlu0.b32.cont [6/16] 0.0, 128
        %301 = vxpose.xlu0.b32.cont [7/16] 0.0, 128
        %302 = vxpose.xlu0.b32.cont [8/16] 0.0, 128
        %303 = vxpose.xlu0.b32.cont [9/16] 0.0, 128
        %304 = vxpose.xlu0.b32.cont [10/16] 0.0, 128
        %305 = vxpose.xlu0.b32.cont [11/16] 0.0, 128
        %306 = vxpose.xlu0.b32.cont [12/16] 0.0, 128
        %307 = vxpose.xlu0.b32.cont [13/16] 0.0, 128
        %308 = vxpose.xlu0.b32.cont [14/16] 0.0, 128
        %309 = vxpose.xlu0.b32.cont [15/16] 0.0, 128
        %310 = vxpose.xlu0.b32.end [16/16] 0.0, 128
        %v311 = vpop.trf.xlu0
        %v312 = vpop.trf.xlu0
        %v313 = vpop.trf.xlu0
        %v314 = vpop.trf.xlu0
        %v315 = vpop.trf.xlu0
        %v316 = vpop.trf.xlu0
        %v317 = vpop.trf.xlu0
        %v318 = vpop.trf.xlu0
        %v319 = vpop.trf.xlu0
        %v320 = vpop.trf.xlu0
        %v321 = vpop.trf.xlu0
        %v322 = vpop.trf.xlu0
        %v323 = vpop.trf.xlu0
        %v324 = vpop.trf.xlu0
        %v325 = vpop.trf.xlu0
        %v326 = vpop.trf.xlu0
        %327 = vxpose.xlu0.b32.start [1/16] %v293, 128
        %328 = vxpose.xlu0.b32.cont [2/16] 0.0, 128
        %329 = vxpose.xlu0.b32.cont [3/16] 0.0, 128
        %330 = vxpose.xlu0.b32.cont [4/16] 0.0, 128
        %331 = vxpose.xlu0.b32.cont [5/16] 0.0, 128
        %332 = vxpose.xlu0.b32.cont [6/16] 0.0, 128
        %333 = vxpose.xlu0.b32.cont [7/16] 0.0, 128
        %334 = vxpose.xlu0.b32.cont [8/16] 0.0, 128
        %335 = vxpose.xlu0.b32.cont [9/16] 0.0, 128
        %336 = vxpose.xlu0.b32.cont [10/16] 0.0, 128
        %337 = vxpose.xlu0.b32.cont [11/16] 0.0, 128
        %338 = vxpose.xlu0.b32.cont [12/16] 0.0, 128
        %339 = vxpose.xlu0.b32.cont [13/16] 0.0, 128
        %340 = vxpose.xlu0.b32.cont [14/16] 0.0, 128
        %341 = vxpose.xlu0.b32.cont [15/16] 0.0, 128
        %342 = vxpose.xlu0.b32.end [16/16] 0.0, 128
        %v343 = vpop.trf.xlu0
        %v344 = vpop.trf.xlu0
        %v345 = vpop.trf.xlu0
        %v346 = vpop.trf.xlu0
        %v347 = vpop.trf.xlu0
        %v348 = vpop.trf.xlu0
        %v349 = vpop.trf.xlu0
        %v350 = vpop.trf.xlu0
        %v351 = vpop.trf.xlu0
        %v352 = vpop.trf.xlu0
        %v353 = vpop.trf.xlu0
        %v354 = vpop.trf.xlu0
        %v355 = vpop.trf.xlu0
        %v356 = vpop.trf.xlu0
        %v357 = vpop.trf.xlu0
        %v358 = vpop.trf.xlu0
        %359 = vxpose.xlu0.b32.start [1/16] %v294, 128
        %360 = vxpose.xlu0.b32.cont [2/16] 0.0, 128
        %361 = vxpose.xlu0.b32.cont [3/16] 0.0, 128
        %362 = vxpose.xlu0.b32.cont [4/16] 0.0, 128
        %363 = vxpose.xlu0.b32.cont [5/16] 0.0, 128
        %364 = vxpose.xlu0.b32.cont [6/16] 0.0, 128
        %365 = vxpose.xlu0.b32.cont [7/16] 0.0, 128
        %366 = vxpose.xlu0.b32.cont [8/16] 0.0, 128
        %367 = vxpose.xlu0.b32.cont [9/16] 0.0, 128
        %368 = vxpose.xlu0.b32.cont [10/16] 0.0, 128
        %369 = vxpose.xlu0.b32.cont [11/16] 0.0, 128
        %370 = vxpose.xlu0.b32.cont [12/16] 0.0, 128
        %371 = vxpose.xlu0.b32.cont [13/16] 0.0, 128
        %372 = vxpose.xlu0.b32.cont [14/16] 0.0, 128
        %373 = vxpose.xlu0.b32.cont [15/16] 0.0, 128
        %374 = vxpose.xlu0.b32.end [16/16] 0.0, 128
        %v375 = vpop.trf.xlu0
        %v376 = vpop.trf.xlu0
        %v377 = vpop.trf.xlu0
        %v378 = vpop.trf.xlu0
        %v379 = vpop.trf.xlu0
        %v380 = vpop.trf.xlu0
        %v381 = vpop.trf.xlu0
        %v382 = vpop.trf.xlu0
        %v383 = vpop.trf.xlu0
        %v384 = vpop.trf.xlu0
        %v385 = vpop.trf.xlu0
        %v386 = vpop.trf.xlu0
        %v387 = vpop.trf.xlu0
        %v388 = vpop.trf.xlu0
        %v389 = vpop.trf.xlu0
        %v390 = vpop.trf.xlu0
        %v391 = vlaneseq
        %v392 = vshrl.u32 %v391, 7
        %v393 = vsub.s32 0, %v392
        %v394 = vrot.slane %v289, %v393
        %396 = vset.pattern.permute.xlu0 0
        %397 = vperm.xlu0 %396, %v311
        %v398 = vpop.permute.xlu0 %397
        %401 = vset.pattern.permute.xlu0 0
        %402 = vperm.xlu0 %401, %v312
        %v403 = vpop.permute.xlu0 %402
        %406 = vset.pattern.permute.xlu0 0
        %407 = vperm.xlu0 %406, %v313
        %v408 = vpop.permute.xlu0 %407
        %411 = vset.pattern.permute.xlu0 0
        %412 = vperm.xlu0 %411, %v314
        %v413 = vpop.permute.xlu0 %412
        %v415 = vsub.f32 %v394, %v398
        %v416 = vsub.f32 %v394, %v403
        %v417 = vsub.f32 %v394, %v408
        %v418 = vsub.f32 %v394, %v413
        %v419 = vmul.f32 %v415, %v415
        %v420 = vmul.f32 %v416, %v416
        %v421 = vmul.f32 %v417, %v417
        %v422 = vmul.f32 %v418, %v418
        %v423 = vadd.f32 %v419, 0.0
        %v424 = vadd.f32 %v420, 0.0
        %v425 = vadd.f32 %v421, 0.0
        %v426 = vadd.f32 %v422, 0.0
        %v427 = vlaneseq
        %v428 = vshrl.u32 %v427, 7
        %v429 = vsub.s32 0, %v428
        %v430 = vrot.slane %v290, %v429
        %432 = vset.pattern.permute.xlu0 0
        %433 = vperm.xlu0 %432, %v343
        %v434 = vpop.permute.xlu0 %433
        %437 = vset.pattern.permute.xlu0 0
        %438 = vperm.xlu0 %437, %v344
        %v439 = vpop.permute.xlu0 %438
        %442 = vset.pattern.permute.xlu0 0
        %443 = vperm.xlu0 %442, %v345
        %v444 = vpop.permute.xlu0 %443
        %447 = vset.pattern.permute.xlu0 0
        %448 = vperm.xlu0 %447, %v346
        %v449 = vpop.permute.xlu0 %448
        %v451 = vsub.f32 %v430, %v434
        %v452 = vsub.f32 %v430, %v439
        %v453 = vsub.f32 %v430, %v444
        %v454 = vsub.f32 %v430, %v449
        %v455 = vmul.f32 %v451, %v451
        %v456 = vmul.f32 %v452, %v452
        %v457 = vmul.f32 %v453, %v453
        %v458 = vmul.f32 %v454, %v454
        %v459 = vadd.f32 %v423, %v455
        %v460 = vadd.f32 %v424, %v456
        %v461 = vadd.f32 %v425, %v457
        %v462 = vadd.f32 %v426, %v458
        %v463 = vlaneseq
        %v464 = vshrl.u32 %v463, 7
        %v465 = vsub.s32 0, %v464
        %v466 = vrot.slane %v291, %v465
        %468 = vset.pattern.permute.xlu0 0
        %469 = vperm.xlu0 %468, %v375
        %v470 = vpop.permute.xlu0 %469
        %473 = vset.pattern.permute.xlu0 0
        %474 = vperm.xlu0 %473, %v376
        %v475 = vpop.permute.xlu0 %474
        %478 = vset.pattern.permute.xlu0 0
        %479 = vperm.xlu0 %478, %v377
        %v480 = vpop.permute.xlu0 %479
        %483 = vset.pattern.permute.xlu0 0
        %484 = vperm.xlu0 %483, %v378
        %v485 = vpop.permute.xlu0 %484
        %v487 = vsub.f32 %v466, %v470
        %v488 = vsub.f32 %v466, %v475
        %v489 = vsub.f32 %v466, %v480
        %v490 = vsub.f32 %v466, %v485
        %v491 = vmul.f32 %v487, %v487
        %v492 = vmul.f32 %v488, %v488
        %v493 = vmul.f32 %v489, %v489
        %v494 = vmul.f32 %v490, %v490
        %v495 = vadd.f32 %v459, %v491
        %v496 = vadd.f32 %v460, %v492
        %v497 = vadd.f32 %v461, %v493
        %v498 = vadd.f32 %v462, %v494
        %v499 = vadd.f32 %v495, 1e-08
        %v500 = vadd.f32 %v496, 1e-08
        %v501 = vadd.f32 %v497, 1e-08
        %v502 = vadd.f32 %v498, 1e-08
        %v503 = vrsqrt.pop %v499
        %v504 = vmul.f32 %v499, %v503
        %vm505 = vcmp.eq.f32.partialorder %v499, inf
        %v506 = vsel %vm505, %v499, %v504
        %vm507 = vcmp.eq.f32.partialorder %v499, 0.0
        %v508 = vand.u32 %v499, 2147483648
        %v509 = vsel %vm507, %v508, %v506
        %v510 = vrsqrt.pop %v500
        %v511 = vmul.f32 %v500, %v510
        %vm512 = vcmp.eq.f32.partialorder %v500, inf
        %v513 = vsel %vm512, %v500, %v511
        %vm514 = vcmp.eq.f32.partialorder %v500, 0.0
        %v515 = vand.u32 %v500, 2147483648
        %v516 = vsel %vm514, %v515, %v513
        %v517 = vrsqrt.pop %v501
        %v518 = vmul.f32 %v501, %v517
        %vm519 = vcmp.eq.f32.partialorder %v501, inf
        %v520 = vsel %vm519, %v501, %v518
        %vm521 = vcmp.eq.f32.partialorder %v501, 0.0
        %v522 = vand.u32 %v501, 2147483648
        %v523 = vsel %vm521, %v522, %v520
        %v524 = vrsqrt.pop %v502
        %v525 = vmul.f32 %v502, %v524
        %vm526 = vcmp.eq.f32.partialorder %v502, inf
        %v527 = vsel %vm526, %v502, %v525
        %vm528 = vcmp.eq.f32.partialorder %v502, 0.0
        %v529 = vand.u32 %v502, 2147483648
        %v530 = vsel %vm528, %v529, %v527
        %v531 = vadd.f32 %v509, 0.0
        %v532 = vadd.f32 %v516, 0.0
        %v533 = vadd.f32 %v523, 0.0
        %v534 = vadd.f32 %v530, 0.0
        %v535 = vlaneseq
        %v536 = vshrl.u32 %v535, 7
        %v537 = vsub.s32 1, %v536
        %v538 = vrot.slane %v289, %v537
        %539 = vset.pattern.permute.xlu0 1
        %540 = vperm.xlu0 %539, %v311
        %v541 = vpop.permute.xlu0 %540
        %543 = vset.pattern.permute.xlu0 1
        %544 = vperm.xlu0 %543, %v312
        %v545 = vpop.permute.xlu0 %544
        %547 = vset.pattern.permute.xlu0 1
        %548 = vperm.xlu0 %547, %v313
        %v549 = vpop.permute.xlu0 %548
        %551 = vset.pattern.permute.xlu0 1
        %552 = vperm.xlu0 %551, %v314
        %v553 = vpop.permute.xlu0 %552
        %v555 = vsub.f32 %v538, %v541
        %v556 = vsub.f32 %v538, %v545
        %v557 = vsub.f32 %v538, %v549
        %v558 = vsub.f32 %v538, %v553
        %v559 = vmul.f32 %v555, %v555
        %v560 = vmul.f32 %v556, %v556
        %v561 = vmul.f32 %v557, %v557
        %v562 = vmul.f32 %v558, %v558
        %v563 = vadd.f32 %v559, 0.0
        %v564 = vadd.f32 %v560, 0.0
        %v565 = vadd.f32 %v561, 0.0
        %v566 = vadd.f32 %v562, 0.0
        %v567 = vlaneseq
        %v568 = vshrl.u32 %v567, 7
        %v569 = vsub.s32 1, %v568
        %v570 = vrot.slane %v290, %v569
        %571 = vset.pattern.permute.xlu0 1
        %572 = vperm.xlu0 %571, %v343
        %v573 = vpop.permute.xlu0 %572
        %575 = vset.pattern.permute.xlu0 1
        %576 = vperm.xlu0 %575, %v344
        %v577 = vpop.permute.xlu0 %576
        %579 = vset.pattern.permute.xlu0 1
        %580 = vperm.xlu0 %579, %v345
        %v581 = vpop.permute.xlu0 %580
        %583 = vset.pattern.permute.xlu0 1
        %584 = vperm.xlu0 %583, %v346
        %v585 = vpop.permute.xlu0 %584
        %v587 = vsub.f32 %v570, %v573
        %v588 = vsub.f32 %v570, %v577
        %v589 = vsub.f32 %v570, %v581
        %v590 = vsub.f32 %v570, %v585
        %v591 = vmul.f32 %v587, %v587
        %v592 = vmul.f32 %v588, %v588
        %v593 = vmul.f32 %v589, %v589
        %v594 = vmul.f32 %v590, %v590
        %v595 = vadd.f32 %v563, %v591
        %v596 = vadd.f32 %v564, %v592
        %v597 = vadd.f32 %v565, %v593
        %v598 = vadd.f32 %v566, %v594
        %v599 = vlaneseq
        %v600 = vshrl.u32 %v599, 7
        %v601 = vsub.s32 1, %v600
        %v602 = vrot.slane %v291, %v601
        %603 = vset.pattern.permute.xlu0 1
        %604 = vperm.xlu0 %603, %v375
        %v605 = vpop.permute.xlu0 %604
        %607 = vset.pattern.permute.xlu0 1
        %608 = vperm.xlu0 %607, %v376
        %v609 = vpop.permute.xlu0 %608
        %611 = vset.pattern.permute.xlu0 1
        %612 = vperm.xlu0 %611, %v377
        %v613 = vpop.permute.xlu0 %612
        %615 = vset.pattern.permute.xlu0 1
        %616 = vperm.xlu0 %615, %v378
        %v617 = vpop.permute.xlu0 %616
        %v619 = vsub.f32 %v602, %v605
        %v620 = vsub.f32 %v602, %v609
        %v621 = vsub.f32 %v602, %v613
        %v622 = vsub.f32 %v602, %v617
        %v623 = vmul.f32 %v619, %v619
        %v624 = vmul.f32 %v620, %v620
        %v625 = vmul.f32 %v621, %v621
        %v626 = vmul.f32 %v622, %v622
        %v627 = vadd.f32 %v595, %v623
        %v628 = vadd.f32 %v596, %v624
        %v629 = vadd.f32 %v597, %v625
        %v630 = vadd.f32 %v598, %v626
        %v631 = vadd.f32 %v627, 1e-08
        %v632 = vadd.f32 %v628, 1e-08
        %v633 = vadd.f32 %v629, 1e-08
        %v634 = vadd.f32 %v630, 1e-08
        %v635 = vrsqrt.pop %v631
        %v636 = vmul.f32 %v631, %v635
        %vm637 = vcmp.eq.f32.partialorder %v631, inf
        %v638 = vsel %vm637, %v631, %v636
        %vm639 = vcmp.eq.f32.partialorder %v631, 0.0
        %v640 = vand.u32 %v631, 2147483648
        %v641 = vsel %vm639, %v640, %v638
        %v642 = vrsqrt.pop %v632
        %v643 = vmul.f32 %v632, %v642
        %vm644 = vcmp.eq.f32.partialorder %v632, inf
        %v645 = vsel %vm644, %v632, %v643
        %vm646 = vcmp.eq.f32.partialorder %v632, 0.0
        %v647 = vand.u32 %v632, 2147483648
        %v648 = vsel %vm646, %v647, %v645
        %v649 = vrsqrt.pop %v633
        %v650 = vmul.f32 %v633, %v649
        %vm651 = vcmp.eq.f32.partialorder %v633, inf
        %v652 = vsel %vm651, %v633, %v650
        %vm653 = vcmp.eq.f32.partialorder %v633, 0.0
        %v654 = vand.u32 %v633, 2147483648
        %v655 = vsel %vm653, %v654, %v652
        %v656 = vrsqrt.pop %v634
        %v657 = vmul.f32 %v634, %v656
        %vm658 = vcmp.eq.f32.partialorder %v634, inf
        %v659 = vsel %vm658, %v634, %v657
        %vm660 = vcmp.eq.f32.partialorder %v634, 0.0
        %v661 = vand.u32 %v634, 2147483648
        %v662 = vsel %vm660, %v661, %v659
        %v663 = vadd.f32 %v531, %v641
        %v664 = vadd.f32 %v532, %v648
        %v665 = vadd.f32 %v533, %v655
        %v666 = vadd.f32 %v534, %v662
        %v667 = vlaneseq
        %v668 = vshrl.u32 %v667, 7
        %v669 = vsub.s32 2, %v668
        %v670 = vrot.slane %v289, %v669
        %671 = vset.pattern.permute.xlu0 2
        %672 = vperm.xlu0 %671, %v311
        %v673 = vpop.permute.xlu0 %672
        %675 = vset.pattern.permute.xlu0 2
        %676 = vperm.xlu0 %675, %v312
        %v677 = vpop.permute.xlu0 %676
        %679 = vset.pattern.permute.xlu0 2
        %680 = vperm.xlu0 %679, %v313
        %v681 = vpop.permute.xlu0 %680
        %683 = vset.pattern.permute.xlu0 2
        %684 = vperm.xlu0 %683, %v314
        %v685 = vpop.permute.xlu0 %684
        %v687 = vsub.f32 %v670, %v673
        %v688 = vsub.f32 %v670, %v677
        %v689 = vsub.f32 %v670, %v681
        %v690 = vsub.f32 %v670, %v685
        %v691 = vmul.f32 %v687, %v687
        %v692 = vmul.f32 %v688, %v688
        %v693 = vmul.f32 %v689, %v689
        %v694 = vmul.f32 %v690, %v690
        %v695 = vadd.f32 %v691, 0.0
        %v696 = vadd.f32 %v692, 0.0
        %v697 = vadd.f32 %v693, 0.0
        %v698 = vadd.f32 %v694, 0.0
        %v699 = vlaneseq
        %v700 = vshrl.u32 %v699, 7
        %v701 = vsub.s32 2, %v700
        %v702 = vrot.slane %v290, %v701
        %703 = vset.pattern.permute.xlu0 2
        %704 = vperm.xlu0 %703, %v343
        %v705 = vpop.permute.xlu0 %704
        %707 = vset.pattern.permute.xlu0 2
        %708 = vperm.xlu0 %707, %v344
        %v709 = vpop.permute.xlu0 %708
        %711 = vset.pattern.permute.xlu0 2
        %712 = vperm.xlu0 %711, %v345
        %v713 = vpop.permute.xlu0 %712
        %715 = vset.pattern.permute.xlu0 2
        %716 = vperm.xlu0 %715, %v346
        %v717 = vpop.permute.xlu0 %716
        %v719 = vsub.f32 %v702, %v705
        %v720 = vsub.f32 %v702, %v709
        %v721 = vsub.f32 %v702, %v713
        %v722 = vsub.f32 %v702, %v717
        %v723 = vmul.f32 %v719, %v719
        %v724 = vmul.f32 %v720, %v720
        %v725 = vmul.f32 %v721, %v721
        %v726 = vmul.f32 %v722, %v722
        %v727 = vadd.f32 %v695, %v723
        %v728 = vadd.f32 %v696, %v724
        %v729 = vadd.f32 %v697, %v725
        %v730 = vadd.f32 %v698, %v726
        %v731 = vlaneseq
        %v732 = vshrl.u32 %v731, 7
        %v733 = vsub.s32 2, %v732
        %v734 = vrot.slane %v291, %v733
        %735 = vset.pattern.permute.xlu0 2
        %736 = vperm.xlu0 %735, %v375
        %v737 = vpop.permute.xlu0 %736
        %739 = vset.pattern.permute.xlu0 2
        %740 = vperm.xlu0 %739, %v376
        %v741 = vpop.permute.xlu0 %740
        %743 = vset.pattern.permute.xlu0 2
        %744 = vperm.xlu0 %743, %v377
        %v745 = vpop.permute.xlu0 %744
        %747 = vset.pattern.permute.xlu0 2
        %748 = vperm.xlu0 %747, %v378
        %v749 = vpop.permute.xlu0 %748
        %v751 = vsub.f32 %v734, %v737
        %v752 = vsub.f32 %v734, %v741
        %v753 = vsub.f32 %v734, %v745
        %v754 = vsub.f32 %v734, %v749
        %v755 = vmul.f32 %v751, %v751
        %v756 = vmul.f32 %v752, %v752
        %v757 = vmul.f32 %v753, %v753
        %v758 = vmul.f32 %v754, %v754
        %v759 = vadd.f32 %v727, %v755
        %v760 = vadd.f32 %v728, %v756
        %v761 = vadd.f32 %v729, %v757
        %v762 = vadd.f32 %v730, %v758
        %v763 = vadd.f32 %v759, 1e-08
        %v764 = vadd.f32 %v760, 1e-08
        %v765 = vadd.f32 %v761, 1e-08
        %v766 = vadd.f32 %v762, 1e-08
        %v767 = vrsqrt.pop %v763
        %v768 = vmul.f32 %v763, %v767
        %vm769 = vcmp.eq.f32.partialorder %v763, inf
        %v770 = vsel %vm769, %v763, %v768
        %vm771 = vcmp.eq.f32.partialorder %v763, 0.0
        %v772 = vand.u32 %v763, 2147483648
        %v773 = vsel %vm771, %v772, %v770
        %v774 = vrsqrt.pop %v764
        %v775 = vmul.f32 %v764, %v774
        %vm776 = vcmp.eq.f32.partialorder %v764, inf
        %v777 = vsel %vm776, %v764, %v775
        %vm778 = vcmp.eq.f32.partialorder %v764, 0.0
        %v779 = vand.u32 %v764, 2147483648
        %v780 = vsel %vm778, %v779, %v777
        %v781 = vrsqrt.pop %v765
        %v782 = vmul.f32 %v765, %v781
        %vm783 = vcmp.eq.f32.partialorder %v765, inf
        %v784 = vsel %vm783, %v765, %v782
        %vm785 = vcmp.eq.f32.partialorder %v765, 0.0
        %v786 = vand.u32 %v765, 2147483648
        %v787 = vsel %vm785, %v786, %v784
        %v788 = vrsqrt.pop %v766
        %v789 = vmul.f32 %v766, %v788
        %vm790 = vcmp.eq.f32.partialorder %v766, inf
        %v791 = vsel %vm790, %v766, %v789
        %vm792 = vcmp.eq.f32.partialorder %v766, 0.0
        %v793 = vand.u32 %v766, 2147483648
        %v794 = vsel %vm792, %v793, %v791
        %v795 = vadd.f32 %v663, %v773
        %v796 = vadd.f32 %v664, %v780
        %v797 = vadd.f32 %v665, %v787
        %v798 = vadd.f32 %v666, %v794
        %v799 = vlaneseq
        %v800 = vshrl.u32 %v799, 7
        %v801 = vsub.s32 3, %v800
        %v802 = vrot.slane %v289, %v801
        %803 = vset.pattern.permute.xlu0 3
        %804 = vperm.xlu0 %803, %v311
        %v805 = vpop.permute.xlu0 %804
        %807 = vset.pattern.permute.xlu0 3
        %808 = vperm.xlu0 %807, %v312
        %v809 = vpop.permute.xlu0 %808
        %811 = vset.pattern.permute.xlu0 3
        %812 = vperm.xlu0 %811, %v313
        %v813 = vpop.permute.xlu0 %812
        %815 = vset.pattern.permute.xlu0 3
        %816 = vperm.xlu0 %815, %v314
        %v817 = vpop.permute.xlu0 %816
        %v819 = vsub.f32 %v802, %v805
        %v820 = vsub.f32 %v802, %v809
        %v821 = vsub.f32 %v802, %v813
        %v822 = vsub.f32 %v802, %v817
        %v823 = vmul.f32 %v819, %v819
        %v824 = vmul.f32 %v820, %v820
        %v825 = vmul.f32 %v821, %v821
        %v826 = vmul.f32 %v822, %v822
        %v827 = vadd.f32 %v823, 0.0
        %v828 = vadd.f32 %v824, 0.0
        %v829 = vadd.f32 %v825, 0.0
        %v830 = vadd.f32 %v826, 0.0
        %v831 = vlaneseq
        %v832 = vshrl.u32 %v831, 7
        %v833 = vsub.s32 3, %v832
        %v834 = vrot.slane %v290, %v833
        %835 = vset.pattern.permute.xlu0 3
        %836 = vperm.xlu0 %835, %v343
        %v837 = vpop.permute.xlu0 %836
        %839 = vset.pattern.permute.xlu0 3
        %840 = vperm.xlu0 %839, %v344
        %v841 = vpop.permute.xlu0 %840
        %843 = vset.pattern.permute.xlu0 3
        %844 = vperm.xlu0 %843, %v345
        %v845 = vpop.permute.xlu0 %844
        %847 = vset.pattern.permute.xlu0 3
        %848 = vperm.xlu0 %847, %v346
        %v849 = vpop.permute.xlu0 %848
        %v851 = vsub.f32 %v834, %v837
        %v852 = vsub.f32 %v834, %v841
        %v853 = vsub.f32 %v834, %v845
        %v854 = vsub.f32 %v834, %v849
        %v855 = vmul.f32 %v851, %v851
        %v856 = vmul.f32 %v852, %v852
        %v857 = vmul.f32 %v853, %v853
        %v858 = vmul.f32 %v854, %v854
        %v859 = vadd.f32 %v827, %v855
        %v860 = vadd.f32 %v828, %v856
        %v861 = vadd.f32 %v829, %v857
        %v862 = vadd.f32 %v830, %v858
        %v863 = vlaneseq
        %v864 = vshrl.u32 %v863, 7
        %v865 = vsub.s32 3, %v864
        %v866 = vrot.slane %v291, %v865
        %867 = vset.pattern.permute.xlu0 3
        %868 = vperm.xlu0 %867, %v375
        %v869 = vpop.permute.xlu0 %868
        %871 = vset.pattern.permute.xlu0 3
        %872 = vperm.xlu0 %871, %v376
        %v873 = vpop.permute.xlu0 %872
        %875 = vset.pattern.permute.xlu0 3
        %876 = vperm.xlu0 %875, %v377
        %v877 = vpop.permute.xlu0 %876
        %879 = vset.pattern.permute.xlu0 3
        %880 = vperm.xlu0 %879, %v378
        %v881 = vpop.permute.xlu0 %880
        %v883 = vsub.f32 %v866, %v869
        %v884 = vsub.f32 %v866, %v873
        %v885 = vsub.f32 %v866, %v877
        %v886 = vsub.f32 %v866, %v881
        %v887 = vmul.f32 %v883, %v883
        %v888 = vmul.f32 %v884, %v884
        %v889 = vmul.f32 %v885, %v885
        %v890 = vmul.f32 %v886, %v886
        %v891 = vadd.f32 %v859, %v887
        %v892 = vadd.f32 %v860, %v888
        %v893 = vadd.f32 %v861, %v889
        %v894 = vadd.f32 %v862, %v890
        %v895 = vadd.f32 %v891, 1e-08
        %v896 = vadd.f32 %v892, 1e-08
        %v897 = vadd.f32 %v893, 1e-08
        %v898 = vadd.f32 %v894, 1e-08
        %v899 = vrsqrt.pop %v895
        %v900 = vmul.f32 %v895, %v899
        %vm901 = vcmp.eq.f32.partialorder %v895, inf
        %v902 = vsel %vm901, %v895, %v900
        %vm903 = vcmp.eq.f32.partialorder %v895, 0.0
        %v904 = vand.u32 %v895, 2147483648
        %v905 = vsel %vm903, %v904, %v902
        %v906 = vrsqrt.pop %v896
        %v907 = vmul.f32 %v896, %v906
        %vm908 = vcmp.eq.f32.partialorder %v896, inf
        %v909 = vsel %vm908, %v896, %v907
        %vm910 = vcmp.eq.f32.partialorder %v896, 0.0
        %v911 = vand.u32 %v896, 2147483648
        %v912 = vsel %vm910, %v911, %v909
        %v913 = vrsqrt.pop %v897
        %v914 = vmul.f32 %v897, %v913
        %vm915 = vcmp.eq.f32.partialorder %v897, inf
        %v916 = vsel %vm915, %v897, %v914
        %vm917 = vcmp.eq.f32.partialorder %v897, 0.0
        %v918 = vand.u32 %v897, 2147483648
        %v919 = vsel %vm917, %v918, %v916
        %v920 = vrsqrt.pop %v898
        %v921 = vmul.f32 %v898, %v920
        %vm922 = vcmp.eq.f32.partialorder %v898, inf
        %v923 = vsel %vm922, %v898, %v921
        %vm924 = vcmp.eq.f32.partialorder %v898, 0.0
        %v925 = vand.u32 %v898, 2147483648
        %v926 = vsel %vm924, %v925, %v923
        %v927 = vadd.f32 %v795, %v905
        %v928 = vadd.f32 %v796, %v912
        %v929 = vadd.f32 %v797, %v919
        %v930 = vadd.f32 %v798, %v926
        %v931 = vlaneseq
        %v932 = vshrl.u32 %v931, 7
        %v933 = vsub.s32 4, %v932
        %v934 = vrot.slane %v289, %v933
        %935 = vset.pattern.permute.xlu0 4
        %936 = vperm.xlu0 %935, %v311
        %v937 = vpop.permute.xlu0 %936
        %939 = vset.pattern.permute.xlu0 4
        %940 = vperm.xlu0 %939, %v312
        %v941 = vpop.permute.xlu0 %940
        %943 = vset.pattern.permute.xlu0 4
        %944 = vperm.xlu0 %943, %v313
        %v945 = vpop.permute.xlu0 %944
        %947 = vset.pattern.permute.xlu0 4
        %948 = vperm.xlu0 %947, %v314
        %v949 = vpop.permute.xlu0 %948
        %v951 = vsub.f32 %v934, %v937
        %v952 = vsub.f32 %v934, %v941
        %v953 = vsub.f32 %v934, %v945
        %v954 = vsub.f32 %v934, %v949
        %v955 = vmul.f32 %v951, %v951
        %v956 = vmul.f32 %v952, %v952
        %v957 = vmul.f32 %v953, %v953
        %v958 = vmul.f32 %v954, %v954
        %v959 = vadd.f32 %v955, 0.0
        %v960 = vadd.f32 %v956, 0.0
        %v961 = vadd.f32 %v957, 0.0
        %v962 = vadd.f32 %v958, 0.0
        %v963 = vlaneseq
        %v964 = vshrl.u32 %v963, 7
        %v965 = vsub.s32 4, %v964
        %v966 = vrot.slane %v290, %v965
        %967 = vset.pattern.permute.xlu0 4
        %968 = vperm.xlu0 %967, %v343
        %v969 = vpop.permute.xlu0 %968
        %971 = vset.pattern.permute.xlu0 4
        %972 = vperm.xlu0 %971, %v344
        %v973 = vpop.permute.xlu0 %972
        %975 = vset.pattern.permute.xlu0 4
        %976 = vperm.xlu0 %975, %v345
        %v977 = vpop.permute.xlu0 %976
        %979 = vset.pattern.permute.xlu0 4
        %980 = vperm.xlu0 %979, %v346
        %v981 = vpop.permute.xlu0 %980
        %v983 = vsub.f32 %v966, %v969
        %v984 = vsub.f32 %v966, %v973
        %v985 = vsub.f32 %v966, %v977
        %v986 = vsub.f32 %v966, %v981
        %v987 = vmul.f32 %v983, %v983
        %v988 = vmul.f32 %v984, %v984
        %v989 = vmul.f32 %v985, %v985
        %v990 = vmul.f32 %v986, %v986
        %v991 = vadd.f32 %v959, %v987
        %v992 = vadd.f32 %v960, %v988
        %v993 = vadd.f32 %v961, %v989
        %v994 = vadd.f32 %v962, %v990
        %v995 = vlaneseq
        %v996 = vshrl.u32 %v995, 7
        %v997 = vsub.s32 4, %v996
        %v998 = vrot.slane %v291, %v997
        %999 = vset.pattern.permute.xlu0 4
        %1000 = vperm.xlu0 %999, %v375
        %v1001 = vpop.permute.xlu0 %1000
        %1003 = vset.pattern.permute.xlu0 4
        %1004 = vperm.xlu0 %1003, %v376
        %v1005 = vpop.permute.xlu0 %1004
        %1007 = vset.pattern.permute.xlu0 4
        %1008 = vperm.xlu0 %1007, %v377
        %v1009 = vpop.permute.xlu0 %1008
        %1011 = vset.pattern.permute.xlu0 4
        %1012 = vperm.xlu0 %1011, %v378
        %v1013 = vpop.permute.xlu0 %1012
        %v1015 = vsub.f32 %v998, %v1001
        %v1016 = vsub.f32 %v998, %v1005
        %v1017 = vsub.f32 %v998, %v1009
        %v1018 = vsub.f32 %v998, %v1013
        %v1019 = vmul.f32 %v1015, %v1015
        %v1020 = vmul.f32 %v1016, %v1016
        %v1021 = vmul.f32 %v1017, %v1017
        %v1022 = vmul.f32 %v1018, %v1018
        %v1023 = vadd.f32 %v991, %v1019
        %v1024 = vadd.f32 %v992, %v1020
        %v1025 = vadd.f32 %v993, %v1021
        %v1026 = vadd.f32 %v994, %v1022
        %v1027 = vadd.f32 %v1023, 1e-08
        %v1028 = vadd.f32 %v1024, 1e-08
        %v1029 = vadd.f32 %v1025, 1e-08
        %v1030 = vadd.f32 %v1026, 1e-08
        %v1031 = vrsqrt.pop %v1027
        %v1032 = vmul.f32 %v1027, %v1031
        %vm1033 = vcmp.eq.f32.partialorder %v1027, inf
        %v1034 = vsel %vm1033, %v1027, %v1032
        %vm1035 = vcmp.eq.f32.partialorder %v1027, 0.0
        %v1036 = vand.u32 %v1027, 2147483648
        %v1037 = vsel %vm1035, %v1036, %v1034
        %v1038 = vrsqrt.pop %v1028
        %v1039 = vmul.f32 %v1028, %v1038
        %vm1040 = vcmp.eq.f32.partialorder %v1028, inf
        %v1041 = vsel %vm1040, %v1028, %v1039
        %vm1042 = vcmp.eq.f32.partialorder %v1028, 0.0
        %v1043 = vand.u32 %v1028, 2147483648
        %v1044 = vsel %vm1042, %v1043, %v1041
        %v1045 = vrsqrt.pop %v1029
        %v1046 = vmul.f32 %v1029, %v1045
        %vm1047 = vcmp.eq.f32.partialorder %v1029, inf
        %v1048 = vsel %vm1047, %v1029, %v1046
        %vm1049 = vcmp.eq.f32.partialorder %v1029, 0.0
        %v1050 = vand.u32 %v1029, 2147483648
        %v1051 = vsel %vm1049, %v1050, %v1048
        %v1052 = vrsqrt.pop %v1030
        %v1053 = vmul.f32 %v1030, %v1052
        %vm1054 = vcmp.eq.f32.partialorder %v1030, inf
        %v1055 = vsel %vm1054, %v1030, %v1053
        %vm1056 = vcmp.eq.f32.partialorder %v1030, 0.0
        %v1057 = vand.u32 %v1030, 2147483648
        %v1058 = vsel %vm1056, %v1057, %v1055
        %v1059 = vadd.f32 %v927, %v1037
        %v1060 = vadd.f32 %v928, %v1044
        %v1061 = vadd.f32 %v929, %v1051
        %v1062 = vadd.f32 %v930, %v1058
        %v1063 = vlaneseq
        %v1064 = vshrl.u32 %v1063, 7
        %v1065 = vsub.s32 5, %v1064
        %v1066 = vrot.slane %v289, %v1065
        %1067 = vset.pattern.permute.xlu0 5
        %1068 = vperm.xlu0 %1067, %v311
        %v1069 = vpop.permute.xlu0 %1068
        %1071 = vset.pattern.permute.xlu0 5
        %1072 = vperm.xlu0 %1071, %v312
        %v1073 = vpop.permute.xlu0 %1072
        %1075 = vset.pattern.permute.xlu0 5
        %1076 = vperm.xlu0 %1075, %v313
        %v1077 = vpop.permute.xlu0 %1076
        %1079 = vset.pattern.permute.xlu0 5
        %1080 = vperm.xlu0 %1079, %v314
        %v1081 = vpop.permute.xlu0 %1080
        %v1083 = vsub.f32 %v1066, %v1069
        %v1084 = vsub.f32 %v1066, %v1073
        %v1085 = vsub.f32 %v1066, %v1077
        %v1086 = vsub.f32 %v1066, %v1081
        %v1087 = vmul.f32 %v1083, %v1083
        %v1088 = vmul.f32 %v1084, %v1084
        %v1089 = vmul.f32 %v1085, %v1085
        %v1090 = vmul.f32 %v1086, %v1086
        %v1091 = vadd.f32 %v1087, 0.0
        %v1092 = vadd.f32 %v1088, 0.0
        %v1093 = vadd.f32 %v1089, 0.0
        %v1094 = vadd.f32 %v1090, 0.0
        %v1095 = vlaneseq
        %v1096 = vshrl.u32 %v1095, 7
        %v1097 = vsub.s32 5, %v1096
        %v1098 = vrot.slane %v290, %v1097
        %1099 = vset.pattern.permute.xlu0 5
        %1100 = vperm.xlu0 %1099, %v343
        %v1101 = vpop.permute.xlu0 %1100
        %1103 = vset.pattern.permute.xlu0 5
        %1104 = vperm.xlu0 %1103, %v344
        %v1105 = vpop.permute.xlu0 %1104
        %1107 = vset.pattern.permute.xlu0 5
        %1108 = vperm.xlu0 %1107, %v345
        %v1109 = vpop.permute.xlu0 %1108
        %1111 = vset.pattern.permute.xlu0 5
        %1112 = vperm.xlu0 %1111, %v346
        %v1113 = vpop.permute.xlu0 %1112
        %v1115 = vsub.f32 %v1098, %v1101
        %v1116 = vsub.f32 %v1098, %v1105
        %v1117 = vsub.f32 %v1098, %v1109
        %v1118 = vsub.f32 %v1098, %v1113
        %v1119 = vmul.f32 %v1115, %v1115
        %v1120 = vmul.f32 %v1116, %v1116
        %v1121 = vmul.f32 %v1117, %v1117
        %v1122 = vmul.f32 %v1118, %v1118
        %v1123 = vadd.f32 %v1091, %v1119
        %v1124 = vadd.f32 %v1092, %v1120
        %v1125 = vadd.f32 %v1093, %v1121
        %v1126 = vadd.f32 %v1094, %v1122
        %v1127 = vlaneseq
        %v1128 = vshrl.u32 %v1127, 7
        %v1129 = vsub.s32 5, %v1128
        %v1130 = vrot.slane %v291, %v1129
        %1131 = vset.pattern.permute.xlu0 5
        %1132 = vperm.xlu0 %1131, %v375
        %v1133 = vpop.permute.xlu0 %1132
        %1135 = vset.pattern.permute.xlu0 5
        %1136 = vperm.xlu0 %1135, %v376
        %v1137 = vpop.permute.xlu0 %1136
        %1139 = vset.pattern.permute.xlu0 5
        %1140 = vperm.xlu0 %1139, %v377
        %v1141 = vpop.permute.xlu0 %1140
        %1143 = vset.pattern.permute.xlu0 5
        %1144 = vperm.xlu0 %1143, %v378
        %v1145 = vpop.permute.xlu0 %1144
        %v1147 = vsub.f32 %v1130, %v1133
        %v1148 = vsub.f32 %v1130, %v1137
        %v1149 = vsub.f32 %v1130, %v1141
        %v1150 = vsub.f32 %v1130, %v1145
        %v1151 = vmul.f32 %v1147, %v1147
        %v1152 = vmul.f32 %v1148, %v1148
        %v1153 = vmul.f32 %v1149, %v1149
        %v1154 = vmul.f32 %v1150, %v1150
        %v1155 = vadd.f32 %v1123, %v1151
        %v1156 = vadd.f32 %v1124, %v1152
        %v1157 = vadd.f32 %v1125, %v1153
        %v1158 = vadd.f32 %v1126, %v1154
        %v1159 = vadd.f32 %v1155, 1e-08
        %v1160 = vadd.f32 %v1156, 1e-08
        %v1161 = vadd.f32 %v1157, 1e-08
        %v1162 = vadd.f32 %v1158, 1e-08
        %v1163 = vrsqrt.pop %v1159
        %v1164 = vmul.f32 %v1159, %v1163
        %vm1165 = vcmp.eq.f32.partialorder %v1159, inf
        %v1166 = vsel %vm1165, %v1159, %v1164
        %vm1167 = vcmp.eq.f32.partialorder %v1159, 0.0
        %v1168 = vand.u32 %v1159, 2147483648
        %v1169 = vsel %vm1167, %v1168, %v1166
        %v1170 = vrsqrt.pop %v1160
        %v1171 = vmul.f32 %v1160, %v1170
        %vm1172 = vcmp.eq.f32.partialorder %v1160, inf
        %v1173 = vsel %vm1172, %v1160, %v1171
        %vm1174 = vcmp.eq.f32.partialorder %v1160, 0.0
        %v1175 = vand.u32 %v1160, 2147483648
        %v1176 = vsel %vm1174, %v1175, %v1173
        %v1177 = vrsqrt.pop %v1161
        %v1178 = vmul.f32 %v1161, %v1177
        %vm1179 = vcmp.eq.f32.partialorder %v1161, inf
        %v1180 = vsel %vm1179, %v1161, %v1178
        %vm1181 = vcmp.eq.f32.partialorder %v1161, 0.0
        %v1182 = vand.u32 %v1161, 2147483648
        %v1183 = vsel %vm1181, %v1182, %v1180
        %v1184 = vrsqrt.pop %v1162
        %v1185 = vmul.f32 %v1162, %v1184
        %vm1186 = vcmp.eq.f32.partialorder %v1162, inf
        %v1187 = vsel %vm1186, %v1162, %v1185
        %vm1188 = vcmp.eq.f32.partialorder %v1162, 0.0
        %v1189 = vand.u32 %v1162, 2147483648
        %v1190 = vsel %vm1188, %v1189, %v1187
        %v1191 = vadd.f32 %v1059, %v1169
        %v1192 = vadd.f32 %v1060, %v1176
        %v1193 = vadd.f32 %v1061, %v1183
        %v1194 = vadd.f32 %v1062, %v1190
        %v1195 = vlaneseq
        %v1196 = vshrl.u32 %v1195, 7
        %v1197 = vsub.s32 6, %v1196
        %v1198 = vrot.slane %v289, %v1197
        %1199 = vset.pattern.permute.xlu0 6
        %1200 = vperm.xlu0 %1199, %v311
        %v1201 = vpop.permute.xlu0 %1200
        %1203 = vset.pattern.permute.xlu0 6
        %1204 = vperm.xlu0 %1203, %v312
        %v1205 = vpop.permute.xlu0 %1204
        %1207 = vset.pattern.permute.xlu0 6
        %1208 = vperm.xlu0 %1207, %v313
        %v1209 = vpop.permute.xlu0 %1208
        %1211 = vset.pattern.permute.xlu0 6
        %1212 = vperm.xlu0 %1211, %v314
        %v1213 = vpop.permute.xlu0 %1212
        %v1215 = vsub.f32 %v1198, %v1201
        %v1216 = vsub.f32 %v1198, %v1205
        %v1217 = vsub.f32 %v1198, %v1209
        %v1218 = vsub.f32 %v1198, %v1213
        %v1219 = vmul.f32 %v1215, %v1215
        %v1220 = vmul.f32 %v1216, %v1216
        %v1221 = vmul.f32 %v1217, %v1217
        %v1222 = vmul.f32 %v1218, %v1218
        %v1223 = vadd.f32 %v1219, 0.0
        %v1224 = vadd.f32 %v1220, 0.0
        %v1225 = vadd.f32 %v1221, 0.0
        %v1226 = vadd.f32 %v1222, 0.0
        %v1227 = vlaneseq
        %v1228 = vshrl.u32 %v1227, 7
        %v1229 = vsub.s32 6, %v1228
        %v1230 = vrot.slane %v290, %v1229
        %1231 = vset.pattern.permute.xlu0 6
        %1232 = vperm.xlu0 %1231, %v343
        %v1233 = vpop.permute.xlu0 %1232
        %1235 = vset.pattern.permute.xlu0 6
        %1236 = vperm.xlu0 %1235, %v344
        %v1237 = vpop.permute.xlu0 %1236
        %1239 = vset.pattern.permute.xlu0 6
        %1240 = vperm.xlu0 %1239, %v345
        %v1241 = vpop.permute.xlu0 %1240
        %1243 = vset.pattern.permute.xlu0 6
        %1244 = vperm.xlu0 %1243, %v346
        %v1245 = vpop.permute.xlu0 %1244
        %v1247 = vsub.f32 %v1230, %v1233
        %v1248 = vsub.f32 %v1230, %v1237
        %v1249 = vsub.f32 %v1230, %v1241
        %v1250 = vsub.f32 %v1230, %v1245
        %v1251 = vmul.f32 %v1247, %v1247
        %v1252 = vmul.f32 %v1248, %v1248
        %v1253 = vmul.f32 %v1249, %v1249
        %v1254 = vmul.f32 %v1250, %v1250
        %v1255 = vadd.f32 %v1223, %v1251
        %v1256 = vadd.f32 %v1224, %v1252
        %v1257 = vadd.f32 %v1225, %v1253
        %v1258 = vadd.f32 %v1226, %v1254
        %v1259 = vlaneseq
        %v1260 = vshrl.u32 %v1259, 7
        %v1261 = vsub.s32 6, %v1260
        %v1262 = vrot.slane %v291, %v1261
        %1263 = vset.pattern.permute.xlu0 6
        %1264 = vperm.xlu0 %1263, %v375
        %v1265 = vpop.permute.xlu0 %1264
        %1267 = vset.pattern.permute.xlu0 6
        %1268 = vperm.xlu0 %1267, %v376
        %v1269 = vpop.permute.xlu0 %1268
        %1271 = vset.pattern.permute.xlu0 6
        %1272 = vperm.xlu0 %1271, %v377
        %v1273 = vpop.permute.xlu0 %1272
        %1275 = vset.pattern.permute.xlu0 6
        %1276 = vperm.xlu0 %1275, %v378
        %v1277 = vpop.permute.xlu0 %1276
        %v1279 = vsub.f32 %v1262, %v1265
        %v1280 = vsub.f32 %v1262, %v1269
        %v1281 = vsub.f32 %v1262, %v1273
        %v1282 = vsub.f32 %v1262, %v1277
        %v1283 = vmul.f32 %v1279, %v1279
        %v1284 = vmul.f32 %v1280, %v1280
        %v1285 = vmul.f32 %v1281, %v1281
        %v1286 = vmul.f32 %v1282, %v1282
        %v1287 = vadd.f32 %v1255, %v1283
        %v1288 = vadd.f32 %v1256, %v1284
        %v1289 = vadd.f32 %v1257, %v1285
        %v1290 = vadd.f32 %v1258, %v1286
        %v1291 = vadd.f32 %v1287, 1e-08
        %v1292 = vadd.f32 %v1288, 1e-08
        %v1293 = vadd.f32 %v1289, 1e-08
        %v1294 = vadd.f32 %v1290, 1e-08
        %v1295 = vrsqrt.pop %v1291
        %v1296 = vmul.f32 %v1291, %v1295
        %vm1297 = vcmp.eq.f32.partialorder %v1291, inf
        %v1298 = vsel %vm1297, %v1291, %v1296
        %vm1299 = vcmp.eq.f32.partialorder %v1291, 0.0
        %v1300 = vand.u32 %v1291, 2147483648
        %v1301 = vsel %vm1299, %v1300, %v1298
        %v1302 = vrsqrt.pop %v1292
        %v1303 = vmul.f32 %v1292, %v1302
        %vm1304 = vcmp.eq.f32.partialorder %v1292, inf
        %v1305 = vsel %vm1304, %v1292, %v1303
        %vm1306 = vcmp.eq.f32.partialorder %v1292, 0.0
        %v1307 = vand.u32 %v1292, 2147483648
        %v1308 = vsel %vm1306, %v1307, %v1305
        %v1309 = vrsqrt.pop %v1293
        %v1310 = vmul.f32 %v1293, %v1309
        %vm1311 = vcmp.eq.f32.partialorder %v1293, inf
        %v1312 = vsel %vm1311, %v1293, %v1310
        %vm1313 = vcmp.eq.f32.partialorder %v1293, 0.0
        %v1314 = vand.u32 %v1293, 2147483648
        %v1315 = vsel %vm1313, %v1314, %v1312
        %v1316 = vrsqrt.pop %v1294
        %v1317 = vmul.f32 %v1294, %v1316
        %vm1318 = vcmp.eq.f32.partialorder %v1294, inf
        %v1319 = vsel %vm1318, %v1294, %v1317
        %vm1320 = vcmp.eq.f32.partialorder %v1294, 0.0
        %v1321 = vand.u32 %v1294, 2147483648
        %v1322 = vsel %vm1320, %v1321, %v1319
        %v1323 = vadd.f32 %v1191, %v1301
        %v1324 = vadd.f32 %v1192, %v1308
        %v1325 = vadd.f32 %v1193, %v1315
        %v1326 = vadd.f32 %v1194, %v1322
        %v1327 = vlaneseq
        %v1328 = vshrl.u32 %v1327, 7
        %v1329 = vsub.s32 7, %v1328
        %v1330 = vrot.slane %v289, %v1329
        %1331 = vset.pattern.permute.xlu0 7
        %1332 = vperm.xlu0 %1331, %v311
        %v1333 = vpop.permute.xlu0 %1332
        %1335 = vset.pattern.permute.xlu0 7
        %1336 = vperm.xlu0 %1335, %v312
        %v1337 = vpop.permute.xlu0 %1336
        %1339 = vset.pattern.permute.xlu0 7
        %1340 = vperm.xlu0 %1339, %v313
        %v1341 = vpop.permute.xlu0 %1340
        %1343 = vset.pattern.permute.xlu0 7
        %1344 = vperm.xlu0 %1343, %v314
        %v1345 = vpop.permute.xlu0 %1344
        %v1347 = vsub.f32 %v1330, %v1333
        %v1348 = vsub.f32 %v1330, %v1337
        %v1349 = vsub.f32 %v1330, %v1341
        %v1350 = vsub.f32 %v1330, %v1345
        %v1351 = vmul.f32 %v1347, %v1347
        %v1352 = vmul.f32 %v1348, %v1348
        %v1353 = vmul.f32 %v1349, %v1349
        %v1354 = vmul.f32 %v1350, %v1350
        %v1355 = vadd.f32 %v1351, 0.0
        %v1356 = vadd.f32 %v1352, 0.0
        %v1357 = vadd.f32 %v1353, 0.0
        %v1358 = vadd.f32 %v1354, 0.0
        %v1359 = vlaneseq
        %v1360 = vshrl.u32 %v1359, 7
        %v1361 = vsub.s32 7, %v1360
        %v1362 = vrot.slane %v290, %v1361
        %1363 = vset.pattern.permute.xlu0 7
        %1364 = vperm.xlu0 %1363, %v343
        %v1365 = vpop.permute.xlu0 %1364
        %1367 = vset.pattern.permute.xlu0 7
        %1368 = vperm.xlu0 %1367, %v344
        %v1369 = vpop.permute.xlu0 %1368
        %1371 = vset.pattern.permute.xlu0 7
        %1372 = vperm.xlu0 %1371, %v345
        %v1373 = vpop.permute.xlu0 %1372
        %1375 = vset.pattern.permute.xlu0 7
        %1376 = vperm.xlu0 %1375, %v346
        %v1377 = vpop.permute.xlu0 %1376
        %v1379 = vsub.f32 %v1362, %v1365
        %v1380 = vsub.f32 %v1362, %v1369
        %v1381 = vsub.f32 %v1362, %v1373
        %v1382 = vsub.f32 %v1362, %v1377
        %v1383 = vmul.f32 %v1379, %v1379
        %v1384 = vmul.f32 %v1380, %v1380
        %v1385 = vmul.f32 %v1381, %v1381
        %v1386 = vmul.f32 %v1382, %v1382
        %v1387 = vadd.f32 %v1355, %v1383
        %v1388 = vadd.f32 %v1356, %v1384
        %v1389 = vadd.f32 %v1357, %v1385
        %v1390 = vadd.f32 %v1358, %v1386
        %v1391 = vlaneseq
        %v1392 = vshrl.u32 %v1391, 7
        %v1393 = vsub.s32 7, %v1392
        %v1394 = vrot.slane %v291, %v1393
        %1395 = vset.pattern.permute.xlu0 7
        %1396 = vperm.xlu0 %1395, %v375
        %v1397 = vpop.permute.xlu0 %1396
        %1399 = vset.pattern.permute.xlu0 7
        %1400 = vperm.xlu0 %1399, %v376
        %v1401 = vpop.permute.xlu0 %1400
        %1403 = vset.pattern.permute.xlu0 7
        %1404 = vperm.xlu0 %1403, %v377
        %v1405 = vpop.permute.xlu0 %1404
        %1407 = vset.pattern.permute.xlu0 7
        %1408 = vperm.xlu0 %1407, %v378
        %v1409 = vpop.permute.xlu0 %1408
        %v1411 = vsub.f32 %v1394, %v1397
        %v1412 = vsub.f32 %v1394, %v1401
        %v1413 = vsub.f32 %v1394, %v1405
        %v1414 = vsub.f32 %v1394, %v1409
        %v1415 = vmul.f32 %v1411, %v1411
        %v1416 = vmul.f32 %v1412, %v1412
        %v1417 = vmul.f32 %v1413, %v1413
        %v1418 = vmul.f32 %v1414, %v1414
        %v1419 = vadd.f32 %v1387, %v1415
        %v1420 = vadd.f32 %v1388, %v1416
        %v1421 = vadd.f32 %v1389, %v1417
        %v1422 = vadd.f32 %v1390, %v1418
        %v1423 = vadd.f32 %v1419, 1e-08
        %v1424 = vadd.f32 %v1420, 1e-08
        %v1425 = vadd.f32 %v1421, 1e-08
        %v1426 = vadd.f32 %v1422, 1e-08
        %v1427 = vrsqrt.pop %v1423
        %v1428 = vmul.f32 %v1423, %v1427
        %vm1429 = vcmp.eq.f32.partialorder %v1423, inf
        %v1430 = vsel %vm1429, %v1423, %v1428
        %vm1431 = vcmp.eq.f32.partialorder %v1423, 0.0
        %v1432 = vand.u32 %v1423, 2147483648
        %v1433 = vsel %vm1431, %v1432, %v1430
        %v1434 = vrsqrt.pop %v1424
        %v1435 = vmul.f32 %v1424, %v1434
        %vm1436 = vcmp.eq.f32.partialorder %v1424, inf
        %v1437 = vsel %vm1436, %v1424, %v1435
        %vm1438 = vcmp.eq.f32.partialorder %v1424, 0.0
        %v1439 = vand.u32 %v1424, 2147483648
        %v1440 = vsel %vm1438, %v1439, %v1437
        %v1441 = vrsqrt.pop %v1425
        %v1442 = vmul.f32 %v1425, %v1441
        %vm1443 = vcmp.eq.f32.partialorder %v1425, inf
        %v1444 = vsel %vm1443, %v1425, %v1442
        %vm1445 = vcmp.eq.f32.partialorder %v1425, 0.0
        %v1446 = vand.u32 %v1425, 2147483648
        %v1447 = vsel %vm1445, %v1446, %v1444
        %v1448 = vrsqrt.pop %v1426
        %v1449 = vmul.f32 %v1426, %v1448
        %vm1450 = vcmp.eq.f32.partialorder %v1426, inf
        %v1451 = vsel %vm1450, %v1426, %v1449
        %vm1452 = vcmp.eq.f32.partialorder %v1426, 0.0
        %v1453 = vand.u32 %v1426, 2147483648
        %v1454 = vsel %vm1452, %v1453, %v1451
        %v1455 = vadd.f32 %v1323, %v1433
        %v1456 = vadd.f32 %v1324, %v1440
        %v1457 = vadd.f32 %v1325, %v1447
        %v1458 = vadd.f32 %v1326, %v1454
        %v1459 = vld [vmem:[%s279] sm:$0xff]
        %v1460 = vld [vmem:[%s279 + $0x8] sm:$0xff]
        %v1461 = vld [vmem:[%s279 + $0x10] sm:$0xff]
        %v1462 = vld [vmem:[%s279 + $0x18] sm:$0xff]
        %v1463 = vmul.f32 %v1455, 0.03125
        %v1464 = vmul.f32 %v1456, 0.03125
        %v1465 = vmul.f32 %v1457, 0.03125
        %v1466 = vmul.f32 %v1458, 0.03125
        %v1467 = vadd.f32 %v1459, %v1463
        %v1468 = vadd.f32 %v1460, %v1464
        %v1469 = vadd.f32 %v1461, %v1465
        %v1470 = vadd.f32 %v1462, %v1466
        %vm1471 = vcmask 261120
        %1472 = vst.msk [vmem:[%s279] sm:$0xff] %vm1471, %v1467
        %1473 = vst.msk [vmem:[%s279 + $0x8] sm:$0xff] %vm1471, %v1468
        %1474 = vst.msk [vmem:[%s279 + $0x10] sm:$0xff] %vm1471, %v1469
        %1475 = vst.msk [vmem:[%s279 + $0x18] sm:$0xff] %vm1471, %v1470
        %s1476 = sand.u32 %s103, 1
        %s1477 = scalar_lea.sflag [#allocation5], %s1476
        %s1478 = sand.u32 %s103, 1
        %s1479 = smul.addr %s1478, 32
        %s1480 = scalar_lea.vmem [#allocation4], %s1479
        // Predicated region
        $region109: #{block_v0_forward.8} parent=95 // pred_check
          %p1481 = pneg %p113
        $region110: #{block_v0_forward.8} parent=95 // pred_check_branch
          %1483 = sbr.rel (%p1481) target = $region112
        $region111: #{block_v0_forward.8} parent=95 // pred_region
          %s1485 = ssub.s32 512, 512
          %1486 = vsyncadd %s1477, %s1485
          %s1487 = smul.addr %s21, 4
          %s1488 = sadd.s32 %s22, %s1487
          %s1489 = smul.addr %s1488, 128
          %s1490 = scalar_lea.hbm %s2, %s1489
          %s1491 = sshll.u32 %s1480, 4
          %s1492 = int_to_ptr.vmem [resolvable:$true] %s1491
          %1497 = dma.vmem_to_hbm [thread:$0]  %s1492, 512, %s1490, %s1477, 128, 128, 8
        $region112: #{block_v0_forward.8} parent=95 // pred_fallthru
          _
      $region96: #{block_v0_forward.8} parent=5 // pred_fallthru
        _
      %p1498 = scmp.le.s32.totalorder 2, %s11
      // Predicated region
      $region113: #{block_v0_forward.8} parent=5 // pred_check
        %p1499 = pneg %p1498
      $region114: #{block_v0_forward.8} parent=5 // pred_check_branch
        %1501 = sbr.rel (%p1499) target = $region116
      $region115: #{block_v0_forward.8} parent=5 // pred_region
        %s1502 = ssub.s32 %s11, 2
        // Predicated region
        $region117: #{block_v0_forward.8} parent=115 // pred_check
          %p1503 = pneg %p119
        $region118: #{block_v0_forward.8} parent=115 // pred_check_branch
          %1505 = sbr.rel (%p1503) target = $region120
        $region119: #{block_v0_forward.8} parent=115 // pred_region
          %s1506 = sand.u32 %s104, 1
          %s1507 = scalar_lea.sflag [#allocation5], %s1506
          %s1508 = sand.u32 %s104, 1
          %s1509 = smul.addr %s1508, 32
          %s1510 = scalar_lea.vmem [#allocation4], %s1509
          %1511 = dma.done %s1507, 512
        $region120: #{block_v0_forward.8} parent=115 // pred_fallthru
          _
      $region116: #{block_v0_forward.8} parent=5 // pred_fallthru
        _
    $region6: #{block_v0_forward.8} parent=1 // loop_footer
      %s15 = sadd.s32 1, %s11
    $region7: #{block_v0_forward.8} parent=1 // loop_footer_branch
      %10 = sbr.rel target = $region3
    $region8: #{block_v0_forward.8} parent=1 // loop_exit
      _
    %1512 = vsyncpa [#allocation5], 1
    %s1513 = scalar_lea.sflag [#allocation5], 1
    %1514 = vsyncpa %s1513, 1

</llo_original>
